<compile_context>
chip_gen: v7x
topology: tpu7x:2x2x1
jax: 0.10.0
libtpu: 0.0.40
codegen_flags: <defaults>
</compile_context>

<pallas_src>
import math
from functools import partial

import jax
import jax.numpy as jnp
from jax.experimental import pallas as pl
from jax.experimental.pallas import tpu as pltpu

CP = 128          # lane-dense channel padding (all channel dims padded to 128)
TILE_M = 256      # row tile for gridded GEMMs
VMEM_LIMIT = 32 * 1024 * 1024


# ----------------------------------------------------------------------------
# Pallas kernels
# ----------------------------------------------------------------------------
def _gemm_bias_act_kernel(x_ref, w_ref, b_ref, o_ref, *, apply_relu):
    acc = jnp.dot(x_ref[...], w_ref[...], preferred_element_type=jnp.float32)
    acc = acc + b_ref[...]
    if apply_relu:
        acc = jnp.maximum(acc, 0.0)
    o_ref[...] = acc.astype(o_ref.dtype)


def gemm_bias_act(x, w, b, *, apply_relu, tile_m=TILE_M):
    """y = act(x @ w + b); grid over M when it is large, single block otherwise."""
    M, K = x.shape
    K2, N = w.shape
    assert K == K2, (K, K2)
    b2 = b.reshape(1, N)
    kernel = partial(_gemm_bias_act_kernel, apply_relu=apply_relu)
    if M > tile_m and M % tile_m == 0:
        grid = (M // tile_m,)
        in_specs = [
            pl.BlockSpec((tile_m, K), lambda i: (i, 0)),
            pl.BlockSpec((K, N), lambda i: (0, 0)),
            pl.BlockSpec((1, N), lambda i: (0, 0)),
        ]
        out_specs = pl.BlockSpec((tile_m, N), lambda i: (i, 0))
        semantics = ("parallel",)
    else:
        grid = (1,)
        in_specs = [
            pl.BlockSpec((M, K), lambda i: (0, 0)),
            pl.BlockSpec((K, N), lambda i: (0, 0)),
            pl.BlockSpec((1, N), lambda i: (0, 0)),
        ]
        out_specs = pl.BlockSpec((M, N), lambda i: (0, 0))
        semantics = ("arbitrary",)
    return pl.pallas_call(
        kernel,
        grid=grid,
        out_shape=jax.ShapeDtypeStruct((M, N), x.dtype),
        in_specs=in_specs,
        out_specs=out_specs,
        compiler_params=pltpu.CompilerParams(
            dimension_semantics=semantics,
            vmem_limit_bytes=VMEM_LIMIT),
        cost_estimate=pl.CostEstimate(
            flops=2 * M * K * N,
            transcendentals=0,
            bytes_accessed=4 * (M * K + K * N + M * N + N)),
    )(x, w, b2)


def _conv_nll_kernel(p_ref, w_ref, b_ref, x_ref, m_ref, sel_ref, o_ref):
    """Final Conv2d GEMM fused with Bernoulli NLL + per-image reduction."""
    @pl.when(pl.program_id(0) == 0)
    def _():
        o_ref[...] = jnp.zeros_like(o_ref)

    logits = jnp.dot(p_ref[...], w_ref[...],
                     preferred_element_type=jnp.float32) + b_ref[...]
    x = x_ref[...]
    # Bernoulli(logits=l).log_prob(x) = x*l - softplus(l) ; NLL = softplus(l) - x*l.
    # Stable softplus written with primitives guaranteed to lower on Mosaic.
    softplus = jnp.maximum(logits, 0.0) + jnp.log(1.0 + jnp.exp(-jnp.abs(logits)))
    nll = (softplus - x * logits) * m_ref[...]          # mask out padded channels
    per_pos = jnp.sum(nll, axis=-1, keepdims=True)      # (TM, 1)
    # Per-image accumulation via a 0/1 selector matrix (rows grouped by batch).
    o_ref[...] += jnp.dot(sel_ref[...], per_pos, preferred_element_type=jnp.float32)


def conv_bernoulli_nll(patches, w, b, x_flat, mask, sel, tile_m=TILE_M):
    M, K = patches.shape
    K2, N = w.shape
    assert K == K2
    B = sel.shape[0]
    b2 = b.reshape(1, N)
    m2 = mask.reshape(1, N)
    if M > tile_m and M % tile_m == 0:
        grid = (M // tile_m,)
        in_specs = [
            pl.BlockSpec((tile_m, K), lambda i: (i, 0)),
            pl.BlockSpec((K, N), lambda i: (0, 0)),
            pl.BlockSpec((1, N), lambda i: (0, 0)),
            pl.BlockSpec((tile_m, N), lambda i: (i, 0)),
            pl.BlockSpec((1, N), lambda i: (0, 0)),
            pl.BlockSpec((B, tile_m), lambda i: (0, i)),
        ]
    else:
        grid = (1,)
        in_specs = [
            pl.BlockSpec((M, K), lambda i: (0, 0)),
            pl.BlockSpec((K, N), lambda i: (0, 0)),
            pl.BlockSpec((1, N), lambda i: (0, 0)),
            pl.BlockSpec((M, N), lambda i: (0, 0)),
            pl.BlockSpec((1, N), lambda i: (0, 0)),
            pl.BlockSpec((B, M), lambda i: (0, 0)),
        ]
    out = pl.pallas_call(
        _conv_nll_kernel,
        grid=grid,
        out_shape=jax.ShapeDtypeStruct((B, 1), jnp.float32),
        in_specs=in_specs,
        out_specs=pl.BlockSpec((B, 1), lambda i: (0, 0)),   # accumulator across grid
        compiler_params=pltpu.CompilerParams(
            dimension_semantics=("arbitrary",),
            vmem_limit_bytes=VMEM_LIMIT),
        cost_estimate=pl.CostEstimate(
            flops=2 * M * K * N + 2 * B * M + 6 * M * N,
            transcendentals=2 * M * N,
            bytes_accessed=4 * (M * K + K * N + 2 * M * N + B * M + B)),
    )(patches, w, b2, x_flat, m2, sel)
    return out[:, 0]


# ----------------------------------------------------------------------------
# XLA-side glue: dilation/padding, NHWC im2col (pure data movement).
# ----------------------------------------------------------------------------
def _dilate_pad_nhwc(h, stride, pad_lo, pad_hi):
    B, H, W, C = h.shape
    if stride > 1:
        hd = jnp.zeros((B, (H - 1) * stride + 1, (W - 1) * stride + 1, C), h.dtype)
        hd = hd.at[:, ::stride, ::stride, :].set(h)
    else:
        hd = h
    return jnp.pad(hd, ((0, 0), (pad_lo, pad_hi), (pad_lo, pad_hi), (0, 0)))


def _im2col_nhwc(xp, Ho, Wo, k=3):
    """Stride-1 im2col, column order (kh, kw, c) -> matches packed GEMM weights."""
    B = xp.shape[0]
    C = xp.shape[-1]
    taps = [xp[:, kh:kh + Ho, kw:kw + Wo, :] for kh in range(k) for kw in range(k)]
    p = jnp.stack(taps, axis=3)                       # (B, Ho, Wo, k*k, C)
    return p.reshape(B * Ho * Wo, k * k * C)


# ----------------------------------------------------------------------------
# Parameter init (PyTorch layouts) + one-time packing into GEMM layouts.
# ----------------------------------------------------------------------------
def _pack_convt(w_t, b):
    # ConvTranspose2d weight (Cin, Cout, K, K) -> equivalent-conv GEMM weight
    # rows=(kh, kw, cin_pad), cols=cout_pad, kernel spatially flipped.
    Cin, Cout, K, _ = w_t.shape
    w_conv = jnp.transpose(w_t, (1, 0, 2, 3))[:, :, ::-1, ::-1]     # (Cout, Cin, K, K)
    w2 = jnp.transpose(w_conv, (2, 3, 1, 0))                        # (K, K, Cin, Cout)
    w2 = jnp.pad(w2, ((0, 0), (0, 0), (0, CP - Cin), (0, CP - Cout)))
    return w2.reshape(K * K * CP, CP), jnp.pad(b, (0, CP - Cout))


def _pack_conv(w, b):
    Cout, Cin, K, _ = w.shape
    w2 = jnp.transpose(w, (2, 3, 1, 0))                             # (K, K, Cin, Cout)
    w2 = jnp.pad(w2, ((0, 0), (0, 0), (0, CP - Cin), (0, CP - Cout)))
    return w2.reshape(K * K * CP, CP), jnp.pad(b, (0, CP - Cout))


def _pack_fc(w, b, C0, fw):
    # Linear weight (C0*fw*fw, latent); PyTorch view order of output is (C0, fw, fw).
    # Pack columns so the fc output is directly NHWC with channel padding.
    latent = w.shape[1]
    w3 = w.reshape(C0, fw, fw, latent).transpose(3, 1, 2, 0)        # (latent, h, w, c)
    w3 = jnp.pad(w3, ((0, 0), (0, 0), (0, 0), (0, CP - C0)))
    b3 = b.reshape(C0, fw, fw).transpose(1, 2, 0)
    b3 = jnp.pad(b3, ((0, 0), (0, 0), (0, CP - C0)))
    return w3.reshape(latent, fw * fw * CP), b3.reshape(fw * fw * CP)


def init_params(key, in_channels, latent_dim, img_size, n_channels, reg):
    fw = math.ceil(img_size / 2 ** len(n_channels))
    S = fw * fw
    raw = {}
    k = key

    def uniform(kk, shape, fan_in):
        bound = 1.0 / math.sqrt(fan_in)
        return jax.random.uniform(kk, shape, jnp.float32, -bound, bound)

    # decoder_input: Linear(latent_dim, n_channels[0] * S) + ReLU
    k, kw, kb = jax.random.split(k, 3)
    raw["fc_w"] = uniform(kw, (n_channels[0] * S, latent_dim), latent_dim)
    raw["fc_b"] = uniform(kb, (n_channels[0] * S,), latent_dim)

    # decoder ConvT blocks + final_layer ConvT (all k=3, s=2, p=1, output_padding=1)
    convt_channels = [(n_channels[i], n_channels[i + 1]) for i in range(len(n_channels) - 1)]
    convt_channels.append((n_channels[-1], n_channels[-1]))
    raw["convt"] = []
    for (ci, co) in convt_channels:
        k, kw, kb = jax.random.split(k, 3)
        fan_in = ci * 9
        raw["convt"].append((uniform(kw, (ci, co, 3, 3), fan_in),
                             uniform(kb, (co,), fan_in)))

    # final Conv2d(n_channels[-1] -> in_channels, k=3, p=1)
    k, kw, kb = jax.random.split(k, 3)
    fan_in = n_channels[-1] * 9
    raw["conv_w"] = uniform(kw, (in_channels, n_channels[-1], 3, 3), fan_in)
    raw["conv_b"] = uniform(kb, (in_channels,), fan_in)

    packed = {
        "fc": _pack_fc(raw["fc_w"], raw["fc_b"], n_channels[0], fw),
        "convt": [_pack_convt(w, b) for (w, b) in raw["convt"]],
        "conv": _pack_conv(raw["conv_w"], raw["conv_b"]),
        "chan_mask": (jnp.arange(CP) < in_channels).astype(jnp.float32),
        "reg": jnp.asarray(reg, jnp.float32),
    }
    return raw, packed, fw


# ----------------------------------------------------------------------------
# Decoder + Bernoulli NLL (Pallas path) and the module forward.
# ----------------------------------------------------------------------------
def decoder_nll(params, z_s, x_nchw, *, fw):
    B = z_s.shape[0]
    # fc + ReLU; output is already NHWC (channel-padded) by weight packing.
    fc_w, fc_b = params["fc"]
    h = gemm_bias_act(z_s, fc_w, fc_b, apply_relu=True)
    h = h.reshape(B, fw, fw, CP)
    # ConvTranspose2d(k3, s2, p1, op1) + ReLU layers: dilate/pad + im2col + fused GEMM.
    for (w2, b2) in params["convt"]:
        Ho, Wo = 2 * h.shape[1], 2 * h.shape[2]
        xp = _dilate_pad_nhwc(h, stride=2, pad_lo=1, pad_hi=2)
        patches = _im2col_nhwc(xp, Ho, Wo)
        y = gemm_bias_act(patches, w2, b2, apply_relu=True)
        h = y.reshape(B, Ho, Wo, CP)
    # Final Conv2d(k3, s1, p1) fused with Bernoulli NLL + per-image reduction.
    H, W = h.shape[1], h.shape[2]
    xp = jnp.pad(h, ((0, 0), (1, 1), (1, 1), (0, 0)))
    patches = _im2col_nhwc(xp, H, W)
    x_nhwc = jnp.transpose(x_nchw, (0, 2, 3, 1))
    Cimg = x_nhwc.shape[-1]
    x_flat = jnp.pad(x_nhwc, ((0, 0), (0, 0), (0, 0), (0, CP - Cimg))).reshape(B * H * W, CP)
    sel = (jnp.arange(B)[:, None] ==
           (jnp.arange(B * H * W)[None, :] // (H * W))).astype(jnp.float32)
    cw, cb = params["conv"]
    return conv_bernoulli_nll(patches, cw, cb, x_flat, params["chan_mask"], sel)


def _coop_forward_impl(params, x, idx, z, C, sample_key, *, fw):
    del idx  # TODO(synk): DualOT dual potentials (indexed by idx) are unavailable.
    # TODO(synk): LargeScaleOT.DualOT not provided; W_xz ~ softmax(-C/reg).
    logits_w = -C / params["reg"]
    s = jax.random.categorical(sample_key, logits_w, axis=-1)   # Categorical(W_xz).sample()
    z_sample = z[s]
    C_ = decoder_nll(params, z_sample, x, fw=fw)                # -log_prob(x).sum([1,2,3])
    return C_, z_sample


coop_forward = partial(jax.jit, static_argnames=("fw",))(_coop_forward_impl)


# ----------------------------------------------------------------------------
# Pure-JAX reference for the Pallas-implemented part (Decoder + Bernoulli NLL).
# ----------------------------------------------------------------------------
def decoder_nll_ref(raw, z_s, x_nchw, n_channels, fw):
    B = z_s.shape[0]
    h = jnp.maximum(z_s @ raw["fc_w"].T + raw["fc_b"], 0.0)
    h = h.reshape(B, n_channels[0], fw, fw)
    for (w_t, b) in raw["convt"]:
        w_conv = jnp.transpose(w_t, (1, 0, 2, 3))[:, :, ::-1, ::-1]
        h = jax.lax.conv_general_dilated(
            h, w_conv, window_strides=(1, 1), padding=((1, 2), (1, 2)),
            lhs_dilation=(2, 2), dimension_numbers=("NCHW", "OIHW", "NCHW"),
            precision=jax.lax.Precision.HIGHEST) + b.reshape(1, -1, 1, 1)
        h = jnp.maximum(h, 0.0)
    logits = jax.lax.conv_general_dilated(
        h, raw["conv_w"], window_strides=(1, 1), padding=((1, 1), (1, 1)),
        dimension_numbers=("NCHW", "OIHW", "NCHW"),
        precision=jax.lax.Precision.HIGHEST) + raw["conv_b"].reshape(1, -1, 1, 1)
    logp = x_nchw * logits - jax.nn.softplus(logits)
    return -logp.sum(axis=(1, 2, 3))


if __name__ == "__main__":
    # Small, module-consistent shapes.
    in_channels = 1
    latent_dim = 8
    img_size = 16
    n_channels = [32, 16, 8]
    reg = 0.5
    B = 2       # x batch
    Nz = 8      # number of candidate latents z passed to forward

    key = jax.random.PRNGKey(0)
    k_par, k_x, k_z, k_c, k_s = jax.random.split(key, 5)
    raw, packed, fw = init_params(k_par, in_channels, latent_dim, img_size, n_channels, reg)

    x = (jax.random.uniform(k_x, (B, in_channels, img_size, img_size)) > 0.5).astype(jnp.float32)
    z = jax.random.normal(k_z, (Nz, latent_dim), jnp.float32)
    C = jax.random.uniform(k_c, (B, Nz), jnp.float32)
    idx = jnp.arange(B, dtype=jnp.int32)

    C_, z_sample = jax.block_until_ready(coop_forward(packed, x, idx, z, C, k_s, fw=fw))

    assert C_.shape == (B,) and z_sample.shape == (B, latent_dim)
    # Correctness check of the Pallas path (tolerance covers MXU accumulation order).
    C_ref = decoder_nll_ref(raw, z_sample, x, n_channels, fw)
    assert jnp.allclose(C_, C_ref, rtol=1e-3, atol=5e-2), (C_, C_ref)

    print("KERNEL_OK")
</pallas_src>

<mosaic_0001>
module attributes {stable_mosaic.version = 11 : i64} {
  func.func @_gemm_bias_act_kernel(%arg0: i32, %arg1: memref<2x8xf32, #tpu.memory_space<vmem>>, %arg2: memref<8x512xf32, #tpu.memory_space<vmem>>, %arg3: memref<1x512xf32, #tpu.memory_space<vmem>>, %arg4: memref<2x512xf32, #tpu.memory_space<vmem>>) attributes {dimension_semantics = [#tpu.dimension_semantics<arbitrary>], iteration_bounds = array<i64: 1>, scalar_prefetch = 0 : i64, scratch_operands = 0 : i64, tpu.core_type = #tpu.core_type<tc>, window_params = [{pipeline_mode = #tpu.pipeline_mode<synchronous>, transform_indices = @transform_0, window_bounds = array<i64: 2, 8>}, {pipeline_mode = #tpu.pipeline_mode<synchronous>, transform_indices = @transform_1, window_bounds = array<i64: 8, 512>}, {pipeline_mode = #tpu.pipeline_mode<synchronous>, transform_indices = @transform_2, window_bounds = array<i64: 1, 512>}, {pipeline_mode = #tpu.pipeline_mode<synchronous>, transform_indices = @transform_3, window_bounds = array<i64: 2, 512>}]} {
    %c0 = arith.constant 0 : index
    %c0_0 = arith.constant 0 : index
    %0 = vector.load %arg1[%c0, %c0_0] : memref<2x8xf32, #tpu.memory_space<vmem>>, vector<2x8xf32>
    %c0_1 = arith.constant 0 : index
    %c0_2 = arith.constant 0 : index
    %1 = vector.load %arg2[%c0_1, %c0_2] : memref<8x512xf32, #tpu.memory_space<vmem>>, vector<8x512xf32>
    %cst = arith.constant dense<0.000000e+00> : vector<2x512xf32>
    %2 = tpu.matmul %0, %1, %cst {dimension_numbers = #tpu.dot_dimension_numbers<[1], [0], [0], [1], [0, 0, 1, 1], [], []>} : vector<2x8xf32>, vector<8x512xf32>, vector<2x512xf32> -> vector<2x512xf32>
    %c0_3 = arith.constant 0 : index
    %c0_4 = arith.constant 0 : index
    %3 = vector.load %arg3[%c0_3, %c0_4] : memref<1x512xf32, #tpu.memory_space<vmem>>, vector<1x512xf32>
    %4 = vector.broadcast %3 : vector<1x512xf32> to vector<2x512xf32>
    %5 = arith.addf %2, %4 : vector<2x512xf32>
    %cst_5 = arith.constant 0.000000e+00 : f32
    %6 = vector.broadcast %cst_5 : f32 to vector<2x512xf32>
    %7 = arith.maximumf %5, %6 : vector<2x512xf32>
    %c0_6 = arith.constant 0 : index
    %c0_7 = arith.constant 0 : index
    %8 = vector.load %arg4[%c0_6, %c0_7] : memref<2x512xf32, #tpu.memory_space<vmem>>, vector<2x512xf32>
    tpu.vector_store %arg4[%c0_6, %c0_7], %7 {strides = array<i32>} : memref<2x512xf32, #tpu.memory_space<vmem>>, vector<2x512xf32>,
    return
  }
  func.func @transform_0(%arg0: i32) -> (i32, i32) {
    %c0_i32 = arith.constant 0 : i32
    %c0_i32_0 = arith.constant 0 : i32
    %c0_i32_1 = arith.constant 0 : i32
    return %c0_i32, %c0_i32_0 : i32, i32
  }
  func.func @transform_1(%arg0: i32) -> (i32, i32) {
    %c0_i32 = arith.constant 0 : i32
    %c0_i32_0 = arith.constant 0 : i32
    %c0_i32_1 = arith.constant 0 : i32
    return %c0_i32, %c0_i32_0 : i32, i32
  }
  func.func @transform_2(%arg0: i32) -> (i32, i32) {
    %c0_i32 = arith.constant 0 : i32
    %c0_i32_0 = arith.constant 0 : i32
    %c0_i32_1 = arith.constant 0 : i32
    return %c0_i32, %c0_i32_0 : i32, i32
  }
  func.func @transform_3(%arg0: i32) -> (i32, i32) {
    %c0_i32 = arith.constant 0 : i32
    %c0_i32_0 = arith.constant 0 : i32
    %c0_i32_1 = arith.constant 0 : i32
    return %c0_i32, %c0_i32_0 : i32, i32
  }
}

module attributes {stable_mosaic.version = 11 : i64} {
  func.func @_gemm_bias_act_kernel(%arg0: i32, %arg1: memref<32x1152xf32, #tpu.memory_space<vmem>>, %arg2: memref<1152x128xf32, #tpu.memory_space<vmem>>, %arg3: memref<1x128xf32, #tpu.memory_space<vmem>>, %arg4: memref<32x128xf32, #tpu.memory_space<vmem>>) attributes {dimension_semantics = [#tpu.dimension_semantics<arbitrary>], iteration_bounds = array<i64: 1>, scalar_prefetch = 0 : i64, scratch_operands = 0 : i64, tpu.core_type = #tpu.core_type<tc>, window_params = [{pipeline_mode = #tpu.pipeline_mode<synchronous>, transform_indices = @transform_0, window_bounds = array<i64: 32, 1152>}, {pipeline_mode = #tpu.pipeline_mode<synchronous>, transform_indices = @transform_1, window_bounds = array<i64: 1152, 128>}, {pipeline_mode = #tpu.pipeline_mode<synchronous>, transform_indices = @transform_2, window_bounds = array<i64: 1, 128>}, {pipeline_mode = #tpu.pipeline_mode<synchronous>, transform_indices = @transform_3, window_bounds = array<i64: 32, 128>}]} {
    %c0 = arith.constant 0 : index
    %c0_0 = arith.constant 0 : index
    %0 = vector.load %arg1[%c0, %c0_0] : memref<32x1152xf32, #tpu.memory_space<vmem>>, vector<32x1152xf32>
    %c0_1 = arith.constant 0 : index
    %c0_2 = arith.constant 0 : index
    %1 = vector.load %arg2[%c0_1, %c0_2] : memref<1152x128xf32, #tpu.memory_space<vmem>>, vector<1152x128xf32>
    %cst = arith.constant dense<0.000000e+00> : vector<32x128xf32>
    %2 = tpu.matmul %0, %1, %cst {dimension_numbers = #tpu.dot_dimension_numbers<[1], [0], [0], [1], [0, 0, 1, 1], [], []>} : vector<32x1152xf32>, vector<1152x128xf32>, vector<32x128xf32> -> vector<32x128xf32>
    %c0_3 = arith.constant 0 : index
    %c0_4 = arith.constant 0 : index
    %3 = vector.load %arg3[%c0_3, %c0_4] : memref<1x128xf32, #tpu.memory_space<vmem>>, vector<1x128xf32>
    %4 = vector.broadcast %3 : vector<1x128xf32> to vector<32x128xf32>
    %5 = arith.addf %2, %4 : vector<32x128xf32>
    %cst_5 = arith.constant 0.000000e+00 : f32
    %6 = vector.broadcast %cst_5 : f32 to vector<32x128xf32>
    %7 = arith.maximumf %5, %6 : vector<32x128xf32>
    %c0_6 = arith.constant 0 : index
    %c0_7 = arith.constant 0 : index
    %8 = vector.load %arg4[%c0_6, %c0_7] : memref<32x128xf32, #tpu.memory_space<vmem>>, vector<32x128xf32>
    tpu.vector_store %arg4[%c0_6, %c0_7], %7 {strides = array<i32>} : memref<32x128xf32, #tpu.memory_space<vmem>>, vector<32x128xf32>,
    return
  }
  func.func @transform_0(%arg0: i32) -> (i32, i32) {
    %c0_i32 = arith.constant 0 : i32
    %c0_i32_0 = arith.constant 0 : i32
    %c0_i32_1 = arith.constant 0 : i32
    return %c0_i32, %c0_i32_0 : i32, i32
  }
  func.func @transform_1(%arg0: i32) -> (i32, i32) {
    %c0_i32 = arith.constant 0 : i32
    %c0_i32_0 = arith.constant 0 : i32
    %c0_i32_1 = arith.constant 0 : i32
    return %c0_i32, %c0_i32_0 : i32, i32
  }
  func.func @transform_2(%arg0: i32) -> (i32, i32) {
    %c0_i32 = arith.constant 0 : i32
    %c0_i32_0 = arith.constant 0 : i32
    %c0_i32_1 = arith.constant 0 : i32
    return %c0_i32, %c0_i32_0 : i32, i32
  }
  func.func @transform_3(%arg0: i32) -> (i32, i32) {
    %c0_i32 = arith.constant 0 : i32
    %c0_i32_0 = arith.constant 0 : i32
    %c0_i32_1 = arith.constant 0 : i32
    return %c0_i32, %c0_i32_0 : i32, i32
  }
}

module attributes {stable_mosaic.version = 11 : i64} {
  func.func @_gemm_bias_act_kernel(%arg0: i32, %arg1: memref<128x1152xf32, #tpu.memory_space<vmem>>, %arg2: memref<1152x128xf32, #tpu.memory_space<vmem>>, %arg3: memref<1x128xf32, #tpu.memory_space<vmem>>, %arg4: memref<128x128xf32, #tpu.memory_space<vmem>>) attributes {dimension_semantics = [#tpu.dimension_semantics<arbitrary>], iteration_bounds = array<i64: 1>, scalar_prefetch = 0 : i64, scratch_operands = 0 : i64, tpu.core_type = #tpu.core_type<tc>, window_params = [{pipeline_mode = #tpu.pipeline_mode<synchronous>, transform_indices = @transform_0, window_bounds = array<i64: 128, 1152>}, {pipeline_mode = #tpu.pipeline_mode<synchronous>, transform_indices = @transform_1, window_bounds = array<i64: 1152, 128>}, {pipeline_mode = #tpu.pipeline_mode<synchronous>, transform_indices = @transform_2, window_bounds = array<i64: 1, 128>}, {pipeline_mode = #tpu.pipeline_mode<synchronous>, transform_indices = @transform_3, window_bounds = array<i64: 128, 128>}]} {
    %c0 = arith.constant 0 : index
    %c0_0 = arith.constant 0 : index
    %0 = vector.load %arg1[%c0, %c0_0] : memref<128x1152xf32, #tpu.memory_space<vmem>>, vector<128x1152xf32>
    %c0_1 = arith.constant 0 : index
    %c0_2 = arith.constant 0 : index
    %1 = vector.load %arg2[%c0_1, %c0_2] : memref<1152x128xf32, #tpu.memory_space<vmem>>, vector<1152x128xf32>
    %cst = arith.constant dense<0.000000e+00> : vector<128x128xf32>
    %2 = tpu.matmul %0, %1, %cst {dimension_numbers = #tpu.dot_dimension_numbers<[1], [0], [0], [1], [0, 0, 1, 1], [], []>} : vector<128x1152xf32>, vector<1152x128xf32>, vector<128x128xf32> -> vector<128x128xf32>
    %c0_3 = arith.constant 0 : index
    %c0_4 = arith.constant 0 : index
    %3 = vector.load %arg3[%c0_3, %c0_4] : memref<1x128xf32, #tpu.memory_space<vmem>>, vector<1x128xf32>
    %4 = vector.broadcast %3 : vector<1x128xf32> to vector<128x128xf32>
    %5 = arith.addf %2, %4 : vector<128x128xf32>
    %cst_5 = arith.constant 0.000000e+00 : f32
    %6 = vector.broadcast %cst_5 : f32 to vector<128x128xf32>
    %7 = arith.maximumf %5, %6 : vector<128x128xf32>
    %c0_6 = arith.constant 0 : index
    %c0_7 = arith.constant 0 : index
    %8 = vector.load %arg4[%c0_6, %c0_7] : memref<128x128xf32, #tpu.memory_space<vmem>>, vector<128x128xf32>
    tpu.vector_store %arg4[%c0_6, %c0_7], %7 {strides = array<i32>} : memref<128x128xf32, #tpu.memory_space<vmem>>, vector<128x128xf32>,
    return
  }
  func.func @transform_0(%arg0: i32) -> (i32, i32) {
    %c0_i32 = arith.constant 0 : i32
    %c0_i32_0 = arith.constant 0 : i32
    %c0_i32_1 = arith.constant 0 : i32
    return %c0_i32, %c0_i32_0 : i32, i32
  }
  func.func @transform_1(%arg0: i32) -> (i32, i32) {
    %c0_i32 = arith.constant 0 : i32
    %c0_i32_0 = arith.constant 0 : i32
    %c0_i32_1 = arith.constant 0 : i32
    return %c0_i32, %c0_i32_0 : i32, i32
  }
  func.func @transform_2(%arg0: i32) -> (i32, i32) {
    %c0_i32 = arith.constant 0 : i32
    %c0_i32_0 = arith.constant 0 : i32
    %c0_i32_1 = arith.constant 0 : i32
    return %c0_i32, %c0_i32_0 : i32, i32
  }
  func.func @transform_3(%arg0: i32) -> (i32, i32) {
    %c0_i32 = arith.constant 0 : i32
    %c0_i32_0 = arith.constant 0 : i32
    %c0_i32_1 = arith.constant 0 : i32
    return %c0_i32, %c0_i32_0 : i32, i32
  }
}

module attributes {stable_mosaic.version = 11 : i64} {
  func.func @_gemm_bias_act_kernel(%arg0: i32, %arg1: memref<256x1152xf32, #tpu.memory_space<vmem>>, %arg2: memref<1152x128xf32, #tpu.memory_space<vmem>>, %arg3: memref<1x128xf32, #tpu.memory_space<vmem>>, %arg4: memref<256x128xf32, #tpu.memory_space<vmem>>) attributes {dimension_semantics = [#tpu.dimension_semantics<parallel>], iteration_bounds = array<i64: 2>, scalar_prefetch = 0 : i64, scratch_operands = 0 : i64, tpu.core_type = #tpu.core_type<tc>, window_params = [{transform_indices = @transform_0, window_bounds = array<i64: 256, 1152>}, {pipeline_mode = #tpu.pipeline_mode<synchronous>, transform_indices = @transform_1, window_bounds = array<i64: 1152, 128>}, {pipeline_mode = #tpu.pipeline_mode<synchronous>, transform_indices = @transform_2, window_bounds = array<i64: 1, 128>}, {transform_indices = @transform_3, window_bounds = array<i64: 256, 128>}]} {
    %c0 = arith.constant 0 : index
    %c0_0 = arith.constant 0 : index
    %0 = vector.load %arg1[%c0, %c0_0] : memref<256x1152xf32, #tpu.memory_space<vmem>>, vector<256x1152xf32>
    %c0_1 = arith.constant 0 : index
    %c0_2 = arith.constant 0 : index
    %1 = vector.load %arg2[%c0_1, %c0_2] : memref<1152x128xf32, #tpu.memory_space<vmem>>, vector<1152x128xf32>
    %cst = arith.constant dense<0.000000e+00> : vector<256x128xf32>
    %2 = tpu.matmul %0, %1, %cst {dimension_numbers = #tpu.dot_dimension_numbers<[1], [0], [0], [1], [0, 0, 1, 1], [], []>} : vector<256x1152xf32>, vector<1152x128xf32>, vector<256x128xf32> -> vector<256x128xf32>
    %c0_3 = arith.constant 0 : index
    %c0_4 = arith.constant 0 : index
    %3 = vector.load %arg3[%c0_3, %c0_4] : memref<1x128xf32, #tpu.memory_space<vmem>>, vector<1x128xf32>
    %4 = vector.broadcast %3 : vector<1x128xf32> to vector<256x128xf32>
    %5 = arith.addf %2, %4 : vector<256x128xf32>
    %cst_5 = arith.constant 0.000000e+00 : f32
    %6 = vector.broadcast %cst_5 : f32 to vector<256x128xf32>
    %7 = arith.maximumf %5, %6 : vector<256x128xf32>
    %c0_6 = arith.constant 0 : index
    %c0_7 = arith.constant 0 : index
    %8 = vector.load %arg4[%c0_6, %c0_7] : memref<256x128xf32, #tpu.memory_space<vmem>>, vector<256x128xf32>
    tpu.vector_store %arg4[%c0_6, %c0_7], %7 {strides = array<i32>} : memref<256x128xf32, #tpu.memory_space<vmem>>, vector<256x128xf32>,
    return
  }
  func.func @transform_0(%arg0: i32) -> (i32, i32) {
    %c0_i32 = arith.constant 0 : i32
    %c0_i32_0 = arith.constant 0 : i32
    return %arg0, %c0_i32 : i32, i32
  }
  func.func @transform_1(%arg0: i32) -> (i32, i32) {
    %c0_i32 = arith.constant 0 : i32
    %c0_i32_0 = arith.constant 0 : i32
    %c0_i32_1 = arith.constant 0 : i32
    return %c0_i32, %c0_i32_0 : i32, i32
  }
  func.func @transform_2(%arg0: i32) -> (i32, i32) {
    %c0_i32 = arith.constant 0 : i32
    %c0_i32_0 = arith.constant 0 : i32
    %c0_i32_1 = arith.constant 0 : i32
    return %c0_i32, %c0_i32_0 : i32, i32
  }
  func.func @transform_3(%arg0: i32) -> (i32, i32) {
    %c0_i32 = arith.constant 0 : i32
    %c0_i32_0 = arith.constant 0 : i32
    return %arg0, %c0_i32 : i32, i32
  }
}

module attributes {stable_mosaic.version = 11 : i64} {
  func.func @_conv_nll_kernel(%arg0: i32, %arg1: memref<256x1152xf32, #tpu.memory_space<vmem>>, %arg2: memref<1152x128xf32, #tpu.memory_space<vmem>>, %arg3: memref<1x128xf32, #tpu.memory_space<vmem>>, %arg4: memref<256x128xf32, #tpu.memory_space<vmem>>, %arg5: memref<1x128xf32, #tpu.memory_space<vmem>>, %arg6: memref<2x256xf32, #tpu.memory_space<vmem>>, %arg7: memref<2x1xf32, #tpu.memory_space<vmem>>) attributes {dimension_semantics = [#tpu.dimension_semantics<arbitrary>], iteration_bounds = array<i64: 2>, scalar_prefetch = 0 : i64, scratch_operands = 0 : i64, tpu.core_type = #tpu.core_type<tc>, window_params = [{transform_indices = @transform_0, window_bounds = array<i64: 256, 1152>}, {pipeline_mode = #tpu.pipeline_mode<synchronous>, transform_indices = @transform_1, window_bounds = array<i64: 1152, 128>}, {pipeline_mode = #tpu.pipeline_mode<synchronous>, transform_indices = @transform_2, window_bounds = array<i64: 1, 128>}, {transform_indices = @transform_3, window_bounds = array<i64: 256, 128>}, {pipeline_mode = #tpu.pipeline_mode<synchronous>, transform_indices = @transform_4, window_bounds = array<i64: 1, 128>}, {transform_indices = @transform_5, window_bounds = array<i64: 2, 256>}, {pipeline_mode = #tpu.pipeline_mode<synchronous>, transform_indices = @transform_6, window_bounds = array<i64: 2, 1>}]} {
    %c0_i32 = arith.constant 0 : i32
    %0 = arith.cmpi eq, %arg0, %c0_i32 : i32
    %1 = arith.extui %0 : i1 to i32
    %c0_i32_0 = arith.constant 0 : i32
    %2 = arith.cmpi ne, %1, %c0_i32_0 : i32
    scf.if %2 {
      %cst_21 = arith.constant 0.000000e+00 : f32
      %32 = vector.broadcast %cst_21 : f32 to vector<2x1xf32>
      %c0_22 = arith.constant 0 : index
      %c0_23 = arith.constant 0 : index
      %33 = vector.load %arg7[%c0_22, %c0_23] : memref<2x1xf32, #tpu.memory_space<vmem>>, vector<2x1xf32>
      tpu.vector_store %arg7[%c0_22, %c0_23], %32 {strides = array<i32>} : memref<2x1xf32, #tpu.memory_space<vmem>>, vector<2x1xf32>,
    } else {
    }
    %c0 = arith.constant 0 : index
    %c0_1 = arith.constant 0 : index
    %3 = vector.load %arg1[%c0, %c0_1] : memref<256x1152xf32, #tpu.memory_space<vmem>>, vector<256x1152xf32>
    %c0_2 = arith.constant 0 : index
    %c0_3 = arith.constant 0 : index
    %4 = vector.load %arg2[%c0_2, %c0_3] : memref<1152x128xf32, #tpu.memory_space<vmem>>, vector<1152x128xf32>
    %cst = arith.constant dense<0.000000e+00> : vector<256x128xf32>
    %5 = tpu.matmul %3, %4, %cst {dimension_numbers = #tpu.dot_dimension_numbers<[1], [0], [0], [1], [0, 0, 1, 1], [], []>} : vector<256x1152xf32>, vector<1152x128xf32>, vector<256x128xf32> -> vector<256x128xf32>
    %c0_4 = arith.constant 0 : index
    %c0_5 = arith.constant 0 : index
    %6 = vector.load %arg3[%c0_4, %c0_5] : memref<1x128xf32, #tpu.memory_space<vmem>>, vector<1x128xf32>
    %7 = vector.broadcast %6 : vector<1x128xf32> to vector<256x128xf32>
    %8 = arith.addf %5, %7 : vector<256x128xf32>
    %c0_6 = arith.constant 0 : index
    %c0_7 = arith.constant 0 : index
    %9 = vector.load %arg4[%c0_6, %c0_7] : memref<256x128xf32, #tpu.memory_space<vmem>>, vector<256x128xf32>
    %cst_8 = arith.constant 0.000000e+00 : f32
    %10 = vector.broadcast %cst_8 : f32 to vector<256x128xf32>
    %11 = arith.maximumf %8, %10 : vector<256x128xf32>
    %12 = math.absf %8 : vector<256x128xf32>
    %cst_9 = arith.constant 0.000000e+00 : f32
    %13 = vector.broadcast %cst_9 : f32 to vector<256x128xf32>
    %14 = arith.subf %13, %12 : vector<256x128xf32>
    %15 = math.exp %14 : vector<256x128xf32>
    %cst_10 = arith.constant 1.000000e+00 : f32
    %16 = vector.broadcast %cst_10 : f32 to vector<256x128xf32>
    %17 = arith.addf %16, %15 : vector<256x128xf32>
    %18 = math.log %17 : vector<256x128xf32>
    %19 = arith.addf %11, %18 : vector<256x128xf32>
    %20 = arith.mulf %9, %8 : vector<256x128xf32>
    %21 = arith.subf %19, %20 : vector<256x128xf32>
    %c0_11 = arith.constant 0 : index
    %c0_12 = arith.constant 0 : index
    %22 = vector.load %arg5[%c0_11, %c0_12] : memref<1x128xf32, #tpu.memory_space<vmem>>, vector<1x128xf32>
    %23 = vector.broadcast %22 : vector<1x128xf32> to vector<256x128xf32>
    %24 = arith.mulf %21, %23 : vector<256x128xf32>
    %cst_13 = arith.constant dense<0.000000e+00> : vector<256xf32>
    %25 = vector.multi_reduction <add>, %24, %cst_13 [1] : vector<256x128xf32> to vector<256xf32>
    %26 = vector.shape_cast %25 : vector<256xf32> to vector<256x1xf32>
    %c0_14 = arith.constant 0 : index
    %c0_15 = arith.constant 0 : index
    %27 = vector.load %arg7[%c0_14, %c0_15] : memref<2x1xf32, #tpu.memory_space<vmem>>, vector<2x1xf32>
    %c0_16 = arith.constant 0 : index
    %c0_17 = arith.constant 0 : index
    %28 = vector.load %arg6[%c0_16, %c0_17] : memref<2x256xf32, #tpu.memory_space<vmem>>, vector<2x256xf32>
    %cst_18 = arith.constant dense<0.000000e+00> : vector<2x1xf32>
    %29 = tpu.matmul %28, %26, %cst_18 {dimension_numbers = #tpu.dot_dimension_numbers<[1], [0], [0], [1], [0, 0, 1, 1], [], []>} : vector<2x256xf32>, vector<256x1xf32>, vector<2x1xf32> -> vector<2x1xf32>
    %30 = arith.addf %27, %29 : vector<2x1xf32>
    %c0_19 = arith.constant 0 : index
    %c0_20 = arith.constant 0 : index
    %31 = vector.load %arg7[%c0_19, %c0_20] : memref<2x1xf32, #tpu.memory_space<vmem>>, vector<2x1xf32>
    tpu.vector_store %arg7[%c0_19, %c0_20], %30 {strides = array<i32>} : memref<2x1xf32, #tpu.memory_space<vmem>>, vector<2x1xf32>,
    return
  }
  func.func @transform_0(%arg0: i32) -> (i32, i32) {
    %c0_i32 = arith.constant 0 : i32
    %c0_i32_0 = arith.constant 0 : i32
    return %arg0, %c0_i32 : i32, i32
  }
  func.func @transform_1(%arg0: i32) -> (i32, i32) {
    %c0_i32 = arith.constant 0 : i32
    %c0_i32_0 = arith.constant 0 : i32
    %c0_i32_1 = arith.constant 0 : i32
    return %c0_i32, %c0_i32_0 : i32, i32
  }
  func.func @transform_2(%arg0: i32) -> (i32, i32) {
    %c0_i32 = arith.constant 0 : i32
    %c0_i32_0 = arith.constant 0 : i32
    %c0_i32_1 = arith.constant 0 : i32
    return %c0_i32, %c0_i32_0 : i32, i32
  }
  func.func @transform_3(%arg0: i32) -> (i32, i32) {
    %c0_i32 = arith.constant 0 : i32
    %c0_i32_0 = arith.constant 0 : i32
    return %arg0, %c0_i32 : i32, i32
  }
  func.func @transform_4(%arg0: i32) -> (i32, i32) {
    %c0_i32 = arith.constant 0 : i32
    %c0_i32_0 = arith.constant 0 : i32
    %c0_i32_1 = arith.constant 0 : i32
    return %c0_i32, %c0_i32_0 : i32, i32
  }
  func.func @transform_5(%arg0: i32) -> (i32, i32) {
    %c0_i32 = arith.constant 0 : i32
    %c0_i32_0 = arith.constant 0 : i32
    return %c0_i32, %arg0 : i32, i32
  }
  func.func @transform_6(%arg0: i32) -> (i32, i32) {
    %c0_i32 = arith.constant 0 : i32
    %c0_i32_0 = arith.constant 0 : i32
    %c0_i32_1 = arith.constant 0 : i32
    return %c0_i32, %c0_i32_0 : i32, i32
  }
}

</mosaic_0001>

<llo_original>
// kernel: _coop_forward_impl.5
$region0: #{_coop_forward_impl.5}
  #allocation0 [shape = 'u32[]', space=smem, size = 0x4, offset = 0x4, fixed_abs, tag = 'smem constant byte address 0x4 - core index']
  #allocation1 [shape = 'u32[144,128]{1,0:T(1,128)}', space=vmem, size = 0x12000, scoped, tag = 'internal scratch']
  %s0 = inlined_call_operand.vmem [shape: f32[2,8], index: 0, kind: input, shape index: {}]
  %s1 = inlined_call_operand.hbm [shape: f32[8,512], index: 1, kind: input, shape index: {}]
  %s2 = inlined_call_operand.hbm [shape: f32[1,512], index: 2, kind: input, shape index: {}]
  %s3 = inlined_call_operand.vmem [shape: f32[2,512], index: 3, kind: output, shape index: {}]
  %s4 = sld [smem:[#allocation0]]
  $region30: #{_coop_forward_impl.5} parent=0
    _
  %s6 = ssub.s32 1, %s4
  %s7 = scalar_select 0, %s6, %s4
  $region1: #{_coop_forward_impl.5} parent=0
    #allocation2 [shape = 'u8[16384]{0}', space=vmem, size = 0x4000, scoped, tag = 'input window, operand 1, single buffered']
    #allocation3 [shape = 's32[1]{0}', space=sflag, size = 0x4, scoped, tag = 'scoped memory for _coop_forward_impl.5']
    #allocation4 [shape = 'u8[2048]{0}', space=vmem, size = 0x800, scoped, tag = 'input window, operand 2, single buffered']
    #allocation5 [shape = 's32[1]{0}', space=sflag, size = 0x4, scoped, tag = 'scoped memory for _coop_forward_impl.5']
    %8 = vsyncpa [#allocation3], 0
    %9 = vsyncpa [#allocation5], 0
    // Predicated region
    $region2: #{_coop_forward_impl.5} parent=1 // pred_check
      _
    $region3: #{_coop_forward_impl.5} parent=1 // pred_check_branch
      %11 = sbr.rel (0) target = $region5
    $region4: #{_coop_forward_impl.5} parent=1 // pred_region
      _
    $region5: #{_coop_forward_impl.5} parent=1 // pred_fallthru
      _
    // Predicated region
    $region6: #{_coop_forward_impl.5} parent=1 // pred_check
      _
    $region7: #{_coop_forward_impl.5} parent=1 // pred_check_branch
      %13 = sbr.rel (0) target = $region9
    $region8: #{_coop_forward_impl.5} parent=1 // pred_region
      %s15 = ssub.s32 512, 512
      %16 = vsyncadd [#allocation3], %s15
      %s18 = sshll.u32 [#allocation2], 4
      %s19 = int_to_ptr.vmem [resolvable:$true] %s18
      %21 = dma.hbm_to_vmem [thread:$0]  %s1, 512, %s19, [#allocation3]
    $region9: #{_coop_forward_impl.5} parent=1 // pred_fallthru
      _
    // Predicated region
    $region10: #{_coop_forward_impl.5} parent=1 // pred_check
      _
    $region11: #{_coop_forward_impl.5} parent=1 // pred_check_branch
      %23 = sbr.rel (0) target = $region13
    $region12: #{_coop_forward_impl.5} parent=1 // pred_region
      %s25 = ssub.s32 64, 64
      %26 = vsyncadd [#allocation5], %s25
      %s28 = sshll.u32 [#allocation4], 4
      %s29 = int_to_ptr.vmem [resolvable:$true] %s28
      %31 = dma.hbm_to_vmem [thread:$0]  %s2, 64, %s29, [#allocation5]
    $region13: #{_coop_forward_impl.5} parent=1 // pred_fallthru
      _
    // Predicated region
    $region14: #{_coop_forward_impl.5} parent=1 // pred_check
      _
    $region15: #{_coop_forward_impl.5} parent=1 // pred_check_branch
      %33 = sbr.rel (0) target = $region17
    $region16: #{_coop_forward_impl.5} parent=1 // pred_region
      %34 = dma.done [#allocation3], 512
    $region17: #{_coop_forward_impl.5} parent=1 // pred_fallthru
      _
    // Predicated region
    $region18: #{_coop_forward_impl.5} parent=1 // pred_check
      _
    $region19: #{_coop_forward_impl.5} parent=1 // pred_check_branch
      %36 = sbr.rel (0) target = $region21
    $region20: #{_coop_forward_impl.5} parent=1 // pred_region
      %37 = dma.done [#allocation5], 64
    $region21: #{_coop_forward_impl.5} parent=1 // pred_fallthru
      _
    %v38 = vld [vmem:[%s0] sm:$0x3]
    %v39 = vld [vmem:[#allocation2] sm:$0xff]
    %v40 = vld [vmem:[#allocation2 + $0x8] sm:$0xff]
    %v41 = vld [vmem:[#allocation2 + $0x10] sm:$0xff]
    %v42 = vld [vmem:[#allocation2 + $0x18] sm:$0xff]
    %v43 = vld [vmem:[#allocation4] sm:$0xf]
    %v45 = vlaneseq
    %v46 = vshrl.u32 %v45, 7
    %v47 = vsub.s32 0, %v46
    %v48 = vrot.slane %v43, %v47
    %v49 = vlaneseq
    %v50 = vshrl.u32 %v49, 7
    %v51 = vsub.s32 1, %v50
    %v52 = vrot.slane %v43, %v51
    %v53 = vlaneseq
    %v54 = vshrl.u32 %v53, 7
    %v55 = vsub.s32 2, %v54
    %v56 = vrot.slane %v43, %v55
    %v57 = vlaneseq
    %v58 = vshrl.u32 %v57, 7
    %v59 = vsub.s32 3, %v58
    %v60 = vrot.slane %v43, %v59
    %vm65 = vcmask 64512
    %v67 = vsel %vm65, %v38, 0
    %69 = vmatprep.subr.mxu0 %v40
    %70 = vmatpush1.msra.mxu0 %v39
    %71 = vmatprep.subr.mxu0 0.0
    %72 = vmatpush1.msra.mxu0 0.0
    %73 = vmatprep.subr.mxu0 0.0
    %74 = vmatpush1.msra.mxu0 0.0
    %75 = vmatprep.subr.mxu0 0.0
    %76 = vmatpush1.msra.mxu0 0.0
    %77 = vmatprep.subr.mxu0 0.0
    %78 = vmatpush1.msra.mxu0 0.0
    %79 = vmatprep.subr.mxu0 0.0
    %80 = vmatpush1.msra.mxu0 0.0
    %81 = vmatprep.subr.mxu0 0.0
    %82 = vmatpush1.msra.mxu0 0.0
    %83 = vmatprep.subr.mxu0 0.0
    %84 = vmatpush1.msra.mxu0 0.0
    %85 = vmatprep.subr.mxu0 0.0
    %86 = vmatpush1.msra.mxu0 0.0
    %87 = vmatprep.subr.mxu0 0.0
    %88 = vmatpush1.msra.mxu0 0.0
    %89 = vmatprep.subr.mxu0 0.0
    %90 = vmatpush1.msra.mxu0 0.0
    %91 = vmatprep.subr.mxu0 0.0
    %92 = vmatpush1.msra.mxu0 0.0
    %93 = vmatprep.subr.mxu0 0.0
    %94 = vmatpush1.msra.mxu0 0.0
    %95 = vmatprep.subr.mxu0 0.0
    %96 = vmatpush1.msra.mxu0 0.0
    %97 = vmatprep.subr.mxu0 0.0
    %98 = vmatpush1.msra.mxu0 0.0
    %99 = vmatprep.subr.mxu0 0.0
    %100 = vmatpush1.msra.mxu0 0.0
    %101 = vmatprep.subr.mxu0 0.0
    %102 = vmatpush1.msra.mxu0 0.0
    %103 = vmatprep.subr.mxu0 0.0
    %104 = vmatpush1.msra.mxu0 0.0
    %105 = vmatprep.subr.mxu0 0.0
    %106 = vmatpush1.msra.mxu0 0.0
    %107 = vmatprep.subr.mxu0 0.0
    %108 = vmatpush1.msra.mxu0 0.0
    %109 = vmatprep.subr.mxu0 0.0
    %110 = vmatpush1.msra.mxu0 0.0
    %111 = vmatprep.subr.mxu0 0.0
    %112 = vmatpush1.msra.mxu0 0.0
    %113 = vmatprep.subr.mxu0 0.0
    %114 = vmatpush1.msra.mxu0 0.0
    %115 = vmatprep.subr.mxu0 0.0
    %116 = vmatpush1.msra.mxu0 0.0
    %117 = vmatprep.subr.mxu0 0.0
    %118 = vmatpush1.msra.mxu0 0.0
    %119 = vmatprep.subr.mxu0 0.0
    %120 = vmatpush1.msra.mxu0 0.0
    %121 = vmatprep.subr.mxu0 0.0
    %122 = vmatpush1.msra.mxu0 0.0
    %123 = vmatprep.subr.mxu0 0.0
    %124 = vmatpush1.msra.mxu0 0.0
    %125 = vmatprep.subr.mxu0 0.0
    %126 = vmatpush1.msra.mxu0 0.0
    %127 = vmatprep.subr.mxu0 0.0
    %128 = vmatpush1.msra.mxu0 0.0
    %129 = vmatprep.subr.mxu0 0.0
    %130 = vmatpush1.msra.mxu0 0.0
    %131 = vmatprep.subr.mxu0 0.0
    %132 = vmatpush1.msra.mxu0 0.0
    %133 = vmatprep.mubr.f32.mxu0 0.0
    %134 = vmatmul.mubr.f32.gmra.mrb[0].mxu0 %v67
    %v135 = vpop.f32.mrb[0].mxu0
    %v136 = vadd.f32 %v48, %v135
    %v137 = vpop.f32.mrb[0].mxu0
    %v138 = vadd.f32 %v52, %v137
    %139 = vdwg.mxu0
    %140 = vmatprep.subr.mxu0 %v42
    %141 = vmatpush1.msra.mxu0 %v41
    %142 = vmatprep.subr.mxu0 0.0
    %143 = vmatpush1.msra.mxu0 0.0
    %144 = vmatprep.subr.mxu0 0.0
    %145 = vmatpush1.msra.mxu0 0.0
    %146 = vmatprep.subr.mxu0 0.0
    %147 = vmatpush1.msra.mxu0 0.0
    %148 = vmatprep.subr.mxu0 0.0
    %149 = vmatpush1.msra.mxu0 0.0
    %150 = vmatprep.subr.mxu0 0.0
    %151 = vmatpush1.msra.mxu0 0.0
    %152 = vmatprep.subr.mxu0 0.0
    %153 = vmatpush1.msra.mxu0 0.0
    %154 = vmatprep.subr.mxu0 0.0
    %155 = vmatpush1.msra.mxu0 0.0
    %156 = vmatprep.subr.mxu0 0.0
    %157 = vmatpush1.msra.mxu0 0.0
    %158 = vmatprep.subr.mxu0 0.0
    %159 = vmatpush1.msra.mxu0 0.0
    %160 = vmatprep.subr.mxu0 0.0
    %161 = vmatpush1.msra.mxu0 0.0
    %162 = vmatprep.subr.mxu0 0.0
    %163 = vmatpush1.msra.mxu0 0.0
    %164 = vmatprep.subr.mxu0 0.0
    %165 = vmatpush1.msra.mxu0 0.0
    %166 = vmatprep.subr.mxu0 0.0
    %167 = vmatpush1.msra.mxu0 0.0
    %168 = vmatprep.subr.mxu0 0.0
    %169 = vmatpush1.msra.mxu0 0.0
    %170 = vmatprep.subr.mxu0 0.0
    %171 = vmatpush1.msra.mxu0 0.0
    %172 = vmatprep.subr.mxu0 0.0
    %173 = vmatpush1.msra.mxu0 0.0
    %174 = vmatprep.subr.mxu0 0.0
    %175 = vmatpush1.msra.mxu0 0.0
    %176 = vmatprep.subr.mxu0 0.0
    %177 = vmatpush1.msra.mxu0 0.0
    %178 = vmatprep.subr.mxu0 0.0
    %179 = vmatpush1.msra.mxu0 0.0
    %180 = vmatprep.subr.mxu0 0.0
    %181 = vmatpush1.msra.mxu0 0.0
    %182 = vmatprep.subr.mxu0 0.0
    %183 = vmatpush1.msra.mxu0 0.0
    %184 = vmatprep.subr.mxu0 0.0
    %185 = vmatpush1.msra.mxu0 0.0
    %186 = vmatprep.subr.mxu0 0.0
    %187 = vmatpush1.msra.mxu0 0.0
    %188 = vmatprep.subr.mxu0 0.0
    %189 = vmatpush1.msra.mxu0 0.0
    %190 = vmatprep.subr.mxu0 0.0
    %191 = vmatpush1.msra.mxu0 0.0
    %192 = vmatprep.subr.mxu0 0.0
    %193 = vmatpush1.msra.mxu0 0.0
    %194 = vmatprep.subr.mxu0 0.0
    %195 = vmatpush1.msra.mxu0 0.0
    %196 = vmatprep.subr.mxu0 0.0
    %197 = vmatpush1.msra.mxu0 0.0
    %198 = vmatprep.subr.mxu0 0.0
    %199 = vmatpush1.msra.mxu0 0.0
    %200 = vmatprep.subr.mxu0 0.0
    %201 = vmatpush1.msra.mxu0 0.0
    %202 = vmatprep.subr.mxu0 0.0
    %203 = vmatpush1.msra.mxu0 0.0
    %204 = vmatprep.mubr.f32.mxu0 0.0
    %205 = vmatmul.mubr.f32.gmra.mrb[0].mxu0 %v67
    %v206 = vpop.f32.mrb[0].mxu0
    %v207 = vadd.f32 %v56, %v206
    %v208 = vpop.f32.mrb[0].mxu0
    %v209 = vadd.f32 %v60, %v208
    %210 = vdwg.mxu0
    %v211 = vmax.f32 %v136, 0.0
    %v212 = vmax.f32 %v138, 0.0
    %v213 = vmax.f32 %v207, 0.0
    %v214 = vmax.f32 %v209, 0.0
    %v219 = vcombine.low %v211, %v212
    %v220 = vcombine.low %v213, %v214
    %v222 = vunpack.c.l.s4 1983009808
    %v223 = vunpack.c.0.s8 %v222
    %v224 = vlaneseq
    %v225 = vshrl.u32 %v224, 7
    %v226 = vsub.s32 %v223, %v225
    %v227 = vrot.slane %v219, %v226
    %v229 = vunpack.c.l.s4 1983009808
    %v230 = vunpack.c.0.s8 %v229
    %v231 = vlaneseq
    %v232 = vshrl.u32 %v231, 7
    %v233 = vsub.s32 %v230, %v232
    %v234 = vrot.slane %v220, %v233
    %v235 = vcombine.low %v227, %v234
    %237 = vst [vmem:[%s3] sm:$0xff] %v235
    // Predicated region
    $region22: #{_coop_forward_impl.5} parent=1 // pred_check
      _
    $region23: #{_coop_forward_impl.5} parent=1 // pred_check_branch
      %239 = sbr.rel (0) target = $region25
    $region24: #{_coop_forward_impl.5} parent=1 // pred_region
      _
    $region25: #{_coop_forward_impl.5} parent=1 // pred_fallthru
      _
    // Predicated region
    $region26: #{_coop_forward_impl.5} parent=1 // pred_check
      _
    $region27: #{_coop_forward_impl.5} parent=1 // pred_check_branch
      %241 = sbr.rel (0) target = $region29
    $region28: #{_coop_forward_impl.5} parent=1 // pred_region
      _
    $region29: #{_coop_forward_impl.5} parent=1 // pred_fallthru
      _
    %242 = vsyncpa [#allocation3], 1
    %243 = vsyncpa [#allocation5], 1

// kernel: _coop_forward_impl.6
$region0: #{_coop_forward_impl.6}
  #allocation0 [shape = 'u32[]', space=smem, size = 0x4, offset = 0x4, fixed_abs, tag = 'smem constant byte address 0x4 - core index']
  #allocation1 [shape = 'u32[144,128]{1,0:T(1,128)}', space=vmem, size = 0x12000, scoped, tag = 'internal scratch']
  %s0 = inlined_call_operand.vmem [shape: f32[32,1152], index: 0, kind: input, shape index: {}]
  %s1 = inlined_call_operand.hbm [shape: f32[1152,128], index: 1, kind: input, shape index: {}]
  %s2 = inlined_call_operand.hbm [shape: f32[1,128], index: 2, kind: input, shape index: {}]
  %s3 = inlined_call_operand.vmem [shape: f32[32,128], index: 3, kind: output, shape index: {}]
  %s4 = sld [smem:[#allocation0]]
  $region30: #{_coop_forward_impl.6} parent=0
    _
  %s6 = ssub.s32 1, %s4
  %s7 = scalar_select 0, %s6, %s4
  $region1: #{_coop_forward_impl.6} parent=0
    #allocation2 [shape = 'u8[589824]{0}', space=vmem, size = 0x90000, scoped, tag = 'input window, operand 1, single buffered']
    #allocation3 [shape = 's32[1]{0}', space=sflag, size = 0x4, scoped, tag = 'scoped memory for _coop_forward_impl.6']
    #allocation4 [shape = 'u8[512]{0}', space=vmem, size = 0x400, scoped, tag = 'input window, operand 2, single buffered']
    #allocation5 [shape = 's32[1]{0}', space=sflag, size = 0x4, scoped, tag = 'scoped memory for _coop_forward_impl.6']
    %8 = vsyncpa [#allocation3], 0
    %9 = vsyncpa [#allocation5], 0
    // Predicated region
    $region2: #{_coop_forward_impl.6} parent=1 // pred_check
      _
    $region3: #{_coop_forward_impl.6} parent=1 // pred_check_branch
      %11 = sbr.rel (0) target = $region5
    $region4: #{_coop_forward_impl.6} parent=1 // pred_region
      _
    $region5: #{_coop_forward_impl.6} parent=1 // pred_fallthru
      _
    // Predicated region
    $region6: #{_coop_forward_impl.6} parent=1 // pred_check
      _
    $region7: #{_coop_forward_impl.6} parent=1 // pred_check_branch
      %13 = sbr.rel (0) target = $region9
    $region8: #{_coop_forward_impl.6} parent=1 // pred_region
      %s15 = ssub.s32 18432, 18432
      %16 = vsyncadd [#allocation3], %s15
      %s17 = sshll.u32 [#allocation2], 4
      %s18 = int_to_ptr.vmem [resolvable:$true] %s17
      %23 = dma.hbm_to_vmem [thread:$0]  %s1, 18432, %s18, [#allocation3], 128, 128, 8
    $region9: #{_coop_forward_impl.6} parent=1 // pred_fallthru
      _
    // Predicated region
    $region10: #{_coop_forward_impl.6} parent=1 // pred_check
      _
    $region11: #{_coop_forward_impl.6} parent=1 // pred_check_branch
      %25 = sbr.rel (0) target = $region13
    $region12: #{_coop_forward_impl.6} parent=1 // pred_region
      %s27 = ssub.s32 16, 16
      %28 = vsyncadd [#allocation5], %s27
      %s30 = sshll.u32 [#allocation4], 4
      %s31 = int_to_ptr.vmem [resolvable:$true] %s30
      %33 = dma.hbm_to_vmem [thread:$0]  %s2, 16, %s31, [#allocation5]
    $region13: #{_coop_forward_impl.6} parent=1 // pred_fallthru
      _
    // Predicated region
    $region14: #{_coop_forward_impl.6} parent=1 // pred_check
      _
    $region15: #{_coop_forward_impl.6} parent=1 // pred_check_branch
      %35 = sbr.rel (0) target = $region17
    $region16: #{_coop_forward_impl.6} parent=1 // pred_region
      %36 = dma.done [#allocation3], 18432
    $region17: #{_coop_forward_impl.6} parent=1 // pred_fallthru
      _
    // Predicated region
    $region18: #{_coop_forward_impl.6} parent=1 // pred_check
      _
    $region19: #{_coop_forward_impl.6} parent=1 // pred_check_branch
      %38 = sbr.rel (0) target = $region21
    $region20: #{_coop_forward_impl.6} parent=1 // pred_region
      %39 = dma.done [#allocation5], 16
    $region21: #{_coop_forward_impl.6} parent=1 // pred_fallthru
      _
    %v40 = vld [vmem:[%s0] sm:$0xff]
    %v41 = vld [vmem:[%s0 + $0x8] sm:$0xff]
    %v42 = vld [vmem:[%s0 + $0x10] sm:$0xff]
    %v43 = vld [vmem:[%s0 + $0x18] sm:$0xff]
    %v44 = vld [vmem:[%s0 + $0x20] sm:$0xff]
    %v45 = vld [vmem:[%s0 + $0x28] sm:$0xff]
    %v46 = vld [vmem:[%s0 + $0x30] sm:$0xff]
    %v47 = vld [vmem:[%s0 + $0x38] sm:$0xff]
    %v48 = vld [vmem:[%s0 + $0x40] sm:$0xff]
    %v49 = vld [vmem:[%s0 + $0x48] sm:$0xff]
    %v50 = vld [vmem:[%s0 + $0x50] sm:$0xff]
    %v51 = vld [vmem:[%s0 + $0x58] sm:$0xff]
    %v52 = vld [vmem:[%s0 + $0x60] sm:$0xff]
    %v53 = vld [vmem:[%s0 + $0x68] sm:$0xff]
    %v54 = vld [vmem:[%s0 + $0x70] sm:$0xff]
    %v55 = vld [vmem:[%s0 + $0x78] sm:$0xff]
    %v56 = vld [vmem:[%s0 + $0x80] sm:$0xff]
    %v57 = vld [vmem:[%s0 + $0x88] sm:$0xff]
    %v58 = vld [vmem:[%s0 + $0x90] sm:$0xff]
    %v59 = vld [vmem:[%s0 + $0x98] sm:$0xff]
    %v60 = vld [vmem:[%s0 + $0xa0] sm:$0xff]
    %v61 = vld [vmem:[%s0 + $0xa8] sm:$0xff]
    %v62 = vld [vmem:[%s0 + $0xb0] sm:$0xff]
    %v63 = vld [vmem:[%s0 + $0xb8] sm:$0xff]
    %v64 = vld [vmem:[%s0 + $0xc0] sm:$0xff]
    %v65 = vld [vmem:[%s0 + $0xc8] sm:$0xff]
    %v66 = vld [vmem:[%s0 + $0xd0] sm:$0xff]
    %v67 = vld [vmem:[%s0 + $0xd8] sm:$0xff]
    %v68 = vld [vmem:[%s0 + $0xe0] sm:$0xff]
    %v69 = vld [vmem:[%s0 + $0xe8] sm:$0xff]
    %v70 = vld [vmem:[%s0 + $0xf0] sm:$0xff]
    %v71 = vld [vmem:[%s0 + $0xf8] sm:$0xff]
    %v72 = vld [vmem:[%s0 + $0x100] sm:$0xff]
    %v73 = vld [vmem:[%s0 + $0x108] sm:$0xff]
    %v74 = vld [vmem:[%s0 + $0x110] sm:$0xff]
    %v75 = vld [vmem:[%s0 + $0x118] sm:$0xff]
    %v76 = vld [vmem:[#allocation2] sm:$0xff]
    %v77 = vld [vmem:[#allocation2 + $0x8] sm:$0xff]
    %v78 = vld [vmem:[#allocation2 + $0x10] sm:$0xff]
    %v79 = vld [vmem:[#allocation2 + $0x18] sm:$0xff]
    %v80 = vld [vmem:[#allocation2 + $0x20] sm:$0xff]
    %v81 = vld [vmem:[#allocation2 + $0x28] sm:$0xff]
    %v82 = vld [vmem:[#allocation2 + $0x30] sm:$0xff]
    %v83 = vld [vmem:[#allocation2 + $0x38] sm:$0xff]
    %v84 = vld [vmem:[#allocation2 + $0x40] sm:$0xff]
    %v85 = vld [vmem:[#allocation2 + $0x48] sm:$0xff]
    %v86 = vld [vmem:[#allocation2 + $0x50] sm:$0xff]
    %v87 = vld [vmem:[#allocation2 + $0x58] sm:$0xff]
    %v88 = vld [vmem:[#allocation2 + $0x60] sm:$0xff]
    %v89 = vld [vmem:[#allocation2 + $0x68] sm:$0xff]
    %v90 = vld [vmem:[#allocation2 + $0x70] sm:$0xff]
    %v91 = vld [vmem:[#allocation2 + $0x78] sm:$0xff]
    %v92 = vld [vmem:[#allocation2 + $0x80] sm:$0xff]
    %v93 = vld [vmem:[#allocation2 + $0x88] sm:$0xff]
    %v94 = vld [vmem:[#allocation2 + $0x90] sm:$0xff]
    %v95 = vld [vmem:[#allocation2 + $0x98] sm:$0xff]
    %v96 = vld [vmem:[#allocation2 + $0xa0] sm:$0xff]
    %v97 = vld [vmem:[#allocation2 + $0xa8] sm:$0xff]
    %v98 = vld [vmem:[#allocation2 + $0xb0] sm:$0xff]
    %v99 = vld [vmem:[#allocation2 + $0xb8] sm:$0xff]
    %v100 = vld [vmem:[#allocation2 + $0xc0] sm:$0xff]
    %v101 = vld [vmem:[#allocation2 + $0xc8] sm:$0xff]
    %v102 = vld [vmem:[#allocation2 + $0xd0] sm:$0xff]
    %v103 = vld [vmem:[#allocation2 + $0xd8] sm:$0xff]
    %v104 = vld [vmem:[#allocation2 + $0xe0] sm:$0xff]
    %v105 = vld [vmem:[#allocation2 + $0xe8] sm:$0xff]
    %v106 = vld [vmem:[#allocation2 + $0xf0] sm:$0xff]
    %v107 = vld [vmem:[#allocation2 + $0xf8] sm:$0xff]
    %v108 = vld [vmem:[#allocation2 + $0x100] sm:$0xff]
    %v109 = vld [vmem:[#allocation2 + $0x108] sm:$0xff]
    %v110 = vld [vmem:[#allocation2 + $0x110] sm:$0xff]
    %v111 = vld [vmem:[#allocation2 + $0x118] sm:$0xff]
    %v112 = vld [vmem:[#allocation2 + $0x120] sm:$0xff]
    %v113 = vld [vmem:[#allocation2 + $0x128] sm:$0xff]
    %v114 = vld [vmem:[#allocation2 + $0x130] sm:$0xff]
    %v115 = vld [vmem:[#allocation2 + $0x138] sm:$0xff]
    %v116 = vld [vmem:[#allocation2 + $0x140] sm:$0xff]
    %v117 = vld [vmem:[#allocation2 + $0x148] sm:$0xff]
    %v118 = vld [vmem:[#allocation2 + $0x150] sm:$0xff]
    %v119 = vld [vmem:[#allocation2 + $0x158] sm:$0xff]
    %v120 = vld [vmem:[#allocation2 + $0x160] sm:$0xff]
    %v121 = vld [vmem:[#allocation2 + $0x168] sm:$0xff]
    %v122 = vld [vmem:[#allocation2 + $0x170] sm:$0xff]
    %v123 = vld [vmem:[#allocation2 + $0x178] sm:$0xff]
    %v124 = vld [vmem:[#allocation2 + $0x180] sm:$0xff]
    %v125 = vld [vmem:[#allocation2 + $0x188] sm:$0xff]
    %v126 = vld [vmem:[#allocation2 + $0x190] sm:$0xff]
    %v127 = vld [vmem:[#allocation2 + $0x198] sm:$0xff]
    %v128 = vld [vmem:[#allocation2 + $0x1a0] sm:$0xff]
    %v129 = vld [vmem:[#allocation2 + $0x1a8] sm:$0xff]
    %v130 = vld [vmem:[#allocation2 + $0x1b0] sm:$0xff]
    %v131 = vld [vmem:[#allocation2 + $0x1b8] sm:$0xff]
    %v132 = vld [vmem:[#allocation2 + $0x1c0] sm:$0xff]
    %v133 = vld [vmem:[#allocation2 + $0x1c8] sm:$0xff]
    %v134 = vld [vmem:[#allocation2 + $0x1d0] sm:$0xff]
    %v135 = vld [vmem:[#allocation2 + $0x1d8] sm:$0xff]
    %v136 = vld [vmem:[#allocation2 + $0x1e0] sm:$0xff]
    %v137 = vld [vmem:[#allocation2 + $0x1e8] sm:$0xff]
    %v138 = vld [vmem:[#allocation2 + $0x1f0] sm:$0xff]
    %v139 = vld [vmem:[#allocation2 + $0x1f8] sm:$0xff]
    %v140 = vld [vmem:[#allocation2 + $0x200] sm:$0xff]
    %v141 = vld [vmem:[#allocation2 + $0x208] sm:$0xff]
    %v142 = vld [vmem:[#allocation2 + $0x210] sm:$0xff]
    %v143 = vld [vmem:[#allocation2 + $0x218] sm:$0xff]
    %v144 = vld [vmem:[#allocation2 + $0x220] sm:$0xff]
    %v145 = vld [vmem:[#allocation2 + $0x228] sm:$0xff]
    %v146 = vld [vmem:[#allocation2 + $0x230] sm:$0xff]
    %v147 = vld [vmem:[#allocation2 + $0x238] sm:$0xff]
    %v148 = vld [vmem:[#allocation2 + $0x240] sm:$0xff]
    %v149 = vld [vmem:[#allocation2 + $0x248] sm:$0xff]
    %v150 = vld [vmem:[#allocation2 + $0x250] sm:$0xff]
    %v151 = vld [vmem:[#allocation2 + $0x258] sm:$0xff]
    %v152 = vld [vmem:[#allocation2 + $0x260] sm:$0xff]
    %v153 = vld [vmem:[#allocation2 + $0x268] sm:$0xff]
    %v154 = vld [vmem:[#allocation2 + $0x270] sm:$0xff]
    %v155 = vld [vmem:[#allocation2 + $0x278] sm:$0xff]
    %v156 = vld [vmem:[#allocation2 + $0x280] sm:$0xff]
    %v157 = vld [vmem:[#allocation2 + $0x288] sm:$0xff]
    %v158 = vld [vmem:[#allocation2 + $0x290] sm:$0xff]
    %v159 = vld [vmem:[#allocation2 + $0x298] sm:$0xff]
    %v160 = vld [vmem:[#allocation2 + $0x2a0] sm:$0xff]
    %v161 = vld [vmem:[#allocation2 + $0x2a8] sm:$0xff]
    %v162 = vld [vmem:[#allocation2 + $0x2b0] sm:$0xff]
    %v163 = vld [vmem:[#allocation2 + $0x2b8] sm:$0xff]
    %v164 = vld [vmem:[#allocation2 + $0x2c0] sm:$0xff]
    %v165 = vld [vmem:[#allocation2 + $0x2c8] sm:$0xff]
    %v166 = vld [vmem:[#allocation2 + $0x2d0] sm:$0xff]
    %v167 = vld [vmem:[#allocation2 + $0x2d8] sm:$0xff]
    %v168 = vld [vmem:[#allocation2 + $0x2e0] sm:$0xff]
    %v169 = vld [vmem:[#allocation2 + $0x2e8] sm:$0xff]
    %v170 = vld [vmem:[#allocation2 + $0x2f0] sm:$0xff]
    %v171 = vld [vmem:[#allocation2 + $0x2f8] sm:$0xff]
    %v172 = vld [vmem:[#allocation2 + $0x300] sm:$0xff]
    %v173 = vld [vmem:[#allocation2 + $0x308] sm:$0xff]
    %v174 = vld [vmem:[#allocation2 + $0x310] sm:$0xff]
    %v175 = vld [vmem:[#allocation2 + $0x318] sm:$0xff]
    %v176 = vld [vmem:[#allocation2 + $0x320] sm:$0xff]
    %v177 = vld [vmem:[#allocation2 + $0x328] sm:$0xff]
    %v178 = vld [vmem:[#allocation2 + $0x330] sm:$0xff]
    %v179 = vld [vmem:[#allocation2 + $0x338] sm:$0xff]
    %v180 = vld [vmem:[#allocation2 + $0x340] sm:$0xff]
    %v181 = vld [vmem:[#allocation2 + $0x348] sm:$0xff]
    %v182 = vld [vmem:[#allocation2 + $0x350] sm:$0xff]
    %v183 = vld [vmem:[#allocation2 + $0x358] sm:$0xff]
    %v184 = vld [vmem:[#allocation2 + $0x360] sm:$0xff]
    %v185 = vld [vmem:[#allocation2 + $0x368] sm:$0xff]
    %v186 = vld [vmem:[#allocation2 + $0x370] sm:$0xff]
    %v187 = vld [vmem:[#allocation2 + $0x378] sm:$0xff]
    %v188 = vld [vmem:[#allocation2 + $0x380] sm:$0xff]
    %v189 = vld [vmem:[#allocation2 + $0x388] sm:$0xff]
    %v190 = vld [vmem:[#allocation2 + $0x390] sm:$0xff]
    %v191 = vld [vmem:[#allocation2 + $0x398] sm:$0xff]
    %v192 = vld [vmem:[#allocation2 + $0x3a0] sm:$0xff]
    %v193 = vld [vmem:[#allocation2 + $0x3a8] sm:$0xff]
    %v194 = vld [vmem:[#allocation2 + $0x3b0] sm:$0xff]
    %v195 = vld [vmem:[#allocation2 + $0x3b8] sm:$0xff]
    %v196 = vld [vmem:[#allocation2 + $0x3c0] sm:$0xff]
    %v197 = vld [vmem:[#allocation2 + $0x3c8] sm:$0xff]
    %v198 = vld [vmem:[#allocation2 + $0x3d0] sm:$0xff]
    %v199 = vld [vmem:[#allocation2 + $0x3d8] sm:$0xff]
    %v200 = vld [vmem:[#allocation2 + $0x3e0] sm:$0xff]
    %v201 = vld [vmem:[#allocation2 + $0x3e8] sm:$0xff]
    %v202 = vld [vmem:[#allocation2 + $0x3f0] sm:$0xff]
    %v203 = vld [vmem:[#allocation2 + $0x3f8] sm:$0xff]
    %v204 = vld [vmem:[#allocation2 + $0x400] sm:$0xff]
    %v205 = vld [vmem:[#allocation2 + $0x408] sm:$0xff]
    %v206 = vld [vmem:[#allocation2 + $0x410] sm:$0xff]
    %v207 = vld [vmem:[#allocation2 + $0x418] sm:$0xff]
    %v208 = vld [vmem:[#allocation2 + $0x420] sm:$0xff]
    %v209 = vld [vmem:[#allocation2 + $0x428] sm:$0xff]
    %v210 = vld [vmem:[#allocation2 + $0x430] sm:$0xff]
    %v211 = vld [vmem:[#allocation2 + $0x438] sm:$0xff]
    %v212 = vld [vmem:[#allocation2 + $0x440] sm:$0xff]
    %v213 = vld [vmem:[#allocation2 + $0x448] sm:$0xff]
    %v214 = vld [vmem:[#allocation2 + $0x450] sm:$0xff]
    %v215 = vld [vmem:[#allocation2 + $0x458] sm:$0xff]
    %v216 = vld [vmem:[#allocation2 + $0x460] sm:$0xff]
    %v217 = vld [vmem:[#allocation2 + $0x468] sm:$0xff]
    %v218 = vld [vmem:[#allocation2 + $0x470] sm:$0xff]
    %v219 = vld [vmem:[#allocation2 + $0x478] sm:$0xff]
    %v220 = vld [vmem:[#allocation4] sm:$0x1]
    %v222 = vlaneseq
    %v223 = vshrl.u32 %v222, 7
    %v224 = vsub.s32 0, %v223
    %v225 = vrot.slane %v220, %v224
    %227 = vmatprep.subr.mxu0 0.0
    %228 = vmatpush1.msra.mxu0 %v76
    %229 = vmatprep.subr.mxu0 0.0
    %230 = vmatpush1.msra.mxu0 %v77
    %231 = vmatprep.subr.mxu0 0.0
    %232 = vmatpush1.msra.mxu0 %v78
    %233 = vmatprep.subr.mxu0 0.0
    %234 = vmatpush1.msra.mxu0 %v79
    %235 = vmatprep.subr.mxu0 0.0
    %236 = vmatpush1.msra.mxu0 %v80
    %237 = vmatprep.subr.mxu0 0.0
    %238 = vmatpush1.msra.mxu0 %v81
    %239 = vmatprep.subr.mxu0 0.0
    %240 = vmatpush1.msra.mxu0 %v82
    %241 = vmatprep.subr.mxu0 0.0
    %242 = vmatpush1.msra.mxu0 %v83
    %243 = vmatprep.subr.mxu0 0.0
    %244 = vmatpush1.msra.mxu0 %v84
    %245 = vmatprep.subr.mxu0 0.0
    %246 = vmatpush1.msra.mxu0 %v85
    %247 = vmatprep.subr.mxu0 0.0
    %248 = vmatpush1.msra.mxu0 %v86
    %249 = vmatprep.subr.mxu0 0.0
    %250 = vmatpush1.msra.mxu0 %v87
    %251 = vmatprep.subr.mxu0 0.0
    %252 = vmatpush1.msra.mxu0 %v88
    %253 = vmatprep.subr.mxu0 0.0
    %254 = vmatpush1.msra.mxu0 %v89
    %255 = vmatprep.subr.mxu0 0.0
    %256 = vmatpush1.msra.mxu0 %v90
    %257 = vmatprep.subr.mxu0 0.0
    %258 = vmatpush1.msra.mxu0 %v91
    %259 = vmatprep.subr.mxu0 0.0
    %260 = vmatpush1.msra.mxu0 %v92
    %261 = vmatprep.subr.mxu0 0.0
    %262 = vmatpush1.msra.mxu0 %v93
    %263 = vmatprep.subr.mxu0 0.0
    %264 = vmatpush1.msra.mxu0 %v94
    %265 = vmatprep.subr.mxu0 0.0
    %266 = vmatpush1.msra.mxu0 %v95
    %267 = vmatprep.subr.mxu0 0.0
    %268 = vmatpush1.msra.mxu0 %v96
    %269 = vmatprep.subr.mxu0 0.0
    %270 = vmatpush1.msra.mxu0 %v97
    %271 = vmatprep.subr.mxu0 0.0
    %272 = vmatpush1.msra.mxu0 %v98
    %273 = vmatprep.subr.mxu0 0.0
    %274 = vmatpush1.msra.mxu0 %v99
    %275 = vmatprep.subr.mxu0 0.0
    %276 = vmatpush1.msra.mxu0 %v100
    %277 = vmatprep.subr.mxu0 0.0
    %278 = vmatpush1.msra.mxu0 %v101
    %279 = vmatprep.subr.mxu0 0.0
    %280 = vmatpush1.msra.mxu0 %v102
    %281 = vmatprep.subr.mxu0 0.0
    %282 = vmatpush1.msra.mxu0 %v103
    %283 = vmatprep.subr.mxu0 0.0
    %284 = vmatpush1.msra.mxu0 %v104
    %285 = vmatprep.subr.mxu0 0.0
    %286 = vmatpush1.msra.mxu0 %v105
    %287 = vmatprep.subr.mxu0 0.0
    %288 = vmatpush1.msra.mxu0 %v106
    %289 = vmatprep.subr.mxu0 0.0
    %290 = vmatpush1.msra.mxu0 %v107
    %291 = vmatprep.mubr.f32.mxu0 %v41
    %292 = vmatmul.mubr.f32.gmra.mrb[0].mxu0 %v40
    %v293 = vpop.f32.mrb[0].mxu0
    %v294 = vadd.f32 %v225, %v293
    %v295 = vpop.f32.mrb[0].mxu0
    %296 = vmatprep.mubr.f32.mxu0 %v50
    %297 = vmatmul.mubr.f32.gmra.mrb[0].mxu0 %v49
    %v298 = vpop.f32.mrb[0].mxu0
    %v299 = vadd.f32 %v225, %v298
    %v300 = vpop.f32.mrb[0].mxu0
    %301 = vmatprep.mubr.f32.mxu0 %v59
    %302 = vmatmul.mubr.f32.gmra.mrb[0].mxu0 %v58
    %v303 = vpop.f32.mrb[0].mxu0
    %v304 = vadd.f32 %v225, %v303
    %v305 = vpop.f32.mrb[0].mxu0
    %306 = vmatprep.mubr.f32.mxu0 %v68
    %307 = vmatmul.mubr.f32.gmra.mrb[0].mxu0 %v67
    %v308 = vpop.f32.mrb[0].mxu0
    %v309 = vadd.f32 %v225, %v308
    %v310 = vpop.f32.mrb[0].mxu0
    %311 = vdwg.mxu0
    %312 = vmatprep.subr.mxu0 0.0
    %313 = vmatpush1.msra.mxu0 %v108
    %314 = vmatprep.subr.mxu0 0.0
    %315 = vmatpush1.msra.mxu0 %v109
    %316 = vmatprep.subr.mxu0 0.0
    %317 = vmatpush1.msra.mxu0 %v110
    %318 = vmatprep.subr.mxu0 0.0
    %319 = vmatpush1.msra.mxu0 %v111
    %320 = vmatprep.subr.mxu0 0.0
    %321 = vmatpush1.msra.mxu0 %v112
    %322 = vmatprep.subr.mxu0 0.0
    %323 = vmatpush1.msra.mxu0 %v113
    %324 = vmatprep.subr.mxu0 0.0
    %325 = vmatpush1.msra.mxu0 %v114
    %326 = vmatprep.subr.mxu0 0.0
    %327 = vmatpush1.msra.mxu0 %v115
    %328 = vmatprep.subr.mxu0 0.0
    %329 = vmatpush1.msra.mxu0 %v116
    %330 = vmatprep.subr.mxu0 0.0
    %331 = vmatpush1.msra.mxu0 %v117
    %332 = vmatprep.subr.mxu0 0.0
    %333 = vmatpush1.msra.mxu0 %v118
    %334 = vmatprep.subr.mxu0 0.0
    %335 = vmatpush1.msra.mxu0 %v119
    %336 = vmatprep.subr.mxu0 0.0
    %337 = vmatpush1.msra.mxu0 %v120
    %338 = vmatprep.subr.mxu0 0.0
    %339 = vmatpush1.msra.mxu0 %v121
    %340 = vmatprep.subr.mxu0 0.0
    %341 = vmatpush1.msra.mxu0 %v122
    %342 = vmatprep.subr.mxu0 0.0
    %343 = vmatpush1.msra.mxu0 %v123
    %344 = vmatprep.subr.mxu0 0.0
    %345 = vmatpush1.msra.mxu0 %v124
    %346 = vmatprep.subr.mxu0 0.0
    %347 = vmatpush1.msra.mxu0 %v125
    %348 = vmatprep.subr.mxu0 0.0
    %349 = vmatpush1.msra.mxu0 %v126
    %350 = vmatprep.subr.mxu0 0.0
    %351 = vmatpush1.msra.mxu0 %v127
    %352 = vmatprep.subr.mxu0 0.0
    %353 = vmatpush1.msra.mxu0 %v128
    %354 = vmatprep.subr.mxu0 0.0
    %355 = vmatpush1.msra.mxu0 %v129
    %356 = vmatprep.subr.mxu0 0.0
    %357 = vmatpush1.msra.mxu0 %v130
    %358 = vmatprep.subr.mxu0 0.0
    %359 = vmatpush1.msra.mxu0 %v131
    %360 = vmatprep.subr.mxu0 0.0
    %361 = vmatpush1.msra.mxu0 %v132
    %362 = vmatprep.subr.mxu0 0.0
    %363 = vmatpush1.msra.mxu0 %v133
    %364 = vmatprep.subr.mxu0 0.0
    %365 = vmatpush1.msra.mxu0 %v134
    %366 = vmatprep.subr.mxu0 0.0
    %367 = vmatpush1.msra.mxu0 %v135
    %368 = vmatprep.subr.mxu0 0.0
    %369 = vmatpush1.msra.mxu0 %v136
    %370 = vmatprep.subr.mxu0 0.0
    %371 = vmatpush1.msra.mxu0 %v137
    %372 = vmatprep.subr.mxu0 0.0
    %373 = vmatpush1.msra.mxu0 %v138
    %374 = vmatprep.subr.mxu0 0.0
    %375 = vmatpush1.msra.mxu0 %v139
    %376 = vmatprep.mubr.f32.mxu0 %v43
    %377 = vmatmul.mubr.f32.gmra.mrb[0].mxu0 %v42
    %v378 = vpop.f32.mrb[0].mxu0
    %v379 = vadd.f32 %v294, %v378
    %v380 = vpop.f32.mrb[0].mxu0
    %381 = vmatprep.mubr.f32.mxu0 %v52
    %382 = vmatmul.mubr.f32.gmra.mrb[0].mxu0 %v51
    %v383 = vpop.f32.mrb[0].mxu0
    %v384 = vadd.f32 %v299, %v383
    %v385 = vpop.f32.mrb[0].mxu0
    %386 = vmatprep.mubr.f32.mxu0 %v61
    %387 = vmatmul.mubr.f32.gmra.mrb[0].mxu0 %v60
    %v388 = vpop.f32.mrb[0].mxu0
    %v389 = vadd.f32 %v304, %v388
    %v390 = vpop.f32.mrb[0].mxu0
    %391 = vmatprep.mubr.f32.mxu0 %v70
    %392 = vmatmul.mubr.f32.gmra.mrb[0].mxu0 %v69
    %v393 = vpop.f32.mrb[0].mxu0
    %v394 = vadd.f32 %v309, %v393
    %v395 = vpop.f32.mrb[0].mxu0
    %396 = vdwg.mxu0
    %397 = vmatprep.subr.mxu0 0.0
    %398 = vmatpush1.msra.mxu0 %v140
    %399 = vmatprep.subr.mxu0 0.0
    %400 = vmatpush1.msra.mxu0 %v141
    %401 = vmatprep.subr.mxu0 0.0
    %402 = vmatpush1.msra.mxu0 %v142
    %403 = vmatprep.subr.mxu0 0.0
    %404 = vmatpush1.msra.mxu0 %v143
    %405 = vmatprep.subr.mxu0 0.0
    %406 = vmatpush1.msra.mxu0 %v144
    %407 = vmatprep.subr.mxu0 0.0
    %408 = vmatpush1.msra.mxu0 %v145
    %409 = vmatprep.subr.mxu0 0.0
    %410 = vmatpush1.msra.mxu0 %v146
    %411 = vmatprep.subr.mxu0 0.0
    %412 = vmatpush1.msra.mxu0 %v147
    %413 = vmatprep.subr.mxu0 0.0
    %414 = vmatpush1.msra.mxu0 %v148
    %415 = vmatprep.subr.mxu0 0.0
    %416 = vmatpush1.msra.mxu0 %v149
    %417 = vmatprep.subr.mxu0 0.0
    %418 = vmatpush1.msra.mxu0 %v150
    %419 = vmatprep.subr.mxu0 0.0
    %420 = vmatpush1.msra.mxu0 %v151
    %421 = vmatprep.subr.mxu0 0.0
    %422 = vmatpush1.msra.mxu0 %v152
    %423 = vmatprep.subr.mxu0 0.0
    %424 = vmatpush1.msra.mxu0 %v153
    %425 = vmatprep.subr.mxu0 0.0
    %426 = vmatpush1.msra.mxu0 %v154
    %427 = vmatprep.subr.mxu0 0.0
    %428 = vmatpush1.msra.mxu0 %v155
    %429 = vmatprep.subr.mxu0 0.0
    %430 = vmatpush1.msra.mxu0 %v156
    %431 = vmatprep.subr.mxu0 0.0
    %432 = vmatpush1.msra.mxu0 %v157
    %433 = vmatprep.subr.mxu0 0.0
    %434 = vmatpush1.msra.mxu0 %v158
    %435 = vmatprep.subr.mxu0 0.0
    %436 = vmatpush1.msra.mxu0 %v159
    %437 = vmatprep.subr.mxu0 0.0
    %438 = vmatpush1.msra.mxu0 %v160
    %439 = vmatprep.subr.mxu0 0.0
    %440 = vmatpush1.msra.mxu0 %v161
    %441 = vmatprep.subr.mxu0 0.0
    %442 = vmatpush1.msra.mxu0 %v162
    %443 = vmatprep.subr.mxu0 0.0
    %444 = vmatpush1.msra.mxu0 %v163
    %445 = vmatprep.subr.mxu0 0.0
    %446 = vmatpush1.msra.mxu0 %v164
    %447 = vmatprep.subr.mxu0 0.0
    %448 = vmatpush1.msra.mxu0 %v165
    %449 = vmatprep.subr.mxu0 0.0
    %450 = vmatpush1.msra.mxu0 %v166
    %451 = vmatprep.subr.mxu0 0.0
    %452 = vmatpush1.msra.mxu0 %v167
    %453 = vmatprep.subr.mxu0 0.0
    %454 = vmatpush1.msra.mxu0 %v168
    %455 = vmatprep.subr.mxu0 0.0
    %456 = vmatpush1.msra.mxu0 %v169
    %457 = vmatprep.subr.mxu0 0.0
    %458 = vmatpush1.msra.mxu0 %v170
    %459 = vmatprep.subr.mxu0 0.0
    %460 = vmatpush1.msra.mxu0 %v171
    %461 = vmatprep.mubr.f32.mxu0 %v45
    %462 = vmatmul.mubr.f32.gmra.mrb[0].mxu0 %v44
    %v463 = vpop.f32.mrb[0].mxu0
    %v464 = vadd.f32 %v379, %v463
    %v465 = vpop.f32.mrb[0].mxu0
    %466 = vmatprep.mubr.f32.mxu0 %v54
    %467 = vmatmul.mubr.f32.gmra.mrb[0].mxu0 %v53
    %v468 = vpop.f32.mrb[0].mxu0
    %v469 = vadd.f32 %v384, %v468
    %v470 = vpop.f32.mrb[0].mxu0
    %471 = vmatprep.mubr.f32.mxu0 %v63
    %472 = vmatmul.mubr.f32.gmra.mrb[0].mxu0 %v62
    %v473 = vpop.f32.mrb[0].mxu0
    %v474 = vadd.f32 %v389, %v473
    %v475 = vpop.f32.mrb[0].mxu0
    %476 = vmatprep.mubr.f32.mxu0 %v72
    %477 = vmatmul.mubr.f32.gmra.mrb[0].mxu0 %v71
    %v478 = vpop.f32.mrb[0].mxu0
    %v479 = vadd.f32 %v394, %v478
    %v480 = vpop.f32.mrb[0].mxu0
    %481 = vdwg.mxu0
    %482 = vmatprep.subr.mxu0 0.0
    %483 = vmatpush1.msra.mxu0 %v172
    %484 = vmatprep.subr.mxu0 0.0
    %485 = vmatpush1.msra.mxu0 %v173
    %486 = vmatprep.subr.mxu0 0.0
    %487 = vmatpush1.msra.mxu0 %v174
    %488 = vmatprep.subr.mxu0 0.0
    %489 = vmatpush1.msra.mxu0 %v175
    %490 = vmatprep.subr.mxu0 0.0
    %491 = vmatpush1.msra.mxu0 %v176
    %492 = vmatprep.subr.mxu0 0.0
    %493 = vmatpush1.msra.mxu0 %v177
    %494 = vmatprep.subr.mxu0 0.0
    %495 = vmatpush1.msra.mxu0 %v178
    %496 = vmatprep.subr.mxu0 0.0
    %497 = vmatpush1.msra.mxu0 %v179
    %498 = vmatprep.subr.mxu0 0.0
    %499 = vmatpush1.msra.mxu0 %v180
    %500 = vmatprep.subr.mxu0 0.0
    %501 = vmatpush1.msra.mxu0 %v181
    %502 = vmatprep.subr.mxu0 0.0
    %503 = vmatpush1.msra.mxu0 %v182
    %504 = vmatprep.subr.mxu0 0.0
    %505 = vmatpush1.msra.mxu0 %v183
    %506 = vmatprep.subr.mxu0 0.0
    %507 = vmatpush1.msra.mxu0 %v184
    %508 = vmatprep.subr.mxu0 0.0
    %509 = vmatpush1.msra.mxu0 %v185
    %510 = vmatprep.subr.mxu0 0.0
    %511 = vmatpush1.msra.mxu0 %v186
    %512 = vmatprep.subr.mxu0 0.0
    %513 = vmatpush1.msra.mxu0 %v187
    %514 = vmatprep.subr.mxu0 0.0
    %515 = vmatpush1.msra.mxu0 %v188
    %516 = vmatprep.subr.mxu0 0.0
    %517 = vmatpush1.msra.mxu0 %v189
    %518 = vmatprep.subr.mxu0 0.0
    %519 = vmatpush1.msra.mxu0 %v190
    %520 = vmatprep.subr.mxu0 0.0
    %521 = vmatpush1.msra.mxu0 %v191
    %522 = vmatprep.subr.mxu0 0.0
    %523 = vmatpush1.msra.mxu0 %v192
    %524 = vmatprep.subr.mxu0 0.0
    %525 = vmatpush1.msra.mxu0 %v193
    %526 = vmatprep.subr.mxu0 0.0
    %527 = vmatpush1.msra.mxu0 %v194
    %528 = vmatprep.subr.mxu0 0.0
    %529 = vmatpush1.msra.mxu0 %v195
    %530 = vmatprep.subr.mxu0 0.0
    %531 = vmatpush1.msra.mxu0 %v196
    %532 = vmatprep.subr.mxu0 0.0
    %533 = vmatpush1.msra.mxu0 %v197
    %534 = vmatprep.subr.mxu0 0.0
    %535 = vmatpush1.msra.mxu0 %v198
    %536 = vmatprep.subr.mxu0 0.0
    %537 = vmatpush1.msra.mxu0 %v199
    %538 = vmatprep.subr.mxu0 0.0
    %539 = vmatpush1.msra.mxu0 %v200
    %540 = vmatprep.subr.mxu0 0.0
    %541 = vmatpush1.msra.mxu0 %v201
    %542 = vmatprep.subr.mxu0 0.0
    %543 = vmatpush1.msra.mxu0 %v202
    %544 = vmatprep.subr.mxu0 0.0
    %545 = vmatpush1.msra.mxu0 %v203
    %546 = vmatprep.mubr.f32.mxu0 %v47
    %547 = vmatmul.mubr.f32.gmra.mrb[0].mxu0 %v46
    %v548 = vpop.f32.mrb[0].mxu0
    %v549 = vadd.f32 %v464, %v548
    %v550 = vpop.f32.mrb[0].mxu0
    %551 = vmatprep.mubr.f32.mxu0 %v56
    %552 = vmatmul.mubr.f32.gmra.mrb[0].mxu0 %v55
    %v553 = vpop.f32.mrb[0].mxu0
    %v554 = vadd.f32 %v469, %v553
    %v555 = vpop.f32.mrb[0].mxu0
    %556 = vmatprep.mubr.f32.mxu0 %v65
    %557 = vmatmul.mubr.f32.gmra.mrb[0].mxu0 %v64
    %v558 = vpop.f32.mrb[0].mxu0
    %v559 = vadd.f32 %v474, %v558
    %v560 = vpop.f32.mrb[0].mxu0
    %561 = vmatprep.mubr.f32.mxu0 %v74
    %562 = vmatmul.mubr.f32.gmra.mrb[0].mxu0 %v73
    %v563 = vpop.f32.mrb[0].mxu0
    %v564 = vadd.f32 %v479, %v563
    %v565 = vpop.f32.mrb[0].mxu0
    %566 = vdwg.mxu0
    %567 = vmatprep.subr.mxu0 0.0
    %568 = vmatpush1.msra.mxu0 %v204
    %569 = vmatprep.subr.mxu0 0.0
    %570 = vmatpush1.msra.mxu0 %v205
    %571 = vmatprep.subr.mxu0 0.0
    %572 = vmatpush1.msra.mxu0 %v206
    %573 = vmatprep.subr.mxu0 0.0
    %574 = vmatpush1.msra.mxu0 %v207
    %575 = vmatprep.subr.mxu0 0.0
    %576 = vmatpush1.msra.mxu0 %v208
    %577 = vmatprep.subr.mxu0 0.0
    %578 = vmatpush1.msra.mxu0 %v209
    %579 = vmatprep.subr.mxu0 0.0
    %580 = vmatpush1.msra.mxu0 %v210
    %581 = vmatprep.subr.mxu0 0.0
    %582 = vmatpush1.msra.mxu0 %v211
    %583 = vmatprep.subr.mxu0 0.0
    %584 = vmatpush1.msra.mxu0 %v212
    %585 = vmatprep.subr.mxu0 0.0
    %586 = vmatpush1.msra.mxu0 %v213
    %587 = vmatprep.subr.mxu0 0.0
    %588 = vmatpush1.msra.mxu0 %v214
    %589 = vmatprep.subr.mxu0 0.0
    %590 = vmatpush1.msra.mxu0 %v215
    %591 = vmatprep.subr.mxu0 0.0
    %592 = vmatpush1.msra.mxu0 %v216
    %593 = vmatprep.subr.mxu0 0.0
    %594 = vmatpush1.msra.mxu0 %v217
    %595 = vmatprep.subr.mxu0 0.0
    %596 = vmatpush1.msra.mxu0 %v218
    %597 = vmatprep.subr.mxu0 0.0
    %598 = vmatpush1.msra.mxu0 %v219
    %599 = vmatprep.subr.mxu0 0.0
    %600 = vmatpush1.msra.mxu0 0.0
    %601 = vmatprep.subr.mxu0 0.0
    %602 = vmatpush1.msra.mxu0 0.0
    %603 = vmatprep.subr.mxu0 0.0
    %604 = vmatpush1.msra.mxu0 0.0
    %605 = vmatprep.subr.mxu0 0.0
    %606 = vmatpush1.msra.mxu0 0.0
    %607 = vmatprep.subr.mxu0 0.0
    %608 = vmatpush1.msra.mxu0 0.0
    %609 = vmatprep.subr.mxu0 0.0
    %610 = vmatpush1.msra.mxu0 0.0
    %611 = vmatprep.subr.mxu0 0.0
    %612 = vmatpush1.msra.mxu0 0.0
    %613 = vmatprep.subr.mxu0 0.0
    %614 = vmatpush1.msra.mxu0 0.0
    %615 = vmatprep.subr.mxu0 0.0
    %616 = vmatpush1.msra.mxu0 0.0
    %617 = vmatprep.subr.mxu0 0.0
    %618 = vmatpush1.msra.mxu0 0.0
    %619 = vmatprep.subr.mxu0 0.0
    %620 = vmatpush1.msra.mxu0 0.0
    %621 = vmatprep.subr.mxu0 0.0
    %622 = vmatpush1.msra.mxu0 0.0
    %623 = vmatprep.subr.mxu0 0.0
    %624 = vmatpush1.msra.mxu0 0.0
    %625 = vmatprep.subr.mxu0 0.0
    %626 = vmatpush1.msra.mxu0 0.0
    %627 = vmatprep.subr.mxu0 0.0
    %628 = vmatpush1.msra.mxu0 0.0
    %629 = vmatprep.subr.mxu0 0.0
    %630 = vmatpush1.msra.mxu0 0.0
    %631 = vmatprep.mubr.f32.mxu0 0.0
    %632 = vmatmul.mubr.f32.gmra.mrb[0].mxu0 %v48
    %v633 = vpop.f32.mrb[0].mxu0
    %v634 = vadd.f32 %v549, %v633
    %v635 = vpop.f32.mrb[0].mxu0
    %636 = vmatprep.mubr.f32.mxu0 0.0
    %637 = vmatmul.mubr.f32.gmra.mrb[0].mxu0 %v57
    %v638 = vpop.f32.mrb[0].mxu0
    %v639 = vadd.f32 %v554, %v638
    %v640 = vpop.f32.mrb[0].mxu0
    %641 = vmatprep.mubr.f32.mxu0 0.0
    %642 = vmatmul.mubr.f32.gmra.mrb[0].mxu0 %v66
    %v643 = vpop.f32.mrb[0].mxu0
    %v644 = vadd.f32 %v559, %v643
    %v645 = vpop.f32.mrb[0].mxu0
    %646 = vmatprep.mubr.f32.mxu0 0.0
    %647 = vmatmul.mubr.f32.gmra.mrb[0].mxu0 %v75
    %v648 = vpop.f32.mrb[0].mxu0
    %v649 = vadd.f32 %v564, %v648
    %v650 = vpop.f32.mrb[0].mxu0
    %651 = vdwg.mxu0
    %v652 = vmax.f32 %v634, 0.0
    %v653 = vmax.f32 %v639, 0.0
    %v654 = vmax.f32 %v644, 0.0
    %v655 = vmax.f32 %v649, 0.0
    %656 = vst [vmem:[%s3] sm:$0xff] %v652
    %657 = vst [vmem:[%s3 + $0x8] sm:$0xff] %v653
    %658 = vst [vmem:[%s3 + $0x10] sm:$0xff] %v654
    %659 = vst [vmem:[%s3 + $0x18] sm:$0xff] %v655
    // Predicated region
    $region22: #{_coop_forward_impl.6} parent=1 // pred_check
      _
    $region23: #{_coop_forward_impl.6} parent=1 // pred_check_branch
      %661 = sbr.rel (0) target = $region25
    $region24: #{_coop_forward_impl.6} parent=1 // pred_region
      _
    $region25: #{_coop_forward_impl.6} parent=1 // pred_fallthru
      _
    // Predicated region
    $region26: #{_coop_forward_impl.6} parent=1 // pred_check
      _
    $region27: #{_coop_forward_impl.6} parent=1 // pred_check_branch
      %663 = sbr.rel (0) target = $region29
    $region28: #{_coop_forward_impl.6} parent=1 // pred_region
      _
    $region29: #{_coop_forward_impl.6} parent=1 // pred_fallthru
      _
    %664 = vsyncpa [#allocation3], 1
    %665 = vsyncpa [#allocation5], 1

// kernel: _coop_forward_impl.7
$region0: #{_coop_forward_impl.7}
  #allocation0 [shape = 'u32[]', space=smem, size = 0x4, offset = 0x4, fixed_abs, tag = 'smem constant byte address 0x4 - core index']
  #allocation1 [shape = 'u32[144,128]{1,0:T(1,128)}', space=vmem, size = 0x12000, scoped, tag = 'internal scratch']
  %s0 = inlined_call_operand.vmem [shape: f32[128,1152], index: 0, kind: input, shape index: {}]
  %s1 = inlined_call_operand.vmem [shape: f32[1152,128], index: 1, kind: input, shape index: {}]
  %s2 = inlined_call_operand.vmem [shape: f32[1,128], index: 2, kind: input, shape index: {}]
  %s3 = inlined_call_operand.vmem [shape: f32[128,128], index: 3, kind: output, shape index: {}]
  %s4 = sld [smem:[#allocation0]]
  $region22: #{_coop_forward_impl.7} parent=0
    _
  %s6 = ssub.s32 1, %s4
  %s7 = scalar_select 0, %s6, %s4
  // Predicated region
  $region2: #{_coop_forward_impl.7} parent=0 // pred_check
    _
  $region3: #{_coop_forward_impl.7} parent=0 // pred_check_branch
    %9 = sbr.rel (0) target = $region5
  $region4: #{_coop_forward_impl.7} parent=0 // pred_region
    _
  $region5: #{_coop_forward_impl.7} parent=0 // pred_fallthru
    _
  // Predicated region
  $region6: #{_coop_forward_impl.7} parent=0 // pred_check
    _
  $region7: #{_coop_forward_impl.7} parent=0 // pred_check_branch
    %11 = sbr.rel (0) target = $region9
  $region8: #{_coop_forward_impl.7} parent=0 // pred_region
    _
  $region9: #{_coop_forward_impl.7} parent=0 // pred_fallthru
    _
  // Predicated region
  $region10: #{_coop_forward_impl.7} parent=0 // pred_check
    _
  $region11: #{_coop_forward_impl.7} parent=0 // pred_check_branch
    %13 = sbr.rel (0) target = $region13
  $region12: #{_coop_forward_impl.7} parent=0 // pred_region
    _
  $region13: #{_coop_forward_impl.7} parent=0 // pred_fallthru
    _
  %v14 = vld [vmem:[%s0] sm:$0xff]
  %v15 = vld [vmem:[%s0 + $0x8] sm:$0xff]
  %v16 = vld [vmem:[%s0 + $0x10] sm:$0xff]
  %v17 = vld [vmem:[%s0 + $0x18] sm:$0xff]
  %v18 = vld [vmem:[%s0 + $0x20] sm:$0xff]
  %v19 = vld [vmem:[%s0 + $0x28] sm:$0xff]
  %v20 = vld [vmem:[%s0 + $0x30] sm:$0xff]
  %v21 = vld [vmem:[%s0 + $0x38] sm:$0xff]
  %v22 = vld [vmem:[%s0 + $0x40] sm:$0xff]
  %v23 = vld [vmem:[%s0 + $0x48] sm:$0xff]
  %v24 = vld [vmem:[%s0 + $0x50] sm:$0xff]
  %v25 = vld [vmem:[%s0 + $0x58] sm:$0xff]
  %v26 = vld [vmem:[%s0 + $0x60] sm:$0xff]
  %v27 = vld [vmem:[%s0 + $0x68] sm:$0xff]
  %v28 = vld [vmem:[%s0 + $0x70] sm:$0xff]
  %v29 = vld [vmem:[%s0 + $0x78] sm:$0xff]
  %v30 = vld [vmem:[%s0 + $0x80] sm:$0xff]
  %v31 = vld [vmem:[%s0 + $0x88] sm:$0xff]
  %v32 = vld [vmem:[%s0 + $0x90] sm:$0xff]
  %v33 = vld [vmem:[%s0 + $0x98] sm:$0xff]
  %v34 = vld [vmem:[%s0 + $0xa0] sm:$0xff]
  %v35 = vld [vmem:[%s0 + $0xa8] sm:$0xff]
  %v36 = vld [vmem:[%s0 + $0xb0] sm:$0xff]
  %v37 = vld [vmem:[%s0 + $0xb8] sm:$0xff]
  %v38 = vld [vmem:[%s0 + $0xc0] sm:$0xff]
  %v39 = vld [vmem:[%s0 + $0xc8] sm:$0xff]
  %v40 = vld [vmem:[%s0 + $0xd0] sm:$0xff]
  %v41 = vld [vmem:[%s0 + $0xd8] sm:$0xff]
  %v42 = vld [vmem:[%s0 + $0xe0] sm:$0xff]
  %v43 = vld [vmem:[%s0 + $0xe8] sm:$0xff]
  %v44 = vld [vmem:[%s0 + $0xf0] sm:$0xff]
  %v45 = vld [vmem:[%s0 + $0xf8] sm:$0xff]
  %v46 = vld [vmem:[%s0 + $0x100] sm:$0xff]
  %v47 = vld [vmem:[%s0 + $0x108] sm:$0xff]
  %v48 = vld [vmem:[%s0 + $0x110] sm:$0xff]
  %v49 = vld [vmem:[%s0 + $0x118] sm:$0xff]
  %v50 = vld [vmem:[%s0 + $0x120] sm:$0xff]
  %v51 = vld [vmem:[%s0 + $0x128] sm:$0xff]
  %v52 = vld [vmem:[%s0 + $0x130] sm:$0xff]
  %v53 = vld [vmem:[%s0 + $0x138] sm:$0xff]
  %v54 = vld [vmem:[%s0 + $0x140] sm:$0xff]
  %v55 = vld [vmem:[%s0 + $0x148] sm:$0xff]
  %v56 = vld [vmem:[%s0 + $0x150] sm:$0xff]
  %v57 = vld [vmem:[%s0 + $0x158] sm:$0xff]
  %v58 = vld [vmem:[%s0 + $0x160] sm:$0xff]
  %v59 = vld [vmem:[%s0 + $0x168] sm:$0xff]
  %v60 = vld [vmem:[%s0 + $0x170] sm:$0xff]
  %v61 = vld [vmem:[%s0 + $0x178] sm:$0xff]
  %v62 = vld [vmem:[%s0 + $0x180] sm:$0xff]
  %v63 = vld [vmem:[%s0 + $0x188] sm:$0xff]
  %v64 = vld [vmem:[%s0 + $0x190] sm:$0xff]
  %v65 = vld [vmem:[%s0 + $0x198] sm:$0xff]
  %v66 = vld [vmem:[%s0 + $0x1a0] sm:$0xff]
  %v67 = vld [vmem:[%s0 + $0x1a8] sm:$0xff]
  %v68 = vld [vmem:[%s0 + $0x1b0] sm:$0xff]
  %v69 = vld [vmem:[%s0 + $0x1b8] sm:$0xff]
  %v70 = vld [vmem:[%s0 + $0x1c0] sm:$0xff]
  %v71 = vld [vmem:[%s0 + $0x1c8] sm:$0xff]
  %v72 = vld [vmem:[%s0 + $0x1d0] sm:$0xff]
  %v73 = vld [vmem:[%s0 + $0x1d8] sm:$0xff]
  %v74 = vld [vmem:[%s0 + $0x1e0] sm:$0xff]
  %v75 = vld [vmem:[%s0 + $0x1e8] sm:$0xff]
  %v76 = vld [vmem:[%s0 + $0x1f0] sm:$0xff]
  %v77 = vld [vmem:[%s0 + $0x1f8] sm:$0xff]
  %v78 = vld [vmem:[%s0 + $0x200] sm:$0xff]
  %v79 = vld [vmem:[%s0 + $0x208] sm:$0xff]
  %v80 = vld [vmem:[%s0 + $0x210] sm:$0xff]
  %v81 = vld [vmem:[%s0 + $0x218] sm:$0xff]
  %v82 = vld [vmem:[%s0 + $0x220] sm:$0xff]
  %v83 = vld [vmem:[%s0 + $0x228] sm:$0xff]
  %v84 = vld [vmem:[%s0 + $0x230] sm:$0xff]
  %v85 = vld [vmem:[%s0 + $0x238] sm:$0xff]
  %v86 = vld [vmem:[%s0 + $0x240] sm:$0xff]
  %v87 = vld [vmem:[%s0 + $0x248] sm:$0xff]
  %v88 = vld [vmem:[%s0 + $0x250] sm:$0xff]
  %v89 = vld [vmem:[%s0 + $0x258] sm:$0xff]
  %v90 = vld [vmem:[%s0 + $0x260] sm:$0xff]
  %v91 = vld [vmem:[%s0 + $0x268] sm:$0xff]
  %v92 = vld [vmem:[%s0 + $0x270] sm:$0xff]
  %v93 = vld [vmem:[%s0 + $0x278] sm:$0xff]
  %v94 = vld [vmem:[%s0 + $0x280] sm:$0xff]
  %v95 = vld [vmem:[%s0 + $0x288] sm:$0xff]
  %v96 = vld [vmem:[%s0 + $0x290] sm:$0xff]
  %v97 = vld [vmem:[%s0 + $0x298] sm:$0xff]
  %v98 = vld [vmem:[%s0 + $0x2a0] sm:$0xff]
  %v99 = vld [vmem:[%s0 + $0x2a8] sm:$0xff]
  %v100 = vld [vmem:[%s0 + $0x2b0] sm:$0xff]
  %v101 = vld [vmem:[%s0 + $0x2b8] sm:$0xff]
  %v102 = vld [vmem:[%s0 + $0x2c0] sm:$0xff]
  %v103 = vld [vmem:[%s0 + $0x2c8] sm:$0xff]
  %v104 = vld [vmem:[%s0 + $0x2d0] sm:$0xff]
  %v105 = vld [vmem:[%s0 + $0x2d8] sm:$0xff]
  %v106 = vld [vmem:[%s0 + $0x2e0] sm:$0xff]
  %v107 = vld [vmem:[%s0 + $0x2e8] sm:$0xff]
  %v108 = vld [vmem:[%s0 + $0x2f0] sm:$0xff]
  %v109 = vld [vmem:[%s0 + $0x2f8] sm:$0xff]
  %v110 = vld [vmem:[%s0 + $0x300] sm:$0xff]
  %v111 = vld [vmem:[%s0 + $0x308] sm:$0xff]
  %v112 = vld [vmem:[%s0 + $0x310] sm:$0xff]
  %v113 = vld [vmem:[%s0 + $0x318] sm:$0xff]
  %v114 = vld [vmem:[%s0 + $0x320] sm:$0xff]
  %v115 = vld [vmem:[%s0 + $0x328] sm:$0xff]
  %v116 = vld [vmem:[%s0 + $0x330] sm:$0xff]
  %v117 = vld [vmem:[%s0 + $0x338] sm:$0xff]
  %v118 = vld [vmem:[%s0 + $0x340] sm:$0xff]
  %v119 = vld [vmem:[%s0 + $0x348] sm:$0xff]
  %v120 = vld [vmem:[%s0 + $0x350] sm:$0xff]
  %v121 = vld [vmem:[%s0 + $0x358] sm:$0xff]
  %v122 = vld [vmem:[%s0 + $0x360] sm:$0xff]
  %v123 = vld [vmem:[%s0 + $0x368] sm:$0xff]
  %v124 = vld [vmem:[%s0 + $0x370] sm:$0xff]
  %v125 = vld [vmem:[%s0 + $0x378] sm:$0xff]
  %v126 = vld [vmem:[%s0 + $0x380] sm:$0xff]
  %v127 = vld [vmem:[%s0 + $0x388] sm:$0xff]
  %v128 = vld [vmem:[%s0 + $0x390] sm:$0xff]
  %v129 = vld [vmem:[%s0 + $0x398] sm:$0xff]
  %v130 = vld [vmem:[%s0 + $0x3a0] sm:$0xff]
  %v131 = vld [vmem:[%s0 + $0x3a8] sm:$0xff]
  %v132 = vld [vmem:[%s0 + $0x3b0] sm:$0xff]
  %v133 = vld [vmem:[%s0 + $0x3b8] sm:$0xff]
  %v134 = vld [vmem:[%s0 + $0x3c0] sm:$0xff]
  %v135 = vld [vmem:[%s0 + $0x3c8] sm:$0xff]
  %v136 = vld [vmem:[%s0 + $0x3d0] sm:$0xff]
  %v137 = vld [vmem:[%s0 + $0x3d8] sm:$0xff]
  %v138 = vld [vmem:[%s0 + $0x3e0] sm:$0xff]
  %v139 = vld [vmem:[%s0 + $0x3e8] sm:$0xff]
  %v140 = vld [vmem:[%s0 + $0x3f0] sm:$0xff]
  %v141 = vld [vmem:[%s0 + $0x3f8] sm:$0xff]
  %v142 = vld [vmem:[%s0 + $0x400] sm:$0xff]
  %v143 = vld [vmem:[%s0 + $0x408] sm:$0xff]
  %v144 = vld [vmem:[%s0 + $0x410] sm:$0xff]
  %v145 = vld [vmem:[%s0 + $0x418] sm:$0xff]
  %v146 = vld [vmem:[%s0 + $0x420] sm:$0xff]
  %v147 = vld [vmem:[%s0 + $0x428] sm:$0xff]
  %v148 = vld [vmem:[%s0 + $0x430] sm:$0xff]
  %v149 = vld [vmem:[%s0 + $0x438] sm:$0xff]
  %v150 = vld [vmem:[%s0 + $0x440] sm:$0xff]
  %v151 = vld [vmem:[%s0 + $0x448] sm:$0xff]
  %v152 = vld [vmem:[%s0 + $0x450] sm:$0xff]
  %v153 = vld [vmem:[%s0 + $0x458] sm:$0xff]
  %v154 = vld [vmem:[%s0 + $0x460] sm:$0xff]
  %v155 = vld [vmem:[%s0 + $0x468] sm:$0xff]
  %v156 = vld [vmem:[%s0 + $0x470] sm:$0xff]
  %v157 = vld [vmem:[%s0 + $0x478] sm:$0xff]
  %v158 = vld [vmem:[%s1] sm:$0xff]
  %v159 = vld [vmem:[%s1 + $0x8] sm:$0xff]
  %v160 = vld [vmem:[%s1 + $0x10] sm:$0xff]
  %v161 = vld [vmem:[%s1 + $0x18] sm:$0xff]
  %v162 = vld [vmem:[%s1 + $0x20] sm:$0xff]
  %v163 = vld [vmem:[%s1 + $0x28] sm:$0xff]
  %v164 = vld [vmem:[%s1 + $0x30] sm:$0xff]
  %v165 = vld [vmem:[%s1 + $0x38] sm:$0xff]
  %v166 = vld [vmem:[%s1 + $0x40] sm:$0xff]
  %v167 = vld [vmem:[%s1 + $0x48] sm:$0xff]
  %v168 = vld [vmem:[%s1 + $0x50] sm:$0xff]
  %v169 = vld [vmem:[%s1 + $0x58] sm:$0xff]
  %v170 = vld [vmem:[%s1 + $0x60] sm:$0xff]
  %v171 = vld [vmem:[%s1 + $0x68] sm:$0xff]
  %v172 = vld [vmem:[%s1 + $0x70] sm:$0xff]
  %v173 = vld [vmem:[%s1 + $0x78] sm:$0xff]
  %v174 = vld [vmem:[%s1 + $0x80] sm:$0xff]
  %v175 = vld [vmem:[%s1 + $0x88] sm:$0xff]
  %v176 = vld [vmem:[%s1 + $0x90] sm:$0xff]
  %v177 = vld [vmem:[%s1 + $0x98] sm:$0xff]
  %v178 = vld [vmem:[%s1 + $0xa0] sm:$0xff]
  %v179 = vld [vmem:[%s1 + $0xa8] sm:$0xff]
  %v180 = vld [vmem:[%s1 + $0xb0] sm:$0xff]
  %v181 = vld [vmem:[%s1 + $0xb8] sm:$0xff]
  %v182 = vld [vmem:[%s1 + $0xc0] sm:$0xff]
  %v183 = vld [vmem:[%s1 + $0xc8] sm:$0xff]
  %v184 = vld [vmem:[%s1 + $0xd0] sm:$0xff]
  %v185 = vld [vmem:[%s1 + $0xd8] sm:$0xff]
  %v186 = vld [vmem:[%s1 + $0xe0] sm:$0xff]
  %v187 = vld [vmem:[%s1 + $0xe8] sm:$0xff]
  %v188 = vld [vmem:[%s1 + $0xf0] sm:$0xff]
  %v189 = vld [vmem:[%s1 + $0xf8] sm:$0xff]
  %v190 = vld [vmem:[%s1 + $0x100] sm:$0xff]
  %v191 = vld [vmem:[%s1 + $0x108] sm:$0xff]
  %v192 = vld [vmem:[%s1 + $0x110] sm:$0xff]
  %v193 = vld [vmem:[%s1 + $0x118] sm:$0xff]
  %v194 = vld [vmem:[%s1 + $0x120] sm:$0xff]
  %v195 = vld [vmem:[%s1 + $0x128] sm:$0xff]
  %v196 = vld [vmem:[%s1 + $0x130] sm:$0xff]
  %v197 = vld [vmem:[%s1 + $0x138] sm:$0xff]
  %v198 = vld [vmem:[%s1 + $0x140] sm:$0xff]
  %v199 = vld [vmem:[%s1 + $0x148] sm:$0xff]
  %v200 = vld [vmem:[%s1 + $0x150] sm:$0xff]
  %v201 = vld [vmem:[%s1 + $0x158] sm:$0xff]
  %v202 = vld [vmem:[%s1 + $0x160] sm:$0xff]
  %v203 = vld [vmem:[%s1 + $0x168] sm:$0xff]
  %v204 = vld [vmem:[%s1 + $0x170] sm:$0xff]
  %v205 = vld [vmem:[%s1 + $0x178] sm:$0xff]
  %v206 = vld [vmem:[%s1 + $0x180] sm:$0xff]
  %v207 = vld [vmem:[%s1 + $0x188] sm:$0xff]
  %v208 = vld [vmem:[%s1 + $0x190] sm:$0xff]
  %v209 = vld [vmem:[%s1 + $0x198] sm:$0xff]
  %v210 = vld [vmem:[%s1 + $0x1a0] sm:$0xff]
  %v211 = vld [vmem:[%s1 + $0x1a8] sm:$0xff]
  %v212 = vld [vmem:[%s1 + $0x1b0] sm:$0xff]
  %v213 = vld [vmem:[%s1 + $0x1b8] sm:$0xff]
  %v214 = vld [vmem:[%s1 + $0x1c0] sm:$0xff]
  %v215 = vld [vmem:[%s1 + $0x1c8] sm:$0xff]
  %v216 = vld [vmem:[%s1 + $0x1d0] sm:$0xff]
  %v217 = vld [vmem:[%s1 + $0x1d8] sm:$0xff]
  %v218 = vld [vmem:[%s1 + $0x1e0] sm:$0xff]
  %v219 = vld [vmem:[%s1 + $0x1e8] sm:$0xff]
  %v220 = vld [vmem:[%s1 + $0x1f0] sm:$0xff]
  %v221 = vld [vmem:[%s1 + $0x1f8] sm:$0xff]
  %v222 = vld [vmem:[%s1 + $0x200] sm:$0xff]
  %v223 = vld [vmem:[%s1 + $0x208] sm:$0xff]
  %v224 = vld [vmem:[%s1 + $0x210] sm:$0xff]
  %v225 = vld [vmem:[%s1 + $0x218] sm:$0xff]
  %v226 = vld [vmem:[%s1 + $0x220] sm:$0xff]
  %v227 = vld [vmem:[%s1 + $0x228] sm:$0xff]
  %v228 = vld [vmem:[%s1 + $0x230] sm:$0xff]
  %v229 = vld [vmem:[%s1 + $0x238] sm:$0xff]
  %v230 = vld [vmem:[%s1 + $0x240] sm:$0xff]
  %v231 = vld [vmem:[%s1 + $0x248] sm:$0xff]
  %v232 = vld [vmem:[%s1 + $0x250] sm:$0xff]
  %v233 = vld [vmem:[%s1 + $0x258] sm:$0xff]
  %v234 = vld [vmem:[%s1 + $0x260] sm:$0xff]
  %v235 = vld [vmem:[%s1 + $0x268] sm:$0xff]
  %v236 = vld [vmem:[%s1 + $0x270] sm:$0xff]
  %v237 = vld [vmem:[%s1 + $0x278] sm:$0xff]
  %v238 = vld [vmem:[%s1 + $0x280] sm:$0xff]
  %v239 = vld [vmem:[%s1 + $0x288] sm:$0xff]
  %v240 = vld [vmem:[%s1 + $0x290] sm:$0xff]
  %v241 = vld [vmem:[%s1 + $0x298] sm:$0xff]
  %v242 = vld [vmem:[%s1 + $0x2a0] sm:$0xff]
  %v243 = vld [vmem:[%s1 + $0x2a8] sm:$0xff]
  %v244 = vld [vmem:[%s1 + $0x2b0] sm:$0xff]
  %v245 = vld [vmem:[%s1 + $0x2b8] sm:$0xff]
  %v246 = vld [vmem:[%s1 + $0x2c0] sm:$0xff]
  %v247 = vld [vmem:[%s1 + $0x2c8] sm:$0xff]
  %v248 = vld [vmem:[%s1 + $0x2d0] sm:$0xff]
  %v249 = vld [vmem:[%s1 + $0x2d8] sm:$0xff]
  %v250 = vld [vmem:[%s1 + $0x2e0] sm:$0xff]
  %v251 = vld [vmem:[%s1 + $0x2e8] sm:$0xff]
  %v252 = vld [vmem:[%s1 + $0x2f0] sm:$0xff]
  %v253 = vld [vmem:[%s1 + $0x2f8] sm:$0xff]
  %v254 = vld [vmem:[%s1 + $0x300] sm:$0xff]
  %v255 = vld [vmem:[%s1 + $0x308] sm:$0xff]
  %v256 = vld [vmem:[%s1 + $0x310] sm:$0xff]
  %v257 = vld [vmem:[%s1 + $0x318] sm:$0xff]
  %v258 = vld [vmem:[%s1 + $0x320] sm:$0xff]
  %v259 = vld [vmem:[%s1 + $0x328] sm:$0xff]
  %v260 = vld [vmem:[%s1 + $0x330] sm:$0xff]
  %v261 = vld [vmem:[%s1 + $0x338] sm:$0xff]
  %v262 = vld [vmem:[%s1 + $0x340] sm:$0xff]
  %v263 = vld [vmem:[%s1 + $0x348] sm:$0xff]
  %v264 = vld [vmem:[%s1 + $0x350] sm:$0xff]
  %v265 = vld [vmem:[%s1 + $0x358] sm:$0xff]
  %v266 = vld [vmem:[%s1 + $0x360] sm:$0xff]
  %v267 = vld [vmem:[%s1 + $0x368] sm:$0xff]
  %v268 = vld [vmem:[%s1 + $0x370] sm:$0xff]
  %v269 = vld [vmem:[%s1 + $0x378] sm:$0xff]
  %v270 = vld [vmem:[%s1 + $0x380] sm:$0xff]
  %v271 = vld [vmem:[%s1 + $0x388] sm:$0xff]
  %v272 = vld [vmem:[%s1 + $0x390] sm:$0xff]
  %v273 = vld [vmem:[%s1 + $0x398] sm:$0xff]
  %v274 = vld [vmem:[%s1 + $0x3a0] sm:$0xff]
  %v275 = vld [vmem:[%s1 + $0x3a8] sm:$0xff]
  %v276 = vld [vmem:[%s1 + $0x3b0] sm:$0xff]
  %v277 = vld [vmem:[%s1 + $0x3b8] sm:$0xff]
  %v278 = vld [vmem:[%s1 + $0x3c0] sm:$0xff]
  %v279 = vld [vmem:[%s1 + $0x3c8] sm:$0xff]
  %v280 = vld [vmem:[%s1 + $0x3d0] sm:$0xff]
  %v281 = vld [vmem:[%s1 + $0x3d8] sm:$0xff]
  %v282 = vld [vmem:[%s1 + $0x3e0] sm:$0xff]
  %v283 = vld [vmem:[%s1 + $0x3e8] sm:$0xff]
  %v284 = vld [vmem:[%s1 + $0x3f0] sm:$0xff]
  %v285 = vld [vmem:[%s1 + $0x3f8] sm:$0xff]
  %v286 = vld [vmem:[%s1 + $0x400] sm:$0xff]
  %v287 = vld [vmem:[%s1 + $0x408] sm:$0xff]
  %v288 = vld [vmem:[%s1 + $0x410] sm:$0xff]
  %v289 = vld [vmem:[%s1 + $0x418] sm:$0xff]
  %v290 = vld [vmem:[%s1 + $0x420] sm:$0xff]
  %v291 = vld [vmem:[%s1 + $0x428] sm:$0xff]
  %v292 = vld [vmem:[%s1 + $0x430] sm:$0xff]
  %v293 = vld [vmem:[%s1 + $0x438] sm:$0xff]
  %v294 = vld [vmem:[%s1 + $0x440] sm:$0xff]
  %v295 = vld [vmem:[%s1 + $0x448] sm:$0xff]
  %v296 = vld [vmem:[%s1 + $0x450] sm:$0xff]
  %v297 = vld [vmem:[%s1 + $0x458] sm:$0xff]
  %v298 = vld [vmem:[%s1 + $0x460] sm:$0xff]
  %v299 = vld [vmem:[%s1 + $0x468] sm:$0xff]
  %v300 = vld [vmem:[%s1 + $0x470] sm:$0xff]
  %v301 = vld [vmem:[%s1 + $0x478] sm:$0xff]
  %v302 = vld [vmem:[%s2] sm:$0x1]
  %v304 = vlaneseq
  %v305 = vshrl.u32 %v304, 7
  %v306 = vsub.s32 0, %v305
  %v307 = vrot.slane %v302, %v306
  %309 = vmatprep.subr.mxu0 0.0
  %310 = vmatpush1.msra.mxu0 %v158
  %311 = vmatprep.subr.mxu0 0.0
  %312 = vmatpush1.msra.mxu0 %v159
  %313 = vmatprep.subr.mxu0 0.0
  %314 = vmatpush1.msra.mxu0 %v160
  %315 = vmatprep.subr.mxu0 0.0
  %316 = vmatpush1.msra.mxu0 %v161
  %317 = vmatprep.subr.mxu0 0.0
  %318 = vmatpush1.msra.mxu0 %v162
  %319 = vmatprep.subr.mxu0 0.0
  %320 = vmatpush1.msra.mxu0 %v163
  %321 = vmatprep.subr.mxu0 0.0
  %322 = vmatpush1.msra.mxu0 %v164
  %323 = vmatprep.subr.mxu0 0.0
  %324 = vmatpush1.msra.mxu0 %v165
  %325 = vmatprep.subr.mxu0 0.0
  %326 = vmatpush1.msra.mxu0 %v166
  %327 = vmatprep.subr.mxu0 0.0
  %328 = vmatpush1.msra.mxu0 %v167
  %329 = vmatprep.subr.mxu0 0.0
  %330 = vmatpush1.msra.mxu0 %v168
  %331 = vmatprep.subr.mxu0 0.0
  %332 = vmatpush1.msra.mxu0 %v169
  %333 = vmatprep.subr.mxu0 0.0
  %334 = vmatpush1.msra.mxu0 %v170
  %335 = vmatprep.subr.mxu0 0.0
  %336 = vmatpush1.msra.mxu0 %v171
  %337 = vmatprep.subr.mxu0 0.0
  %338 = vmatpush1.msra.mxu0 %v172
  %339 = vmatprep.subr.mxu0 0.0
  %340 = vmatpush1.msra.mxu0 %v173
  %341 = vmatprep.subr.mxu0 0.0
  %342 = vmatpush1.msra.mxu0 %v174
  %343 = vmatprep.subr.mxu0 0.0
  %344 = vmatpush1.msra.mxu0 %v175
  %345 = vmatprep.subr.mxu0 0.0
  %346 = vmatpush1.msra.mxu0 %v176
  %347 = vmatprep.subr.mxu0 0.0
  %348 = vmatpush1.msra.mxu0 %v177
  %349 = vmatprep.subr.mxu0 0.0
  %350 = vmatpush1.msra.mxu0 %v178
  %351 = vmatprep.subr.mxu0 0.0
  %352 = vmatpush1.msra.mxu0 %v179
  %353 = vmatprep.subr.mxu0 0.0
  %354 = vmatpush1.msra.mxu0 %v180
  %355 = vmatprep.subr.mxu0 0.0
  %356 = vmatpush1.msra.mxu0 %v181
  %357 = vmatprep.subr.mxu0 0.0
  %358 = vmatpush1.msra.mxu0 %v182
  %359 = vmatprep.subr.mxu0 0.0
  %360 = vmatpush1.msra.mxu0 %v183
  %361 = vmatprep.subr.mxu0 0.0
  %362 = vmatpush1.msra.mxu0 %v184
  %363 = vmatprep.subr.mxu0 0.0
  %364 = vmatpush1.msra.mxu0 %v185
  %365 = vmatprep.subr.mxu0 0.0
  %366 = vmatpush1.msra.mxu0 %v186
  %367 = vmatprep.subr.mxu0 0.0
  %368 = vmatpush1.msra.mxu0 %v187
  %369 = vmatprep.subr.mxu0 0.0
  %370 = vmatpush1.msra.mxu0 %v188
  %371 = vmatprep.subr.mxu0 0.0
  %372 = vmatpush1.msra.mxu0 %v189
  %373 = vmatprep.mubr.f32.mxu0 %v15
  %374 = vmatmul.mubr.f32.gmra.mrb[0].mxu0 %v14
  %v375 = vpop.f32.mrb[0].mxu0
  %v376 = vadd.f32 %v307, %v375
  %v377 = vpop.f32.mrb[0].mxu0
  %378 = vmatprep.mubr.f32.mxu0 %v24
  %379 = vmatmul.mubr.f32.gmra.mrb[0].mxu0 %v23
  %v380 = vpop.f32.mrb[0].mxu0
  %v381 = vadd.f32 %v307, %v380
  %v382 = vpop.f32.mrb[0].mxu0
  %383 = vmatprep.mubr.f32.mxu0 %v33
  %384 = vmatmul.mubr.f32.gmra.mrb[0].mxu0 %v32
  %v385 = vpop.f32.mrb[0].mxu0
  %v386 = vadd.f32 %v307, %v385
  %v387 = vpop.f32.mrb[0].mxu0
  %388 = vmatprep.mubr.f32.mxu0 %v42
  %389 = vmatmul.mubr.f32.gmra.mrb[0].mxu0 %v41
  %v390 = vpop.f32.mrb[0].mxu0
  %v391 = vadd.f32 %v307, %v390
  %v392 = vpop.f32.mrb[0].mxu0
  %393 = vmatprep.mubr.f32.mxu0 %v51
  %394 = vmatmul.mubr.f32.gmra.mrb[0].mxu0 %v50
  %v395 = vpop.f32.mrb[0].mxu0
  %v396 = vadd.f32 %v307, %v395
  %v397 = vpop.f32.mrb[0].mxu0
  %398 = vmatprep.mubr.f32.mxu0 %v60
  %399 = vmatmul.mubr.f32.gmra.mrb[0].mxu0 %v59
  %v400 = vpop.f32.mrb[0].mxu0
  %v401 = vadd.f32 %v307, %v400
  %v402 = vpop.f32.mrb[0].mxu0
  %403 = vmatprep.mubr.f32.mxu0 %v69
  %404 = vmatmul.mubr.f32.gmra.mrb[0].mxu0 %v68
  %v405 = vpop.f32.mrb[0].mxu0
  %v406 = vadd.f32 %v307, %v405
  %v407 = vpop.f32.mrb[0].mxu0
  %408 = vmatprep.mubr.f32.mxu0 %v78
  %409 = vmatmul.mubr.f32.gmra.mrb[0].mxu0 %v77
  %v410 = vpop.f32.mrb[0].mxu0
  %v411 = vadd.f32 %v307, %v410
  %v412 = vpop.f32.mrb[0].mxu0
  %413 = vmatprep.mubr.f32.mxu0 %v87
  %414 = vmatmul.mubr.f32.gmra.mrb[0].mxu0 %v86
  %v415 = vpop.f32.mrb[0].mxu0
  %v416 = vadd.f32 %v307, %v415
  %v417 = vpop.f32.mrb[0].mxu0
  %418 = vmatprep.mubr.f32.mxu0 %v96
  %419 = vmatmul.mubr.f32.gmra.mrb[0].mxu0 %v95
  %v420 = vpop.f32.mrb[0].mxu0
  %v421 = vadd.f32 %v307, %v420
  %v422 = vpop.f32.mrb[0].mxu0
  %423 = vmatprep.mubr.f32.mxu0 %v105
  %424 = vmatmul.mubr.f32.gmra.mrb[0].mxu0 %v104
  %v425 = vpop.f32.mrb[0].mxu0
  %v426 = vadd.f32 %v307, %v425
  %v427 = vpop.f32.mrb[0].mxu0
  %428 = vmatprep.mubr.f32.mxu0 %v114
  %429 = vmatmul.mubr.f32.gmra.mrb[0].mxu0 %v113
  %v430 = vpop.f32.mrb[0].mxu0
  %v431 = vadd.f32 %v307, %v430
  %v432 = vpop.f32.mrb[0].mxu0
  %433 = vmatprep.mubr.f32.mxu0 %v123
  %434 = vmatmul.mubr.f32.gmra.mrb[0].mxu0 %v122
  %v435 = vpop.f32.mrb[0].mxu0
  %v436 = vadd.f32 %v307, %v435
  %v437 = vpop.f32.mrb[0].mxu0
  %438 = vmatprep.mubr.f32.mxu0 %v132
  %439 = vmatmul.mubr.f32.gmra.mrb[0].mxu0 %v131
  %v440 = vpop.f32.mrb[0].mxu0
  %v441 = vadd.f32 %v307, %v440
  %v442 = vpop.f32.mrb[0].mxu0
  %443 = vmatprep.mubr.f32.mxu0 %v141
  %444 = vmatmul.mubr.f32.gmra.mrb[0].mxu0 %v140
  %v445 = vpop.f32.mrb[0].mxu0
  %v446 = vadd.f32 %v307, %v445
  %v447 = vpop.f32.mrb[0].mxu0
  %448 = vmatprep.mubr.f32.mxu0 %v150
  %449 = vmatmul.mubr.f32.gmra.mrb[0].mxu0 %v149
  %v450 = vpop.f32.mrb[0].mxu0
  %v451 = vadd.f32 %v307, %v450
  %v452 = vpop.f32.mrb[0].mxu0
  %453 = vdwg.mxu0
  %454 = vmatprep.subr.mxu0 0.0
  %455 = vmatpush1.msra.mxu0 %v190
  %456 = vmatprep.subr.mxu0 0.0
  %457 = vmatpush1.msra.mxu0 %v191
  %458 = vmatprep.subr.mxu0 0.0
  %459 = vmatpush1.msra.mxu0 %v192
  %460 = vmatprep.subr.mxu0 0.0
  %461 = vmatpush1.msra.mxu0 %v193
  %462 = vmatprep.subr.mxu0 0.0
  %463 = vmatpush1.msra.mxu0 %v194
  %464 = vmatprep.subr.mxu0 0.0
  %465 = vmatpush1.msra.mxu0 %v195
  %466 = vmatprep.subr.mxu0 0.0
  %467 = vmatpush1.msra.mxu0 %v196
  %468 = vmatprep.subr.mxu0 0.0
  %469 = vmatpush1.msra.mxu0 %v197
  %470 = vmatprep.subr.mxu0 0.0
  %471 = vmatpush1.msra.mxu0 %v198
  %472 = vmatprep.subr.mxu0 0.0
  %473 = vmatpush1.msra.mxu0 %v199
  %474 = vmatprep.subr.mxu0 0.0
  %475 = vmatpush1.msra.mxu0 %v200
  %476 = vmatprep.subr.mxu0 0.0
  %477 = vmatpush1.msra.mxu0 %v201
  %478 = vmatprep.subr.mxu0 0.0
  %479 = vmatpush1.msra.mxu0 %v202
  %480 = vmatprep.subr.mxu0 0.0
  %481 = vmatpush1.msra.mxu0 %v203
  %482 = vmatprep.subr.mxu0 0.0
  %483 = vmatpush1.msra.mxu0 %v204
  %484 = vmatprep.subr.mxu0 0.0
  %485 = vmatpush1.msra.mxu0 %v205
  %486 = vmatprep.subr.mxu0 0.0
  %487 = vmatpush1.msra.mxu0 %v206
  %488 = vmatprep.subr.mxu0 0.0
  %489 = vmatpush1.msra.mxu0 %v207
  %490 = vmatprep.subr.mxu0 0.0
  %491 = vmatpush1.msra.mxu0 %v208
  %492 = vmatprep.subr.mxu0 0.0
  %493 = vmatpush1.msra.mxu0 %v209
  %494 = vmatprep.subr.mxu0 0.0
  %495 = vmatpush1.msra.mxu0 %v210
  %496 = vmatprep.subr.mxu0 0.0
  %497 = vmatpush1.msra.mxu0 %v211
  %498 = vmatprep.subr.mxu0 0.0
  %499 = vmatpush1.msra.mxu0 %v212
  %500 = vmatprep.subr.mxu0 0.0
  %501 = vmatpush1.msra.mxu0 %v213
  %502 = vmatprep.subr.mxu0 0.0
  %503 = vmatpush1.msra.mxu0 %v214
  %504 = vmatprep.subr.mxu0 0.0
  %505 = vmatpush1.msra.mxu0 %v215
  %506 = vmatprep.subr.mxu0 0.0
  %507 = vmatpush1.msra.mxu0 %v216
  %508 = vmatprep.subr.mxu0 0.0
  %509 = vmatpush1.msra.mxu0 %v217
  %510 = vmatprep.subr.mxu0 0.0
  %511 = vmatpush1.msra.mxu0 %v218
  %512 = vmatprep.subr.mxu0 0.0
  %513 = vmatpush1.msra.mxu0 %v219
  %514 = vmatprep.subr.mxu0 0.0
  %515 = vmatpush1.msra.mxu0 %v220
  %516 = vmatprep.subr.mxu0 0.0
  %517 = vmatpush1.msra.mxu0 %v221
  %518 = vmatprep.mubr.f32.mxu0 %v17
  %519 = vmatmul.mubr.f32.gmra.mrb[0].mxu0 %v16
  %v520 = vpop.f32.mrb[0].mxu0
  %v521 = vadd.f32 %v376, %v520
  %v522 = vpop.f32.mrb[0].mxu0
  %523 = vmatprep.mubr.f32.mxu0 %v26
  %524 = vmatmul.mubr.f32.gmra.mrb[0].mxu0 %v25
  %v525 = vpop.f32.mrb[0].mxu0
  %v526 = vadd.f32 %v381, %v525
  %v527 = vpop.f32.mrb[0].mxu0
  %528 = vmatprep.mubr.f32.mxu0 %v35
  %529 = vmatmul.mubr.f32.gmra.mrb[0].mxu0 %v34
  %v530 = vpop.f32.mrb[0].mxu0
  %v531 = vadd.f32 %v386, %v530
  %v532 = vpop.f32.mrb[0].mxu0
  %533 = vmatprep.mubr.f32.mxu0 %v44
  %534 = vmatmul.mubr.f32.gmra.mrb[0].mxu0 %v43
  %v535 = vpop.f32.mrb[0].mxu0
  %v536 = vadd.f32 %v391, %v535
  %v537 = vpop.f32.mrb[0].mxu0
  %538 = vmatprep.mubr.f32.mxu0 %v53
  %539 = vmatmul.mubr.f32.gmra.mrb[0].mxu0 %v52
  %v540 = vpop.f32.mrb[0].mxu0
  %v541 = vadd.f32 %v396, %v540
  %v542 = vpop.f32.mrb[0].mxu0
  %543 = vmatprep.mubr.f32.mxu0 %v62
  %544 = vmatmul.mubr.f32.gmra.mrb[0].mxu0 %v61
  %v545 = vpop.f32.mrb[0].mxu0
  %v546 = vadd.f32 %v401, %v545
  %v547 = vpop.f32.mrb[0].mxu0
  %548 = vmatprep.mubr.f32.mxu0 %v71
  %549 = vmatmul.mubr.f32.gmra.mrb[0].mxu0 %v70
  %v550 = vpop.f32.mrb[0].mxu0
  %v551 = vadd.f32 %v406, %v550
  %v552 = vpop.f32.mrb[0].mxu0
  %553 = vmatprep.mubr.f32.mxu0 %v80
  %554 = vmatmul.mubr.f32.gmra.mrb[0].mxu0 %v79
  %v555 = vpop.f32.mrb[0].mxu0
  %v556 = vadd.f32 %v411, %v555
  %v557 = vpop.f32.mrb[0].mxu0
  %558 = vmatprep.mubr.f32.mxu0 %v89
  %559 = vmatmul.mubr.f32.gmra.mrb[0].mxu0 %v88
  %v560 = vpop.f32.mrb[0].mxu0
  %v561 = vadd.f32 %v416, %v560
  %v562 = vpop.f32.mrb[0].mxu0
  %563 = vmatprep.mubr.f32.mxu0 %v98
  %564 = vmatmul.mubr.f32.gmra.mrb[0].mxu0 %v97
  %v565 = vpop.f32.mrb[0].mxu0
  %v566 = vadd.f32 %v421, %v565
  %v567 = vpop.f32.mrb[0].mxu0
  %568 = vmatprep.mubr.f32.mxu0 %v107
  %569 = vmatmul.mubr.f32.gmra.mrb[0].mxu0 %v106
  %v570 = vpop.f32.mrb[0].mxu0
  %v571 = vadd.f32 %v426, %v570
  %v572 = vpop.f32.mrb[0].mxu0
  %573 = vmatprep.mubr.f32.mxu0 %v116
  %574 = vmatmul.mubr.f32.gmra.mrb[0].mxu0 %v115
  %v575 = vpop.f32.mrb[0].mxu0
  %v576 = vadd.f32 %v431, %v575
  %v577 = vpop.f32.mrb[0].mxu0
  %578 = vmatprep.mubr.f32.mxu0 %v125
  %579 = vmatmul.mubr.f32.gmra.mrb[0].mxu0 %v124
  %v580 = vpop.f32.mrb[0].mxu0
  %v581 = vadd.f32 %v436, %v580
  %v582 = vpop.f32.mrb[0].mxu0
  %583 = vmatprep.mubr.f32.mxu0 %v134
  %584 = vmatmul.mubr.f32.gmra.mrb[0].mxu0 %v133
  %v585 = vpop.f32.mrb[0].mxu0
  %v586 = vadd.f32 %v441, %v585
  %v587 = vpop.f32.mrb[0].mxu0
  %588 = vmatprep.mubr.f32.mxu0 %v143
  %589 = vmatmul.mubr.f32.gmra.mrb[0].mxu0 %v142
  %v590 = vpop.f32.mrb[0].mxu0
  %v591 = vadd.f32 %v446, %v590
  %v592 = vpop.f32.mrb[0].mxu0
  %593 = vmatprep.mubr.f32.mxu0 %v152
  %594 = vmatmul.mubr.f32.gmra.mrb[0].mxu0 %v151
  %v595 = vpop.f32.mrb[0].mxu0
  %v596 = vadd.f32 %v451, %v595
  %v597 = vpop.f32.mrb[0].mxu0
  %598 = vdwg.mxu0
  %599 = vmatprep.subr.mxu0 0.0
  %600 = vmatpush1.msra.mxu0 %v222
  %601 = vmatprep.subr.mxu0 0.0
  %602 = vmatpush1.msra.mxu0 %v223
  %603 = vmatprep.subr.mxu0 0.0
  %604 = vmatpush1.msra.mxu0 %v224
  %605 = vmatprep.subr.mxu0 0.0
  %606 = vmatpush1.msra.mxu0 %v225
  %607 = vmatprep.subr.mxu0 0.0
  %608 = vmatpush1.msra.mxu0 %v226
  %609 = vmatprep.subr.mxu0 0.0
  %610 = vmatpush1.msra.mxu0 %v227
  %611 = vmatprep.subr.mxu0 0.0
  %612 = vmatpush1.msra.mxu0 %v228
  %613 = vmatprep.subr.mxu0 0.0
  %614 = vmatpush1.msra.mxu0 %v229
  %615 = vmatprep.subr.mxu0 0.0
  %616 = vmatpush1.msra.mxu0 %v230
  %617 = vmatprep.subr.mxu0 0.0
  %618 = vmatpush1.msra.mxu0 %v231
  %619 = vmatprep.subr.mxu0 0.0
  %620 = vmatpush1.msra.mxu0 %v232
  %621 = vmatprep.subr.mxu0 0.0
  %622 = vmatpush1.msra.mxu0 %v233
  %623 = vmatprep.subr.mxu0 0.0
  %624 = vmatpush1.msra.mxu0 %v234
  %625 = vmatprep.subr.mxu0 0.0
  %626 = vmatpush1.msra.mxu0 %v235
  %627 = vmatprep.subr.mxu0 0.0
  %628 = vmatpush1.msra.mxu0 %v236
  %629 = vmatprep.subr.mxu0 0.0
  %630 = vmatpush1.msra.mxu0 %v237
  %631 = vmatprep.subr.mxu0 0.0
  %632 = vmatpush1.msra.mxu0 %v238
  %633 = vmatprep.subr.mxu0 0.0
  %634 = vmatpush1.msra.mxu0 %v239
  %635 = vmatprep.subr.mxu0 0.0
  %636 = vmatpush1.msra.mxu0 %v240
  %637 = vmatprep.subr.mxu0 0.0
  %638 = vmatpush1.msra.mxu0 %v241
  %639 = vmatprep.subr.mxu0 0.0
  %640 = vmatpush1.msra.mxu0 %v242
  %641 = vmatprep.subr.mxu0 0.0
  %642 = vmatpush1.msra.mxu0 %v243
  %643 = vmatprep.subr.mxu0 0.0
  %644 = vmatpush1.msra.mxu0 %v244
  %645 = vmatprep.subr.mxu0 0.0
  %646 = vmatpush1.msra.mxu0 %v245
  %647 = vmatprep.subr.mxu0 0.0
  %648 = vmatpush1.msra.mxu0 %v246
  %649 = vmatprep.subr.mxu0 0.0
  %650 = vmatpush1.msra.mxu0 %v247
  %651 = vmatprep.subr.mxu0 0.0
  %652 = vmatpush1.msra.mxu0 %v248
  %653 = vmatprep.subr.mxu0 0.0
  %654 = vmatpush1.msra.mxu0 %v249
  %655 = vmatprep.subr.mxu0 0.0
  %656 = vmatpush1.msra.mxu0 %v250
  %657 = vmatprep.subr.mxu0 0.0
  %658 = vmatpush1.msra.mxu0 %v251
  %659 = vmatprep.subr.mxu0 0.0
  %660 = vmatpush1.msra.mxu0 %v252
  %661 = vmatprep.subr.mxu0 0.0
  %662 = vmatpush1.msra.mxu0 %v253
  %663 = vmatprep.mubr.f32.mxu0 %v19
  %664 = vmatmul.mubr.f32.gmra.mrb[0].mxu0 %v18
  %v665 = vpop.f32.mrb[0].mxu0
  %v666 = vadd.f32 %v521, %v665
  %v667 = vpop.f32.mrb[0].mxu0
  %668 = vmatprep.mubr.f32.mxu0 %v28
  %669 = vmatmul.mubr.f32.gmra.mrb[0].mxu0 %v27
  %v670 = vpop.f32.mrb[0].mxu0
  %v671 = vadd.f32 %v526, %v670
  %v672 = vpop.f32.mrb[0].mxu0
  %673 = vmatprep.mubr.f32.mxu0 %v37
  %674 = vmatmul.mubr.f32.gmra.mrb[0].mxu0 %v36
  %v675 = vpop.f32.mrb[0].mxu0
  %v676 = vadd.f32 %v531, %v675
  %v677 = vpop.f32.mrb[0].mxu0
  %678 = vmatprep.mubr.f32.mxu0 %v46
  %679 = vmatmul.mubr.f32.gmra.mrb[0].mxu0 %v45
  %v680 = vpop.f32.mrb[0].mxu0
  %v681 = vadd.f32 %v536, %v680
  %v682 = vpop.f32.mrb[0].mxu0
  %683 = vmatprep.mubr.f32.mxu0 %v55
  %684 = vmatmul.mubr.f32.gmra.mrb[0].mxu0 %v54
  %v685 = vpop.f32.mrb[0].mxu0
  %v686 = vadd.f32 %v541, %v685
  %v687 = vpop.f32.mrb[0].mxu0
  %688 = vmatprep.mubr.f32.mxu0 %v64
  %689 = vmatmul.mubr.f32.gmra.mrb[0].mxu0 %v63
  %v690 = vpop.f32.mrb[0].mxu0
  %v691 = vadd.f32 %v546, %v690
  %v692 = vpop.f32.mrb[0].mxu0
  %693 = vmatprep.mubr.f32.mxu0 %v73
  %694 = vmatmul.mubr.f32.gmra.mrb[0].mxu0 %v72
  %v695 = vpop.f32.mrb[0].mxu0
  %v696 = vadd.f32 %v551, %v695
  %v697 = vpop.f32.mrb[0].mxu0
  %698 = vmatprep.mubr.f32.mxu0 %v82
  %699 = vmatmul.mubr.f32.gmra.mrb[0].mxu0 %v81
  %v700 = vpop.f32.mrb[0].mxu0
  %v701 = vadd.f32 %v556, %v700
  %v702 = vpop.f32.mrb[0].mxu0
  %703 = vmatprep.mubr.f32.mxu0 %v91
  %704 = vmatmul.mubr.f32.gmra.mrb[0].mxu0 %v90
  %v705 = vpop.f32.mrb[0].mxu0
  %v706 = vadd.f32 %v561, %v705
  %v707 = vpop.f32.mrb[0].mxu0
  %708 = vmatprep.mubr.f32.mxu0 %v100
  %709 = vmatmul.mubr.f32.gmra.mrb[0].mxu0 %v99
  %v710 = vpop.f32.mrb[0].mxu0
  %v711 = vadd.f32 %v566, %v710
  %v712 = vpop.f32.mrb[0].mxu0
  %713 = vmatprep.mubr.f32.mxu0 %v109
  %714 = vmatmul.mubr.f32.gmra.mrb[0].mxu0 %v108
  %v715 = vpop.f32.mrb[0].mxu0
  %v716 = vadd.f32 %v571, %v715
  %v717 = vpop.f32.mrb[0].mxu0
  %718 = vmatprep.mubr.f32.mxu0 %v118
  %719 = vmatmul.mubr.f32.gmra.mrb[0].mxu0 %v117
  %v720 = vpop.f32.mrb[0].mxu0
  %v721 = vadd.f32 %v576, %v720
  %v722 = vpop.f32.mrb[0].mxu0
  %723 = vmatprep.mubr.f32.mxu0 %v127
  %724 = vmatmul.mubr.f32.gmra.mrb[0].mxu0 %v126
  %v725 = vpop.f32.mrb[0].mxu0
  %v726 = vadd.f32 %v581, %v725
  %v727 = vpop.f32.mrb[0].mxu0
  %728 = vmatprep.mubr.f32.mxu0 %v136
  %729 = vmatmul.mubr.f32.gmra.mrb[0].mxu0 %v135
  %v730 = vpop.f32.mrb[0].mxu0
  %v731 = vadd.f32 %v586, %v730
  %v732 = vpop.f32.mrb[0].mxu0
  %733 = vmatprep.mubr.f32.mxu0 %v145
  %734 = vmatmul.mubr.f32.gmra.mrb[0].mxu0 %v144
  %v735 = vpop.f32.mrb[0].mxu0
  %v736 = vadd.f32 %v591, %v735
  %v737 = vpop.f32.mrb[0].mxu0
  %738 = vmatprep.mubr.f32.mxu0 %v154
  %739 = vmatmul.mubr.f32.gmra.mrb[0].mxu0 %v153
  %v740 = vpop.f32.mrb[0].mxu0
  %v741 = vadd.f32 %v596, %v740
  %v742 = vpop.f32.mrb[0].mxu0
  %743 = vdwg.mxu0
  %744 = vmatprep.subr.mxu0 0.0
  %745 = vmatpush1.msra.mxu0 %v254
  %746 = vmatprep.subr.mxu0 0.0
  %747 = vmatpush1.msra.mxu0 %v255
  %748 = vmatprep.subr.mxu0 0.0
  %749 = vmatpush1.msra.mxu0 %v256
  %750 = vmatprep.subr.mxu0 0.0
  %751 = vmatpush1.msra.mxu0 %v257
  %752 = vmatprep.subr.mxu0 0.0
  %753 = vmatpush1.msra.mxu0 %v258
  %754 = vmatprep.subr.mxu0 0.0
  %755 = vmatpush1.msra.mxu0 %v259
  %756 = vmatprep.subr.mxu0 0.0
  %757 = vmatpush1.msra.mxu0 %v260
  %758 = vmatprep.subr.mxu0 0.0
  %759 = vmatpush1.msra.mxu0 %v261
  %760 = vmatprep.subr.mxu0 0.0
  %761 = vmatpush1.msra.mxu0 %v262
  %762 = vmatprep.subr.mxu0 0.0
  %763 = vmatpush1.msra.mxu0 %v263
  %764 = vmatprep.subr.mxu0 0.0
  %765 = vmatpush1.msra.mxu0 %v264
  %766 = vmatprep.subr.mxu0 0.0
  %767 = vmatpush1.msra.mxu0 %v265
  %768 = vmatprep.subr.mxu0 0.0
  %769 = vmatpush1.msra.mxu0 %v266
  %770 = vmatprep.subr.mxu0 0.0
  %771 = vmatpush1.msra.mxu0 %v267
  %772 = vmatprep.subr.mxu0 0.0
  %773 = vmatpush1.msra.mxu0 %v268
  %774 = vmatprep.subr.mxu0 0.0
  %775 = vmatpush1.msra.mxu0 %v269
  %776 = vmatprep.subr.mxu0 0.0
  %777 = vmatpush1.msra.mxu0 %v270
  %778 = vmatprep.subr.mxu0 0.0
  %779 = vmatpush1.msra.mxu0 %v271
  %780 = vmatprep.subr.mxu0 0.0
  %781 = vmatpush1.msra.mxu0 %v272
  %782 = vmatprep.subr.mxu0 0.0
  %783 = vmatpush1.msra.mxu0 %v273
  %784 = vmatprep.subr.mxu0 0.0
  %785 = vmatpush1.msra.mxu0 %v274
  %786 = vmatprep.subr.mxu0 0.0
  %787 = vmatpush1.msra.mxu0 %v275
  %788 = vmatprep.subr.mxu0 0.0
  %789 = vmatpush1.msra.mxu0 %v276
  %790 = vmatprep.subr.mxu0 0.0
  %791 = vmatpush1.msra.mxu0 %v277
  %792 = vmatprep.subr.mxu0 0.0
  %793 = vmatpush1.msra.mxu0 %v278
  %794 = vmatprep.subr.mxu0 0.0
  %795 = vmatpush1.msra.mxu0 %v279
  %796 = vmatprep.subr.mxu0 0.0
  %797 = vmatpush1.msra.mxu0 %v280
  %798 = vmatprep.subr.mxu0 0.0
  %799 = vmatpush1.msra.mxu0 %v281
  %800 = vmatprep.subr.mxu0 0.0
  %801 = vmatpush1.msra.mxu0 %v282
  %802 = vmatprep.subr.mxu0 0.0
  %803 = vmatpush1.msra.mxu0 %v283
  %804 = vmatprep.subr.mxu0 0.0
  %805 = vmatpush1.msra.mxu0 %v284
  %806 = vmatprep.subr.mxu0 0.0
  %807 = vmatpush1.msra.mxu0 %v285
  %808 = vmatprep.mubr.f32.mxu0 %v21
  %809 = vmatmul.mubr.f32.gmra.mrb[0].mxu0 %v20
  %v810 = vpop.f32.mrb[0].mxu0
  %v811 = vadd.f32 %v666, %v810
  %v812 = vpop.f32.mrb[0].mxu0
  %813 = vmatprep.mubr.f32.mxu0 %v30
  %814 = vmatmul.mubr.f32.gmra.mrb[0].mxu0 %v29
  %v815 = vpop.f32.mrb[0].mxu0
  %v816 = vadd.f32 %v671, %v815
  %v817 = vpop.f32.mrb[0].mxu0
  %818 = vmatprep.mubr.f32.mxu0 %v39
  %819 = vmatmul.mubr.f32.gmra.mrb[0].mxu0 %v38
  %v820 = vpop.f32.mrb[0].mxu0
  %v821 = vadd.f32 %v676, %v820
  %v822 = vpop.f32.mrb[0].mxu0
  %823 = vmatprep.mubr.f32.mxu0 %v48
  %824 = vmatmul.mubr.f32.gmra.mrb[0].mxu0 %v47
  %v825 = vpop.f32.mrb[0].mxu0
  %v826 = vadd.f32 %v681, %v825
  %v827 = vpop.f32.mrb[0].mxu0
  %828 = vmatprep.mubr.f32.mxu0 %v57
  %829 = vmatmul.mubr.f32.gmra.mrb[0].mxu0 %v56
  %v830 = vpop.f32.mrb[0].mxu0
  %v831 = vadd.f32 %v686, %v830
  %v832 = vpop.f32.mrb[0].mxu0
  %833 = vmatprep.mubr.f32.mxu0 %v66
  %834 = vmatmul.mubr.f32.gmra.mrb[0].mxu0 %v65
  %v835 = vpop.f32.mrb[0].mxu0
  %v836 = vadd.f32 %v691, %v835
  %v837 = vpop.f32.mrb[0].mxu0
  %838 = vmatprep.mubr.f32.mxu0 %v75
  %839 = vmatmul.mubr.f32.gmra.mrb[0].mxu0 %v74
  %v840 = vpop.f32.mrb[0].mxu0
  %v841 = vadd.f32 %v696, %v840
  %v842 = vpop.f32.mrb[0].mxu0
  %843 = vmatprep.mubr.f32.mxu0 %v84
  %844 = vmatmul.mubr.f32.gmra.mrb[0].mxu0 %v83
  %v845 = vpop.f32.mrb[0].mxu0
  %v846 = vadd.f32 %v701, %v845
  %v847 = vpop.f32.mrb[0].mxu0
  %848 = vmatprep.mubr.f32.mxu0 %v93
  %849 = vmatmul.mubr.f32.gmra.mrb[0].mxu0 %v92
  %v850 = vpop.f32.mrb[0].mxu0
  %v851 = vadd.f32 %v706, %v850
  %v852 = vpop.f32.mrb[0].mxu0
  %853 = vmatprep.mubr.f32.mxu0 %v102
  %854 = vmatmul.mubr.f32.gmra.mrb[0].mxu0 %v101
  %v855 = vpop.f32.mrb[0].mxu0
  %v856 = vadd.f32 %v711, %v855
  %v857 = vpop.f32.mrb[0].mxu0
  %858 = vmatprep.mubr.f32.mxu0 %v111
  %859 = vmatmul.mubr.f32.gmra.mrb[0].mxu0 %v110
  %v860 = vpop.f32.mrb[0].mxu0
  %v861 = vadd.f32 %v716, %v860
  %v862 = vpop.f32.mrb[0].mxu0
  %863 = vmatprep.mubr.f32.mxu0 %v120
  %864 = vmatmul.mubr.f32.gmra.mrb[0].mxu0 %v119
  %v865 = vpop.f32.mrb[0].mxu0
  %v866 = vadd.f32 %v721, %v865
  %v867 = vpop.f32.mrb[0].mxu0
  %868 = vmatprep.mubr.f32.mxu0 %v129
  %869 = vmatmul.mubr.f32.gmra.mrb[0].mxu0 %v128
  %v870 = vpop.f32.mrb[0].mxu0
  %v871 = vadd.f32 %v726, %v870
  %v872 = vpop.f32.mrb[0].mxu0
  %873 = vmatprep.mubr.f32.mxu0 %v138
  %874 = vmatmul.mubr.f32.gmra.mrb[0].mxu0 %v137
  %v875 = vpop.f32.mrb[0].mxu0
  %v876 = vadd.f32 %v731, %v875
  %v877 = vpop.f32.mrb[0].mxu0
  %878 = vmatprep.mubr.f32.mxu0 %v147
  %879 = vmatmul.mubr.f32.gmra.mrb[0].mxu0 %v146
  %v880 = vpop.f32.mrb[0].mxu0
  %v881 = vadd.f32 %v736, %v880
  %v882 = vpop.f32.mrb[0].mxu0
  %883 = vmatprep.mubr.f32.mxu0 %v156
  %884 = vmatmul.mubr.f32.gmra.mrb[0].mxu0 %v155
  %v885 = vpop.f32.mrb[0].mxu0
  %v886 = vadd.f32 %v741, %v885
  %v887 = vpop.f32.mrb[0].mxu0
  %888 = vdwg.mxu0
  %889 = vmatprep.subr.mxu0 0.0
  %890 = vmatpush1.msra.mxu0 %v286
  %891 = vmatprep.subr.mxu0 0.0
  %892 = vmatpush1.msra.mxu0 %v287
  %893 = vmatprep.subr.mxu0 0.0
  %894 = vmatpush1.msra.mxu0 %v288
  %895 = vmatprep.subr.mxu0 0.0
  %896 = vmatpush1.msra.mxu0 %v289
  %897 = vmatprep.subr.mxu0 0.0
  %898 = vmatpush1.msra.mxu0 %v290
  %899 = vmatprep.subr.mxu0 0.0
  %900 = vmatpush1.msra.mxu0 %v291
  %901 = vmatprep.subr.mxu0 0.0
  %902 = vmatpush1.msra.mxu0 %v292
  %903 = vmatprep.subr.mxu0 0.0
  %904 = vmatpush1.msra.mxu0 %v293
  %905 = vmatprep.subr.mxu0 0.0
  %906 = vmatpush1.msra.mxu0 %v294
  %907 = vmatprep.subr.mxu0 0.0
  %908 = vmatpush1.msra.mxu0 %v295
  %909 = vmatprep.subr.mxu0 0.0
  %910 = vmatpush1.msra.mxu0 %v296
  %911 = vmatprep.subr.mxu0 0.0
  %912 = vmatpush1.msra.mxu0 %v297
  %913 = vmatprep.subr.mxu0 0.0
  %914 = vmatpush1.msra.mxu0 %v298
  %915 = vmatprep.subr.mxu0 0.0
  %916 = vmatpush1.msra.mxu0 %v299
  %917 = vmatprep.subr.mxu0 0.0
  %918 = vmatpush1.msra.mxu0 %v300
  %919 = vmatprep.subr.mxu0 0.0
  %920 = vmatpush1.msra.mxu0 %v301
  %921 = vmatprep.subr.mxu0 0.0
  %922 = vmatpush1.msra.mxu0 0.0
  %923 = vmatprep.subr.mxu0 0.0
  %924 = vmatpush1.msra.mxu0 0.0
  %925 = vmatprep.subr.mxu0 0.0
  %926 = vmatpush1.msra.mxu0 0.0
  %927 = vmatprep.subr.mxu0 0.0
  %928 = vmatpush1.msra.mxu0 0.0
  %929 = vmatprep.subr.mxu0 0.0
  %930 = vmatpush1.msra.mxu0 0.0
  %931 = vmatprep.subr.mxu0 0.0
  %932 = vmatpush1.msra.mxu0 0.0
  %933 = vmatprep.subr.mxu0 0.0
  %934 = vmatpush1.msra.mxu0 0.0
  %935 = vmatprep.subr.mxu0 0.0
  %936 = vmatpush1.msra.mxu0 0.0
  %937 = vmatprep.subr.mxu0 0.0
  %938 = vmatpush1.msra.mxu0 0.0
  %939 = vmatprep.subr.mxu0 0.0
  %940 = vmatpush1.msra.mxu0 0.0
  %941 = vmatprep.subr.mxu0 0.0
  %942 = vmatpush1.msra.mxu0 0.0
  %943 = vmatprep.subr.mxu0 0.0
  %944 = vmatpush1.msra.mxu0 0.0
  %945 = vmatprep.subr.mxu0 0.0
  %946 = vmatpush1.msra.mxu0 0.0
  %947 = vmatprep.subr.mxu0 0.0
  %948 = vmatpush1.msra.mxu0 0.0
  %949 = vmatprep.subr.mxu0 0.0
  %950 = vmatpush1.msra.mxu0 0.0
  %951 = vmatprep.subr.mxu0 0.0
  %952 = vmatpush1.msra.mxu0 0.0
  %953 = vmatprep.mubr.f32.mxu0 0.0
  %954 = vmatmul.mubr.f32.gmra.mrb[0].mxu0 %v22
  %v955 = vpop.f32.mrb[0].mxu0
  %v956 = vadd.f32 %v811, %v955
  %v957 = vpop.f32.mrb[0].mxu0
  %958 = vmatprep.mubr.f32.mxu0 0.0
  %959 = vmatmul.mubr.f32.gmra.mrb[0].mxu0 %v31
  %v960 = vpop.f32.mrb[0].mxu0
  %v961 = vadd.f32 %v816, %v960
  %v962 = vpop.f32.mrb[0].mxu0
  %963 = vmatprep.mubr.f32.mxu0 0.0
  %964 = vmatmul.mubr.f32.gmra.mrb[0].mxu0 %v40
  %v965 = vpop.f32.mrb[0].mxu0
  %v966 = vadd.f32 %v821, %v965
  %v967 = vpop.f32.mrb[0].mxu0
  %968 = vmatprep.mubr.f32.mxu0 0.0
  %969 = vmatmul.mubr.f32.gmra.mrb[0].mxu0 %v49
  %v970 = vpop.f32.mrb[0].mxu0
  %v971 = vadd.f32 %v826, %v970
  %v972 = vpop.f32.mrb[0].mxu0
  %973 = vmatprep.mubr.f32.mxu0 0.0
  %974 = vmatmul.mubr.f32.gmra.mrb[0].mxu0 %v58
  %v975 = vpop.f32.mrb[0].mxu0
  %v976 = vadd.f32 %v831, %v975
  %v977 = vpop.f32.mrb[0].mxu0
  %978 = vmatprep.mubr.f32.mxu0 0.0
  %979 = vmatmul.mubr.f32.gmra.mrb[0].mxu0 %v67
  %v980 = vpop.f32.mrb[0].mxu0
  %v981 = vadd.f32 %v836, %v980
  %v982 = vpop.f32.mrb[0].mxu0
  %983 = vmatprep.mubr.f32.mxu0 0.0
  %984 = vmatmul.mubr.f32.gmra.mrb[0].mxu0 %v76
  %v985 = vpop.f32.mrb[0].mxu0
  %v986 = vadd.f32 %v841, %v985
  %v987 = vpop.f32.mrb[0].mxu0
  %988 = vmatprep.mubr.f32.mxu0 0.0
  %989 = vmatmul.mubr.f32.gmra.mrb[0].mxu0 %v85
  %v990 = vpop.f32.mrb[0].mxu0
  %v991 = vadd.f32 %v846, %v990
  %v992 = vpop.f32.mrb[0].mxu0
  %993 = vmatprep.mubr.f32.mxu0 0.0
  %994 = vmatmul.mubr.f32.gmra.mrb[0].mxu0 %v94
  %v995 = vpop.f32.mrb[0].mxu0
  %v996 = vadd.f32 %v851, %v995
  %v997 = vpop.f32.mrb[0].mxu0
  %998 = vmatprep.mubr.f32.mxu0 0.0
  %999 = vmatmul.mubr.f32.gmra.mrb[0].mxu0 %v103
  %v1000 = vpop.f32.mrb[0].mxu0
  %v1001 = vadd.f32 %v856, %v1000
  %v1002 = vpop.f32.mrb[0].mxu0
  %1003 = vmatprep.mubr.f32.mxu0 0.0
  %1004 = vmatmul.mubr.f32.gmra.mrb[0].mxu0 %v112
  %v1005 = vpop.f32.mrb[0].mxu0
  %v1006 = vadd.f32 %v861, %v1005
  %v1007 = vpop.f32.mrb[0].mxu0
  %1008 = vmatprep.mubr.f32.mxu0 0.0
  %1009 = vmatmul.mubr.f32.gmra.mrb[0].mxu0 %v121
  %v1010 = vpop.f32.mrb[0].mxu0
  %v1011 = vadd.f32 %v866, %v1010
  %v1012 = vpop.f32.mrb[0].mxu0
  %1013 = vmatprep.mubr.f32.mxu0 0.0
  %1014 = vmatmul.mubr.f32.gmra.mrb[0].mxu0 %v130
  %v1015 = vpop.f32.mrb[0].mxu0
  %v1016 = vadd.f32 %v871, %v1015
  %v1017 = vpop.f32.mrb[0].mxu0
  %1018 = vmatprep.mubr.f32.mxu0 0.0
  %1019 = vmatmul.mubr.f32.gmra.mrb[0].mxu0 %v139
  %v1020 = vpop.f32.mrb[0].mxu0
  %v1021 = vadd.f32 %v876, %v1020
  %v1022 = vpop.f32.mrb[0].mxu0
  %1023 = vmatprep.mubr.f32.mxu0 0.0
  %1024 = vmatmul.mubr.f32.gmra.mrb[0].mxu0 %v148
  %v1025 = vpop.f32.mrb[0].mxu0
  %v1026 = vadd.f32 %v881, %v1025
  %v1027 = vpop.f32.mrb[0].mxu0
  %1028 = vmatprep.mubr.f32.mxu0 0.0
  %1029 = vmatmul.mubr.f32.gmra.mrb[0].mxu0 %v157
  %v1030 = vpop.f32.mrb[0].mxu0
  %v1031 = vadd.f32 %v886, %v1030
  %v1032 = vpop.f32.mrb[0].mxu0
  %1033 = vdwg.mxu0
  %v1034 = vmax.f32 %v956, 0.0
  %v1035 = vmax.f32 %v961, 0.0
  %v1036 = vmax.f32 %v966, 0.0
  %v1037 = vmax.f32 %v971, 0.0
  %v1038 = vmax.f32 %v976, 0.0
  %v1039 = vmax.f32 %v981, 0.0
  %v1040 = vmax.f32 %v986, 0.0
  %v1041 = vmax.f32 %v991, 0.0
  %v1042 = vmax.f32 %v996, 0.0
  %v1043 = vmax.f32 %v1001, 0.0
  %v1044 = vmax.f32 %v1006, 0.0
  %v1045 = vmax.f32 %v1011, 0.0
  %v1046 = vmax.f32 %v1016, 0.0
  %v1047 = vmax.f32 %v1021, 0.0
  %v1048 = vmax.f32 %v1026, 0.0
  %v1049 = vmax.f32 %v1031, 0.0
  %1050 = vst [vmem:[%s3] sm:$0xff] %v1034
  %1051 = vst [vmem:[%s3 + $0x8] sm:$0xff] %v1035
  %1052 = vst [vmem:[%s3 + $0x10] sm:$0xff] %v1036
  %1053 = vst [vmem:[%s3 + $0x18] sm:$0xff] %v1037
  %1054 = vst [vmem:[%s3 + $0x20] sm:$0xff] %v1038
  %1055 = vst [vmem:[%s3 + $0x28] sm:$0xff] %v1039
  %1056 = vst [vmem:[%s3 + $0x30] sm:$0xff] %v1040
  %1057 = vst [vmem:[%s3 + $0x38] sm:$0xff] %v1041
  %1058 = vst [vmem:[%s3 + $0x40] sm:$0xff] %v1042
  %1059 = vst [vmem:[%s3 + $0x48] sm:$0xff] %v1043
  %1060 = vst [vmem:[%s3 + $0x50] sm:$0xff] %v1044
  %1061 = vst [vmem:[%s3 + $0x58] sm:$0xff] %v1045
  %1062 = vst [vmem:[%s3 + $0x60] sm:$0xff] %v1046
  %1063 = vst [vmem:[%s3 + $0x68] sm:$0xff] %v1047
  %1064 = vst [vmem:[%s3 + $0x70] sm:$0xff] %v1048
  %1065 = vst [vmem:[%s3 + $0x78] sm:$0xff] %v1049
  // Predicated region
  $region14: #{_coop_forward_impl.7} parent=0 // pred_check
    _
  $region15: #{_coop_forward_impl.7} parent=0 // pred_check_branch
    %1067 = sbr.rel (0) target = $region17
  $region16: #{_coop_forward_impl.7} parent=0 // pred_region
    _
  $region17: #{_coop_forward_impl.7} parent=0 // pred_fallthru
    _
  // Predicated region
  $region18: #{_coop_forward_impl.7} parent=0 // pred_check
    _
  $region19: #{_coop_forward_impl.7} parent=0 // pred_check_branch
    %1069 = sbr.rel (0) target = $region21
  $region20: #{_coop_forward_impl.7} parent=0 // pred_region
    _
  $region21: #{_coop_forward_impl.7} parent=0 // pred_fallthru
    _

// kernel: _coop_forward_impl.8
$region0: #{_coop_forward_impl.8}
  #allocation0 [shape = 'u32[]', space=smem, size = 0x4, offset = 0x4, fixed_abs, tag = 'smem constant byte address 0x4 - core index']
  #allocation1 [shape = 'u32[144,128]{1,0:T(1,128)}', space=vmem, size = 0x12000, scoped, tag = 'internal scratch']
  %s0 = inlined_call_operand.vmem [shape: f32[512,1152], index: 0, kind: input, shape index: {}]
  %s1 = inlined_call_operand.vmem [shape: f32[1152,128], index: 1, kind: input, shape index: {}]
  %s2 = inlined_call_operand.vmem [shape: f32[1,128], index: 2, kind: input, shape index: {}]
  %s3 = inlined_call_operand.vmem [shape: f32[512,128], index: 3, kind: output, shape index: {}]
  %s4 = sld [smem:[#allocation0]]
  $region45: #{_coop_forward_impl.8} parent=0
    _
  %s6 = ssub.s32 1, %s4
  %s7 = scalar_select 0, %s6, %s4
  loop: start=0, step=1, limit=4
  $region2: #{_coop_forward_impl.8} parent=0 // loop_pre_header
    _
  $region3: #{_coop_forward_impl.8} parent=0 // loop_header
    %s9 = sphi 0, %s13
    %p10 = scmp.ge.s32.totalorder %s9, 4
    %s19 = sphi 0, %s21
    %s22 = sphi 0, %s19
    %s23 = sphi 0, %s22
    %s39 = sphi 0, %s23
    %s43 = sphi 0, %s43
    %s45 = sphi 0, %s43
    %s46 = sphi 0, %s45
    %s60 = sphi 0, %s46
    %s64 = sphi 0, %s64
    %s66 = sphi 0, %s64
    %s67 = sphi 0, %s66
    %s81 = sphi 0, %s67
    %s87 = sphi 0, %s89
    %s90 = sphi 0, %s87
    %s91 = sphi 0, %s90
    %s107 = sphi 0, %s91
  $region4: #{_coop_forward_impl.8} parent=0 // loop_header_branch
    %12 = sbr.rel (%p10) target = $region8
  $region5: #{_coop_forward_impl.8} parent=0 // loop_body
    %s14 = ssub.s32 %s9, 1
    %s15 = ssub.s32 %s9, 2
    %s16 = sadd.s32 %s9, 1
    %s17 = ssub.s32 %s9, %s16
    %p18 = scmp.eq.s32.totalorder %s17, 0
    %s20 = sadd.s32 %s19, 1
    %s21 = scalar_select %p18, %s19, %s20
    %p24 = pneg %p18
    %p25 = scmp.eq.s32.totalorder %s9, 1
    %p26 = por %p24, %p25
    %p27 = scmp.ne.s32.totalorder %s19, %s22
    %p28 = scmp.eq.s32.totalorder %s9, 0
    %p29 = por %p27, %p28
    %p30 = scmp.ne.s32.totalorder %s19, %s22
    %p31 = scmp.eq.s32.totalorder %s14, 1
    %p32 = por %p30, %p31
    %p33 = scmp.ne.s32.totalorder %s22, %s23
    %p34 = scmp.eq.s32.totalorder %s14, 0
    %p35 = por %p33, %p34
    %p36 = scmp.ne.s32.totalorder %s22, %s23
    %p37 = scmp.eq.s32.totalorder %s15, 1
    %p38 = por %p36, %p37
    %p40 = scmp.ne.s32.totalorder %s23, %s39
    %p41 = scmp.eq.s32.totalorder %s15, 0
    %p42 = por %p40, %p41
    %s44 = sadd.s32 %s43, 1
    %p47 = scmp.eq.s32.totalorder %s9, 1
    %p48 = scmp.ne.s32.totalorder %s43, %s45
    %p49 = scmp.eq.s32.totalorder %s9, 0
    %p50 = por %p48, %p49
    %p51 = scmp.ne.s32.totalorder %s43, %s45
    %p52 = scmp.eq.s32.totalorder %s14, 1
    %p53 = por %p51, %p52
    %p54 = scmp.ne.s32.totalorder %s45, %s46
    %p55 = scmp.eq.s32.totalorder %s14, 0
    %p56 = por %p54, %p55
    %p57 = scmp.ne.s32.totalorder %s45, %s46
    %p58 = scmp.eq.s32.totalorder %s15, 1
    %p59 = por %p57, %p58
    %p61 = scmp.ne.s32.totalorder %s46, %s60
    %p62 = scmp.eq.s32.totalorder %s15, 0
    %p63 = por %p61, %p62
    %s65 = sadd.s32 %s64, 1
    %p68 = scmp.eq.s32.totalorder %s9, 1
    %p69 = scmp.ne.s32.totalorder %s64, %s66
    %p70 = scmp.eq.s32.totalorder %s9, 0
    %p71 = por %p69, %p70
    %p72 = scmp.ne.s32.totalorder %s64, %s66
    %p73 = scmp.eq.s32.totalorder %s14, 1
    %p74 = por %p72, %p73
    %p75 = scmp.ne.s32.totalorder %s66, %s67
    %p76 = scmp.eq.s32.totalorder %s14, 0
    %p77 = por %p75, %p76
    %p78 = scmp.ne.s32.totalorder %s66, %s67
    %p79 = scmp.eq.s32.totalorder %s15, 1
    %p80 = por %p78, %p79
    %p82 = scmp.ne.s32.totalorder %s67, %s81
    %p83 = scmp.eq.s32.totalorder %s15, 0
    %p84 = por %p82, %p83
    %s85 = ssub.s32 %s9, %s16
    %p86 = scmp.eq.s32.totalorder %s85, 0
    %s88 = sadd.s32 %s87, 1
    %s89 = scalar_select %p86, %s87, %s88
    %p92 = pneg %p86
    %p93 = scmp.eq.s32.totalorder %s9, 1
    %p94 = por %p92, %p93
    %p95 = scmp.ne.s32.totalorder %s87, %s90
    %p96 = scmp.eq.s32.totalorder %s9, 0
    %p97 = por %p95, %p96
    %p98 = scmp.ne.s32.totalorder %s87, %s90
    %p99 = scmp.eq.s32.totalorder %s14, 1
    %p100 = por %p98, %p99
    %p101 = scmp.ne.s32.totalorder %s90, %s91
    %p102 = scmp.eq.s32.totalorder %s14, 0
    %p103 = por %p101, %p102
    %p104 = scmp.ne.s32.totalorder %s90, %s91
    %p105 = scmp.eq.s32.totalorder %s15, 1
    %p106 = por %p104, %p105
    %p108 = scmp.ne.s32.totalorder %s91, %s107
    %p109 = scmp.eq.s32.totalorder %s15, 0
    %p110 = por %p108, %p109
    %p111 = scmp.le.s32.totalorder 1, %s9
    %p112 = scmp.lt.s32.totalorder %s9, 3
    %p113 = pnand %p111, %p112
    %p114 = pneg %p113
    // Predicated region
    $region9: #{_coop_forward_impl.8} parent=5 // pred_check
      _
    $region10: #{_coop_forward_impl.8} parent=5 // pred_check_branch
      %116 = sbr.rel (%p113) target = $region12
    $region11: #{_coop_forward_impl.8} parent=5 // pred_region
      %s117 = ssub.s32 %s9, 1
      // Predicated region
      $region13: #{_coop_forward_impl.8} parent=11 // pred_check
        %p118 = pneg %p56
      $region14: #{_coop_forward_impl.8} parent=11 // pred_check_branch
        %120 = sbr.rel (%p118) target = $region16
      $region15: #{_coop_forward_impl.8} parent=11 // pred_region
        _
      $region16: #{_coop_forward_impl.8} parent=11 // pred_fallthru
        _
      // Predicated region
      $region17: #{_coop_forward_impl.8} parent=11 // pred_check
        %p121 = pneg %p77
      $region18: #{_coop_forward_impl.8} parent=11 // pred_check_branch
        %123 = sbr.rel (%p121) target = $region20
      $region19: #{_coop_forward_impl.8} parent=11 // pred_region
        _
      $region20: #{_coop_forward_impl.8} parent=11 // pred_fallthru
        _
    $region12: #{_coop_forward_impl.8} parent=5 // pred_fallthru
      _
    %p124 = scmp.lt.s32.totalorder %s9, 2
    // Predicated region
    $region21: #{_coop_forward_impl.8} parent=5 // pred_check
      %p125 = pneg %p124
    $region22: #{_coop_forward_impl.8} parent=5 // pred_check_branch
      %127 = sbr.rel (%p125) target = $region24
    $region23: #{_coop_forward_impl.8} parent=5 // pred_region
      // Predicated region
      $region25: #{_coop_forward_impl.8} parent=23 // pred_check
        %p128 = pneg %p29
      $region26: #{_coop_forward_impl.8} parent=23 // pred_check_branch
        %130 = sbr.rel (%p128) target = $region28
      $region27: #{_coop_forward_impl.8} parent=23 // pred_region
        %s131 = smul.u32 32, %s9
        %p132 = scmp.lt.s32.totalorder %s131, 63
        %s133 = scalar_select %p132, %s131, 63
        %s134 = smul.addr %s133, 9
        %s135 = smul.addr %s134, 8
        %s136 = scalar_lea.vmem %s0, %s135
        %s137 = smul.u32 32, %s9
      $region28: #{_coop_forward_impl.8} parent=23 // pred_fallthru
        _
    $region24: #{_coop_forward_impl.8} parent=5 // pred_fallthru
      _
    %p138 = scmp.le.s32.totalorder 1, %s9
    %p139 = scmp.lt.s32.totalorder %s9, 3
    %p140 = pnand %p138, %p139
    %p141 = pneg %p140
    // Predicated region
    $region29: #{_coop_forward_impl.8} parent=5 // pred_check
      _
    $region30: #{_coop_forward_impl.8} parent=5 // pred_check_branch
      %143 = sbr.rel (%p140) target = $region32
    $region31: #{_coop_forward_impl.8} parent=5 // pred_region
      %s144 = ssub.s32 %s9, 1
      %s145 = smul.u32 32, %s14
      %p146 = scmp.lt.s32.totalorder %s145, 63
      %s147 = scalar_select %p146, %s145, 63
      %s148 = smul.addr %s147, 9
      %s149 = smul.addr %s148, 8
      %s150 = scalar_lea.vmem %s0, %s149
      %p151 = pneg %p35
      %p152 = pneg %p32
      %p153 = pneg %p56
      %p154 = pneg %p53
      %p155 = pneg %p77
      %p156 = pneg %p74
      %p157 = pneg %p103
      %p158 = pneg %p100
      %s159 = smul.u32 32, %s14
      %p160 = scmp.lt.s32.totalorder %s159, 63
      %s161 = scalar_select %p160, %s159, 63
      %s162 = smul.addr %s161, 8
      %s163 = scalar_lea.vmem %s3, %s162
      %s164 = smul.u32 32, %s14
      %p165 = scmp.lt.s32.totalorder %s164, 63
      %s166 = scalar_select %p165, %s164, 63
      %s167 = smul.addr %s166, 9
      %s168 = smul.addr %s167, 8
      %s169 = scalar_lea.vmem %s0, %s168
      %s170 = smul.u32 32, %s14
      %s171 = smul.u32 32, %s14
      %p172 = scmp.lt.s32.totalorder %s171, 63
      %s173 = scalar_select %p172, %s171, 63
      %s174 = smul.addr %s173, 8
      %s175 = scalar_lea.vmem %s3, %s174
      %s176 = smul.u32 32, %s14
      %v177 = vld [vmem:[%s169] sm:$0xff]
      %v178 = vld [vmem:[%s169 + $0x8] sm:$0xff]
      %v179 = vld [vmem:[%s169 + $0x10] sm:$0xff]
      %v180 = vld [vmem:[%s169 + $0x18] sm:$0xff]
      %v181 = vld [vmem:[%s169 + $0x20] sm:$0xff]
      %v182 = vld [vmem:[%s169 + $0x28] sm:$0xff]
      %v183 = vld [vmem:[%s169 + $0x30] sm:$0xff]
      %v184 = vld [vmem:[%s169 + $0x38] sm:$0xff]
      %v185 = vld [vmem:[%s169 + $0x40] sm:$0xff]
      %v186 = vld [vmem:[%s169 + $0x48] sm:$0xff]
      %v187 = vld [vmem:[%s169 + $0x50] sm:$0xff]
      %v188 = vld [vmem:[%s169 + $0x58] sm:$0xff]
      %v189 = vld [vmem:[%s169 + $0x60] sm:$0xff]
      %v190 = vld [vmem:[%s169 + $0x68] sm:$0xff]
      %v191 = vld [vmem:[%s169 + $0x70] sm:$0xff]
      %v192 = vld [vmem:[%s169 + $0x78] sm:$0xff]
      %v193 = vld [vmem:[%s169 + $0x80] sm:$0xff]
      %v194 = vld [vmem:[%s169 + $0x88] sm:$0xff]
      %v195 = vld [vmem:[%s169 + $0x90] sm:$0xff]
      %v196 = vld [vmem:[%s169 + $0x98] sm:$0xff]
      %v197 = vld [vmem:[%s169 + $0xa0] sm:$0xff]
      %v198 = vld [vmem:[%s169 + $0xa8] sm:$0xff]
      %v199 = vld [vmem:[%s169 + $0xb0] sm:$0xff]
      %v200 = vld [vmem:[%s169 + $0xb8] sm:$0xff]
      %v201 = vld [vmem:[%s169 + $0xc0] sm:$0xff]
      %v202 = vld [vmem:[%s169 + $0xc8] sm:$0xff]
      %v203 = vld [vmem:[%s169 + $0xd0] sm:$0xff]
      %v204 = vld [vmem:[%s169 + $0xd8] sm:$0xff]
      %v205 = vld [vmem:[%s169 + $0xe0] sm:$0xff]
      %v206 = vld [vmem:[%s169 + $0xe8] sm:$0xff]
      %v207 = vld [vmem:[%s169 + $0xf0] sm:$0xff]
      %v208 = vld [vmem:[%s169 + $0xf8] sm:$0xff]
      %v209 = vld [vmem:[%s169 + $0x100] sm:$0xff]
      %v210 = vld [vmem:[%s169 + $0x108] sm:$0xff]
      %v211 = vld [vmem:[%s169 + $0x110] sm:$0xff]
      %v212 = vld [vmem:[%s169 + $0x118] sm:$0xff]
      %v213 = vld [vmem:[%s169 + $0x120] sm:$0xff]
      %v214 = vld [vmem:[%s169 + $0x128] sm:$0xff]
      %v215 = vld [vmem:[%s169 + $0x130] sm:$0xff]
      %v216 = vld [vmem:[%s169 + $0x138] sm:$0xff]
      %v217 = vld [vmem:[%s169 + $0x140] sm:$0xff]
      %v218 = vld [vmem:[%s169 + $0x148] sm:$0xff]
      %v219 = vld [vmem:[%s169 + $0x150] sm:$0xff]
      %v220 = vld [vmem:[%s169 + $0x158] sm:$0xff]
      %v221 = vld [vmem:[%s169 + $0x160] sm:$0xff]
      %v222 = vld [vmem:[%s169 + $0x168] sm:$0xff]
      %v223 = vld [vmem:[%s169 + $0x170] sm:$0xff]
      %v224 = vld [vmem:[%s169 + $0x178] sm:$0xff]
      %v225 = vld [vmem:[%s169 + $0x180] sm:$0xff]
      %v226 = vld [vmem:[%s169 + $0x188] sm:$0xff]
      %v227 = vld [vmem:[%s169 + $0x190] sm:$0xff]
      %v228 = vld [vmem:[%s169 + $0x198] sm:$0xff]
      %v229 = vld [vmem:[%s169 + $0x1a0] sm:$0xff]
      %v230 = vld [vmem:[%s169 + $0x1a8] sm:$0xff]
      %v231 = vld [vmem:[%s169 + $0x1b0] sm:$0xff]
      %v232 = vld [vmem:[%s169 + $0x1b8] sm:$0xff]
      %v233 = vld [vmem:[%s169 + $0x1c0] sm:$0xff]
      %v234 = vld [vmem:[%s169 + $0x1c8] sm:$0xff]
      %v235 = vld [vmem:[%s169 + $0x1d0] sm:$0xff]
      %v236 = vld [vmem:[%s169 + $0x1d8] sm:$0xff]
      %v237 = vld [vmem:[%s169 + $0x1e0] sm:$0xff]
      %v238 = vld [vmem:[%s169 + $0x1e8] sm:$0xff]
      %v239 = vld [vmem:[%s169 + $0x1f0] sm:$0xff]
      %v240 = vld [vmem:[%s169 + $0x1f8] sm:$0xff]
      %v241 = vld [vmem:[%s169 + $0x200] sm:$0xff]
      %v242 = vld [vmem:[%s169 + $0x208] sm:$0xff]
      %v243 = vld [vmem:[%s169 + $0x210] sm:$0xff]
      %v244 = vld [vmem:[%s169 + $0x218] sm:$0xff]
      %v245 = vld [vmem:[%s169 + $0x220] sm:$0xff]
      %v246 = vld [vmem:[%s169 + $0x228] sm:$0xff]
      %v247 = vld [vmem:[%s169 + $0x230] sm:$0xff]
      %v248 = vld [vmem:[%s169 + $0x238] sm:$0xff]
      %v249 = vld [vmem:[%s169 + $0x240] sm:$0xff]
      %v250 = vld [vmem:[%s169 + $0x248] sm:$0xff]
      %v251 = vld [vmem:[%s169 + $0x250] sm:$0xff]
      %v252 = vld [vmem:[%s169 + $0x258] sm:$0xff]
      %v253 = vld [vmem:[%s169 + $0x260] sm:$0xff]
      %v254 = vld [vmem:[%s169 + $0x268] sm:$0xff]
      %v255 = vld [vmem:[%s169 + $0x270] sm:$0xff]
      %v256 = vld [vmem:[%s169 + $0x278] sm:$0xff]
      %v257 = vld [vmem:[%s169 + $0x280] sm:$0xff]
      %v258 = vld [vmem:[%s169 + $0x288] sm:$0xff]
      %v259 = vld [vmem:[%s169 + $0x290] sm:$0xff]
      %v260 = vld [vmem:[%s169 + $0x298] sm:$0xff]
      %v261 = vld [vmem:[%s169 + $0x2a0] sm:$0xff]
      %v262 = vld [vmem:[%s169 + $0x2a8] sm:$0xff]
      %v263 = vld [vmem:[%s169 + $0x2b0] sm:$0xff]
      %v264 = vld [vmem:[%s169 + $0x2b8] sm:$0xff]
      %v265 = vld [vmem:[%s169 + $0x2c0] sm:$0xff]
      %v266 = vld [vmem:[%s169 + $0x2c8] sm:$0xff]
      %v267 = vld [vmem:[%s169 + $0x2d0] sm:$0xff]
      %v268 = vld [vmem:[%s169 + $0x2d8] sm:$0xff]
      %v269 = vld [vmem:[%s169 + $0x2e0] sm:$0xff]
      %v270 = vld [vmem:[%s169 + $0x2e8] sm:$0xff]
      %v271 = vld [vmem:[%s169 + $0x2f0] sm:$0xff]
      %v272 = vld [vmem:[%s169 + $0x2f8] sm:$0xff]
      %v273 = vld [vmem:[%s169 + $0x300] sm:$0xff]
      %v274 = vld [vmem:[%s169 + $0x308] sm:$0xff]
      %v275 = vld [vmem:[%s169 + $0x310] sm:$0xff]
      %v276 = vld [vmem:[%s169 + $0x318] sm:$0xff]
      %v277 = vld [vmem:[%s169 + $0x320] sm:$0xff]
      %v278 = vld [vmem:[%s169 + $0x328] sm:$0xff]
      %v279 = vld [vmem:[%s169 + $0x330] sm:$0xff]
      %v280 = vld [vmem:[%s169 + $0x338] sm:$0xff]
      %v281 = vld [vmem:[%s169 + $0x340] sm:$0xff]
      %v282 = vld [vmem:[%s169 + $0x348] sm:$0xff]
      %v283 = vld [vmem:[%s169 + $0x350] sm:$0xff]
      %v284 = vld [vmem:[%s169 + $0x358] sm:$0xff]
      %v285 = vld [vmem:[%s169 + $0x360] sm:$0xff]
      %v286 = vld [vmem:[%s169 + $0x368] sm:$0xff]
      %v287 = vld [vmem:[%s169 + $0x370] sm:$0xff]
      %v288 = vld [vmem:[%s169 + $0x378] sm:$0xff]
      %v289 = vld [vmem:[%s169 + $0x380] sm:$0xff]
      %v290 = vld [vmem:[%s169 + $0x388] sm:$0xff]
      %v291 = vld [vmem:[%s169 + $0x390] sm:$0xff]
      %v292 = vld [vmem:[%s169 + $0x398] sm:$0xff]
      %v293 = vld [vmem:[%s169 + $0x3a0] sm:$0xff]
      %v294 = vld [vmem:[%s169 + $0x3a8] sm:$0xff]
      %v295 = vld [vmem:[%s169 + $0x3b0] sm:$0xff]
      %v296 = vld [vmem:[%s169 + $0x3b8] sm:$0xff]
      %v297 = vld [vmem:[%s169 + $0x3c0] sm:$0xff]
      %v298 = vld [vmem:[%s169 + $0x3c8] sm:$0xff]
      %v299 = vld [vmem:[%s169 + $0x3d0] sm:$0xff]
      %v300 = vld [vmem:[%s169 + $0x3d8] sm:$0xff]
      %v301 = vld [vmem:[%s169 + $0x3e0] sm:$0xff]
      %v302 = vld [vmem:[%s169 + $0x3e8] sm:$0xff]
      %v303 = vld [vmem:[%s169 + $0x3f0] sm:$0xff]
      %v304 = vld [vmem:[%s169 + $0x3f8] sm:$0xff]
      %v305 = vld [vmem:[%s169 + $0x400] sm:$0xff]
      %v306 = vld [vmem:[%s169 + $0x408] sm:$0xff]
      %v307 = vld [vmem:[%s169 + $0x410] sm:$0xff]
      %v308 = vld [vmem:[%s169 + $0x418] sm:$0xff]
      %v309 = vld [vmem:[%s169 + $0x420] sm:$0xff]
      %v310 = vld [vmem:[%s169 + $0x428] sm:$0xff]
      %v311 = vld [vmem:[%s169 + $0x430] sm:$0xff]
      %v312 = vld [vmem:[%s169 + $0x438] sm:$0xff]
      %v313 = vld [vmem:[%s169 + $0x440] sm:$0xff]
      %v314 = vld [vmem:[%s169 + $0x448] sm:$0xff]
      %v315 = vld [vmem:[%s169 + $0x450] sm:$0xff]
      %v316 = vld [vmem:[%s169 + $0x458] sm:$0xff]
      %v317 = vld [vmem:[%s169 + $0x460] sm:$0xff]
      %v318 = vld [vmem:[%s169 + $0x468] sm:$0xff]
      %v319 = vld [vmem:[%s169 + $0x470] sm:$0xff]
      %v320 = vld [vmem:[%s169 + $0x478] sm:$0xff]
      %v321 = vld [vmem:[%s169 + $0x480] sm:$0xff]
      %v322 = vld [vmem:[%s169 + $0x488] sm:$0xff]
      %v323 = vld [vmem:[%s169 + $0x490] sm:$0xff]
      %v324 = vld [vmem:[%s169 + $0x498] sm:$0xff]
      %v325 = vld [vmem:[%s169 + $0x4a0] sm:$0xff]
      %v326 = vld [vmem:[%s169 + $0x4a8] sm:$0xff]
      %v327 = vld [vmem:[%s169 + $0x4b0] sm:$0xff]
      %v328 = vld [vmem:[%s169 + $0x4b8] sm:$0xff]
      %v329 = vld [vmem:[%s169 + $0x4c0] sm:$0xff]
      %v330 = vld [vmem:[%s169 + $0x4c8] sm:$0xff]
      %v331 = vld [vmem:[%s169 + $0x4d0] sm:$0xff]
      %v332 = vld [vmem:[%s169 + $0x4d8] sm:$0xff]
      %v333 = vld [vmem:[%s169 + $0x4e0] sm:$0xff]
      %v334 = vld [vmem:[%s169 + $0x4e8] sm:$0xff]
      %v335 = vld [vmem:[%s169 + $0x4f0] sm:$0xff]
      %v336 = vld [vmem:[%s169 + $0x4f8] sm:$0xff]
      %v337 = vld [vmem:[%s169 + $0x500] sm:$0xff]
      %v338 = vld [vmem:[%s169 + $0x508] sm:$0xff]
      %v339 = vld [vmem:[%s169 + $0x510] sm:$0xff]
      %v340 = vld [vmem:[%s169 + $0x518] sm:$0xff]
      %v341 = vld [vmem:[%s169 + $0x520] sm:$0xff]
      %v342 = vld [vmem:[%s169 + $0x528] sm:$0xff]
      %v343 = vld [vmem:[%s169 + $0x530] sm:$0xff]
      %v344 = vld [vmem:[%s169 + $0x538] sm:$0xff]
      %v345 = vld [vmem:[%s169 + $0x540] sm:$0xff]
      %v346 = vld [vmem:[%s169 + $0x548] sm:$0xff]
      %v347 = vld [vmem:[%s169 + $0x550] sm:$0xff]
      %v348 = vld [vmem:[%s169 + $0x558] sm:$0xff]
      %v349 = vld [vmem:[%s169 + $0x560] sm:$0xff]
      %v350 = vld [vmem:[%s169 + $0x568] sm:$0xff]
      %v351 = vld [vmem:[%s169 + $0x570] sm:$0xff]
      %v352 = vld [vmem:[%s169 + $0x578] sm:$0xff]
      %v353 = vld [vmem:[%s169 + $0x580] sm:$0xff]
      %v354 = vld [vmem:[%s169 + $0x588] sm:$0xff]
      %v355 = vld [vmem:[%s169 + $0x590] sm:$0xff]
      %v356 = vld [vmem:[%s169 + $0x598] sm:$0xff]
      %v357 = vld [vmem:[%s169 + $0x5a0] sm:$0xff]
      %v358 = vld [vmem:[%s169 + $0x5a8] sm:$0xff]
      %v359 = vld [vmem:[%s169 + $0x5b0] sm:$0xff]
      %v360 = vld [vmem:[%s169 + $0x5b8] sm:$0xff]
      %v361 = vld [vmem:[%s169 + $0x5c0] sm:$0xff]
      %v362 = vld [vmem:[%s169 + $0x5c8] sm:$0xff]
      %v363 = vld [vmem:[%s169 + $0x5d0] sm:$0xff]
      %v364 = vld [vmem:[%s169 + $0x5d8] sm:$0xff]
      %v365 = vld [vmem:[%s169 + $0x5e0] sm:$0xff]
      %v366 = vld [vmem:[%s169 + $0x5e8] sm:$0xff]
      %v367 = vld [vmem:[%s169 + $0x5f0] sm:$0xff]
      %v368 = vld [vmem:[%s169 + $0x5f8] sm:$0xff]
      %v369 = vld [vmem:[%s169 + $0x600] sm:$0xff]
      %v370 = vld [vmem:[%s169 + $0x608] sm:$0xff]
      %v371 = vld [vmem:[%s169 + $0x610] sm:$0xff]
      %v372 = vld [vmem:[%s169 + $0x618] sm:$0xff]
      %v373 = vld [vmem:[%s169 + $0x620] sm:$0xff]
      %v374 = vld [vmem:[%s169 + $0x628] sm:$0xff]
      %v375 = vld [vmem:[%s169 + $0x630] sm:$0xff]
      %v376 = vld [vmem:[%s169 + $0x638] sm:$0xff]
      %v377 = vld [vmem:[%s169 + $0x640] sm:$0xff]
      %v378 = vld [vmem:[%s169 + $0x648] sm:$0xff]
      %v379 = vld [vmem:[%s169 + $0x650] sm:$0xff]
      %v380 = vld [vmem:[%s169 + $0x658] sm:$0xff]
      %v381 = vld [vmem:[%s169 + $0x660] sm:$0xff]
      %v382 = vld [vmem:[%s169 + $0x668] sm:$0xff]
      %v383 = vld [vmem:[%s169 + $0x670] sm:$0xff]
      %v384 = vld [vmem:[%s169 + $0x678] sm:$0xff]
      %v385 = vld [vmem:[%s169 + $0x680] sm:$0xff]
      %v386 = vld [vmem:[%s169 + $0x688] sm:$0xff]
      %v387 = vld [vmem:[%s169 + $0x690] sm:$0xff]
      %v388 = vld [vmem:[%s169 + $0x698] sm:$0xff]
      %v389 = vld [vmem:[%s169 + $0x6a0] sm:$0xff]
      %v390 = vld [vmem:[%s169 + $0x6a8] sm:$0xff]
      %v391 = vld [vmem:[%s169 + $0x6b0] sm:$0xff]
      %v392 = vld [vmem:[%s169 + $0x6b8] sm:$0xff]
      %v393 = vld [vmem:[%s169 + $0x6c0] sm:$0xff]
      %v394 = vld [vmem:[%s169 + $0x6c8] sm:$0xff]
      %v395 = vld [vmem:[%s169 + $0x6d0] sm:$0xff]
      %v396 = vld [vmem:[%s169 + $0x6d8] sm:$0xff]
      %v397 = vld [vmem:[%s169 + $0x6e0] sm:$0xff]
      %v398 = vld [vmem:[%s169 + $0x6e8] sm:$0xff]
      %v399 = vld [vmem:[%s169 + $0x6f0] sm:$0xff]
      %v400 = vld [vmem:[%s169 + $0x6f8] sm:$0xff]
      %v401 = vld [vmem:[%s169 + $0x700] sm:$0xff]
      %v402 = vld [vmem:[%s169 + $0x708] sm:$0xff]
      %v403 = vld [vmem:[%s169 + $0x710] sm:$0xff]
      %v404 = vld [vmem:[%s169 + $0x718] sm:$0xff]
      %v405 = vld [vmem:[%s169 + $0x720] sm:$0xff]
      %v406 = vld [vmem:[%s169 + $0x728] sm:$0xff]
      %v407 = vld [vmem:[%s169 + $0x730] sm:$0xff]
      %v408 = vld [vmem:[%s169 + $0x738] sm:$0xff]
      %v409 = vld [vmem:[%s169 + $0x740] sm:$0xff]
      %v410 = vld [vmem:[%s169 + $0x748] sm:$0xff]
      %v411 = vld [vmem:[%s169 + $0x750] sm:$0xff]
      %v412 = vld [vmem:[%s169 + $0x758] sm:$0xff]
      %v413 = vld [vmem:[%s169 + $0x760] sm:$0xff]
      %v414 = vld [vmem:[%s169 + $0x768] sm:$0xff]
      %v415 = vld [vmem:[%s169 + $0x770] sm:$0xff]
      %v416 = vld [vmem:[%s169 + $0x778] sm:$0xff]
      %v417 = vld [vmem:[%s169 + $0x780] sm:$0xff]
      %v418 = vld [vmem:[%s169 + $0x788] sm:$0xff]
      %v419 = vld [vmem:[%s169 + $0x790] sm:$0xff]
      %v420 = vld [vmem:[%s169 + $0x798] sm:$0xff]
      %v421 = vld [vmem:[%s169 + $0x7a0] sm:$0xff]
      %v422 = vld [vmem:[%s169 + $0x7a8] sm:$0xff]
      %v423 = vld [vmem:[%s169 + $0x7b0] sm:$0xff]
      %v424 = vld [vmem:[%s169 + $0x7b8] sm:$0xff]
      %v425 = vld [vmem:[%s169 + $0x7c0] sm:$0xff]
      %v426 = vld [vmem:[%s169 + $0x7c8] sm:$0xff]
      %v427 = vld [vmem:[%s169 + $0x7d0] sm:$0xff]
      %v428 = vld [vmem:[%s169 + $0x7d8] sm:$0xff]
      %v429 = vld [vmem:[%s169 + $0x7e0] sm:$0xff]
      %v430 = vld [vmem:[%s169 + $0x7e8] sm:$0xff]
      %v431 = vld [vmem:[%s169 + $0x7f0] sm:$0xff]
      %v432 = vld [vmem:[%s169 + $0x7f8] sm:$0xff]
      %v433 = vld [vmem:[%s169 + $0x800] sm:$0xff]
      %v434 = vld [vmem:[%s169 + $0x808] sm:$0xff]
      %v435 = vld [vmem:[%s169 + $0x810] sm:$0xff]
      %v436 = vld [vmem:[%s169 + $0x818] sm:$0xff]
      %v437 = vld [vmem:[%s169 + $0x820] sm:$0xff]
      %v438 = vld [vmem:[%s169 + $0x828] sm:$0xff]
      %v439 = vld [vmem:[%s169 + $0x830] sm:$0xff]
      %v440 = vld [vmem:[%s169 + $0x838] sm:$0xff]
      %v441 = vld [vmem:[%s169 + $0x840] sm:$0xff]
      %v442 = vld [vmem:[%s169 + $0x848] sm:$0xff]
      %v443 = vld [vmem:[%s169 + $0x850] sm:$0xff]
      %v444 = vld [vmem:[%s169 + $0x858] sm:$0xff]
      %v445 = vld [vmem:[%s169 + $0x860] sm:$0xff]
      %v446 = vld [vmem:[%s169 + $0x868] sm:$0xff]
      %v447 = vld [vmem:[%s169 + $0x870] sm:$0xff]
      %v448 = vld [vmem:[%s169 + $0x878] sm:$0xff]
      %v449 = vld [vmem:[%s169 + $0x880] sm:$0xff]
      %v450 = vld [vmem:[%s169 + $0x888] sm:$0xff]
      %v451 = vld [vmem:[%s169 + $0x890] sm:$0xff]
      %v452 = vld [vmem:[%s169 + $0x898] sm:$0xff]
      %v453 = vld [vmem:[%s169 + $0x8a0] sm:$0xff]
      %v454 = vld [vmem:[%s169 + $0x8a8] sm:$0xff]
      %v455 = vld [vmem:[%s169 + $0x8b0] sm:$0xff]
      %v456 = vld [vmem:[%s169 + $0x8b8] sm:$0xff]
      %v457 = vld [vmem:[%s169 + $0x8c0] sm:$0xff]
      %v458 = vld [vmem:[%s169 + $0x8c8] sm:$0xff]
      %v459 = vld [vmem:[%s169 + $0x8d0] sm:$0xff]
      %v460 = vld [vmem:[%s169 + $0x8d8] sm:$0xff]
      %v461 = vld [vmem:[%s169 + $0x8e0] sm:$0xff]
      %v462 = vld [vmem:[%s169 + $0x8e8] sm:$0xff]
      %v463 = vld [vmem:[%s169 + $0x8f0] sm:$0xff]
      %v464 = vld [vmem:[%s169 + $0x8f8] sm:$0xff]
      %v465 = vld [vmem:[%s1] sm:$0xff]
      %v466 = vld [vmem:[%s1 + $0x8] sm:$0xff]
      %v467 = vld [vmem:[%s1 + $0x10] sm:$0xff]
      %v468 = vld [vmem:[%s1 + $0x18] sm:$0xff]
      %v469 = vld [vmem:[%s1 + $0x20] sm:$0xff]
      %v470 = vld [vmem:[%s1 + $0x28] sm:$0xff]
      %v471 = vld [vmem:[%s1 + $0x30] sm:$0xff]
      %v472 = vld [vmem:[%s1 + $0x38] sm:$0xff]
      %v473 = vld [vmem:[%s1 + $0x40] sm:$0xff]
      %v474 = vld [vmem:[%s1 + $0x48] sm:$0xff]
      %v475 = vld [vmem:[%s1 + $0x50] sm:$0xff]
      %v476 = vld [vmem:[%s1 + $0x58] sm:$0xff]
      %v477 = vld [vmem:[%s1 + $0x60] sm:$0xff]
      %v478 = vld [vmem:[%s1 + $0x68] sm:$0xff]
      %v479 = vld [vmem:[%s1 + $0x70] sm:$0xff]
      %v480 = vld [vmem:[%s1 + $0x78] sm:$0xff]
      %v481 = vld [vmem:[%s1 + $0x80] sm:$0xff]
      %v482 = vld [vmem:[%s1 + $0x88] sm:$0xff]
      %v483 = vld [vmem:[%s1 + $0x90] sm:$0xff]
      %v484 = vld [vmem:[%s1 + $0x98] sm:$0xff]
      %v485 = vld [vmem:[%s1 + $0xa0] sm:$0xff]
      %v486 = vld [vmem:[%s1 + $0xa8] sm:$0xff]
      %v487 = vld [vmem:[%s1 + $0xb0] sm:$0xff]
      %v488 = vld [vmem:[%s1 + $0xb8] sm:$0xff]
      %v489 = vld [vmem:[%s1 + $0xc0] sm:$0xff]
      %v490 = vld [vmem:[%s1 + $0xc8] sm:$0xff]
      %v491 = vld [vmem:[%s1 + $0xd0] sm:$0xff]
      %v492 = vld [vmem:[%s1 + $0xd8] sm:$0xff]
      %v493 = vld [vmem:[%s1 + $0xe0] sm:$0xff]
      %v494 = vld [vmem:[%s1 + $0xe8] sm:$0xff]
      %v495 = vld [vmem:[%s1 + $0xf0] sm:$0xff]
      %v496 = vld [vmem:[%s1 + $0xf8] sm:$0xff]
      %v497 = vld [vmem:[%s1 + $0x100] sm:$0xff]
      %v498 = vld [vmem:[%s1 + $0x108] sm:$0xff]
      %v499 = vld [vmem:[%s1 + $0x110] sm:$0xff]
      %v500 = vld [vmem:[%s1 + $0x118] sm:$0xff]
      %v501 = vld [vmem:[%s1 + $0x120] sm:$0xff]
      %v502 = vld [vmem:[%s1 + $0x128] sm:$0xff]
      %v503 = vld [vmem:[%s1 + $0x130] sm:$0xff]
      %v504 = vld [vmem:[%s1 + $0x138] sm:$0xff]
      %v505 = vld [vmem:[%s1 + $0x140] sm:$0xff]
      %v506 = vld [vmem:[%s1 + $0x148] sm:$0xff]
      %v507 = vld [vmem:[%s1 + $0x150] sm:$0xff]
      %v508 = vld [vmem:[%s1 + $0x158] sm:$0xff]
      %v509 = vld [vmem:[%s1 + $0x160] sm:$0xff]
      %v510 = vld [vmem:[%s1 + $0x168] sm:$0xff]
      %v511 = vld [vmem:[%s1 + $0x170] sm:$0xff]
      %v512 = vld [vmem:[%s1 + $0x178] sm:$0xff]
      %v513 = vld [vmem:[%s1 + $0x180] sm:$0xff]
      %v514 = vld [vmem:[%s1 + $0x188] sm:$0xff]
      %v515 = vld [vmem:[%s1 + $0x190] sm:$0xff]
      %v516 = vld [vmem:[%s1 + $0x198] sm:$0xff]
      %v517 = vld [vmem:[%s1 + $0x1a0] sm:$0xff]
      %v518 = vld [vmem:[%s1 + $0x1a8] sm:$0xff]
      %v519 = vld [vmem:[%s1 + $0x1b0] sm:$0xff]
      %v520 = vld [vmem:[%s1 + $0x1b8] sm:$0xff]
      %v521 = vld [vmem:[%s1 + $0x1c0] sm:$0xff]
      %v522 = vld [vmem:[%s1 + $0x1c8] sm:$0xff]
      %v523 = vld [vmem:[%s1 + $0x1d0] sm:$0xff]
      %v524 = vld [vmem:[%s1 + $0x1d8] sm:$0xff]
      %v525 = vld [vmem:[%s1 + $0x1e0] sm:$0xff]
      %v526 = vld [vmem:[%s1 + $0x1e8] sm:$0xff]
      %v527 = vld [vmem:[%s1 + $0x1f0] sm:$0xff]
      %v528 = vld [vmem:[%s1 + $0x1f8] sm:$0xff]
      %v529 = vld [vmem:[%s1 + $0x200] sm:$0xff]
      %v530 = vld [vmem:[%s1 + $0x208] sm:$0xff]
      %v531 = vld [vmem:[%s1 + $0x210] sm:$0xff]
      %v532 = vld [vmem:[%s1 + $0x218] sm:$0xff]
      %v533 = vld [vmem:[%s1 + $0x220] sm:$0xff]
      %v534 = vld [vmem:[%s1 + $0x228] sm:$0xff]
      %v535 = vld [vmem:[%s1 + $0x230] sm:$0xff]
      %v536 = vld [vmem:[%s1 + $0x238] sm:$0xff]
      %v537 = vld [vmem:[%s1 + $0x240] sm:$0xff]
      %v538 = vld [vmem:[%s1 + $0x248] sm:$0xff]
      %v539 = vld [vmem:[%s1 + $0x250] sm:$0xff]
      %v540 = vld [vmem:[%s1 + $0x258] sm:$0xff]
      %v541 = vld [vmem:[%s1 + $0x260] sm:$0xff]
      %v542 = vld [vmem:[%s1 + $0x268] sm:$0xff]
      %v543 = vld [vmem:[%s1 + $0x270] sm:$0xff]
      %v544 = vld [vmem:[%s1 + $0x278] sm:$0xff]
      %v545 = vld [vmem:[%s1 + $0x280] sm:$0xff]
      %v546 = vld [vmem:[%s1 + $0x288] sm:$0xff]
      %v547 = vld [vmem:[%s1 + $0x290] sm:$0xff]
      %v548 = vld [vmem:[%s1 + $0x298] sm:$0xff]
      %v549 = vld [vmem:[%s1 + $0x2a0] sm:$0xff]
      %v550 = vld [vmem:[%s1 + $0x2a8] sm:$0xff]
      %v551 = vld [vmem:[%s1 + $0x2b0] sm:$0xff]
      %v552 = vld [vmem:[%s1 + $0x2b8] sm:$0xff]
      %v553 = vld [vmem:[%s1 + $0x2c0] sm:$0xff]
      %v554 = vld [vmem:[%s1 + $0x2c8] sm:$0xff]
      %v555 = vld [vmem:[%s1 + $0x2d0] sm:$0xff]
      %v556 = vld [vmem:[%s1 + $0x2d8] sm:$0xff]
      %v557 = vld [vmem:[%s1 + $0x2e0] sm:$0xff]
      %v558 = vld [vmem:[%s1 + $0x2e8] sm:$0xff]
      %v559 = vld [vmem:[%s1 + $0x2f0] sm:$0xff]
      %v560 = vld [vmem:[%s1 + $0x2f8] sm:$0xff]
      %v561 = vld [vmem:[%s1 + $0x300] sm:$0xff]
      %v562 = vld [vmem:[%s1 + $0x308] sm:$0xff]
      %v563 = vld [vmem:[%s1 + $0x310] sm:$0xff]
      %v564 = vld [vmem:[%s1 + $0x318] sm:$0xff]
      %v565 = vld [vmem:[%s1 + $0x320] sm:$0xff]
      %v566 = vld [vmem:[%s1 + $0x328] sm:$0xff]
      %v567 = vld [vmem:[%s1 + $0x330] sm:$0xff]
      %v568 = vld [vmem:[%s1 + $0x338] sm:$0xff]
      %v569 = vld [vmem:[%s1 + $0x340] sm:$0xff]
      %v570 = vld [vmem:[%s1 + $0x348] sm:$0xff]
      %v571 = vld [vmem:[%s1 + $0x350] sm:$0xff]
      %v572 = vld [vmem:[%s1 + $0x358] sm:$0xff]
      %v573 = vld [vmem:[%s1 + $0x360] sm:$0xff]
      %v574 = vld [vmem:[%s1 + $0x368] sm:$0xff]
      %v575 = vld [vmem:[%s1 + $0x370] sm:$0xff]
      %v576 = vld [vmem:[%s1 + $0x378] sm:$0xff]
      %v577 = vld [vmem:[%s1 + $0x380] sm:$0xff]
      %v578 = vld [vmem:[%s1 + $0x388] sm:$0xff]
      %v579 = vld [vmem:[%s1 + $0x390] sm:$0xff]
      %v580 = vld [vmem:[%s1 + $0x398] sm:$0xff]
      %v581 = vld [vmem:[%s1 + $0x3a0] sm:$0xff]
      %v582 = vld [vmem:[%s1 + $0x3a8] sm:$0xff]
      %v583 = vld [vmem:[%s1 + $0x3b0] sm:$0xff]
      %v584 = vld [vmem:[%s1 + $0x3b8] sm:$0xff]
      %v585 = vld [vmem:[%s1 + $0x3c0] sm:$0xff]
      %v586 = vld [vmem:[%s1 + $0x3c8] sm:$0xff]
      %v587 = vld [vmem:[%s1 + $0x3d0] sm:$0xff]
      %v588 = vld [vmem:[%s1 + $0x3d8] sm:$0xff]
      %v589 = vld [vmem:[%s1 + $0x3e0] sm:$0xff]
      %v590 = vld [vmem:[%s1 + $0x3e8] sm:$0xff]
      %v591 = vld [vmem:[%s1 + $0x3f0] sm:$0xff]
      %v592 = vld [vmem:[%s1 + $0x3f8] sm:$0xff]
      %v593 = vld [vmem:[%s1 + $0x400] sm:$0xff]
      %v594 = vld [vmem:[%s1 + $0x408] sm:$0xff]
      %v595 = vld [vmem:[%s1 + $0x410] sm:$0xff]
      %v596 = vld [vmem:[%s1 + $0x418] sm:$0xff]
      %v597 = vld [vmem:[%s1 + $0x420] sm:$0xff]
      %v598 = vld [vmem:[%s1 + $0x428] sm:$0xff]
      %v599 = vld [vmem:[%s1 + $0x430] sm:$0xff]
      %v600 = vld [vmem:[%s1 + $0x438] sm:$0xff]
      %v601 = vld [vmem:[%s1 + $0x440] sm:$0xff]
      %v602 = vld [vmem:[%s1 + $0x448] sm:$0xff]
      %v603 = vld [vmem:[%s1 + $0x450] sm:$0xff]
      %v604 = vld [vmem:[%s1 + $0x458] sm:$0xff]
      %v605 = vld [vmem:[%s1 + $0x460] sm:$0xff]
      %v606 = vld [vmem:[%s1 + $0x468] sm:$0xff]
      %v607 = vld [vmem:[%s1 + $0x470] sm:$0xff]
      %v608 = vld [vmem:[%s1 + $0x478] sm:$0xff]
      %v609 = vld [vmem:[%s2] sm:$0x1]
      %v611 = vlaneseq
      %v612 = vshrl.u32 %v611, 7
      %v613 = vsub.s32 0, %v612
      %v614 = vrot.slane %v609, %v613
      %616 = vmatprep.subr.mxu0 0.0
      %617 = vmatpush1.msra.mxu0 %v465
      %618 = vmatprep.subr.mxu0 0.0
      %619 = vmatpush1.msra.mxu0 %v466
      %620 = vmatprep.subr.mxu0 0.0
      %621 = vmatpush1.msra.mxu0 %v467
      %622 = vmatprep.subr.mxu0 0.0
      %623 = vmatpush1.msra.mxu0 %v468
      %624 = vmatprep.subr.mxu0 0.0
      %625 = vmatpush1.msra.mxu0 %v469
      %626 = vmatprep.subr.mxu0 0.0
      %627 = vmatpush1.msra.mxu0 %v470
      %628 = vmatprep.subr.mxu0 0.0
      %629 = vmatpush1.msra.mxu0 %v471
      %630 = vmatprep.subr.mxu0 0.0
      %631 = vmatpush1.msra.mxu0 %v472
      %632 = vmatprep.subr.mxu0 0.0
      %633 = vmatpush1.msra.mxu0 %v473
      %634 = vmatprep.subr.mxu0 0.0
      %635 = vmatpush1.msra.mxu0 %v474
      %636 = vmatprep.subr.mxu0 0.0
      %637 = vmatpush1.msra.mxu0 %v475
      %638 = vmatprep.subr.mxu0 0.0
      %639 = vmatpush1.msra.mxu0 %v476
      %640 = vmatprep.subr.mxu0 0.0
      %641 = vmatpush1.msra.mxu0 %v477
      %642 = vmatprep.subr.mxu0 0.0
      %643 = vmatpush1.msra.mxu0 %v478
      %644 = vmatprep.subr.mxu0 0.0
      %645 = vmatpush1.msra.mxu0 %v479
      %646 = vmatprep.subr.mxu0 0.0
      %647 = vmatpush1.msra.mxu0 %v480
      %648 = vmatprep.subr.mxu0 0.0
      %649 = vmatpush1.msra.mxu0 %v481
      %650 = vmatprep.subr.mxu0 0.0
      %651 = vmatpush1.msra.mxu0 %v482
      %652 = vmatprep.subr.mxu0 0.0
      %653 = vmatpush1.msra.mxu0 %v483
      %654 = vmatprep.subr.mxu0 0.0
      %655 = vmatpush1.msra.mxu0 %v484
      %656 = vmatprep.subr.mxu0 0.0
      %657 = vmatpush1.msra.mxu0 %v485
      %658 = vmatprep.subr.mxu0 0.0
      %659 = vmatpush1.msra.mxu0 %v486
      %660 = vmatprep.subr.mxu0 0.0
      %661 = vmatpush1.msra.mxu0 %v487
      %662 = vmatprep.subr.mxu0 0.0
      %663 = vmatpush1.msra.mxu0 %v488
      %664 = vmatprep.subr.mxu0 0.0
      %665 = vmatpush1.msra.mxu0 %v489
      %666 = vmatprep.subr.mxu0 0.0
      %667 = vmatpush1.msra.mxu0 %v490
      %668 = vmatprep.subr.mxu0 0.0
      %669 = vmatpush1.msra.mxu0 %v491
      %670 = vmatprep.subr.mxu0 0.0
      %671 = vmatpush1.msra.mxu0 %v492
      %672 = vmatprep.subr.mxu0 0.0
      %673 = vmatpush1.msra.mxu0 %v493
      %674 = vmatprep.subr.mxu0 0.0
      %675 = vmatpush1.msra.mxu0 %v494
      %676 = vmatprep.subr.mxu0 0.0
      %677 = vmatpush1.msra.mxu0 %v495
      %678 = vmatprep.subr.mxu0 0.0
      %679 = vmatpush1.msra.mxu0 %v496
      %680 = vmatprep.mubr.f32.mxu0 %v178
      %681 = vmatmul.mubr.f32.gmra.mrb[0].mxu0 %v177
      %v682 = vpop.f32.mrb[0].mxu0
      %v683 = vadd.f32 %v614, %v682
      %v684 = vpop.f32.mrb[0].mxu0
      %685 = vmatprep.mubr.f32.mxu0 %v187
      %686 = vmatmul.mubr.f32.gmra.mrb[0].mxu0 %v186
      %v687 = vpop.f32.mrb[0].mxu0
      %v688 = vadd.f32 %v614, %v687
      %v689 = vpop.f32.mrb[0].mxu0
      %690 = vmatprep.mubr.f32.mxu0 %v196
      %691 = vmatmul.mubr.f32.gmra.mrb[0].mxu0 %v195
      %v692 = vpop.f32.mrb[0].mxu0
      %v693 = vadd.f32 %v614, %v692
      %v694 = vpop.f32.mrb[0].mxu0
      %695 = vmatprep.mubr.f32.mxu0 %v205
      %696 = vmatmul.mubr.f32.gmra.mrb[0].mxu0 %v204
      %v697 = vpop.f32.mrb[0].mxu0
      %v698 = vadd.f32 %v614, %v697
      %v699 = vpop.f32.mrb[0].mxu0
      %700 = vmatprep.mubr.f32.mxu0 %v214
      %701 = vmatmul.mubr.f32.gmra.mrb[0].mxu0 %v213
      %v702 = vpop.f32.mrb[0].mxu0
      %v703 = vadd.f32 %v614, %v702
      %v704 = vpop.f32.mrb[0].mxu0
      %705 = vmatprep.mubr.f32.mxu0 %v223
      %706 = vmatmul.mubr.f32.gmra.mrb[0].mxu0 %v222
      %v707 = vpop.f32.mrb[0].mxu0
      %v708 = vadd.f32 %v614, %v707
      %v709 = vpop.f32.mrb[0].mxu0
      %710 = vmatprep.mubr.f32.mxu0 %v232
      %711 = vmatmul.mubr.f32.gmra.mrb[0].mxu0 %v231
      %v712 = vpop.f32.mrb[0].mxu0
      %v713 = vadd.f32 %v614, %v712
      %v714 = vpop.f32.mrb[0].mxu0
      %715 = vmatprep.mubr.f32.mxu0 %v241
      %716 = vmatmul.mubr.f32.gmra.mrb[0].mxu0 %v240
      %v717 = vpop.f32.mrb[0].mxu0
      %v718 = vadd.f32 %v614, %v717
      %v719 = vpop.f32.mrb[0].mxu0
      %720 = vmatprep.mubr.f32.mxu0 %v250
      %721 = vmatmul.mubr.f32.gmra.mrb[0].mxu0 %v249
      %v722 = vpop.f32.mrb[0].mxu0
      %v723 = vadd.f32 %v614, %v722
      %v724 = vpop.f32.mrb[0].mxu0
      %725 = vmatprep.mubr.f32.mxu0 %v259
      %726 = vmatmul.mubr.f32.gmra.mrb[0].mxu0 %v258
      %v727 = vpop.f32.mrb[0].mxu0
      %v728 = vadd.f32 %v614, %v727
      %v729 = vpop.f32.mrb[0].mxu0
      %730 = vmatprep.mubr.f32.mxu0 %v268
      %731 = vmatmul.mubr.f32.gmra.mrb[0].mxu0 %v267
      %v732 = vpop.f32.mrb[0].mxu0
      %v733 = vadd.f32 %v614, %v732
      %v734 = vpop.f32.mrb[0].mxu0
      %735 = vmatprep.mubr.f32.mxu0 %v277
      %736 = vmatmul.mubr.f32.gmra.mrb[0].mxu0 %v276
      %v737 = vpop.f32.mrb[0].mxu0
      %v738 = vadd.f32 %v614, %v737
      %v739 = vpop.f32.mrb[0].mxu0
      %740 = vmatprep.mubr.f32.mxu0 %v286
      %741 = vmatmul.mubr.f32.gmra.mrb[0].mxu0 %v285
      %v742 = vpop.f32.mrb[0].mxu0
      %v743 = vadd.f32 %v614, %v742
      %v744 = vpop.f32.mrb[0].mxu0
      %745 = vmatprep.mubr.f32.mxu0 %v295
      %746 = vmatmul.mubr.f32.gmra.mrb[0].mxu0 %v294
      %v747 = vpop.f32.mrb[0].mxu0
      %v748 = vadd.f32 %v614, %v747
      %v749 = vpop.f32.mrb[0].mxu0
      %750 = vmatprep.mubr.f32.mxu0 %v304
      %751 = vmatmul.mubr.f32.gmra.mrb[0].mxu0 %v303
      %v752 = vpop.f32.mrb[0].mxu0
      %v753 = vadd.f32 %v614, %v752
      %v754 = vpop.f32.mrb[0].mxu0
      %755 = vmatprep.mubr.f32.mxu0 %v313
      %756 = vmatmul.mubr.f32.gmra.mrb[0].mxu0 %v312
      %v757 = vpop.f32.mrb[0].mxu0
      %v758 = vadd.f32 %v614, %v757
      %v759 = vpop.f32.mrb[0].mxu0
      %760 = vmatprep.mubr.f32.mxu0 %v322
      %761 = vmatmul.mubr.f32.gmra.mrb[0].mxu0 %v321
      %v762 = vpop.f32.mrb[0].mxu0
      %v763 = vadd.f32 %v614, %v762
      %v764 = vpop.f32.mrb[0].mxu0
      %765 = vmatprep.mubr.f32.mxu0 %v331
      %766 = vmatmul.mubr.f32.gmra.mrb[0].mxu0 %v330
      %v767 = vpop.f32.mrb[0].mxu0
      %v768 = vadd.f32 %v614, %v767
      %v769 = vpop.f32.mrb[0].mxu0
      %770 = vmatprep.mubr.f32.mxu0 %v340
      %771 = vmatmul.mubr.f32.gmra.mrb[0].mxu0 %v339
      %v772 = vpop.f32.mrb[0].mxu0
      %v773 = vadd.f32 %v614, %v772
      %v774 = vpop.f32.mrb[0].mxu0
      %775 = vmatprep.mubr.f32.mxu0 %v349
      %776 = vmatmul.mubr.f32.gmra.mrb[0].mxu0 %v348
      %v777 = vpop.f32.mrb[0].mxu0
      %v778 = vadd.f32 %v614, %v777
      %v779 = vpop.f32.mrb[0].mxu0
      %780 = vmatprep.mubr.f32.mxu0 %v358
      %781 = vmatmul.mubr.f32.gmra.mrb[0].mxu0 %v357
      %v782 = vpop.f32.mrb[0].mxu0
      %v783 = vadd.f32 %v614, %v782
      %v784 = vpop.f32.mrb[0].mxu0
      %785 = vmatprep.mubr.f32.mxu0 %v367
      %786 = vmatmul.mubr.f32.gmra.mrb[0].mxu0 %v366
      %v787 = vpop.f32.mrb[0].mxu0
      %v788 = vadd.f32 %v614, %v787
      %v789 = vpop.f32.mrb[0].mxu0
      %790 = vmatprep.mubr.f32.mxu0 %v376
      %791 = vmatmul.mubr.f32.gmra.mrb[0].mxu0 %v375
      %v792 = vpop.f32.mrb[0].mxu0
      %v793 = vadd.f32 %v614, %v792
      %v794 = vpop.f32.mrb[0].mxu0
      %795 = vmatprep.mubr.f32.mxu0 %v385
      %796 = vmatmul.mubr.f32.gmra.mrb[0].mxu0 %v384
      %v797 = vpop.f32.mrb[0].mxu0
      %v798 = vadd.f32 %v614, %v797
      %v799 = vpop.f32.mrb[0].mxu0
      %800 = vmatprep.mubr.f32.mxu0 %v394
      %801 = vmatmul.mubr.f32.gmra.mrb[0].mxu0 %v393
      %v802 = vpop.f32.mrb[0].mxu0
      %v803 = vadd.f32 %v614, %v802
      %v804 = vpop.f32.mrb[0].mxu0
      %805 = vmatprep.mubr.f32.mxu0 %v403
      %806 = vmatmul.mubr.f32.gmra.mrb[0].mxu0 %v402
      %v807 = vpop.f32.mrb[0].mxu0
      %v808 = vadd.f32 %v614, %v807
      %v809 = vpop.f32.mrb[0].mxu0
      %810 = vmatprep.mubr.f32.mxu0 %v412
      %811 = vmatmul.mubr.f32.gmra.mrb[0].mxu0 %v411
      %v812 = vpop.f32.mrb[0].mxu0
      %v813 = vadd.f32 %v614, %v812
      %v814 = vpop.f32.mrb[0].mxu0
      %815 = vmatprep.mubr.f32.mxu0 %v421
      %816 = vmatmul.mubr.f32.gmra.mrb[0].mxu0 %v420
      %v817 = vpop.f32.mrb[0].mxu0
      %v818 = vadd.f32 %v614, %v817
      %v819 = vpop.f32.mrb[0].mxu0
      %820 = vmatprep.mubr.f32.mxu0 %v430
      %821 = vmatmul.mubr.f32.gmra.mrb[0].mxu0 %v429
      %v822 = vpop.f32.mrb[0].mxu0
      %v823 = vadd.f32 %v614, %v822
      %v824 = vpop.f32.mrb[0].mxu0
      %825 = vmatprep.mubr.f32.mxu0 %v439
      %826 = vmatmul.mubr.f32.gmra.mrb[0].mxu0 %v438
      %v827 = vpop.f32.mrb[0].mxu0
      %v828 = vadd.f32 %v614, %v827
      %v829 = vpop.f32.mrb[0].mxu0
      %830 = vmatprep.mubr.f32.mxu0 %v448
      %831 = vmatmul.mubr.f32.gmra.mrb[0].mxu0 %v447
      %v832 = vpop.f32.mrb[0].mxu0
      %v833 = vadd.f32 %v614, %v832
      %v834 = vpop.f32.mrb[0].mxu0
      %835 = vmatprep.mubr.f32.mxu0 %v457
      %836 = vmatmul.mubr.f32.gmra.mrb[0].mxu0 %v456
      %v837 = vpop.f32.mrb[0].mxu0
      %v838 = vadd.f32 %v614, %v837
      %v839 = vpop.f32.mrb[0].mxu0
      %840 = vdwg.mxu0
      %841 = vmatprep.subr.mxu0 0.0
      %842 = vmatpush1.msra.mxu0 %v497
      %843 = vmatprep.subr.mxu0 0.0
      %844 = vmatpush1.msra.mxu0 %v498
      %845 = vmatprep.subr.mxu0 0.0
      %846 = vmatpush1.msra.mxu0 %v499
      %847 = vmatprep.subr.mxu0 0.0
      %848 = vmatpush1.msra.mxu0 %v500
      %849 = vmatprep.subr.mxu0 0.0
      %850 = vmatpush1.msra.mxu0 %v501
      %851 = vmatprep.subr.mxu0 0.0
      %852 = vmatpush1.msra.mxu0 %v502
      %853 = vmatprep.subr.mxu0 0.0
      %854 = vmatpush1.msra.mxu0 %v503
      %855 = vmatprep.subr.mxu0 0.0
      %856 = vmatpush1.msra.mxu0 %v504
      %857 = vmatprep.subr.mxu0 0.0
      %858 = vmatpush1.msra.mxu0 %v505
      %859 = vmatprep.subr.mxu0 0.0
      %860 = vmatpush1.msra.mxu0 %v506
      %861 = vmatprep.subr.mxu0 0.0
      %862 = vmatpush1.msra.mxu0 %v507
      %863 = vmatprep.subr.mxu0 0.0
      %864 = vmatpush1.msra.mxu0 %v508
      %865 = vmatprep.subr.mxu0 0.0
      %866 = vmatpush1.msra.mxu0 %v509
      %867 = vmatprep.subr.mxu0 0.0
      %868 = vmatpush1.msra.mxu0 %v510
      %869 = vmatprep.subr.mxu0 0.0
      %870 = vmatpush1.msra.mxu0 %v511
      %871 = vmatprep.subr.mxu0 0.0
      %872 = vmatpush1.msra.mxu0 %v512
      %873 = vmatprep.subr.mxu0 0.0
      %874 = vmatpush1.msra.mxu0 %v513
      %875 = vmatprep.subr.mxu0 0.0
      %876 = vmatpush1.msra.mxu0 %v514
      %877 = vmatprep.subr.mxu0 0.0
      %878 = vmatpush1.msra.mxu0 %v515
      %879 = vmatprep.subr.mxu0 0.0
      %880 = vmatpush1.msra.mxu0 %v516
      %881 = vmatprep.subr.mxu0 0.0
      %882 = vmatpush1.msra.mxu0 %v517
      %883 = vmatprep.subr.mxu0 0.0
      %884 = vmatpush1.msra.mxu0 %v518
      %885 = vmatprep.subr.mxu0 0.0
      %886 = vmatpush1.msra.mxu0 %v519
      %887 = vmatprep.subr.mxu0 0.0
      %888 = vmatpush1.msra.mxu0 %v520
      %889 = vmatprep.subr.mxu0 0.0
      %890 = vmatpush1.msra.mxu0 %v521
      %891 = vmatprep.subr.mxu0 0.0
      %892 = vmatpush1.msra.mxu0 %v522
      %893 = vmatprep.subr.mxu0 0.0
      %894 = vmatpush1.msra.mxu0 %v523
      %895 = vmatprep.subr.mxu0 0.0
      %896 = vmatpush1.msra.mxu0 %v524
      %897 = vmatprep.subr.mxu0 0.0
      %898 = vmatpush1.msra.mxu0 %v525
      %899 = vmatprep.subr.mxu0 0.0
      %900 = vmatpush1.msra.mxu0 %v526
      %901 = vmatprep.subr.mxu0 0.0
      %902 = vmatpush1.msra.mxu0 %v527
      %903 = vmatprep.subr.mxu0 0.0
      %904 = vmatpush1.msra.mxu0 %v528
      %905 = vmatprep.mubr.f32.mxu0 %v180
      %906 = vmatmul.mubr.f32.gmra.mrb[0].mxu0 %v179
      %v907 = vpop.f32.mrb[0].mxu0
      %v908 = vadd.f32 %v683, %v907
      %v909 = vpop.f32.mrb[0].mxu0
      %910 = vmatprep.mubr.f32.mxu0 %v189
      %911 = vmatmul.mubr.f32.gmra.mrb[0].mxu0 %v188
      %v912 = vpop.f32.mrb[0].mxu0
      %v913 = vadd.f32 %v688, %v912
      %v914 = vpop.f32.mrb[0].mxu0
      %915 = vmatprep.mubr.f32.mxu0 %v198
      %916 = vmatmul.mubr.f32.gmra.mrb[0].mxu0 %v197
      %v917 = vpop.f32.mrb[0].mxu0
      %v918 = vadd.f32 %v693, %v917
      %v919 = vpop.f32.mrb[0].mxu0
      %920 = vmatprep.mubr.f32.mxu0 %v207
      %921 = vmatmul.mubr.f32.gmra.mrb[0].mxu0 %v206
      %v922 = vpop.f32.mrb[0].mxu0
      %v923 = vadd.f32 %v698, %v922
      %v924 = vpop.f32.mrb[0].mxu0
      %925 = vmatprep.mubr.f32.mxu0 %v216
      %926 = vmatmul.mubr.f32.gmra.mrb[0].mxu0 %v215
      %v927 = vpop.f32.mrb[0].mxu0
      %v928 = vadd.f32 %v703, %v927
      %v929 = vpop.f32.mrb[0].mxu0
      %930 = vmatprep.mubr.f32.mxu0 %v225
      %931 = vmatmul.mubr.f32.gmra.mrb[0].mxu0 %v224
      %v932 = vpop.f32.mrb[0].mxu0
      %v933 = vadd.f32 %v708, %v932
      %v934 = vpop.f32.mrb[0].mxu0
      %935 = vmatprep.mubr.f32.mxu0 %v234
      %936 = vmatmul.mubr.f32.gmra.mrb[0].mxu0 %v233
      %v937 = vpop.f32.mrb[0].mxu0
      %v938 = vadd.f32 %v713, %v937
      %v939 = vpop.f32.mrb[0].mxu0
      %940 = vmatprep.mubr.f32.mxu0 %v243
      %941 = vmatmul.mubr.f32.gmra.mrb[0].mxu0 %v242
      %v942 = vpop.f32.mrb[0].mxu0
      %v943 = vadd.f32 %v718, %v942
      %v944 = vpop.f32.mrb[0].mxu0
      %945 = vmatprep.mubr.f32.mxu0 %v252
      %946 = vmatmul.mubr.f32.gmra.mrb[0].mxu0 %v251
      %v947 = vpop.f32.mrb[0].mxu0
      %v948 = vadd.f32 %v723, %v947
      %v949 = vpop.f32.mrb[0].mxu0
      %950 = vmatprep.mubr.f32.mxu0 %v261
      %951 = vmatmul.mubr.f32.gmra.mrb[0].mxu0 %v260
      %v952 = vpop.f32.mrb[0].mxu0
      %v953 = vadd.f32 %v728, %v952
      %v954 = vpop.f32.mrb[0].mxu0
      %955 = vmatprep.mubr.f32.mxu0 %v270
      %956 = vmatmul.mubr.f32.gmra.mrb[0].mxu0 %v269
      %v957 = vpop.f32.mrb[0].mxu0
      %v958 = vadd.f32 %v733, %v957
      %v959 = vpop.f32.mrb[0].mxu0
      %960 = vmatprep.mubr.f32.mxu0 %v279
      %961 = vmatmul.mubr.f32.gmra.mrb[0].mxu0 %v278
      %v962 = vpop.f32.mrb[0].mxu0
      %v963 = vadd.f32 %v738, %v962
      %v964 = vpop.f32.mrb[0].mxu0
      %965 = vmatprep.mubr.f32.mxu0 %v288
      %966 = vmatmul.mubr.f32.gmra.mrb[0].mxu0 %v287
      %v967 = vpop.f32.mrb[0].mxu0
      %v968 = vadd.f32 %v743, %v967
      %v969 = vpop.f32.mrb[0].mxu0
      %970 = vmatprep.mubr.f32.mxu0 %v297
      %971 = vmatmul.mubr.f32.gmra.mrb[0].mxu0 %v296
      %v972 = vpop.f32.mrb[0].mxu0
      %v973 = vadd.f32 %v748, %v972
      %v974 = vpop.f32.mrb[0].mxu0
      %975 = vmatprep.mubr.f32.mxu0 %v306
      %976 = vmatmul.mubr.f32.gmra.mrb[0].mxu0 %v305
      %v977 = vpop.f32.mrb[0].mxu0
      %v978 = vadd.f32 %v753, %v977
      %v979 = vpop.f32.mrb[0].mxu0
      %980 = vmatprep.mubr.f32.mxu0 %v315
      %981 = vmatmul.mubr.f32.gmra.mrb[0].mxu0 %v314
      %v982 = vpop.f32.mrb[0].mxu0
      %v983 = vadd.f32 %v758, %v982
      %v984 = vpop.f32.mrb[0].mxu0
      %985 = vmatprep.mubr.f32.mxu0 %v324
      %986 = vmatmul.mubr.f32.gmra.mrb[0].mxu0 %v323
      %v987 = vpop.f32.mrb[0].mxu0
      %v988 = vadd.f32 %v763, %v987
      %v989 = vpop.f32.mrb[0].mxu0
      %990 = vmatprep.mubr.f32.mxu0 %v333
      %991 = vmatmul.mubr.f32.gmra.mrb[0].mxu0 %v332
      %v992 = vpop.f32.mrb[0].mxu0
      %v993 = vadd.f32 %v768, %v992
      %v994 = vpop.f32.mrb[0].mxu0
      %995 = vmatprep.mubr.f32.mxu0 %v342
      %996 = vmatmul.mubr.f32.gmra.mrb[0].mxu0 %v341
      %v997 = vpop.f32.mrb[0].mxu0
      %v998 = vadd.f32 %v773, %v997
      %v999 = vpop.f32.mrb[0].mxu0
      %1000 = vmatprep.mubr.f32.mxu0 %v351
      %1001 = vmatmul.mubr.f32.gmra.mrb[0].mxu0 %v350
      %v1002 = vpop.f32.mrb[0].mxu0
      %v1003 = vadd.f32 %v778, %v1002
      %v1004 = vpop.f32.mrb[0].mxu0
      %1005 = vmatprep.mubr.f32.mxu0 %v360
      %1006 = vmatmul.mubr.f32.gmra.mrb[0].mxu0 %v359
      %v1007 = vpop.f32.mrb[0].mxu0
      %v1008 = vadd.f32 %v783, %v1007
      %v1009 = vpop.f32.mrb[0].mxu0
      %1010 = vmatprep.mubr.f32.mxu0 %v369
      %1011 = vmatmul.mubr.f32.gmra.mrb[0].mxu0 %v368
      %v1012 = vpop.f32.mrb[0].mxu0
      %v1013 = vadd.f32 %v788, %v1012
      %v1014 = vpop.f32.mrb[0].mxu0
      %1015 = vmatprep.mubr.f32.mxu0 %v378
      %1016 = vmatmul.mubr.f32.gmra.mrb[0].mxu0 %v377
      %v1017 = vpop.f32.mrb[0].mxu0
      %v1018 = vadd.f32 %v793, %v1017
      %v1019 = vpop.f32.mrb[0].mxu0
      %1020 = vmatprep.mubr.f32.mxu0 %v387
      %1021 = vmatmul.mubr.f32.gmra.mrb[0].mxu0 %v386
      %v1022 = vpop.f32.mrb[0].mxu0
      %v1023 = vadd.f32 %v798, %v1022
      %v1024 = vpop.f32.mrb[0].mxu0
      %1025 = vmatprep.mubr.f32.mxu0 %v396
      %1026 = vmatmul.mubr.f32.gmra.mrb[0].mxu0 %v395
      %v1027 = vpop.f32.mrb[0].mxu0
      %v1028 = vadd.f32 %v803, %v1027
      %v1029 = vpop.f32.mrb[0].mxu0
      %1030 = vmatprep.mubr.f32.mxu0 %v405
      %1031 = vmatmul.mubr.f32.gmra.mrb[0].mxu0 %v404
      %v1032 = vpop.f32.mrb[0].mxu0
      %v1033 = vadd.f32 %v808, %v1032
      %v1034 = vpop.f32.mrb[0].mxu0
      %1035 = vmatprep.mubr.f32.mxu0 %v414
      %1036 = vmatmul.mubr.f32.gmra.mrb[0].mxu0 %v413
      %v1037 = vpop.f32.mrb[0].mxu0
      %v1038 = vadd.f32 %v813, %v1037
      %v1039 = vpop.f32.mrb[0].mxu0
      %1040 = vmatprep.mubr.f32.mxu0 %v423
      %1041 = vmatmul.mubr.f32.gmra.mrb[0].mxu0 %v422
      %v1042 = vpop.f32.mrb[0].mxu0
      %v1043 = vadd.f32 %v818, %v1042
      %v1044 = vpop.f32.mrb[0].mxu0
      %1045 = vmatprep.mubr.f32.mxu0 %v432
      %1046 = vmatmul.mubr.f32.gmra.mrb[0].mxu0 %v431
      %v1047 = vpop.f32.mrb[0].mxu0
      %v1048 = vadd.f32 %v823, %v1047
      %v1049 = vpop.f32.mrb[0].mxu0
      %1050 = vmatprep.mubr.f32.mxu0 %v441
      %1051 = vmatmul.mubr.f32.gmra.mrb[0].mxu0 %v440
      %v1052 = vpop.f32.mrb[0].mxu0
      %v1053 = vadd.f32 %v828, %v1052
      %v1054 = vpop.f32.mrb[0].mxu0
      %1055 = vmatprep.mubr.f32.mxu0 %v450
      %1056 = vmatmul.mubr.f32.gmra.mrb[0].mxu0 %v449
      %v1057 = vpop.f32.mrb[0].mxu0
      %v1058 = vadd.f32 %v833, %v1057
      %v1059 = vpop.f32.mrb[0].mxu0
      %1060 = vmatprep.mubr.f32.mxu0 %v459
      %1061 = vmatmul.mubr.f32.gmra.mrb[0].mxu0 %v458
      %v1062 = vpop.f32.mrb[0].mxu0
      %v1063 = vadd.f32 %v838, %v1062
      %v1064 = vpop.f32.mrb[0].mxu0
      %1065 = vdwg.mxu0
      %1066 = vmatprep.subr.mxu0 0.0
      %1067 = vmatpush1.msra.mxu0 %v529
      %1068 = vmatprep.subr.mxu0 0.0
      %1069 = vmatpush1.msra.mxu0 %v530
      %1070 = vmatprep.subr.mxu0 0.0
      %1071 = vmatpush1.msra.mxu0 %v531
      %1072 = vmatprep.subr.mxu0 0.0
      %1073 = vmatpush1.msra.mxu0 %v532
      %1074 = vmatprep.subr.mxu0 0.0
      %1075 = vmatpush1.msra.mxu0 %v533
      %1076 = vmatprep.subr.mxu0 0.0
      %1077 = vmatpush1.msra.mxu0 %v534
      %1078 = vmatprep.subr.mxu0 0.0
      %1079 = vmatpush1.msra.mxu0 %v535
      %1080 = vmatprep.subr.mxu0 0.0
      %1081 = vmatpush1.msra.mxu0 %v536
      %1082 = vmatprep.subr.mxu0 0.0
      %1083 = vmatpush1.msra.mxu0 %v537
      %1084 = vmatprep.subr.mxu0 0.0
      %1085 = vmatpush1.msra.mxu0 %v538
      %1086 = vmatprep.subr.mxu0 0.0
      %1087 = vmatpush1.msra.mxu0 %v539
      %1088 = vmatprep.subr.mxu0 0.0
      %1089 = vmatpush1.msra.mxu0 %v540
      %1090 = vmatprep.subr.mxu0 0.0
      %1091 = vmatpush1.msra.mxu0 %v541
      %1092 = vmatprep.subr.mxu0 0.0
      %1093 = vmatpush1.msra.mxu0 %v542
      %1094 = vmatprep.subr.mxu0 0.0
      %1095 = vmatpush1.msra.mxu0 %v543
      %1096 = vmatprep.subr.mxu0 0.0
      %1097 = vmatpush1.msra.mxu0 %v544
      %1098 = vmatprep.subr.mxu0 0.0
      %1099 = vmatpush1.msra.mxu0 %v545
      %1100 = vmatprep.subr.mxu0 0.0
      %1101 = vmatpush1.msra.mxu0 %v546
      %1102 = vmatprep.subr.mxu0 0.0
      %1103 = vmatpush1.msra.mxu0 %v547
      %1104 = vmatprep.subr.mxu0 0.0
      %1105 = vmatpush1.msra.mxu0 %v548
      %1106 = vmatprep.subr.mxu0 0.0
      %1107 = vmatpush1.msra.mxu0 %v549
      %1108 = vmatprep.subr.mxu0 0.0
      %1109 = vmatpush1.msra.mxu0 %v550
      %1110 = vmatprep.subr.mxu0 0.0
      %1111 = vmatpush1.msra.mxu0 %v551
      %1112 = vmatprep.subr.mxu0 0.0
      %1113 = vmatpush1.msra.mxu0 %v552
      %1114 = vmatprep.subr.mxu0 0.0
      %1115 = vmatpush1.msra.mxu0 %v553
      %1116 = vmatprep.subr.mxu0 0.0
      %1117 = vmatpush1.msra.mxu0 %v554
      %1118 = vmatprep.subr.mxu0 0.0
      %1119 = vmatpush1.msra.mxu0 %v555
      %1120 = vmatprep.subr.mxu0 0.0
      %1121 = vmatpush1.msra.mxu0 %v556
      %1122 = vmatprep.subr.mxu0 0.0
      %1123 = vmatpush1.msra.mxu0 %v557
      %1124 = vmatprep.subr.mxu0 0.0
      %1125 = vmatpush1.msra.mxu0 %v558
      %1126 = vmatprep.subr.mxu0 0.0
      %1127 = vmatpush1.msra.mxu0 %v559
      %1128 = vmatprep.subr.mxu0 0.0
      %1129 = vmatpush1.msra.mxu0 %v560
      %1130 = vmatprep.mubr.f32.mxu0 %v182
      %1131 = vmatmul.mubr.f32.gmra.mrb[0].mxu0 %v181
      %v1132 = vpop.f32.mrb[0].mxu0
      %v1133 = vadd.f32 %v908, %v1132
      %v1134 = vpop.f32.mrb[0].mxu0
      %1135 = vmatprep.mubr.f32.mxu0 %v191
      %1136 = vmatmul.mubr.f32.gmra.mrb[0].mxu0 %v190
      %v1137 = vpop.f32.mrb[0].mxu0
      %v1138 = vadd.f32 %v913, %v1137
      %v1139 = vpop.f32.mrb[0].mxu0
      %1140 = vmatprep.mubr.f32.mxu0 %v200
      %1141 = vmatmul.mubr.f32.gmra.mrb[0].mxu0 %v199
      %v1142 = vpop.f32.mrb[0].mxu0
      %v1143 = vadd.f32 %v918, %v1142
      %v1144 = vpop.f32.mrb[0].mxu0
      %1145 = vmatprep.mubr.f32.mxu0 %v209
      %1146 = vmatmul.mubr.f32.gmra.mrb[0].mxu0 %v208
      %v1147 = vpop.f32.mrb[0].mxu0
      %v1148 = vadd.f32 %v923, %v1147
      %v1149 = vpop.f32.mrb[0].mxu0
      %1150 = vmatprep.mubr.f32.mxu0 %v218
      %1151 = vmatmul.mubr.f32.gmra.mrb[0].mxu0 %v217
      %v1152 = vpop.f32.mrb[0].mxu0
      %v1153 = vadd.f32 %v928, %v1152
      %v1154 = vpop.f32.mrb[0].mxu0
      %1155 = vmatprep.mubr.f32.mxu0 %v227
      %1156 = vmatmul.mubr.f32.gmra.mrb[0].mxu0 %v226
      %v1157 = vpop.f32.mrb[0].mxu0
      %v1158 = vadd.f32 %v933, %v1157
      %v1159 = vpop.f32.mrb[0].mxu0
      %1160 = vmatprep.mubr.f32.mxu0 %v236
      %1161 = vmatmul.mubr.f32.gmra.mrb[0].mxu0 %v235
      %v1162 = vpop.f32.mrb[0].mxu0
      %v1163 = vadd.f32 %v938, %v1162
      %v1164 = vpop.f32.mrb[0].mxu0
      %1165 = vmatprep.mubr.f32.mxu0 %v245
      %1166 = vmatmul.mubr.f32.gmra.mrb[0].mxu0 %v244
      %v1167 = vpop.f32.mrb[0].mxu0
      %v1168 = vadd.f32 %v943, %v1167
      %v1169 = vpop.f32.mrb[0].mxu0
      %1170 = vmatprep.mubr.f32.mxu0 %v254
      %1171 = vmatmul.mubr.f32.gmra.mrb[0].mxu0 %v253
      %v1172 = vpop.f32.mrb[0].mxu0
      %v1173 = vadd.f32 %v948, %v1172
      %v1174 = vpop.f32.mrb[0].mxu0
      %1175 = vmatprep.mubr.f32.mxu0 %v263
      %1176 = vmatmul.mubr.f32.gmra.mrb[0].mxu0 %v262
      %v1177 = vpop.f32.mrb[0].mxu0
      %v1178 = vadd.f32 %v953, %v1177
      %v1179 = vpop.f32.mrb[0].mxu0
      %1180 = vmatprep.mubr.f32.mxu0 %v272
      %1181 = vmatmul.mubr.f32.gmra.mrb[0].mxu0 %v271
      %v1182 = vpop.f32.mrb[0].mxu0
      %v1183 = vadd.f32 %v958, %v1182
      %v1184 = vpop.f32.mrb[0].mxu0
      %1185 = vmatprep.mubr.f32.mxu0 %v281
      %1186 = vmatmul.mubr.f32.gmra.mrb[0].mxu0 %v280
      %v1187 = vpop.f32.mrb[0].mxu0
      %v1188 = vadd.f32 %v963, %v1187
      %v1189 = vpop.f32.mrb[0].mxu0
      %1190 = vmatprep.mubr.f32.mxu0 %v290
      %1191 = vmatmul.mubr.f32.gmra.mrb[0].mxu0 %v289
      %v1192 = vpop.f32.mrb[0].mxu0
      %v1193 = vadd.f32 %v968, %v1192
      %v1194 = vpop.f32.mrb[0].mxu0
      %1195 = vmatprep.mubr.f32.mxu0 %v299
      %1196 = vmatmul.mubr.f32.gmra.mrb[0].mxu0 %v298
      %v1197 = vpop.f32.mrb[0].mxu0
      %v1198 = vadd.f32 %v973, %v1197
      %v1199 = vpop.f32.mrb[0].mxu0
      %1200 = vmatprep.mubr.f32.mxu0 %v308
      %1201 = vmatmul.mubr.f32.gmra.mrb[0].mxu0 %v307
      %v1202 = vpop.f32.mrb[0].mxu0
      %v1203 = vadd.f32 %v978, %v1202
      %v1204 = vpop.f32.mrb[0].mxu0
      %1205 = vmatprep.mubr.f32.mxu0 %v317
      %1206 = vmatmul.mubr.f32.gmra.mrb[0].mxu0 %v316
      %v1207 = vpop.f32.mrb[0].mxu0
      %v1208 = vadd.f32 %v983, %v1207
      %v1209 = vpop.f32.mrb[0].mxu0
      %1210 = vmatprep.mubr.f32.mxu0 %v326
      %1211 = vmatmul.mubr.f32.gmra.mrb[0].mxu0 %v325
      %v1212 = vpop.f32.mrb[0].mxu0
      %v1213 = vadd.f32 %v988, %v1212
      %v1214 = vpop.f32.mrb[0].mxu0
      %1215 = vmatprep.mubr.f32.mxu0 %v335
      %1216 = vmatmul.mubr.f32.gmra.mrb[0].mxu0 %v334
      %v1217 = vpop.f32.mrb[0].mxu0
      %v1218 = vadd.f32 %v993, %v1217
      %v1219 = vpop.f32.mrb[0].mxu0
      %1220 = vmatprep.mubr.f32.mxu0 %v344
      %1221 = vmatmul.mubr.f32.gmra.mrb[0].mxu0 %v343
      %v1222 = vpop.f32.mrb[0].mxu0
      %v1223 = vadd.f32 %v998, %v1222
      %v1224 = vpop.f32.mrb[0].mxu0
      %1225 = vmatprep.mubr.f32.mxu0 %v353
      %1226 = vmatmul.mubr.f32.gmra.mrb[0].mxu0 %v352
      %v1227 = vpop.f32.mrb[0].mxu0
      %v1228 = vadd.f32 %v1003, %v1227
      %v1229 = vpop.f32.mrb[0].mxu0
      %1230 = vmatprep.mubr.f32.mxu0 %v362
      %1231 = vmatmul.mubr.f32.gmra.mrb[0].mxu0 %v361
      %v1232 = vpop.f32.mrb[0].mxu0
      %v1233 = vadd.f32 %v1008, %v1232
      %v1234 = vpop.f32.mrb[0].mxu0
      %1235 = vmatprep.mubr.f32.mxu0 %v371
      %1236 = vmatmul.mubr.f32.gmra.mrb[0].mxu0 %v370
      %v1237 = vpop.f32.mrb[0].mxu0
      %v1238 = vadd.f32 %v1013, %v1237
      %v1239 = vpop.f32.mrb[0].mxu0
      %1240 = vmatprep.mubr.f32.mxu0 %v380
      %1241 = vmatmul.mubr.f32.gmra.mrb[0].mxu0 %v379
      %v1242 = vpop.f32.mrb[0].mxu0
      %v1243 = vadd.f32 %v1018, %v1242
      %v1244 = vpop.f32.mrb[0].mxu0
      %1245 = vmatprep.mubr.f32.mxu0 %v389
      %1246 = vmatmul.mubr.f32.gmra.mrb[0].mxu0 %v388
      %v1247 = vpop.f32.mrb[0].mxu0
      %v1248 = vadd.f32 %v1023, %v1247
      %v1249 = vpop.f32.mrb[0].mxu0
      %1250 = vmatprep.mubr.f32.mxu0 %v398
      %1251 = vmatmul.mubr.f32.gmra.mrb[0].mxu0 %v397
      %v1252 = vpop.f32.mrb[0].mxu0
      %v1253 = vadd.f32 %v1028, %v1252
      %v1254 = vpop.f32.mrb[0].mxu0
      %1255 = vmatprep.mubr.f32.mxu0 %v407
      %1256 = vmatmul.mubr.f32.gmra.mrb[0].mxu0 %v406
      %v1257 = vpop.f32.mrb[0].mxu0
      %v1258 = vadd.f32 %v1033, %v1257
      %v1259 = vpop.f32.mrb[0].mxu0
      %1260 = vmatprep.mubr.f32.mxu0 %v416
      %1261 = vmatmul.mubr.f32.gmra.mrb[0].mxu0 %v415
      %v1262 = vpop.f32.mrb[0].mxu0
      %v1263 = vadd.f32 %v1038, %v1262
      %v1264 = vpop.f32.mrb[0].mxu0
      %1265 = vmatprep.mubr.f32.mxu0 %v425
      %1266 = vmatmul.mubr.f32.gmra.mrb[0].mxu0 %v424
      %v1267 = vpop.f32.mrb[0].mxu0
      %v1268 = vadd.f32 %v1043, %v1267
      %v1269 = vpop.f32.mrb[0].mxu0
      %1270 = vmatprep.mubr.f32.mxu0 %v434
      %1271 = vmatmul.mubr.f32.gmra.mrb[0].mxu0 %v433
      %v1272 = vpop.f32.mrb[0].mxu0
      %v1273 = vadd.f32 %v1048, %v1272
      %v1274 = vpop.f32.mrb[0].mxu0
      %1275 = vmatprep.mubr.f32.mxu0 %v443
      %1276 = vmatmul.mubr.f32.gmra.mrb[0].mxu0 %v442
      %v1277 = vpop.f32.mrb[0].mxu0
      %v1278 = vadd.f32 %v1053, %v1277
      %v1279 = vpop.f32.mrb[0].mxu0
      %1280 = vmatprep.mubr.f32.mxu0 %v452
      %1281 = vmatmul.mubr.f32.gmra.mrb[0].mxu0 %v451
      %v1282 = vpop.f32.mrb[0].mxu0
      %v1283 = vadd.f32 %v1058, %v1282
      %v1284 = vpop.f32.mrb[0].mxu0
      %1285 = vmatprep.mubr.f32.mxu0 %v461
      %1286 = vmatmul.mubr.f32.gmra.mrb[0].mxu0 %v460
      %v1287 = vpop.f32.mrb[0].mxu0
      %v1288 = vadd.f32 %v1063, %v1287
      %v1289 = vpop.f32.mrb[0].mxu0
      %1290 = vdwg.mxu0
      %1291 = vmatprep.subr.mxu0 0.0
      %1292 = vmatpush1.msra.mxu0 %v561
      %1293 = vmatprep.subr.mxu0 0.0
      %1294 = vmatpush1.msra.mxu0 %v562
      %1295 = vmatprep.subr.mxu0 0.0
      %1296 = vmatpush1.msra.mxu0 %v563
      %1297 = vmatprep.subr.mxu0 0.0
      %1298 = vmatpush1.msra.mxu0 %v564
      %1299 = vmatprep.subr.mxu0 0.0
      %1300 = vmatpush1.msra.mxu0 %v565
      %1301 = vmatprep.subr.mxu0 0.0
      %1302 = vmatpush1.msra.mxu0 %v566
      %1303 = vmatprep.subr.mxu0 0.0
      %1304 = vmatpush1.msra.mxu0 %v567
      %1305 = vmatprep.subr.mxu0 0.0
      %1306 = vmatpush1.msra.mxu0 %v568
      %1307 = vmatprep.subr.mxu0 0.0
      %1308 = vmatpush1.msra.mxu0 %v569
      %1309 = vmatprep.subr.mxu0 0.0
      %1310 = vmatpush1.msra.mxu0 %v570
      %1311 = vmatprep.subr.mxu0 0.0
      %1312 = vmatpush1.msra.mxu0 %v571
      %1313 = vmatprep.subr.mxu0 0.0
      %1314 = vmatpush1.msra.mxu0 %v572
      %1315 = vmatprep.subr.mxu0 0.0
      %1316 = vmatpush1.msra.mxu0 %v573
      %1317 = vmatprep.subr.mxu0 0.0
      %1318 = vmatpush1.msra.mxu0 %v574
      %1319 = vmatprep.subr.mxu0 0.0
      %1320 = vmatpush1.msra.mxu0 %v575
      %1321 = vmatprep.subr.mxu0 0.0
      %1322 = vmatpush1.msra.mxu0 %v576
      %1323 = vmatprep.subr.mxu0 0.0
      %1324 = vmatpush1.msra.mxu0 %v577
      %1325 = vmatprep.subr.mxu0 0.0
      %1326 = vmatpush1.msra.mxu0 %v578
      %1327 = vmatprep.subr.mxu0 0.0
      %1328 = vmatpush1.msra.mxu0 %v579
      %1329 = vmatprep.subr.mxu0 0.0
      %1330 = vmatpush1.msra.mxu0 %v580
      %1331 = vmatprep.subr.mxu0 0.0
      %1332 = vmatpush1.msra.mxu0 %v581
      %1333 = vmatprep.subr.mxu0 0.0
      %1334 = vmatpush1.msra.mxu0 %v582
      %1335 = vmatprep.subr.mxu0 0.0
      %1336 = vmatpush1.msra.mxu0 %v583
      %1337 = vmatprep.subr.mxu0 0.0
      %1338 = vmatpush1.msra.mxu0 %v584
      %1339 = vmatprep.subr.mxu0 0.0
      %1340 = vmatpush1.msra.mxu0 %v585
      %1341 = vmatprep.subr.mxu0 0.0
      %1342 = vmatpush1.msra.mxu0 %v586
      %1343 = vmatprep.subr.mxu0 0.0
      %1344 = vmatpush1.msra.mxu0 %v587
      %1345 = vmatprep.subr.mxu0 0.0
      %1346 = vmatpush1.msra.mxu0 %v588
      %1347 = vmatprep.subr.mxu0 0.0
      %1348 = vmatpush1.msra.mxu0 %v589
      %1349 = vmatprep.subr.mxu0 0.0
      %1350 = vmatpush1.msra.mxu0 %v590
      %1351 = vmatprep.subr.mxu0 0.0
      %1352 = vmatpush1.msra.mxu0 %v591
      %1353 = vmatprep.subr.mxu0 0.0
      %1354 = vmatpush1.msra.mxu0 %v592
      %1355 = vmatprep.mubr.f32.mxu0 %v184
      %1356 = vmatmul.mubr.f32.gmra.mrb[0].mxu0 %v183
      %v1357 = vpop.f32.mrb[0].mxu0
      %v1358 = vadd.f32 %v1133, %v1357
      %v1359 = vpop.f32.mrb[0].mxu0
      %1360 = vmatprep.mubr.f32.mxu0 %v193
      %1361 = vmatmul.mubr.f32.gmra.mrb[0].mxu0 %v192
      %v1362 = vpop.f32.mrb[0].mxu0
      %v1363 = vadd.f32 %v1138, %v1362
      %v1364 = vpop.f32.mrb[0].mxu0
      %1365 = vmatprep.mubr.f32.mxu0 %v202
      %1366 = vmatmul.mubr.f32.gmra.mrb[0].mxu0 %v201
      %v1367 = vpop.f32.mrb[0].mxu0
      %v1368 = vadd.f32 %v1143, %v1367
      %v1369 = vpop.f32.mrb[0].mxu0
      %1370 = vmatprep.mubr.f32.mxu0 %v211
      %1371 = vmatmul.mubr.f32.gmra.mrb[0].mxu0 %v210
      %v1372 = vpop.f32.mrb[0].mxu0
      %v1373 = vadd.f32 %v1148, %v1372
      %v1374 = vpop.f32.mrb[0].mxu0
      %1375 = vmatprep.mubr.f32.mxu0 %v220
      %1376 = vmatmul.mubr.f32.gmra.mrb[0].mxu0 %v219
      %v1377 = vpop.f32.mrb[0].mxu0
      %v1378 = vadd.f32 %v1153, %v1377
      %v1379 = vpop.f32.mrb[0].mxu0
      %1380 = vmatprep.mubr.f32.mxu0 %v229
      %1381 = vmatmul.mubr.f32.gmra.mrb[0].mxu0 %v228
      %v1382 = vpop.f32.mrb[0].mxu0
      %v1383 = vadd.f32 %v1158, %v1382
      %v1384 = vpop.f32.mrb[0].mxu0
      %1385 = vmatprep.mubr.f32.mxu0 %v238
      %1386 = vmatmul.mubr.f32.gmra.mrb[0].mxu0 %v237
      %v1387 = vpop.f32.mrb[0].mxu0
      %v1388 = vadd.f32 %v1163, %v1387
      %v1389 = vpop.f32.mrb[0].mxu0
      %1390 = vmatprep.mubr.f32.mxu0 %v247
      %1391 = vmatmul.mubr.f32.gmra.mrb[0].mxu0 %v246
      %v1392 = vpop.f32.mrb[0].mxu0
      %v1393 = vadd.f32 %v1168, %v1392
      %v1394 = vpop.f32.mrb[0].mxu0
      %1395 = vmatprep.mubr.f32.mxu0 %v256
      %1396 = vmatmul.mubr.f32.gmra.mrb[0].mxu0 %v255
      %v1397 = vpop.f32.mrb[0].mxu0
      %v1398 = vadd.f32 %v1173, %v1397
      %v1399 = vpop.f32.mrb[0].mxu0
      %1400 = vmatprep.mubr.f32.mxu0 %v265
      %1401 = vmatmul.mubr.f32.gmra.mrb[0].mxu0 %v264
      %v1402 = vpop.f32.mrb[0].mxu0
      %v1403 = vadd.f32 %v1178, %v1402
      %v1404 = vpop.f32.mrb[0].mxu0
      %1405 = vmatprep.mubr.f32.mxu0 %v274
      %1406 = vmatmul.mubr.f32.gmra.mrb[0].mxu0 %v273
      %v1407 = vpop.f32.mrb[0].mxu0
      %v1408 = vadd.f32 %v1183, %v1407
      %v1409 = vpop.f32.mrb[0].mxu0
      %1410 = vmatprep.mubr.f32.mxu0 %v283
      %1411 = vmatmul.mubr.f32.gmra.mrb[0].mxu0 %v282
      %v1412 = vpop.f32.mrb[0].mxu0
      %v1413 = vadd.f32 %v1188, %v1412
      %v1414 = vpop.f32.mrb[0].mxu0
      %1415 = vmatprep.mubr.f32.mxu0 %v292
      %1416 = vmatmul.mubr.f32.gmra.mrb[0].mxu0 %v291
      %v1417 = vpop.f32.mrb[0].mxu0
      %v1418 = vadd.f32 %v1193, %v1417
      %v1419 = vpop.f32.mrb[0].mxu0
      %1420 = vmatprep.mubr.f32.mxu0 %v301
      %1421 = vmatmul.mubr.f32.gmra.mrb[0].mxu0 %v300
      %v1422 = vpop.f32.mrb[0].mxu0
      %v1423 = vadd.f32 %v1198, %v1422
      %v1424 = vpop.f32.mrb[0].mxu0
      %1425 = vmatprep.mubr.f32.mxu0 %v310
      %1426 = vmatmul.mubr.f32.gmra.mrb[0].mxu0 %v309
      %v1427 = vpop.f32.mrb[0].mxu0
      %v1428 = vadd.f32 %v1203, %v1427
      %v1429 = vpop.f32.mrb[0].mxu0
      %1430 = vmatprep.mubr.f32.mxu0 %v319
      %1431 = vmatmul.mubr.f32.gmra.mrb[0].mxu0 %v318
      %v1432 = vpop.f32.mrb[0].mxu0
      %v1433 = vadd.f32 %v1208, %v1432
      %v1434 = vpop.f32.mrb[0].mxu0
      %1435 = vmatprep.mubr.f32.mxu0 %v328
      %1436 = vmatmul.mubr.f32.gmra.mrb[0].mxu0 %v327
      %v1437 = vpop.f32.mrb[0].mxu0
      %v1438 = vadd.f32 %v1213, %v1437
      %v1439 = vpop.f32.mrb[0].mxu0
      %1440 = vmatprep.mubr.f32.mxu0 %v337
      %1441 = vmatmul.mubr.f32.gmra.mrb[0].mxu0 %v336
      %v1442 = vpop.f32.mrb[0].mxu0
      %v1443 = vadd.f32 %v1218, %v1442
      %v1444 = vpop.f32.mrb[0].mxu0
      %1445 = vmatprep.mubr.f32.mxu0 %v346
      %1446 = vmatmul.mubr.f32.gmra.mrb[0].mxu0 %v345
      %v1447 = vpop.f32.mrb[0].mxu0
      %v1448 = vadd.f32 %v1223, %v1447
      %v1449 = vpop.f32.mrb[0].mxu0
      %1450 = vmatprep.mubr.f32.mxu0 %v355
      %1451 = vmatmul.mubr.f32.gmra.mrb[0].mxu0 %v354
      %v1452 = vpop.f32.mrb[0].mxu0
      %v1453 = vadd.f32 %v1228, %v1452
      %v1454 = vpop.f32.mrb[0].mxu0
      %1455 = vmatprep.mubr.f32.mxu0 %v364
      %1456 = vmatmul.mubr.f32.gmra.mrb[0].mxu0 %v363
      %v1457 = vpop.f32.mrb[0].mxu0
      %v1458 = vadd.f32 %v1233, %v1457
      %v1459 = vpop.f32.mrb[0].mxu0
      %1460 = vmatprep.mubr.f32.mxu0 %v373
      %1461 = vmatmul.mubr.f32.gmra.mrb[0].mxu0 %v372
      %v1462 = vpop.f32.mrb[0].mxu0
      %v1463 = vadd.f32 %v1238, %v1462
      %v1464 = vpop.f32.mrb[0].mxu0
      %1465 = vmatprep.mubr.f32.mxu0 %v382
      %1466 = vmatmul.mubr.f32.gmra.mrb[0].mxu0 %v381
      %v1467 = vpop.f32.mrb[0].mxu0
      %v1468 = vadd.f32 %v1243, %v1467
      %v1469 = vpop.f32.mrb[0].mxu0
      %1470 = vmatprep.mubr.f32.mxu0 %v391
      %1471 = vmatmul.mubr.f32.gmra.mrb[0].mxu0 %v390
      %v1472 = vpop.f32.mrb[0].mxu0
      %v1473 = vadd.f32 %v1248, %v1472
      %v1474 = vpop.f32.mrb[0].mxu0
      %1475 = vmatprep.mubr.f32.mxu0 %v400
      %1476 = vmatmul.mubr.f32.gmra.mrb[0].mxu0 %v399
      %v1477 = vpop.f32.mrb[0].mxu0
      %v1478 = vadd.f32 %v1253, %v1477
      %v1479 = vpop.f32.mrb[0].mxu0
      %1480 = vmatprep.mubr.f32.mxu0 %v409
      %1481 = vmatmul.mubr.f32.gmra.mrb[0].mxu0 %v408
      %v1482 = vpop.f32.mrb[0].mxu0
      %v1483 = vadd.f32 %v1258, %v1482
      %v1484 = vpop.f32.mrb[0].mxu0
      %1485 = vmatprep.mubr.f32.mxu0 %v418
      %1486 = vmatmul.mubr.f32.gmra.mrb[0].mxu0 %v417
      %v1487 = vpop.f32.mrb[0].mxu0
      %v1488 = vadd.f32 %v1263, %v1487
      %v1489 = vpop.f32.mrb[0].mxu0
      %1490 = vmatprep.mubr.f32.mxu0 %v427
      %1491 = vmatmul.mubr.f32.gmra.mrb[0].mxu0 %v426
      %v1492 = vpop.f32.mrb[0].mxu0
      %v1493 = vadd.f32 %v1268, %v1492
      %v1494 = vpop.f32.mrb[0].mxu0
      %1495 = vmatprep.mubr.f32.mxu0 %v436
      %1496 = vmatmul.mubr.f32.gmra.mrb[0].mxu0 %v435
      %v1497 = vpop.f32.mrb[0].mxu0
      %v1498 = vadd.f32 %v1273, %v1497
      %v1499 = vpop.f32.mrb[0].mxu0
      %1500 = vmatprep.mubr.f32.mxu0 %v445
      %1501 = vmatmul.mubr.f32.gmra.mrb[0].mxu0 %v444
      %v1502 = vpop.f32.mrb[0].mxu0
      %v1503 = vadd.f32 %v1278, %v1502
      %v1504 = vpop.f32.mrb[0].mxu0
      %1505 = vmatprep.mubr.f32.mxu0 %v454
      %1506 = vmatmul.mubr.f32.gmra.mrb[0].mxu0 %v453
      %v1507 = vpop.f32.mrb[0].mxu0
      %v1508 = vadd.f32 %v1283, %v1507
      %v1509 = vpop.f32.mrb[0].mxu0
      %1510 = vmatprep.mubr.f32.mxu0 %v463
      %1511 = vmatmul.mubr.f32.gmra.mrb[0].mxu0 %v462
      %v1512 = vpop.f32.mrb[0].mxu0
      %v1513 = vadd.f32 %v1288, %v1512
      %v1514 = vpop.f32.mrb[0].mxu0
      %1515 = vdwg.mxu0
      %1516 = vmatprep.subr.mxu0 0.0
      %1517 = vmatpush1.msra.mxu0 %v593
      %1518 = vmatprep.subr.mxu0 0.0
      %1519 = vmatpush1.msra.mxu0 %v594
      %1520 = vmatprep.subr.mxu0 0.0
      %1521 = vmatpush1.msra.mxu0 %v595
      %1522 = vmatprep.subr.mxu0 0.0
      %1523 = vmatpush1.msra.mxu0 %v596
      %1524 = vmatprep.subr.mxu0 0.0
      %1525 = vmatpush1.msra.mxu0 %v597
      %1526 = vmatprep.subr.mxu0 0.0
      %1527 = vmatpush1.msra.mxu0 %v598
      %1528 = vmatprep.subr.mxu0 0.0
      %1529 = vmatpush1.msra.mxu0 %v599
      %1530 = vmatprep.subr.mxu0 0.0
      %1531 = vmatpush1.msra.mxu0 %v600
      %1532 = vmatprep.subr.mxu0 0.0
      %1533 = vmatpush1.msra.mxu0 %v601
      %1534 = vmatprep.subr.mxu0 0.0
      %1535 = vmatpush1.msra.mxu0 %v602
      %1536 = vmatprep.subr.mxu0 0.0
      %1537 = vmatpush1.msra.mxu0 %v603
      %1538 = vmatprep.subr.mxu0 0.0
      %1539 = vmatpush1.msra.mxu0 %v604
      %1540 = vmatprep.subr.mxu0 0.0
      %1541 = vmatpush1.msra.mxu0 %v605
      %1542 = vmatprep.subr.mxu0 0.0
      %1543 = vmatpush1.msra.mxu0 %v606
      %1544 = vmatprep.subr.mxu0 0.0
      %1545 = vmatpush1.msra.mxu0 %v607
      %1546 = vmatprep.subr.mxu0 0.0
      %1547 = vmatpush1.msra.mxu0 %v608
      %1548 = vmatprep.subr.mxu0 0.0
      %1549 = vmatpush1.msra.mxu0 0.0
      %1550 = vmatprep.subr.mxu0 0.0
      %1551 = vmatpush1.msra.mxu0 0.0
      %1552 = vmatprep.subr.mxu0 0.0
      %1553 = vmatpush1.msra.mxu0 0.0
      %1554 = vmatprep.subr.mxu0 0.0
      %1555 = vmatpush1.msra.mxu0 0.0
      %1556 = vmatprep.subr.mxu0 0.0
      %1557 = vmatpush1.msra.mxu0 0.0
      %1558 = vmatprep.subr.mxu0 0.0
      %1559 = vmatpush1.msra.mxu0 0.0
      %1560 = vmatprep.subr.mxu0 0.0
      %1561 = vmatpush1.msra.mxu0 0.0
      %1562 = vmatprep.subr.mxu0 0.0
      %1563 = vmatpush1.msra.mxu0 0.0
      %1564 = vmatprep.subr.mxu0 0.0
      %1565 = vmatpush1.msra.mxu0 0.0
      %1566 = vmatprep.subr.mxu0 0.0
      %1567 = vmatpush1.msra.mxu0 0.0
      %1568 = vmatprep.subr.mxu0 0.0
      %1569 = vmatpush1.msra.mxu0 0.0
      %1570 = vmatprep.subr.mxu0 0.0
      %1571 = vmatpush1.msra.mxu0 0.0
      %1572 = vmatprep.subr.mxu0 0.0
      %1573 = vmatpush1.msra.mxu0 0.0
      %1574 = vmatprep.subr.mxu0 0.0
      %1575 = vmatpush1.msra.mxu0 0.0
      %1576 = vmatprep.subr.mxu0 0.0
      %1577 = vmatpush1.msra.mxu0 0.0
      %1578 = vmatprep.subr.mxu0 0.0
      %1579 = vmatpush1.msra.mxu0 0.0
      %1580 = vmatprep.mubr.f32.mxu0 0.0
      %1581 = vmatmul.mubr.f32.gmra.mrb[0].mxu0 %v185
      %v1582 = vpop.f32.mrb[0].mxu0
      %v1583 = vadd.f32 %v1358, %v1582
      %v1584 = vpop.f32.mrb[0].mxu0
      %1585 = vmatprep.mubr.f32.mxu0 0.0
      %1586 = vmatmul.mubr.f32.gmra.mrb[0].mxu0 %v194
      %v1587 = vpop.f32.mrb[0].mxu0
      %v1588 = vadd.f32 %v1363, %v1587
      %v1589 = vpop.f32.mrb[0].mxu0
      %1590 = vmatprep.mubr.f32.mxu0 0.0
      %1591 = vmatmul.mubr.f32.gmra.mrb[0].mxu0 %v203
      %v1592 = vpop.f32.mrb[0].mxu0
      %v1593 = vadd.f32 %v1368, %v1592
      %v1594 = vpop.f32.mrb[0].mxu0
      %1595 = vmatprep.mubr.f32.mxu0 0.0
      %1596 = vmatmul.mubr.f32.gmra.mrb[0].mxu0 %v212
      %v1597 = vpop.f32.mrb[0].mxu0
      %v1598 = vadd.f32 %v1373, %v1597
      %v1599 = vpop.f32.mrb[0].mxu0
      %1600 = vmatprep.mubr.f32.mxu0 0.0
      %1601 = vmatmul.mubr.f32.gmra.mrb[0].mxu0 %v221
      %v1602 = vpop.f32.mrb[0].mxu0
      %v1603 = vadd.f32 %v1378, %v1602
      %v1604 = vpop.f32.mrb[0].mxu0
      %1605 = vmatprep.mubr.f32.mxu0 0.0
      %1606 = vmatmul.mubr.f32.gmra.mrb[0].mxu0 %v230
      %v1607 = vpop.f32.mrb[0].mxu0
      %v1608 = vadd.f32 %v1383, %v1607
      %v1609 = vpop.f32.mrb[0].mxu0
      %1610 = vmatprep.mubr.f32.mxu0 0.0
      %1611 = vmatmul.mubr.f32.gmra.mrb[0].mxu0 %v239
      %v1612 = vpop.f32.mrb[0].mxu0
      %v1613 = vadd.f32 %v1388, %v1612
      %v1614 = vpop.f32.mrb[0].mxu0
      %1615 = vmatprep.mubr.f32.mxu0 0.0
      %1616 = vmatmul.mubr.f32.gmra.mrb[0].mxu0 %v248
      %v1617 = vpop.f32.mrb[0].mxu0
      %v1618 = vadd.f32 %v1393, %v1617
      %v1619 = vpop.f32.mrb[0].mxu0
      %1620 = vmatprep.mubr.f32.mxu0 0.0
      %1621 = vmatmul.mubr.f32.gmra.mrb[0].mxu0 %v257
      %v1622 = vpop.f32.mrb[0].mxu0
      %v1623 = vadd.f32 %v1398, %v1622
      %v1624 = vpop.f32.mrb[0].mxu0
      %1625 = vmatprep.mubr.f32.mxu0 0.0
      %1626 = vmatmul.mubr.f32.gmra.mrb[0].mxu0 %v266
      %v1627 = vpop.f32.mrb[0].mxu0
      %v1628 = vadd.f32 %v1403, %v1627
      %v1629 = vpop.f32.mrb[0].mxu0
      %1630 = vmatprep.mubr.f32.mxu0 0.0
      %1631 = vmatmul.mubr.f32.gmra.mrb[0].mxu0 %v275
      %v1632 = vpop.f32.mrb[0].mxu0
      %v1633 = vadd.f32 %v1408, %v1632
      %v1634 = vpop.f32.mrb[0].mxu0
      %1635 = vmatprep.mubr.f32.mxu0 0.0
      %1636 = vmatmul.mubr.f32.gmra.mrb[0].mxu0 %v284
      %v1637 = vpop.f32.mrb[0].mxu0
      %v1638 = vadd.f32 %v1413, %v1637
      %v1639 = vpop.f32.mrb[0].mxu0
      %1640 = vmatprep.mubr.f32.mxu0 0.0
      %1641 = vmatmul.mubr.f32.gmra.mrb[0].mxu0 %v293
      %v1642 = vpop.f32.mrb[0].mxu0
      %v1643 = vadd.f32 %v1418, %v1642
      %v1644 = vpop.f32.mrb[0].mxu0
      %1645 = vmatprep.mubr.f32.mxu0 0.0
      %1646 = vmatmul.mubr.f32.gmra.mrb[0].mxu0 %v302
      %v1647 = vpop.f32.mrb[0].mxu0
      %v1648 = vadd.f32 %v1423, %v1647
      %v1649 = vpop.f32.mrb[0].mxu0
      %1650 = vmatprep.mubr.f32.mxu0 0.0
      %1651 = vmatmul.mubr.f32.gmra.mrb[0].mxu0 %v311
      %v1652 = vpop.f32.mrb[0].mxu0
      %v1653 = vadd.f32 %v1428, %v1652
      %v1654 = vpop.f32.mrb[0].mxu0
      %1655 = vmatprep.mubr.f32.mxu0 0.0
      %1656 = vmatmul.mubr.f32.gmra.mrb[0].mxu0 %v320
      %v1657 = vpop.f32.mrb[0].mxu0
      %v1658 = vadd.f32 %v1433, %v1657
      %v1659 = vpop.f32.mrb[0].mxu0
      %1660 = vmatprep.mubr.f32.mxu0 0.0
      %1661 = vmatmul.mubr.f32.gmra.mrb[0].mxu0 %v329
      %v1662 = vpop.f32.mrb[0].mxu0
      %v1663 = vadd.f32 %v1438, %v1662
      %v1664 = vpop.f32.mrb[0].mxu0
      %1665 = vmatprep.mubr.f32.mxu0 0.0
      %1666 = vmatmul.mubr.f32.gmra.mrb[0].mxu0 %v338
      %v1667 = vpop.f32.mrb[0].mxu0
      %v1668 = vadd.f32 %v1443, %v1667
      %v1669 = vpop.f32.mrb[0].mxu0
      %1670 = vmatprep.mubr.f32.mxu0 0.0
      %1671 = vmatmul.mubr.f32.gmra.mrb[0].mxu0 %v347
      %v1672 = vpop.f32.mrb[0].mxu0
      %v1673 = vadd.f32 %v1448, %v1672
      %v1674 = vpop.f32.mrb[0].mxu0
      %1675 = vmatprep.mubr.f32.mxu0 0.0
      %1676 = vmatmul.mubr.f32.gmra.mrb[0].mxu0 %v356
      %v1677 = vpop.f32.mrb[0].mxu0
      %v1678 = vadd.f32 %v1453, %v1677
      %v1679 = vpop.f32.mrb[0].mxu0
      %1680 = vmatprep.mubr.f32.mxu0 0.0
      %1681 = vmatmul.mubr.f32.gmra.mrb[0].mxu0 %v365
      %v1682 = vpop.f32.mrb[0].mxu0
      %v1683 = vadd.f32 %v1458, %v1682
      %v1684 = vpop.f32.mrb[0].mxu0
      %1685 = vmatprep.mubr.f32.mxu0 0.0
      %1686 = vmatmul.mubr.f32.gmra.mrb[0].mxu0 %v374
      %v1687 = vpop.f32.mrb[0].mxu0
      %v1688 = vadd.f32 %v1463, %v1687
      %v1689 = vpop.f32.mrb[0].mxu0
      %1690 = vmatprep.mubr.f32.mxu0 0.0
      %1691 = vmatmul.mubr.f32.gmra.mrb[0].mxu0 %v383
      %v1692 = vpop.f32.mrb[0].mxu0
      %v1693 = vadd.f32 %v1468, %v1692
      %v1694 = vpop.f32.mrb[0].mxu0
      %1695 = vmatprep.mubr.f32.mxu0 0.0
      %1696 = vmatmul.mubr.f32.gmra.mrb[0].mxu0 %v392
      %v1697 = vpop.f32.mrb[0].mxu0
      %v1698 = vadd.f32 %v1473, %v1697
      %v1699 = vpop.f32.mrb[0].mxu0
      %1700 = vmatprep.mubr.f32.mxu0 0.0
      %1701 = vmatmul.mubr.f32.gmra.mrb[0].mxu0 %v401
      %v1702 = vpop.f32.mrb[0].mxu0
      %v1703 = vadd.f32 %v1478, %v1702
      %v1704 = vpop.f32.mrb[0].mxu0
      %1705 = vmatprep.mubr.f32.mxu0 0.0
      %1706 = vmatmul.mubr.f32.gmra.mrb[0].mxu0 %v410
      %v1707 = vpop.f32.mrb[0].mxu0
      %v1708 = vadd.f32 %v1483, %v1707
      %v1709 = vpop.f32.mrb[0].mxu0
      %1710 = vmatprep.mubr.f32.mxu0 0.0
      %1711 = vmatmul.mubr.f32.gmra.mrb[0].mxu0 %v419
      %v1712 = vpop.f32.mrb[0].mxu0
      %v1713 = vadd.f32 %v1488, %v1712
      %v1714 = vpop.f32.mrb[0].mxu0
      %1715 = vmatprep.mubr.f32.mxu0 0.0
      %1716 = vmatmul.mubr.f32.gmra.mrb[0].mxu0 %v428
      %v1717 = vpop.f32.mrb[0].mxu0
      %v1718 = vadd.f32 %v1493, %v1717
      %v1719 = vpop.f32.mrb[0].mxu0
      %1720 = vmatprep.mubr.f32.mxu0 0.0
      %1721 = vmatmul.mubr.f32.gmra.mrb[0].mxu0 %v437
      %v1722 = vpop.f32.mrb[0].mxu0
      %v1723 = vadd.f32 %v1498, %v1722
      %v1724 = vpop.f32.mrb[0].mxu0
      %1725 = vmatprep.mubr.f32.mxu0 0.0
      %1726 = vmatmul.mubr.f32.gmra.mrb[0].mxu0 %v446
      %v1727 = vpop.f32.mrb[0].mxu0
      %v1728 = vadd.f32 %v1503, %v1727
      %v1729 = vpop.f32.mrb[0].mxu0
      %1730 = vmatprep.mubr.f32.mxu0 0.0
      %1731 = vmatmul.mubr.f32.gmra.mrb[0].mxu0 %v455
      %v1732 = vpop.f32.mrb[0].mxu0
      %v1733 = vadd.f32 %v1508, %v1732
      %v1734 = vpop.f32.mrb[0].mxu0
      %1735 = vmatprep.mubr.f32.mxu0 0.0
      %1736 = vmatmul.mubr.f32.gmra.mrb[0].mxu0 %v464
      %v1737 = vpop.f32.mrb[0].mxu0
      %v1738 = vadd.f32 %v1513, %v1737
      %v1739 = vpop.f32.mrb[0].mxu0
      %1740 = vdwg.mxu0
      %v1741 = vmax.f32 %v1583, 0.0
      %v1742 = vmax.f32 %v1588, 0.0
      %v1743 = vmax.f32 %v1593, 0.0
      %v1744 = vmax.f32 %v1598, 0.0
      %v1745 = vmax.f32 %v1603, 0.0
      %v1746 = vmax.f32 %v1608, 0.0
      %v1747 = vmax.f32 %v1613, 0.0
      %v1748 = vmax.f32 %v1618, 0.0
      %v1749 = vmax.f32 %v1623, 0.0
      %v1750 = vmax.f32 %v1628, 0.0
      %v1751 = vmax.f32 %v1633, 0.0
      %v1752 = vmax.f32 %v1638, 0.0
      %v1753 = vmax.f32 %v1643, 0.0
      %v1754 = vmax.f32 %v1648, 0.0
      %v1755 = vmax.f32 %v1653, 0.0
      %v1756 = vmax.f32 %v1658, 0.0
      %v1757 = vmax.f32 %v1663, 0.0
      %v1758 = vmax.f32 %v1668, 0.0
      %v1759 = vmax.f32 %v1673, 0.0
      %v1760 = vmax.f32 %v1678, 0.0
      %v1761 = vmax.f32 %v1683, 0.0
      %v1762 = vmax.f32 %v1688, 0.0
      %v1763 = vmax.f32 %v1693, 0.0
      %v1764 = vmax.f32 %v1698, 0.0
      %v1765 = vmax.f32 %v1703, 0.0
      %v1766 = vmax.f32 %v1708, 0.0
      %v1767 = vmax.f32 %v1713, 0.0
      %v1768 = vmax.f32 %v1718, 0.0
      %v1769 = vmax.f32 %v1723, 0.0
      %v1770 = vmax.f32 %v1728, 0.0
      %v1771 = vmax.f32 %v1733, 0.0
      %v1772 = vmax.f32 %v1738, 0.0
      %1773 = vst [vmem:[%s175] sm:$0xff] %v1741
      %1774 = vst [vmem:[%s175 + $0x8] sm:$0xff] %v1742
      %1775 = vst [vmem:[%s175 + $0x10] sm:$0xff] %v1743
      %1776 = vst [vmem:[%s175 + $0x18] sm:$0xff] %v1744
      %1777 = vst [vmem:[%s175 + $0x20] sm:$0xff] %v1745
      %1778 = vst [vmem:[%s175 + $0x28] sm:$0xff] %v1746
      %1779 = vst [vmem:[%s175 + $0x30] sm:$0xff] %v1747
      %1780 = vst [vmem:[%s175 + $0x38] sm:$0xff] %v1748
      %1781 = vst [vmem:[%s175 + $0x40] sm:$0xff] %v1749
      %1782 = vst [vmem:[%s175 + $0x48] sm:$0xff] %v1750
      %1783 = vst [vmem:[%s175 + $0x50] sm:$0xff] %v1751
      %1784 = vst [vmem:[%s175 + $0x58] sm:$0xff] %v1752
      %1785 = vst [vmem:[%s175 + $0x60] sm:$0xff] %v1753
      %1786 = vst [vmem:[%s175 + $0x68] sm:$0xff] %v1754
      %1787 = vst [vmem:[%s175 + $0x70] sm:$0xff] %v1755
      %1788 = vst [vmem:[%s175 + $0x78] sm:$0xff] %v1756
      %1789 = vst [vmem:[%s175 + $0x80] sm:$0xff] %v1757
      %1790 = vst [vmem:[%s175 + $0x88] sm:$0xff] %v1758
      %1791 = vst [vmem:[%s175 + $0x90] sm:$0xff] %v1759
      %1792 = vst [vmem:[%s175 + $0x98] sm:$0xff] %v1760
      %1793 = vst [vmem:[%s175 + $0xa0] sm:$0xff] %v1761
      %1794 = vst [vmem:[%s175 + $0xa8] sm:$0xff] %v1762
      %1795 = vst [vmem:[%s175 + $0xb0] sm:$0xff] %v1763
      %1796 = vst [vmem:[%s175 + $0xb8] sm:$0xff] %v1764
      %1797 = vst [vmem:[%s175 + $0xc0] sm:$0xff] %v1765
      %1798 = vst [vmem:[%s175 + $0xc8] sm:$0xff] %v1766
      %1799 = vst [vmem:[%s175 + $0xd0] sm:$0xff] %v1767
      %1800 = vst [vmem:[%s175 + $0xd8] sm:$0xff] %v1768
      %1801 = vst [vmem:[%s175 + $0xe0] sm:$0xff] %v1769
      %1802 = vst [vmem:[%s175 + $0xe8] sm:$0xff] %v1770
      %1803 = vst [vmem:[%s175 + $0xf0] sm:$0xff] %v1771
      %1804 = vst [vmem:[%s175 + $0xf8] sm:$0xff] %v1772
      %s1805 = smul.u32 32, %s14
      %p1806 = scmp.lt.s32.totalorder %s1805, 63
      %s1807 = scalar_select %p1806, %s1805, 63
      %s1808 = smul.addr %s1807, 8
      %s1809 = scalar_lea.vmem %s3, %s1808
      // Predicated region
      $region33: #{_coop_forward_impl.8} parent=31 // pred_check
        %p1810 = pneg %p100
      $region34: #{_coop_forward_impl.8} parent=31 // pred_check_branch
        %1812 = sbr.rel (%p1810) target = $region36
      $region35: #{_coop_forward_impl.8} parent=31 // pred_region
        %s1813 = smul.u32 32, %s14
      $region36: #{_coop_forward_impl.8} parent=31 // pred_fallthru
        _
    $region32: #{_coop_forward_impl.8} parent=5 // pred_fallthru
      _
    %p1814 = scmp.le.s32.totalorder 2, %s9
    // Predicated region
    $region37: #{_coop_forward_impl.8} parent=5 // pred_check
      %p1815 = pneg %p1814
    $region38: #{_coop_forward_impl.8} parent=5 // pred_check_branch
      %1817 = sbr.rel (%p1815) target = $region40
    $region39: #{_coop_forward_impl.8} parent=5 // pred_region
      %s1818 = ssub.s32 %s9, 2
      // Predicated region
      $region41: #{_coop_forward_impl.8} parent=39 // pred_check
        %p1819 = pneg %p106
      $region42: #{_coop_forward_impl.8} parent=39 // pred_check_branch
        %1821 = sbr.rel (%p1819) target = $region44
      $region43: #{_coop_forward_impl.8} parent=39 // pred_region
        %s1822 = smul.u32 32, %s15
        %p1823 = scmp.lt.s32.totalorder %s1822, 63
        %s1824 = scalar_select %p1823, %s1822, 63
        %s1825 = smul.addr %s1824, 8
        %s1826 = scalar_lea.vmem %s3, %s1825
      $region44: #{_coop_forward_impl.8} parent=39 // pred_fallthru
        _
    $region40: #{_coop_forward_impl.8} parent=5 // pred_fallthru
      _
  $region6: #{_coop_forward_impl.8} parent=0 // loop_footer
    %s13 = sadd.s32 1, %s9
  $region7: #{_coop_forward_impl.8} parent=0 // loop_footer_branch
    %8 = sbr.rel target = $region3
  $region8: #{_coop_forward_impl.8} parent=0 // loop_exit
    _

// kernel: _coop_forward_impl.9
$region0: #{_coop_forward_impl.9}
  #allocation0 [shape = 'u32[]', space=smem, size = 0x4, offset = 0x4, fixed_abs, tag = 'smem constant byte address 0x4 - core index']
  #allocation1 [shape = 'u32[144,128]{1,0:T(1,128)}', space=vmem, size = 0x12000, scoped, tag = 'internal scratch']
  %s0 = inlined_call_operand.vmem [shape: f32[512,1152], index: 0, kind: input, shape index: {}]
  %s1 = inlined_call_operand.vmem [shape: f32[1152,128], index: 1, kind: input, shape index: {}]
  %s2 = inlined_call_operand.vmem [shape: f32[1,128], index: 2, kind: input, shape index: {}]
  %s3 = inlined_call_operand.vmem [shape: f32[512,128], index: 3, kind: input, shape index: {}]
  %s4 = inlined_call_operand.vmem [shape: f32[1,128], index: 4, kind: input, shape index: {}]
  %s5 = inlined_call_operand.vmem [shape: f32[2,512], index: 5, kind: input, shape index: {}]
  %s6 = inlined_call_operand.vmem [shape: f32[2,1], index: 6, kind: output, shape index: {}]
  %s7 = sld [smem:[#allocation0]]
  $region61: #{_coop_forward_impl.9} parent=0
    _
  %s9 = ssub.s32 1, %s7
  %s10 = scalar_select 0, %s9, %s7
  loop: start=0, step=1, limit=4
  $region2: #{_coop_forward_impl.9} parent=0 // loop_pre_header
    _
  $region3: #{_coop_forward_impl.9} parent=0 // loop_header
    %s12 = sphi 0, %s16
    %p13 = scmp.ge.s32.totalorder %s12, 4
    %s22 = sphi 0, %s24
    %s25 = sphi 0, %s22
    %s26 = sphi 0, %s25
    %s42 = sphi 0, %s26
    %s46 = sphi 0, %s46
    %s48 = sphi 0, %s46
    %s49 = sphi 0, %s48
    %s63 = sphi 0, %s49
    %s67 = sphi 0, %s67
    %s69 = sphi 0, %s67
    %s70 = sphi 0, %s69
    %s84 = sphi 0, %s70
    %s90 = sphi 0, %s92
    %s93 = sphi 0, %s90
    %s94 = sphi 0, %s93
    %s110 = sphi 0, %s94
    %s114 = sphi 0, %s114
    %s116 = sphi 0, %s114
    %s117 = sphi 0, %s116
    %s131 = sphi 0, %s117
    %s137 = sphi 0, %s139
    %s140 = sphi 0, %s137
    %s141 = sphi 0, %s140
    %s157 = sphi 0, %s141
    %s161 = sphi 0, %s161
    %s163 = sphi 0, %s161
    %s164 = sphi 0, %s163
    %s178 = sphi 0, %s164
  $region4: #{_coop_forward_impl.9} parent=0 // loop_header_branch
    %15 = sbr.rel (%p13) target = $region8
  $region5: #{_coop_forward_impl.9} parent=0 // loop_body
    %s17 = ssub.s32 %s12, 1
    %s18 = ssub.s32 %s12, 2
    %s19 = sadd.s32 %s12, 1
    %s20 = ssub.s32 %s12, %s19
    %p21 = scmp.eq.s32.totalorder %s20, 0
    %s23 = sadd.s32 %s22, 1
    %s24 = scalar_select %p21, %s22, %s23
    %p27 = pneg %p21
    %p28 = scmp.eq.s32.totalorder %s12, 1
    %p29 = por %p27, %p28
    %p30 = scmp.ne.s32.totalorder %s22, %s25
    %p31 = scmp.eq.s32.totalorder %s12, 0
    %p32 = por %p30, %p31
    %p33 = scmp.ne.s32.totalorder %s22, %s25
    %p34 = scmp.eq.s32.totalorder %s17, 1
    %p35 = por %p33, %p34
    %p36 = scmp.ne.s32.totalorder %s25, %s26
    %p37 = scmp.eq.s32.totalorder %s17, 0
    %p38 = por %p36, %p37
    %p39 = scmp.ne.s32.totalorder %s25, %s26
    %p40 = scmp.eq.s32.totalorder %s18, 1
    %p41 = por %p39, %p40
    %p43 = scmp.ne.s32.totalorder %s26, %s42
    %p44 = scmp.eq.s32.totalorder %s18, 0
    %p45 = por %p43, %p44
    %s47 = sadd.s32 %s46, 1
    %p50 = scmp.eq.s32.totalorder %s12, 1
    %p51 = scmp.ne.s32.totalorder %s46, %s48
    %p52 = scmp.eq.s32.totalorder %s12, 0
    %p53 = por %p51, %p52
    %p54 = scmp.ne.s32.totalorder %s46, %s48
    %p55 = scmp.eq.s32.totalorder %s17, 1
    %p56 = por %p54, %p55
    %p57 = scmp.ne.s32.totalorder %s48, %s49
    %p58 = scmp.eq.s32.totalorder %s17, 0
    %p59 = por %p57, %p58
    %p60 = scmp.ne.s32.totalorder %s48, %s49
    %p61 = scmp.eq.s32.totalorder %s18, 1
    %p62 = por %p60, %p61
    %p64 = scmp.ne.s32.totalorder %s49, %s63
    %p65 = scmp.eq.s32.totalorder %s18, 0
    %p66 = por %p64, %p65
    %s68 = sadd.s32 %s67, 1
    %p71 = scmp.eq.s32.totalorder %s12, 1
    %p72 = scmp.ne.s32.totalorder %s67, %s69
    %p73 = scmp.eq.s32.totalorder %s12, 0
    %p74 = por %p72, %p73
    %p75 = scmp.ne.s32.totalorder %s67, %s69
    %p76 = scmp.eq.s32.totalorder %s17, 1
    %p77 = por %p75, %p76
    %p78 = scmp.ne.s32.totalorder %s69, %s70
    %p79 = scmp.eq.s32.totalorder %s17, 0
    %p80 = por %p78, %p79
    %p81 = scmp.ne.s32.totalorder %s69, %s70
    %p82 = scmp.eq.s32.totalorder %s18, 1
    %p83 = por %p81, %p82
    %p85 = scmp.ne.s32.totalorder %s70, %s84
    %p86 = scmp.eq.s32.totalorder %s18, 0
    %p87 = por %p85, %p86
    %s88 = ssub.s32 %s12, %s19
    %p89 = scmp.eq.s32.totalorder %s88, 0
    %s91 = sadd.s32 %s90, 1
    %s92 = scalar_select %p89, %s90, %s91
    %p95 = pneg %p89
    %p96 = scmp.eq.s32.totalorder %s12, 1
    %p97 = por %p95, %p96
    %p98 = scmp.ne.s32.totalorder %s90, %s93
    %p99 = scmp.eq.s32.totalorder %s12, 0
    %p100 = por %p98, %p99
    %p101 = scmp.ne.s32.totalorder %s90, %s93
    %p102 = scmp.eq.s32.totalorder %s17, 1
    %p103 = por %p101, %p102
    %p104 = scmp.ne.s32.totalorder %s93, %s94
    %p105 = scmp.eq.s32.totalorder %s17, 0
    %p106 = por %p104, %p105
    %p107 = scmp.ne.s32.totalorder %s93, %s94
    %p108 = scmp.eq.s32.totalorder %s18, 1
    %p109 = por %p107, %p108
    %p111 = scmp.ne.s32.totalorder %s94, %s110
    %p112 = scmp.eq.s32.totalorder %s18, 0
    %p113 = por %p111, %p112
    %s115 = sadd.s32 %s114, 1
    %p118 = scmp.eq.s32.totalorder %s12, 1
    %p119 = scmp.ne.s32.totalorder %s114, %s116
    %p120 = scmp.eq.s32.totalorder %s12, 0
    %p121 = por %p119, %p120
    %p122 = scmp.ne.s32.totalorder %s114, %s116
    %p123 = scmp.eq.s32.totalorder %s17, 1
    %p124 = por %p122, %p123
    %p125 = scmp.ne.s32.totalorder %s116, %s117
    %p126 = scmp.eq.s32.totalorder %s17, 0
    %p127 = por %p125, %p126
    %p128 = scmp.ne.s32.totalorder %s116, %s117
    %p129 = scmp.eq.s32.totalorder %s18, 1
    %p130 = por %p128, %p129
    %p132 = scmp.ne.s32.totalorder %s117, %s131
    %p133 = scmp.eq.s32.totalorder %s18, 0
    %p134 = por %p132, %p133
    %s135 = ssub.s32 %s12, %s19
    %p136 = scmp.eq.s32.totalorder %s135, 0
    %s138 = sadd.s32 %s137, 1
    %s139 = scalar_select %p136, %s137, %s138
    %p142 = pneg %p136
    %p143 = scmp.eq.s32.totalorder %s12, 1
    %p144 = por %p142, %p143
    %p145 = scmp.ne.s32.totalorder %s137, %s140
    %p146 = scmp.eq.s32.totalorder %s12, 0
    %p147 = por %p145, %p146
    %p148 = scmp.ne.s32.totalorder %s137, %s140
    %p149 = scmp.eq.s32.totalorder %s17, 1
    %p150 = por %p148, %p149
    %p151 = scmp.ne.s32.totalorder %s140, %s141
    %p152 = scmp.eq.s32.totalorder %s17, 0
    %p153 = por %p151, %p152
    %p154 = scmp.ne.s32.totalorder %s140, %s141
    %p155 = scmp.eq.s32.totalorder %s18, 1
    %p156 = por %p154, %p155
    %p158 = scmp.ne.s32.totalorder %s141, %s157
    %p159 = scmp.eq.s32.totalorder %s18, 0
    %p160 = por %p158, %p159
    %s162 = sadd.s32 %s161, 1
    %p165 = scmp.eq.s32.totalorder %s12, 1
    %p166 = scmp.ne.s32.totalorder %s161, %s163
    %p167 = scmp.eq.s32.totalorder %s12, 0
    %p168 = por %p166, %p167
    %p169 = scmp.ne.s32.totalorder %s161, %s163
    %p170 = scmp.eq.s32.totalorder %s17, 1
    %p171 = por %p169, %p170
    %p172 = scmp.ne.s32.totalorder %s163, %s164
    %p173 = scmp.eq.s32.totalorder %s17, 0
    %p174 = por %p172, %p173
    %p175 = scmp.ne.s32.totalorder %s163, %s164
    %p176 = scmp.eq.s32.totalorder %s18, 1
    %p177 = por %p175, %p176
    %p179 = scmp.ne.s32.totalorder %s164, %s178
    %p180 = scmp.eq.s32.totalorder %s18, 0
    %p181 = por %p179, %p180
    %p182 = scmp.le.s32.totalorder 1, %s12
    %p183 = scmp.lt.s32.totalorder %s12, 3
    %p184 = pnand %p182, %p183
    %p185 = pneg %p184
    // Predicated region
    $region9: #{_coop_forward_impl.9} parent=5 // pred_check
      _
    $region10: #{_coop_forward_impl.9} parent=5 // pred_check_branch
      %187 = sbr.rel (%p184) target = $region12
    $region11: #{_coop_forward_impl.9} parent=5 // pred_region
      %s188 = ssub.s32 %s12, 1
      // Predicated region
      $region13: #{_coop_forward_impl.9} parent=11 // pred_check
        %p189 = pneg %p59
      $region14: #{_coop_forward_impl.9} parent=11 // pred_check_branch
        %191 = sbr.rel (%p189) target = $region16
      $region15: #{_coop_forward_impl.9} parent=11 // pred_region
        _
      $region16: #{_coop_forward_impl.9} parent=11 // pred_fallthru
        _
      // Predicated region
      $region17: #{_coop_forward_impl.9} parent=11 // pred_check
        %p192 = pneg %p80
      $region18: #{_coop_forward_impl.9} parent=11 // pred_check_branch
        %194 = sbr.rel (%p192) target = $region20
      $region19: #{_coop_forward_impl.9} parent=11 // pred_region
        _
      $region20: #{_coop_forward_impl.9} parent=11 // pred_fallthru
        _
      // Predicated region
      $region21: #{_coop_forward_impl.9} parent=11 // pred_check
        %p195 = pneg %p127
      $region22: #{_coop_forward_impl.9} parent=11 // pred_check_branch
        %197 = sbr.rel (%p195) target = $region24
      $region23: #{_coop_forward_impl.9} parent=11 // pred_region
        _
      $region24: #{_coop_forward_impl.9} parent=11 // pred_fallthru
        _
    $region12: #{_coop_forward_impl.9} parent=5 // pred_fallthru
      _
    %p198 = scmp.lt.s32.totalorder %s12, 2
    // Predicated region
    $region25: #{_coop_forward_impl.9} parent=5 // pred_check
      %p199 = pneg %p198
    $region26: #{_coop_forward_impl.9} parent=5 // pred_check_branch
      %201 = sbr.rel (%p199) target = $region28
    $region27: #{_coop_forward_impl.9} parent=5 // pred_region
      // Predicated region
      $region29: #{_coop_forward_impl.9} parent=27 // pred_check
        %p202 = pneg %p32
      $region30: #{_coop_forward_impl.9} parent=27 // pred_check_branch
        %204 = sbr.rel (%p202) target = $region32
      $region31: #{_coop_forward_impl.9} parent=27 // pred_region
        %s205 = smul.u32 32, %s12
        %p206 = scmp.lt.s32.totalorder %s205, 63
        %s207 = scalar_select %p206, %s205, 63
        %s208 = smul.addr %s207, 9
        %s209 = smul.addr %s208, 8
        %s210 = scalar_lea.vmem %s0, %s209
        %s211 = smul.u32 32, %s12
      $region32: #{_coop_forward_impl.9} parent=27 // pred_fallthru
        _
      // Predicated region
      $region33: #{_coop_forward_impl.9} parent=27 // pred_check
        %p212 = pneg %p100
      $region34: #{_coop_forward_impl.9} parent=27 // pred_check_branch
        %214 = sbr.rel (%p212) target = $region36
      $region35: #{_coop_forward_impl.9} parent=27 // pred_region
        %s215 = smul.u32 32, %s12
        %p216 = scmp.lt.s32.totalorder %s215, 63
        %s217 = scalar_select %p216, %s215, 63
        %s218 = smul.addr %s217, 8
        %s219 = scalar_lea.vmem %s3, %s218
        %s220 = smul.u32 32, %s12
      $region36: #{_coop_forward_impl.9} parent=27 // pred_fallthru
        _
      // Predicated region
      $region37: #{_coop_forward_impl.9} parent=27 // pred_check
        %p221 = pneg %p147
      $region38: #{_coop_forward_impl.9} parent=27 // pred_check_branch
        %223 = sbr.rel (%p221) target = $region40
      $region39: #{_coop_forward_impl.9} parent=27 // pred_region
        %s224 = smul.u32 2, %s12
        %p225 = scmp.lt.s32.totalorder %s224, 3
        %s226 = scalar_select %p225, %s224, 3
        %s227 = smul.addr %s226, 2
        %s228 = scalar_lea.vmem %s5, %s227
        %s229 = smul.u32 2, %s12
      $region40: #{_coop_forward_impl.9} parent=27 // pred_fallthru
        _
    $region28: #{_coop_forward_impl.9} parent=5 // pred_fallthru
      _
    %p230 = scmp.le.s32.totalorder 1, %s12
    %p231 = scmp.lt.s32.totalorder %s12, 3
    %p232 = pnand %p230, %p231
    %p233 = pneg %p232
    // Predicated region
    $region41: #{_coop_forward_impl.9} parent=5 // pred_check
      _
    $region42: #{_coop_forward_impl.9} parent=5 // pred_check_branch
      %235 = sbr.rel (%p232) target = $region44
    $region43: #{_coop_forward_impl.9} parent=5 // pred_region
      %s236 = ssub.s32 %s12, 1
      %s237 = smul.u32 32, %s17
      %p238 = scmp.lt.s32.totalorder %s237, 63
      %s239 = scalar_select %p238, %s237, 63
      %s240 = smul.addr %s239, 9
      %s241 = smul.addr %s240, 8
      %s242 = scalar_lea.vmem %s0, %s241
      %p243 = pneg %p38
      %p244 = pneg %p35
      %p245 = pneg %p59
      %p246 = pneg %p56
      %p247 = pneg %p80
      %p248 = pneg %p77
      %s249 = smul.u32 32, %s17
      %p250 = scmp.lt.s32.totalorder %s249, 63
      %s251 = scalar_select %p250, %s249, 63
      %s252 = smul.addr %s251, 8
      %s253 = scalar_lea.vmem %s3, %s252
      %p254 = pneg %p106
      %p255 = pneg %p103
      %p256 = pneg %p127
      %p257 = pneg %p124
      %s258 = smul.u32 2, %s17
      %p259 = scmp.lt.s32.totalorder %s258, 3
      %s260 = scalar_select %p259, %s258, 3
      %s261 = smul.addr %s260, 2
      %s262 = scalar_lea.vmem %s5, %s261
      %p263 = pneg %p153
      %p264 = pneg %p150
      %p265 = pneg %p174
      %p266 = pneg %p171
      %s267 = smul.u32 32, %s17
      %p268 = scmp.lt.s32.totalorder %s267, 63
      %s269 = scalar_select %p268, %s267, 63
      %s270 = smul.addr %s269, 9
      %s271 = smul.addr %s270, 8
      %s272 = scalar_lea.vmem %s0, %s271
      %s273 = smul.u32 32, %s17
      %s274 = smul.u32 32, %s17
      %p275 = scmp.lt.s32.totalorder %s274, 63
      %s276 = scalar_select %p275, %s274, 63
      %s277 = smul.addr %s276, 8
      %s278 = scalar_lea.vmem %s3, %s277
      %s279 = smul.u32 32, %s17
      %s280 = smul.u32 2, %s17
      %p281 = scmp.lt.s32.totalorder %s280, 3
      %s282 = scalar_select %p281, %s280, 3
      %s283 = smul.addr %s282, 2
      %s284 = scalar_lea.vmem %s5, %s283
      %s285 = smul.u32 2, %s17
      %p286 = scmp.eq.s32.totalorder %s17, 0
      // Predicated region
      $region45: #{_coop_forward_impl.9} parent=43 // pred_check
        %p287 = pneg %p286
      $region46: #{_coop_forward_impl.9} parent=43 // pred_check_branch
        %289 = sbr.rel (%p287) target = $region48
      $region47: #{_coop_forward_impl.9} parent=43 // pred_region
        %vm290 = vcmask 1024
        %291 = vst.msk [vmem:[%s6] sm:$0x3] %vm290, 0.0
      $region48: #{_coop_forward_impl.9} parent=43 // pred_fallthru
        _
      %v292 = vld [vmem:[%s272] sm:$0xff]
      %v293 = vld [vmem:[%s272 + $0x8] sm:$0xff]
      %v294 = vld [vmem:[%s272 + $0x10] sm:$0xff]
      %v295 = vld [vmem:[%s272 + $0x18] sm:$0xff]
      %v296 = vld [vmem:[%s272 + $0x20] sm:$0xff]
      %v297 = vld [vmem:[%s272 + $0x28] sm:$0xff]
      %v298 = vld [vmem:[%s272 + $0x30] sm:$0xff]
      %v299 = vld [vmem:[%s272 + $0x38] sm:$0xff]
      %v300 = vld [vmem:[%s272 + $0x40] sm:$0xff]
      %v301 = vld [vmem:[%s272 + $0x48] sm:$0xff]
      %v302 = vld [vmem:[%s272 + $0x50] sm:$0xff]
      %v303 = vld [vmem:[%s272 + $0x58] sm:$0xff]
      %v304 = vld [vmem:[%s272 + $0x60] sm:$0xff]
      %v305 = vld [vmem:[%s272 + $0x68] sm:$0xff]
      %v306 = vld [vmem:[%s272 + $0x70] sm:$0xff]
      %v307 = vld [vmem:[%s272 + $0x78] sm:$0xff]
      %v308 = vld [vmem:[%s272 + $0x80] sm:$0xff]
      %v309 = vld [vmem:[%s272 + $0x88] sm:$0xff]
      %v310 = vld [vmem:[%s272 + $0x90] sm:$0xff]
      %v311 = vld [vmem:[%s272 + $0x98] sm:$0xff]
      %v312 = vld [vmem:[%s272 + $0xa0] sm:$0xff]
      %v313 = vld [vmem:[%s272 + $0xa8] sm:$0xff]
      %v314 = vld [vmem:[%s272 + $0xb0] sm:$0xff]
      %v315 = vld [vmem:[%s272 + $0xb8] sm:$0xff]
      %v316 = vld [vmem:[%s272 + $0xc0] sm:$0xff]
      %v317 = vld [vmem:[%s272 + $0xc8] sm:$0xff]
      %v318 = vld [vmem:[%s272 + $0xd0] sm:$0xff]
      %v319 = vld [vmem:[%s272 + $0xd8] sm:$0xff]
      %v320 = vld [vmem:[%s272 + $0xe0] sm:$0xff]
      %v321 = vld [vmem:[%s272 + $0xe8] sm:$0xff]
      %v322 = vld [vmem:[%s272 + $0xf0] sm:$0xff]
      %v323 = vld [vmem:[%s272 + $0xf8] sm:$0xff]
      %v324 = vld [vmem:[%s272 + $0x100] sm:$0xff]
      %v325 = vld [vmem:[%s272 + $0x108] sm:$0xff]
      %v326 = vld [vmem:[%s272 + $0x110] sm:$0xff]
      %v327 = vld [vmem:[%s272 + $0x118] sm:$0xff]
      %v328 = vld [vmem:[%s272 + $0x120] sm:$0xff]
      %v329 = vld [vmem:[%s272 + $0x128] sm:$0xff]
      %v330 = vld [vmem:[%s272 + $0x130] sm:$0xff]
      %v331 = vld [vmem:[%s272 + $0x138] sm:$0xff]
      %v332 = vld [vmem:[%s272 + $0x140] sm:$0xff]
      %v333 = vld [vmem:[%s272 + $0x148] sm:$0xff]
      %v334 = vld [vmem:[%s272 + $0x150] sm:$0xff]
      %v335 = vld [vmem:[%s272 + $0x158] sm:$0xff]
      %v336 = vld [vmem:[%s272 + $0x160] sm:$0xff]
      %v337 = vld [vmem:[%s272 + $0x168] sm:$0xff]
      %v338 = vld [vmem:[%s272 + $0x170] sm:$0xff]
      %v339 = vld [vmem:[%s272 + $0x178] sm:$0xff]
      %v340 = vld [vmem:[%s272 + $0x180] sm:$0xff]
      %v341 = vld [vmem:[%s272 + $0x188] sm:$0xff]
      %v342 = vld [vmem:[%s272 + $0x190] sm:$0xff]
      %v343 = vld [vmem:[%s272 + $0x198] sm:$0xff]
      %v344 = vld [vmem:[%s272 + $0x1a0] sm:$0xff]
      %v345 = vld [vmem:[%s272 + $0x1a8] sm:$0xff]
      %v346 = vld [vmem:[%s272 + $0x1b0] sm:$0xff]
      %v347 = vld [vmem:[%s272 + $0x1b8] sm:$0xff]
      %v348 = vld [vmem:[%s272 + $0x1c0] sm:$0xff]
      %v349 = vld [vmem:[%s272 + $0x1c8] sm:$0xff]
      %v350 = vld [vmem:[%s272 + $0x1d0] sm:$0xff]
      %v351 = vld [vmem:[%s272 + $0x1d8] sm:$0xff]
      %v352 = vld [vmem:[%s272 + $0x1e0] sm:$0xff]
      %v353 = vld [vmem:[%s272 + $0x1e8] sm:$0xff]
      %v354 = vld [vmem:[%s272 + $0x1f0] sm:$0xff]
      %v355 = vld [vmem:[%s272 + $0x1f8] sm:$0xff]
      %v356 = vld [vmem:[%s272 + $0x200] sm:$0xff]
      %v357 = vld [vmem:[%s272 + $0x208] sm:$0xff]
      %v358 = vld [vmem:[%s272 + $0x210] sm:$0xff]
      %v359 = vld [vmem:[%s272 + $0x218] sm:$0xff]
      %v360 = vld [vmem:[%s272 + $0x220] sm:$0xff]
      %v361 = vld [vmem:[%s272 + $0x228] sm:$0xff]
      %v362 = vld [vmem:[%s272 + $0x230] sm:$0xff]
      %v363 = vld [vmem:[%s272 + $0x238] sm:$0xff]
      %v364 = vld [vmem:[%s272 + $0x240] sm:$0xff]
      %v365 = vld [vmem:[%s272 + $0x248] sm:$0xff]
      %v366 = vld [vmem:[%s272 + $0x250] sm:$0xff]
      %v367 = vld [vmem:[%s272 + $0x258] sm:$0xff]
      %v368 = vld [vmem:[%s272 + $0x260] sm:$0xff]
      %v369 = vld [vmem:[%s272 + $0x268] sm:$0xff]
      %v370 = vld [vmem:[%s272 + $0x270] sm:$0xff]
      %v371 = vld [vmem:[%s272 + $0x278] sm:$0xff]
      %v372 = vld [vmem:[%s272 + $0x280] sm:$0xff]
      %v373 = vld [vmem:[%s272 + $0x288] sm:$0xff]
      %v374 = vld [vmem:[%s272 + $0x290] sm:$0xff]
      %v375 = vld [vmem:[%s272 + $0x298] sm:$0xff]
      %v376 = vld [vmem:[%s272 + $0x2a0] sm:$0xff]
      %v377 = vld [vmem:[%s272 + $0x2a8] sm:$0xff]
      %v378 = vld [vmem:[%s272 + $0x2b0] sm:$0xff]
      %v379 = vld [vmem:[%s272 + $0x2b8] sm:$0xff]
      %v380 = vld [vmem:[%s272 + $0x2c0] sm:$0xff]
      %v381 = vld [vmem:[%s272 + $0x2c8] sm:$0xff]
      %v382 = vld [vmem:[%s272 + $0x2d0] sm:$0xff]
      %v383 = vld [vmem:[%s272 + $0x2d8] sm:$0xff]
      %v384 = vld [vmem:[%s272 + $0x2e0] sm:$0xff]
      %v385 = vld [vmem:[%s272 + $0x2e8] sm:$0xff]
      %v386 = vld [vmem:[%s272 + $0x2f0] sm:$0xff]
      %v387 = vld [vmem:[%s272 + $0x2f8] sm:$0xff]
      %v388 = vld [vmem:[%s272 + $0x300] sm:$0xff]
      %v389 = vld [vmem:[%s272 + $0x308] sm:$0xff]
      %v390 = vld [vmem:[%s272 + $0x310] sm:$0xff]
      %v391 = vld [vmem:[%s272 + $0x318] sm:$0xff]
      %v392 = vld [vmem:[%s272 + $0x320] sm:$0xff]
      %v393 = vld [vmem:[%s272 + $0x328] sm:$0xff]
      %v394 = vld [vmem:[%s272 + $0x330] sm:$0xff]
      %v395 = vld [vmem:[%s272 + $0x338] sm:$0xff]
      %v396 = vld [vmem:[%s272 + $0x340] sm:$0xff]
      %v397 = vld [vmem:[%s272 + $0x348] sm:$0xff]
      %v398 = vld [vmem:[%s272 + $0x350] sm:$0xff]
      %v399 = vld [vmem:[%s272 + $0x358] sm:$0xff]
      %v400 = vld [vmem:[%s272 + $0x360] sm:$0xff]
      %v401 = vld [vmem:[%s272 + $0x368] sm:$0xff]
      %v402 = vld [vmem:[%s272 + $0x370] sm:$0xff]
      %v403 = vld [vmem:[%s272 + $0x378] sm:$0xff]
      %v404 = vld [vmem:[%s272 + $0x380] sm:$0xff]
      %v405 = vld [vmem:[%s272 + $0x388] sm:$0xff]
      %v406 = vld [vmem:[%s272 + $0x390] sm:$0xff]
      %v407 = vld [vmem:[%s272 + $0x398] sm:$0xff]
      %v408 = vld [vmem:[%s272 + $0x3a0] sm:$0xff]
      %v409 = vld [vmem:[%s272 + $0x3a8] sm:$0xff]
      %v410 = vld [vmem:[%s272 + $0x3b0] sm:$0xff]
      %v411 = vld [vmem:[%s272 + $0x3b8] sm:$0xff]
      %v412 = vld [vmem:[%s272 + $0x3c0] sm:$0xff]
      %v413 = vld [vmem:[%s272 + $0x3c8] sm:$0xff]
      %v414 = vld [vmem:[%s272 + $0x3d0] sm:$0xff]
      %v415 = vld [vmem:[%s272 + $0x3d8] sm:$0xff]
      %v416 = vld [vmem:[%s272 + $0x3e0] sm:$0xff]
      %v417 = vld [vmem:[%s272 + $0x3e8] sm:$0xff]
      %v418 = vld [vmem:[%s272 + $0x3f0] sm:$0xff]
      %v419 = vld [vmem:[%s272 + $0x3f8] sm:$0xff]
      %v420 = vld [vmem:[%s272 + $0x400] sm:$0xff]
      %v421 = vld [vmem:[%s272 + $0x408] sm:$0xff]
      %v422 = vld [vmem:[%s272 + $0x410] sm:$0xff]
      %v423 = vld [vmem:[%s272 + $0x418] sm:$0xff]
      %v424 = vld [vmem:[%s272 + $0x420] sm:$0xff]
      %v425 = vld [vmem:[%s272 + $0x428] sm:$0xff]
      %v426 = vld [vmem:[%s272 + $0x430] sm:$0xff]
      %v427 = vld [vmem:[%s272 + $0x438] sm:$0xff]
      %v428 = vld [vmem:[%s272 + $0x440] sm:$0xff]
      %v429 = vld [vmem:[%s272 + $0x448] sm:$0xff]
      %v430 = vld [vmem:[%s272 + $0x450] sm:$0xff]
      %v431 = vld [vmem:[%s272 + $0x458] sm:$0xff]
      %v432 = vld [vmem:[%s272 + $0x460] sm:$0xff]
      %v433 = vld [vmem:[%s272 + $0x468] sm:$0xff]
      %v434 = vld [vmem:[%s272 + $0x470] sm:$0xff]
      %v435 = vld [vmem:[%s272 + $0x478] sm:$0xff]
      %v436 = vld [vmem:[%s272 + $0x480] sm:$0xff]
      %v437 = vld [vmem:[%s272 + $0x488] sm:$0xff]
      %v438 = vld [vmem:[%s272 + $0x490] sm:$0xff]
      %v439 = vld [vmem:[%s272 + $0x498] sm:$0xff]
      %v440 = vld [vmem:[%s272 + $0x4a0] sm:$0xff]
      %v441 = vld [vmem:[%s272 + $0x4a8] sm:$0xff]
      %v442 = vld [vmem:[%s272 + $0x4b0] sm:$0xff]
      %v443 = vld [vmem:[%s272 + $0x4b8] sm:$0xff]
      %v444 = vld [vmem:[%s272 + $0x4c0] sm:$0xff]
      %v445 = vld [vmem:[%s272 + $0x4c8] sm:$0xff]
      %v446 = vld [vmem:[%s272 + $0x4d0] sm:$0xff]
      %v447 = vld [vmem:[%s272 + $0x4d8] sm:$0xff]
      %v448 = vld [vmem:[%s272 + $0x4e0] sm:$0xff]
      %v449 = vld [vmem:[%s272 + $0x4e8] sm:$0xff]
      %v450 = vld [vmem:[%s272 + $0x4f0] sm:$0xff]
      %v451 = vld [vmem:[%s272 + $0x4f8] sm:$0xff]
      %v452 = vld [vmem:[%s272 + $0x500] sm:$0xff]
      %v453 = vld [vmem:[%s272 + $0x508] sm:$0xff]
      %v454 = vld [vmem:[%s272 + $0x510] sm:$0xff]
      %v455 = vld [vmem:[%s272 + $0x518] sm:$0xff]
      %v456 = vld [vmem:[%s272 + $0x520] sm:$0xff]
      %v457 = vld [vmem:[%s272 + $0x528] sm:$0xff]
      %v458 = vld [vmem:[%s272 + $0x530] sm:$0xff]
      %v459 = vld [vmem:[%s272 + $0x538] sm:$0xff]
      %v460 = vld [vmem:[%s272 + $0x540] sm:$0xff]
      %v461 = vld [vmem:[%s272 + $0x548] sm:$0xff]
      %v462 = vld [vmem:[%s272 + $0x550] sm:$0xff]
      %v463 = vld [vmem:[%s272 + $0x558] sm:$0xff]
      %v464 = vld [vmem:[%s272 + $0x560] sm:$0xff]
      %v465 = vld [vmem:[%s272 + $0x568] sm:$0xff]
      %v466 = vld [vmem:[%s272 + $0x570] sm:$0xff]
      %v467 = vld [vmem:[%s272 + $0x578] sm:$0xff]
      %v468 = vld [vmem:[%s272 + $0x580] sm:$0xff]
      %v469 = vld [vmem:[%s272 + $0x588] sm:$0xff]
      %v470 = vld [vmem:[%s272 + $0x590] sm:$0xff]
      %v471 = vld [vmem:[%s272 + $0x598] sm:$0xff]
      %v472 = vld [vmem:[%s272 + $0x5a0] sm:$0xff]
      %v473 = vld [vmem:[%s272 + $0x5a8] sm:$0xff]
      %v474 = vld [vmem:[%s272 + $0x5b0] sm:$0xff]
      %v475 = vld [vmem:[%s272 + $0x5b8] sm:$0xff]
      %v476 = vld [vmem:[%s272 + $0x5c0] sm:$0xff]
      %v477 = vld [vmem:[%s272 + $0x5c8] sm:$0xff]
      %v478 = vld [vmem:[%s272 + $0x5d0] sm:$0xff]
      %v479 = vld [vmem:[%s272 + $0x5d8] sm:$0xff]
      %v480 = vld [vmem:[%s272 + $0x5e0] sm:$0xff]
      %v481 = vld [vmem:[%s272 + $0x5e8] sm:$0xff]
      %v482 = vld [vmem:[%s272 + $0x5f0] sm:$0xff]
      %v483 = vld [vmem:[%s272 + $0x5f8] sm:$0xff]
      %v484 = vld [vmem:[%s272 + $0x600] sm:$0xff]
      %v485 = vld [vmem:[%s272 + $0x608] sm:$0xff]
      %v486 = vld [vmem:[%s272 + $0x610] sm:$0xff]
      %v487 = vld [vmem:[%s272 + $0x618] sm:$0xff]
      %v488 = vld [vmem:[%s272 + $0x620] sm:$0xff]
      %v489 = vld [vmem:[%s272 + $0x628] sm:$0xff]
      %v490 = vld [vmem:[%s272 + $0x630] sm:$0xff]
      %v491 = vld [vmem:[%s272 + $0x638] sm:$0xff]
      %v492 = vld [vmem:[%s272 + $0x640] sm:$0xff]
      %v493 = vld [vmem:[%s272 + $0x648] sm:$0xff]
      %v494 = vld [vmem:[%s272 + $0x650] sm:$0xff]
      %v495 = vld [vmem:[%s272 + $0x658] sm:$0xff]
      %v496 = vld [vmem:[%s272 + $0x660] sm:$0xff]
      %v497 = vld [vmem:[%s272 + $0x668] sm:$0xff]
      %v498 = vld [vmem:[%s272 + $0x670] sm:$0xff]
      %v499 = vld [vmem:[%s272 + $0x678] sm:$0xff]
      %v500 = vld [vmem:[%s272 + $0x680] sm:$0xff]
      %v501 = vld [vmem:[%s272 + $0x688] sm:$0xff]
      %v502 = vld [vmem:[%s272 + $0x690] sm:$0xff]
      %v503 = vld [vmem:[%s272 + $0x698] sm:$0xff]
      %v504 = vld [vmem:[%s272 + $0x6a0] sm:$0xff]
      %v505 = vld [vmem:[%s272 + $0x6a8] sm:$0xff]
      %v506 = vld [vmem:[%s272 + $0x6b0] sm:$0xff]
      %v507 = vld [vmem:[%s272 + $0x6b8] sm:$0xff]
      %v508 = vld [vmem:[%s272 + $0x6c0] sm:$0xff]
      %v509 = vld [vmem:[%s272 + $0x6c8] sm:$0xff]
      %v510 = vld [vmem:[%s272 + $0x6d0] sm:$0xff]
      %v511 = vld [vmem:[%s272 + $0x6d8] sm:$0xff]
      %v512 = vld [vmem:[%s272 + $0x6e0] sm:$0xff]
      %v513 = vld [vmem:[%s272 + $0x6e8] sm:$0xff]
      %v514 = vld [vmem:[%s272 + $0x6f0] sm:$0xff]
      %v515 = vld [vmem:[%s272 + $0x6f8] sm:$0xff]
      %v516 = vld [vmem:[%s272 + $0x700] sm:$0xff]
      %v517 = vld [vmem:[%s272 + $0x708] sm:$0xff]
      %v518 = vld [vmem:[%s272 + $0x710] sm:$0xff]
      %v519 = vld [vmem:[%s272 + $0x718] sm:$0xff]
      %v520 = vld [vmem:[%s272 + $0x720] sm:$0xff]
      %v521 = vld [vmem:[%s272 + $0x728] sm:$0xff]
      %v522 = vld [vmem:[%s272 + $0x730] sm:$0xff]
      %v523 = vld [vmem:[%s272 + $0x738] sm:$0xff]
      %v524 = vld [vmem:[%s272 + $0x740] sm:$0xff]
      %v525 = vld [vmem:[%s272 + $0x748] sm:$0xff]
      %v526 = vld [vmem:[%s272 + $0x750] sm:$0xff]
      %v527 = vld [vmem:[%s272 + $0x758] sm:$0xff]
      %v528 = vld [vmem:[%s272 + $0x760] sm:$0xff]
      %v529 = vld [vmem:[%s272 + $0x768] sm:$0xff]
      %v530 = vld [vmem:[%s272 + $0x770] sm:$0xff]
      %v531 = vld [vmem:[%s272 + $0x778] sm:$0xff]
      %v532 = vld [vmem:[%s272 + $0x780] sm:$0xff]
      %v533 = vld [vmem:[%s272 + $0x788] sm:$0xff]
      %v534 = vld [vmem:[%s272 + $0x790] sm:$0xff]
      %v535 = vld [vmem:[%s272 + $0x798] sm:$0xff]
      %v536 = vld [vmem:[%s272 + $0x7a0] sm:$0xff]
      %v537 = vld [vmem:[%s272 + $0x7a8] sm:$0xff]
      %v538 = vld [vmem:[%s272 + $0x7b0] sm:$0xff]
      %v539 = vld [vmem:[%s272 + $0x7b8] sm:$0xff]
      %v540 = vld [vmem:[%s272 + $0x7c0] sm:$0xff]
      %v541 = vld [vmem:[%s272 + $0x7c8] sm:$0xff]
      %v542 = vld [vmem:[%s272 + $0x7d0] sm:$0xff]
      %v543 = vld [vmem:[%s272 + $0x7d8] sm:$0xff]
      %v544 = vld [vmem:[%s272 + $0x7e0] sm:$0xff]
      %v545 = vld [vmem:[%s272 + $0x7e8] sm:$0xff]
      %v546 = vld [vmem:[%s272 + $0x7f0] sm:$0xff]
      %v547 = vld [vmem:[%s272 + $0x7f8] sm:$0xff]
      %v548 = vld [vmem:[%s272 + $0x800] sm:$0xff]
      %v549 = vld [vmem:[%s272 + $0x808] sm:$0xff]
      %v550 = vld [vmem:[%s272 + $0x810] sm:$0xff]
      %v551 = vld [vmem:[%s272 + $0x818] sm:$0xff]
      %v552 = vld [vmem:[%s272 + $0x820] sm:$0xff]
      %v553 = vld [vmem:[%s272 + $0x828] sm:$0xff]
      %v554 = vld [vmem:[%s272 + $0x830] sm:$0xff]
      %v555 = vld [vmem:[%s272 + $0x838] sm:$0xff]
      %v556 = vld [vmem:[%s272 + $0x840] sm:$0xff]
      %v557 = vld [vmem:[%s272 + $0x848] sm:$0xff]
      %v558 = vld [vmem:[%s272 + $0x850] sm:$0xff]
      %v559 = vld [vmem:[%s272 + $0x858] sm:$0xff]
      %v560 = vld [vmem:[%s272 + $0x860] sm:$0xff]
      %v561 = vld [vmem:[%s272 + $0x868] sm:$0xff]
      %v562 = vld [vmem:[%s272 + $0x870] sm:$0xff]
      %v563 = vld [vmem:[%s272 + $0x878] sm:$0xff]
      %v564 = vld [vmem:[%s272 + $0x880] sm:$0xff]
      %v565 = vld [vmem:[%s272 + $0x888] sm:$0xff]
      %v566 = vld [vmem:[%s272 + $0x890] sm:$0xff]
      %v567 = vld [vmem:[%s272 + $0x898] sm:$0xff]
      %v568 = vld [vmem:[%s272 + $0x8a0] sm:$0xff]
      %v569 = vld [vmem:[%s272 + $0x8a8] sm:$0xff]
      %v570 = vld [vmem:[%s272 + $0x8b0] sm:$0xff]
      %v571 = vld [vmem:[%s272 + $0x8b8] sm:$0xff]
      %v572 = vld [vmem:[%s272 + $0x8c0] sm:$0xff]
      %v573 = vld [vmem:[%s272 + $0x8c8] sm:$0xff]
      %v574 = vld [vmem:[%s272 + $0x8d0] sm:$0xff]
      %v575 = vld [vmem:[%s272 + $0x8d8] sm:$0xff]
      %v576 = vld [vmem:[%s272 + $0x8e0] sm:$0xff]
      %v577 = vld [vmem:[%s272 + $0x8e8] sm:$0xff]
      %v578 = vld [vmem:[%s272 + $0x8f0] sm:$0xff]
      %v579 = vld [vmem:[%s272 + $0x8f8] sm:$0xff]
      %v580 = vld [vmem:[%s1] sm:$0xff]
      %v581 = vld [vmem:[%s1 + $0x8] sm:$0xff]
      %v582 = vld [vmem:[%s1 + $0x10] sm:$0xff]
      %v583 = vld [vmem:[%s1 + $0x18] sm:$0xff]
      %v584 = vld [vmem:[%s1 + $0x20] sm:$0xff]
      %v585 = vld [vmem:[%s1 + $0x28] sm:$0xff]
      %v586 = vld [vmem:[%s1 + $0x30] sm:$0xff]
      %v587 = vld [vmem:[%s1 + $0x38] sm:$0xff]
      %v588 = vld [vmem:[%s1 + $0x40] sm:$0xff]
      %v589 = vld [vmem:[%s1 + $0x48] sm:$0xff]
      %v590 = vld [vmem:[%s1 + $0x50] sm:$0xff]
      %v591 = vld [vmem:[%s1 + $0x58] sm:$0xff]
      %v592 = vld [vmem:[%s1 + $0x60] sm:$0xff]
      %v593 = vld [vmem:[%s1 + $0x68] sm:$0xff]
      %v594 = vld [vmem:[%s1 + $0x70] sm:$0xff]
      %v595 = vld [vmem:[%s1 + $0x78] sm:$0xff]
      %v596 = vld [vmem:[%s1 + $0x80] sm:$0xff]
      %v597 = vld [vmem:[%s1 + $0x88] sm:$0xff]
      %v598 = vld [vmem:[%s1 + $0x90] sm:$0xff]
      %v599 = vld [vmem:[%s1 + $0x98] sm:$0xff]
      %v600 = vld [vmem:[%s1 + $0xa0] sm:$0xff]
      %v601 = vld [vmem:[%s1 + $0xa8] sm:$0xff]
      %v602 = vld [vmem:[%s1 + $0xb0] sm:$0xff]
      %v603 = vld [vmem:[%s1 + $0xb8] sm:$0xff]
      %v604 = vld [vmem:[%s1 + $0xc0] sm:$0xff]
      %v605 = vld [vmem:[%s1 + $0xc8] sm:$0xff]
      %v606 = vld [vmem:[%s1 + $0xd0] sm:$0xff]
      %v607 = vld [vmem:[%s1 + $0xd8] sm:$0xff]
      %v608 = vld [vmem:[%s1 + $0xe0] sm:$0xff]
      %v609 = vld [vmem:[%s1 + $0xe8] sm:$0xff]
      %v610 = vld [vmem:[%s1 + $0xf0] sm:$0xff]
      %v611 = vld [vmem:[%s1 + $0xf8] sm:$0xff]
      %v612 = vld [vmem:[%s1 + $0x100] sm:$0xff]
      %v613 = vld [vmem:[%s1 + $0x108] sm:$0xff]
      %v614 = vld [vmem:[%s1 + $0x110] sm:$0xff]
      %v615 = vld [vmem:[%s1 + $0x118] sm:$0xff]
      %v616 = vld [vmem:[%s1 + $0x120] sm:$0xff]
      %v617 = vld [vmem:[%s1 + $0x128] sm:$0xff]
      %v618 = vld [vmem:[%s1 + $0x130] sm:$0xff]
      %v619 = vld [vmem:[%s1 + $0x138] sm:$0xff]
      %v620 = vld [vmem:[%s1 + $0x140] sm:$0xff]
      %v621 = vld [vmem:[%s1 + $0x148] sm:$0xff]
      %v622 = vld [vmem:[%s1 + $0x150] sm:$0xff]
      %v623 = vld [vmem:[%s1 + $0x158] sm:$0xff]
      %v624 = vld [vmem:[%s1 + $0x160] sm:$0xff]
      %v625 = vld [vmem:[%s1 + $0x168] sm:$0xff]
      %v626 = vld [vmem:[%s1 + $0x170] sm:$0xff]
      %v627 = vld [vmem:[%s1 + $0x178] sm:$0xff]
      %v628 = vld [vmem:[%s1 + $0x180] sm:$0xff]
      %v629 = vld [vmem:[%s1 + $0x188] sm:$0xff]
      %v630 = vld [vmem:[%s1 + $0x190] sm:$0xff]
      %v631 = vld [vmem:[%s1 + $0x198] sm:$0xff]
      %v632 = vld [vmem:[%s1 + $0x1a0] sm:$0xff]
      %v633 = vld [vmem:[%s1 + $0x1a8] sm:$0xff]
      %v634 = vld [vmem:[%s1 + $0x1b0] sm:$0xff]
      %v635 = vld [vmem:[%s1 + $0x1b8] sm:$0xff]
      %v636 = vld [vmem:[%s1 + $0x1c0] sm:$0xff]
      %v637 = vld [vmem:[%s1 + $0x1c8] sm:$0xff]
      %v638 = vld [vmem:[%s1 + $0x1d0] sm:$0xff]
      %v639 = vld [vmem:[%s1 + $0x1d8] sm:$0xff]
      %v640 = vld [vmem:[%s1 + $0x1e0] sm:$0xff]
      %v641 = vld [vmem:[%s1 + $0x1e8] sm:$0xff]
      %v642 = vld [vmem:[%s1 + $0x1f0] sm:$0xff]
      %v643 = vld [vmem:[%s1 + $0x1f8] sm:$0xff]
      %v644 = vld [vmem:[%s1 + $0x200] sm:$0xff]
      %v645 = vld [vmem:[%s1 + $0x208] sm:$0xff]
      %v646 = vld [vmem:[%s1 + $0x210] sm:$0xff]
      %v647 = vld [vmem:[%s1 + $0x218] sm:$0xff]
      %v648 = vld [vmem:[%s1 + $0x220] sm:$0xff]
      %v649 = vld [vmem:[%s1 + $0x228] sm:$0xff]
      %v650 = vld [vmem:[%s1 + $0x230] sm:$0xff]
      %v651 = vld [vmem:[%s1 + $0x238] sm:$0xff]
      %v652 = vld [vmem:[%s1 + $0x240] sm:$0xff]
      %v653 = vld [vmem:[%s1 + $0x248] sm:$0xff]
      %v654 = vld [vmem:[%s1 + $0x250] sm:$0xff]
      %v655 = vld [vmem:[%s1 + $0x258] sm:$0xff]
      %v656 = vld [vmem:[%s1 + $0x260] sm:$0xff]
      %v657 = vld [vmem:[%s1 + $0x268] sm:$0xff]
      %v658 = vld [vmem:[%s1 + $0x270] sm:$0xff]
      %v659 = vld [vmem:[%s1 + $0x278] sm:$0xff]
      %v660 = vld [vmem:[%s1 + $0x280] sm:$0xff]
      %v661 = vld [vmem:[%s1 + $0x288] sm:$0xff]
      %v662 = vld [vmem:[%s1 + $0x290] sm:$0xff]
      %v663 = vld [vmem:[%s1 + $0x298] sm:$0xff]
      %v664 = vld [vmem:[%s1 + $0x2a0] sm:$0xff]
      %v665 = vld [vmem:[%s1 + $0x2a8] sm:$0xff]
      %v666 = vld [vmem:[%s1 + $0x2b0] sm:$0xff]
      %v667 = vld [vmem:[%s1 + $0x2b8] sm:$0xff]
      %v668 = vld [vmem:[%s1 + $0x2c0] sm:$0xff]
      %v669 = vld [vmem:[%s1 + $0x2c8] sm:$0xff]
      %v670 = vld [vmem:[%s1 + $0x2d0] sm:$0xff]
      %v671 = vld [vmem:[%s1 + $0x2d8] sm:$0xff]
      %v672 = vld [vmem:[%s1 + $0x2e0] sm:$0xff]
      %v673 = vld [vmem:[%s1 + $0x2e8] sm:$0xff]
      %v674 = vld [vmem:[%s1 + $0x2f0] sm:$0xff]
      %v675 = vld [vmem:[%s1 + $0x2f8] sm:$0xff]
      %v676 = vld [vmem:[%s1 + $0x300] sm:$0xff]
      %v677 = vld [vmem:[%s1 + $0x308] sm:$0xff]
      %v678 = vld [vmem:[%s1 + $0x310] sm:$0xff]
      %v679 = vld [vmem:[%s1 + $0x318] sm:$0xff]
      %v680 = vld [vmem:[%s1 + $0x320] sm:$0xff]
      %v681 = vld [vmem:[%s1 + $0x328] sm:$0xff]
      %v682 = vld [vmem:[%s1 + $0x330] sm:$0xff]
      %v683 = vld [vmem:[%s1 + $0x338] sm:$0xff]
      %v684 = vld [vmem:[%s1 + $0x340] sm:$0xff]
      %v685 = vld [vmem:[%s1 + $0x348] sm:$0xff]
      %v686 = vld [vmem:[%s1 + $0x350] sm:$0xff]
      %v687 = vld [vmem:[%s1 + $0x358] sm:$0xff]
      %v688 = vld [vmem:[%s1 + $0x360] sm:$0xff]
      %v689 = vld [vmem:[%s1 + $0x368] sm:$0xff]
      %v690 = vld [vmem:[%s1 + $0x370] sm:$0xff]
      %v691 = vld [vmem:[%s1 + $0x378] sm:$0xff]
      %v692 = vld [vmem:[%s1 + $0x380] sm:$0xff]
      %v693 = vld [vmem:[%s1 + $0x388] sm:$0xff]
      %v694 = vld [vmem:[%s1 + $0x390] sm:$0xff]
      %v695 = vld [vmem:[%s1 + $0x398] sm:$0xff]
      %v696 = vld [vmem:[%s1 + $0x3a0] sm:$0xff]
      %v697 = vld [vmem:[%s1 + $0x3a8] sm:$0xff]
      %v698 = vld [vmem:[%s1 + $0x3b0] sm:$0xff]
      %v699 = vld [vmem:[%s1 + $0x3b8] sm:$0xff]
      %v700 = vld [vmem:[%s1 + $0x3c0] sm:$0xff]
      %v701 = vld [vmem:[%s1 + $0x3c8] sm:$0xff]
      %v702 = vld [vmem:[%s1 + $0x3d0] sm:$0xff]
      %v703 = vld [vmem:[%s1 + $0x3d8] sm:$0xff]
      %v704 = vld [vmem:[%s1 + $0x3e0] sm:$0xff]
      %v705 = vld [vmem:[%s1 + $0x3e8] sm:$0xff]
      %v706 = vld [vmem:[%s1 + $0x3f0] sm:$0xff]
      %v707 = vld [vmem:[%s1 + $0x3f8] sm:$0xff]
      %v708 = vld [vmem:[%s1 + $0x400] sm:$0xff]
      %v709 = vld [vmem:[%s1 + $0x408] sm:$0xff]
      %v710 = vld [vmem:[%s1 + $0x410] sm:$0xff]
      %v711 = vld [vmem:[%s1 + $0x418] sm:$0xff]
      %v712 = vld [vmem:[%s1 + $0x420] sm:$0xff]
      %v713 = vld [vmem:[%s1 + $0x428] sm:$0xff]
      %v714 = vld [vmem:[%s1 + $0x430] sm:$0xff]
      %v715 = vld [vmem:[%s1 + $0x438] sm:$0xff]
      %v716 = vld [vmem:[%s1 + $0x440] sm:$0xff]
      %v717 = vld [vmem:[%s1 + $0x448] sm:$0xff]
      %v718 = vld [vmem:[%s1 + $0x450] sm:$0xff]
      %v719 = vld [vmem:[%s1 + $0x458] sm:$0xff]
      %v720 = vld [vmem:[%s1 + $0x460] sm:$0xff]
      %v721 = vld [vmem:[%s1 + $0x468] sm:$0xff]
      %v722 = vld [vmem:[%s1 + $0x470] sm:$0xff]
      %v723 = vld [vmem:[%s1 + $0x478] sm:$0xff]
      %v724 = vld [vmem:[%s2] sm:$0x1]
      %v726 = vlaneseq
      %v727 = vshrl.u32 %v726, 7
      %v728 = vsub.s32 0, %v727
      %v729 = vrot.slane %v724, %v728
      %731 = vmatprep.subr.mxu0 0.0
      %732 = vmatpush1.msra.mxu0 %v580
      %733 = vmatprep.subr.mxu0 0.0
      %734 = vmatpush1.msra.mxu0 %v581
      %735 = vmatprep.subr.mxu0 0.0
      %736 = vmatpush1.msra.mxu0 %v582
      %737 = vmatprep.subr.mxu0 0.0
      %738 = vmatpush1.msra.mxu0 %v583
      %739 = vmatprep.subr.mxu0 0.0
      %740 = vmatpush1.msra.mxu0 %v584
      %741 = vmatprep.subr.mxu0 0.0
      %742 = vmatpush1.msra.mxu0 %v585
      %743 = vmatprep.subr.mxu0 0.0
      %744 = vmatpush1.msra.mxu0 %v586
      %745 = vmatprep.subr.mxu0 0.0
      %746 = vmatpush1.msra.mxu0 %v587
      %747 = vmatprep.subr.mxu0 0.0
      %748 = vmatpush1.msra.mxu0 %v588
      %749 = vmatprep.subr.mxu0 0.0
      %750 = vmatpush1.msra.mxu0 %v589
      %751 = vmatprep.subr.mxu0 0.0
      %752 = vmatpush1.msra.mxu0 %v590
      %753 = vmatprep.subr.mxu0 0.0
      %754 = vmatpush1.msra.mxu0 %v591
      %755 = vmatprep.subr.mxu0 0.0
      %756 = vmatpush1.msra.mxu0 %v592
      %757 = vmatprep.subr.mxu0 0.0
      %758 = vmatpush1.msra.mxu0 %v593
      %759 = vmatprep.subr.mxu0 0.0
      %760 = vmatpush1.msra.mxu0 %v594
      %761 = vmatprep.subr.mxu0 0.0
      %762 = vmatpush1.msra.mxu0 %v595
      %763 = vmatprep.subr.mxu0 0.0
      %764 = vmatpush1.msra.mxu0 %v596
      %765 = vmatprep.subr.mxu0 0.0
      %766 = vmatpush1.msra.mxu0 %v597
      %767 = vmatprep.subr.mxu0 0.0
      %768 = vmatpush1.msra.mxu0 %v598
      %769 = vmatprep.subr.mxu0 0.0
      %770 = vmatpush1.msra.mxu0 %v599
      %771 = vmatprep.subr.mxu0 0.0
      %772 = vmatpush1.msra.mxu0 %v600
      %773 = vmatprep.subr.mxu0 0.0
      %774 = vmatpush1.msra.mxu0 %v601
      %775 = vmatprep.subr.mxu0 0.0
      %776 = vmatpush1.msra.mxu0 %v602
      %777 = vmatprep.subr.mxu0 0.0
      %778 = vmatpush1.msra.mxu0 %v603
      %779 = vmatprep.subr.mxu0 0.0
      %780 = vmatpush1.msra.mxu0 %v604
      %781 = vmatprep.subr.mxu0 0.0
      %782 = vmatpush1.msra.mxu0 %v605
      %783 = vmatprep.subr.mxu0 0.0
      %784 = vmatpush1.msra.mxu0 %v606
      %785 = vmatprep.subr.mxu0 0.0
      %786 = vmatpush1.msra.mxu0 %v607
      %787 = vmatprep.subr.mxu0 0.0
      %788 = vmatpush1.msra.mxu0 %v608
      %789 = vmatprep.subr.mxu0 0.0
      %790 = vmatpush1.msra.mxu0 %v609
      %791 = vmatprep.subr.mxu0 0.0
      %792 = vmatpush1.msra.mxu0 %v610
      %793 = vmatprep.subr.mxu0 0.0
      %794 = vmatpush1.msra.mxu0 %v611
      %795 = vmatprep.mubr.f32.mxu0 %v293
      %796 = vmatmul.mubr.f32.gmra.mrb[0].mxu0 %v292
      %v797 = vpop.f32.mrb[0].mxu0
      %v798 = vadd.f32 %v729, %v797
      %v799 = vpop.f32.mrb[0].mxu0
      %800 = vmatprep.mubr.f32.mxu0 %v302
      %801 = vmatmul.mubr.f32.gmra.mrb[0].mxu0 %v301
      %v802 = vpop.f32.mrb[0].mxu0
      %v803 = vadd.f32 %v729, %v802
      %v804 = vpop.f32.mrb[0].mxu0
      %805 = vmatprep.mubr.f32.mxu0 %v311
      %806 = vmatmul.mubr.f32.gmra.mrb[0].mxu0 %v310
      %v807 = vpop.f32.mrb[0].mxu0
      %v808 = vadd.f32 %v729, %v807
      %v809 = vpop.f32.mrb[0].mxu0
      %810 = vmatprep.mubr.f32.mxu0 %v320
      %811 = vmatmul.mubr.f32.gmra.mrb[0].mxu0 %v319
      %v812 = vpop.f32.mrb[0].mxu0
      %v813 = vadd.f32 %v729, %v812
      %v814 = vpop.f32.mrb[0].mxu0
      %815 = vmatprep.mubr.f32.mxu0 %v329
      %816 = vmatmul.mubr.f32.gmra.mrb[0].mxu0 %v328
      %v817 = vpop.f32.mrb[0].mxu0
      %v818 = vadd.f32 %v729, %v817
      %v819 = vpop.f32.mrb[0].mxu0
      %820 = vmatprep.mubr.f32.mxu0 %v338
      %821 = vmatmul.mubr.f32.gmra.mrb[0].mxu0 %v337
      %v822 = vpop.f32.mrb[0].mxu0
      %v823 = vadd.f32 %v729, %v822
      %v824 = vpop.f32.mrb[0].mxu0
      %825 = vmatprep.mubr.f32.mxu0 %v347
      %826 = vmatmul.mubr.f32.gmra.mrb[0].mxu0 %v346
      %v827 = vpop.f32.mrb[0].mxu0
      %v828 = vadd.f32 %v729, %v827
      %v829 = vpop.f32.mrb[0].mxu0
      %830 = vmatprep.mubr.f32.mxu0 %v356
      %831 = vmatmul.mubr.f32.gmra.mrb[0].mxu0 %v355
      %v832 = vpop.f32.mrb[0].mxu0
      %v833 = vadd.f32 %v729, %v832
      %v834 = vpop.f32.mrb[0].mxu0
      %835 = vmatprep.mubr.f32.mxu0 %v365
      %836 = vmatmul.mubr.f32.gmra.mrb[0].mxu0 %v364
      %v837 = vpop.f32.mrb[0].mxu0
      %v838 = vadd.f32 %v729, %v837
      %v839 = vpop.f32.mrb[0].mxu0
      %840 = vmatprep.mubr.f32.mxu0 %v374
      %841 = vmatmul.mubr.f32.gmra.mrb[0].mxu0 %v373
      %v842 = vpop.f32.mrb[0].mxu0
      %v843 = vadd.f32 %v729, %v842
      %v844 = vpop.f32.mrb[0].mxu0
      %845 = vmatprep.mubr.f32.mxu0 %v383
      %846 = vmatmul.mubr.f32.gmra.mrb[0].mxu0 %v382
      %v847 = vpop.f32.mrb[0].mxu0
      %v848 = vadd.f32 %v729, %v847
      %v849 = vpop.f32.mrb[0].mxu0
      %850 = vmatprep.mubr.f32.mxu0 %v392
      %851 = vmatmul.mubr.f32.gmra.mrb[0].mxu0 %v391
      %v852 = vpop.f32.mrb[0].mxu0
      %v853 = vadd.f32 %v729, %v852
      %v854 = vpop.f32.mrb[0].mxu0
      %855 = vmatprep.mubr.f32.mxu0 %v401
      %856 = vmatmul.mubr.f32.gmra.mrb[0].mxu0 %v400
      %v857 = vpop.f32.mrb[0].mxu0
      %v858 = vadd.f32 %v729, %v857
      %v859 = vpop.f32.mrb[0].mxu0
      %860 = vmatprep.mubr.f32.mxu0 %v410
      %861 = vmatmul.mubr.f32.gmra.mrb[0].mxu0 %v409
      %v862 = vpop.f32.mrb[0].mxu0
      %v863 = vadd.f32 %v729, %v862
      %v864 = vpop.f32.mrb[0].mxu0
      %865 = vmatprep.mubr.f32.mxu0 %v419
      %866 = vmatmul.mubr.f32.gmra.mrb[0].mxu0 %v418
      %v867 = vpop.f32.mrb[0].mxu0
      %v868 = vadd.f32 %v729, %v867
      %v869 = vpop.f32.mrb[0].mxu0
      %870 = vmatprep.mubr.f32.mxu0 %v428
      %871 = vmatmul.mubr.f32.gmra.mrb[0].mxu0 %v427
      %v872 = vpop.f32.mrb[0].mxu0
      %v873 = vadd.f32 %v729, %v872
      %v874 = vpop.f32.mrb[0].mxu0
      %875 = vmatprep.mubr.f32.mxu0 %v437
      %876 = vmatmul.mubr.f32.gmra.mrb[0].mxu0 %v436
      %v877 = vpop.f32.mrb[0].mxu0
      %v878 = vadd.f32 %v729, %v877
      %v879 = vpop.f32.mrb[0].mxu0
      %880 = vmatprep.mubr.f32.mxu0 %v446
      %881 = vmatmul.mubr.f32.gmra.mrb[0].mxu0 %v445
      %v882 = vpop.f32.mrb[0].mxu0
      %v883 = vadd.f32 %v729, %v882
      %v884 = vpop.f32.mrb[0].mxu0
      %885 = vmatprep.mubr.f32.mxu0 %v455
      %886 = vmatmul.mubr.f32.gmra.mrb[0].mxu0 %v454
      %v887 = vpop.f32.mrb[0].mxu0
      %v888 = vadd.f32 %v729, %v887
      %v889 = vpop.f32.mrb[0].mxu0
      %890 = vmatprep.mubr.f32.mxu0 %v464
      %891 = vmatmul.mubr.f32.gmra.mrb[0].mxu0 %v463
      %v892 = vpop.f32.mrb[0].mxu0
      %v893 = vadd.f32 %v729, %v892
      %v894 = vpop.f32.mrb[0].mxu0
      %895 = vmatprep.mubr.f32.mxu0 %v473
      %896 = vmatmul.mubr.f32.gmra.mrb[0].mxu0 %v472
      %v897 = vpop.f32.mrb[0].mxu0
      %v898 = vadd.f32 %v729, %v897
      %v899 = vpop.f32.mrb[0].mxu0
      %900 = vmatprep.mubr.f32.mxu0 %v482
      %901 = vmatmul.mubr.f32.gmra.mrb[0].mxu0 %v481
      %v902 = vpop.f32.mrb[0].mxu0
      %v903 = vadd.f32 %v729, %v902
      %v904 = vpop.f32.mrb[0].mxu0
      %905 = vmatprep.mubr.f32.mxu0 %v491
      %906 = vmatmul.mubr.f32.gmra.mrb[0].mxu0 %v490
      %v907 = vpop.f32.mrb[0].mxu0
      %v908 = vadd.f32 %v729, %v907
      %v909 = vpop.f32.mrb[0].mxu0
      %910 = vmatprep.mubr.f32.mxu0 %v500
      %911 = vmatmul.mubr.f32.gmra.mrb[0].mxu0 %v499
      %v912 = vpop.f32.mrb[0].mxu0
      %v913 = vadd.f32 %v729, %v912
      %v914 = vpop.f32.mrb[0].mxu0
      %915 = vmatprep.mubr.f32.mxu0 %v509
      %916 = vmatmul.mubr.f32.gmra.mrb[0].mxu0 %v508
      %v917 = vpop.f32.mrb[0].mxu0
      %v918 = vadd.f32 %v729, %v917
      %v919 = vpop.f32.mrb[0].mxu0
      %920 = vmatprep.mubr.f32.mxu0 %v518
      %921 = vmatmul.mubr.f32.gmra.mrb[0].mxu0 %v517
      %v922 = vpop.f32.mrb[0].mxu0
      %v923 = vadd.f32 %v729, %v922
      %v924 = vpop.f32.mrb[0].mxu0
      %925 = vmatprep.mubr.f32.mxu0 %v527
      %926 = vmatmul.mubr.f32.gmra.mrb[0].mxu0 %v526
      %v927 = vpop.f32.mrb[0].mxu0
      %v928 = vadd.f32 %v729, %v927
      %v929 = vpop.f32.mrb[0].mxu0
      %930 = vmatprep.mubr.f32.mxu0 %v536
      %931 = vmatmul.mubr.f32.gmra.mrb[0].mxu0 %v535
      %v932 = vpop.f32.mrb[0].mxu0
      %v933 = vadd.f32 %v729, %v932
      %v934 = vpop.f32.mrb[0].mxu0
      %935 = vmatprep.mubr.f32.mxu0 %v545
      %936 = vmatmul.mubr.f32.gmra.mrb[0].mxu0 %v544
      %v937 = vpop.f32.mrb[0].mxu0
      %v938 = vadd.f32 %v729, %v937
      %v939 = vpop.f32.mrb[0].mxu0
      %940 = vmatprep.mubr.f32.mxu0 %v554
      %941 = vmatmul.mubr.f32.gmra.mrb[0].mxu0 %v553
      %v942 = vpop.f32.mrb[0].mxu0
      %v943 = vadd.f32 %v729, %v942
      %v944 = vpop.f32.mrb[0].mxu0
      %945 = vmatprep.mubr.f32.mxu0 %v563
      %946 = vmatmul.mubr.f32.gmra.mrb[0].mxu0 %v562
      %v947 = vpop.f32.mrb[0].mxu0
      %v948 = vadd.f32 %v729, %v947
      %v949 = vpop.f32.mrb[0].mxu0
      %950 = vmatprep.mubr.f32.mxu0 %v572
      %951 = vmatmul.mubr.f32.gmra.mrb[0].mxu0 %v571
      %v952 = vpop.f32.mrb[0].mxu0
      %v953 = vadd.f32 %v729, %v952
      %v954 = vpop.f32.mrb[0].mxu0
      %955 = vdwg.mxu0
      %956 = vmatprep.subr.mxu0 0.0
      %957 = vmatpush1.msra.mxu0 %v612
      %958 = vmatprep.subr.mxu0 0.0
      %959 = vmatpush1.msra.mxu0 %v613
      %960 = vmatprep.subr.mxu0 0.0
      %961 = vmatpush1.msra.mxu0 %v614
      %962 = vmatprep.subr.mxu0 0.0
      %963 = vmatpush1.msra.mxu0 %v615
      %964 = vmatprep.subr.mxu0 0.0
      %965 = vmatpush1.msra.mxu0 %v616
      %966 = vmatprep.subr.mxu0 0.0
      %967 = vmatpush1.msra.mxu0 %v617
      %968 = vmatprep.subr.mxu0 0.0
      %969 = vmatpush1.msra.mxu0 %v618
      %970 = vmatprep.subr.mxu0 0.0
      %971 = vmatpush1.msra.mxu0 %v619
      %972 = vmatprep.subr.mxu0 0.0
      %973 = vmatpush1.msra.mxu0 %v620
      %974 = vmatprep.subr.mxu0 0.0
      %975 = vmatpush1.msra.mxu0 %v621
      %976 = vmatprep.subr.mxu0 0.0
      %977 = vmatpush1.msra.mxu0 %v622
      %978 = vmatprep.subr.mxu0 0.0
      %979 = vmatpush1.msra.mxu0 %v623
      %980 = vmatprep.subr.mxu0 0.0
      %981 = vmatpush1.msra.mxu0 %v624
      %982 = vmatprep.subr.mxu0 0.0
      %983 = vmatpush1.msra.mxu0 %v625
      %984 = vmatprep.subr.mxu0 0.0
      %985 = vmatpush1.msra.mxu0 %v626
      %986 = vmatprep.subr.mxu0 0.0
      %987 = vmatpush1.msra.mxu0 %v627
      %988 = vmatprep.subr.mxu0 0.0
      %989 = vmatpush1.msra.mxu0 %v628
      %990 = vmatprep.subr.mxu0 0.0
      %991 = vmatpush1.msra.mxu0 %v629
      %992 = vmatprep.subr.mxu0 0.0
      %993 = vmatpush1.msra.mxu0 %v630
      %994 = vmatprep.subr.mxu0 0.0
      %995 = vmatpush1.msra.mxu0 %v631
      %996 = vmatprep.subr.mxu0 0.0
      %997 = vmatpush1.msra.mxu0 %v632
      %998 = vmatprep.subr.mxu0 0.0
      %999 = vmatpush1.msra.mxu0 %v633
      %1000 = vmatprep.subr.mxu0 0.0
      %1001 = vmatpush1.msra.mxu0 %v634
      %1002 = vmatprep.subr.mxu0 0.0
      %1003 = vmatpush1.msra.mxu0 %v635
      %1004 = vmatprep.subr.mxu0 0.0
      %1005 = vmatpush1.msra.mxu0 %v636
      %1006 = vmatprep.subr.mxu0 0.0
      %1007 = vmatpush1.msra.mxu0 %v637
      %1008 = vmatprep.subr.mxu0 0.0
      %1009 = vmatpush1.msra.mxu0 %v638
      %1010 = vmatprep.subr.mxu0 0.0
      %1011 = vmatpush1.msra.mxu0 %v639
      %1012 = vmatprep.subr.mxu0 0.0
      %1013 = vmatpush1.msra.mxu0 %v640
      %1014 = vmatprep.subr.mxu0 0.0
      %1015 = vmatpush1.msra.mxu0 %v641
      %1016 = vmatprep.subr.mxu0 0.0
      %1017 = vmatpush1.msra.mxu0 %v642
      %1018 = vmatprep.subr.mxu0 0.0
      %1019 = vmatpush1.msra.mxu0 %v643
      %1020 = vmatprep.mubr.f32.mxu0 %v295
      %1021 = vmatmul.mubr.f32.gmra.mrb[0].mxu0 %v294
      %v1022 = vpop.f32.mrb[0].mxu0
      %v1023 = vadd.f32 %v798, %v1022
      %v1024 = vpop.f32.mrb[0].mxu0
      %1025 = vmatprep.mubr.f32.mxu0 %v304
      %1026 = vmatmul.mubr.f32.gmra.mrb[0].mxu0 %v303
      %v1027 = vpop.f32.mrb[0].mxu0
      %v1028 = vadd.f32 %v803, %v1027
      %v1029 = vpop.f32.mrb[0].mxu0
      %1030 = vmatprep.mubr.f32.mxu0 %v313
      %1031 = vmatmul.mubr.f32.gmra.mrb[0].mxu0 %v312
      %v1032 = vpop.f32.mrb[0].mxu0
      %v1033 = vadd.f32 %v808, %v1032
      %v1034 = vpop.f32.mrb[0].mxu0
      %1035 = vmatprep.mubr.f32.mxu0 %v322
      %1036 = vmatmul.mubr.f32.gmra.mrb[0].mxu0 %v321
      %v1037 = vpop.f32.mrb[0].mxu0
      %v1038 = vadd.f32 %v813, %v1037
      %v1039 = vpop.f32.mrb[0].mxu0
      %1040 = vmatprep.mubr.f32.mxu0 %v331
      %1041 = vmatmul.mubr.f32.gmra.mrb[0].mxu0 %v330
      %v1042 = vpop.f32.mrb[0].mxu0
      %v1043 = vadd.f32 %v818, %v1042
      %v1044 = vpop.f32.mrb[0].mxu0
      %1045 = vmatprep.mubr.f32.mxu0 %v340
      %1046 = vmatmul.mubr.f32.gmra.mrb[0].mxu0 %v339
      %v1047 = vpop.f32.mrb[0].mxu0
      %v1048 = vadd.f32 %v823, %v1047
      %v1049 = vpop.f32.mrb[0].mxu0
      %1050 = vmatprep.mubr.f32.mxu0 %v349
      %1051 = vmatmul.mubr.f32.gmra.mrb[0].mxu0 %v348
      %v1052 = vpop.f32.mrb[0].mxu0
      %v1053 = vadd.f32 %v828, %v1052
      %v1054 = vpop.f32.mrb[0].mxu0
      %1055 = vmatprep.mubr.f32.mxu0 %v358
      %1056 = vmatmul.mubr.f32.gmra.mrb[0].mxu0 %v357
      %v1057 = vpop.f32.mrb[0].mxu0
      %v1058 = vadd.f32 %v833, %v1057
      %v1059 = vpop.f32.mrb[0].mxu0
      %1060 = vmatprep.mubr.f32.mxu0 %v367
      %1061 = vmatmul.mubr.f32.gmra.mrb[0].mxu0 %v366
      %v1062 = vpop.f32.mrb[0].mxu0
      %v1063 = vadd.f32 %v838, %v1062
      %v1064 = vpop.f32.mrb[0].mxu0
      %1065 = vmatprep.mubr.f32.mxu0 %v376
      %1066 = vmatmul.mubr.f32.gmra.mrb[0].mxu0 %v375
      %v1067 = vpop.f32.mrb[0].mxu0
      %v1068 = vadd.f32 %v843, %v1067
      %v1069 = vpop.f32.mrb[0].mxu0
      %1070 = vmatprep.mubr.f32.mxu0 %v385
      %1071 = vmatmul.mubr.f32.gmra.mrb[0].mxu0 %v384
      %v1072 = vpop.f32.mrb[0].mxu0
      %v1073 = vadd.f32 %v848, %v1072
      %v1074 = vpop.f32.mrb[0].mxu0
      %1075 = vmatprep.mubr.f32.mxu0 %v394
      %1076 = vmatmul.mubr.f32.gmra.mrb[0].mxu0 %v393
      %v1077 = vpop.f32.mrb[0].mxu0
      %v1078 = vadd.f32 %v853, %v1077
      %v1079 = vpop.f32.mrb[0].mxu0
      %1080 = vmatprep.mubr.f32.mxu0 %v403
      %1081 = vmatmul.mubr.f32.gmra.mrb[0].mxu0 %v402
      %v1082 = vpop.f32.mrb[0].mxu0
      %v1083 = vadd.f32 %v858, %v1082
      %v1084 = vpop.f32.mrb[0].mxu0
      %1085 = vmatprep.mubr.f32.mxu0 %v412
      %1086 = vmatmul.mubr.f32.gmra.mrb[0].mxu0 %v411
      %v1087 = vpop.f32.mrb[0].mxu0
      %v1088 = vadd.f32 %v863, %v1087
      %v1089 = vpop.f32.mrb[0].mxu0
      %1090 = vmatprep.mubr.f32.mxu0 %v421
      %1091 = vmatmul.mubr.f32.gmra.mrb[0].mxu0 %v420
      %v1092 = vpop.f32.mrb[0].mxu0
      %v1093 = vadd.f32 %v868, %v1092
      %v1094 = vpop.f32.mrb[0].mxu0
      %1095 = vmatprep.mubr.f32.mxu0 %v430
      %1096 = vmatmul.mubr.f32.gmra.mrb[0].mxu0 %v429
      %v1097 = vpop.f32.mrb[0].mxu0
      %v1098 = vadd.f32 %v873, %v1097
      %v1099 = vpop.f32.mrb[0].mxu0
      %1100 = vmatprep.mubr.f32.mxu0 %v439
      %1101 = vmatmul.mubr.f32.gmra.mrb[0].mxu0 %v438
      %v1102 = vpop.f32.mrb[0].mxu0
      %v1103 = vadd.f32 %v878, %v1102
      %v1104 = vpop.f32.mrb[0].mxu0
      %1105 = vmatprep.mubr.f32.mxu0 %v448
      %1106 = vmatmul.mubr.f32.gmra.mrb[0].mxu0 %v447
      %v1107 = vpop.f32.mrb[0].mxu0
      %v1108 = vadd.f32 %v883, %v1107
      %v1109 = vpop.f32.mrb[0].mxu0
      %1110 = vmatprep.mubr.f32.mxu0 %v457
      %1111 = vmatmul.mubr.f32.gmra.mrb[0].mxu0 %v456
      %v1112 = vpop.f32.mrb[0].mxu0
      %v1113 = vadd.f32 %v888, %v1112
      %v1114 = vpop.f32.mrb[0].mxu0
      %1115 = vmatprep.mubr.f32.mxu0 %v466
      %1116 = vmatmul.mubr.f32.gmra.mrb[0].mxu0 %v465
      %v1117 = vpop.f32.mrb[0].mxu0
      %v1118 = vadd.f32 %v893, %v1117
      %v1119 = vpop.f32.mrb[0].mxu0
      %1120 = vmatprep.mubr.f32.mxu0 %v475
      %1121 = vmatmul.mubr.f32.gmra.mrb[0].mxu0 %v474
      %v1122 = vpop.f32.mrb[0].mxu0
      %v1123 = vadd.f32 %v898, %v1122
      %v1124 = vpop.f32.mrb[0].mxu0
      %1125 = vmatprep.mubr.f32.mxu0 %v484
      %1126 = vmatmul.mubr.f32.gmra.mrb[0].mxu0 %v483
      %v1127 = vpop.f32.mrb[0].mxu0
      %v1128 = vadd.f32 %v903, %v1127
      %v1129 = vpop.f32.mrb[0].mxu0
      %1130 = vmatprep.mubr.f32.mxu0 %v493
      %1131 = vmatmul.mubr.f32.gmra.mrb[0].mxu0 %v492
      %v1132 = vpop.f32.mrb[0].mxu0
      %v1133 = vadd.f32 %v908, %v1132
      %v1134 = vpop.f32.mrb[0].mxu0
      %1135 = vmatprep.mubr.f32.mxu0 %v502
      %1136 = vmatmul.mubr.f32.gmra.mrb[0].mxu0 %v501
      %v1137 = vpop.f32.mrb[0].mxu0
      %v1138 = vadd.f32 %v913, %v1137
      %v1139 = vpop.f32.mrb[0].mxu0
      %1140 = vmatprep.mubr.f32.mxu0 %v511
      %1141 = vmatmul.mubr.f32.gmra.mrb[0].mxu0 %v510
      %v1142 = vpop.f32.mrb[0].mxu0
      %v1143 = vadd.f32 %v918, %v1142
      %v1144 = vpop.f32.mrb[0].mxu0
      %1145 = vmatprep.mubr.f32.mxu0 %v520
      %1146 = vmatmul.mubr.f32.gmra.mrb[0].mxu0 %v519
      %v1147 = vpop.f32.mrb[0].mxu0
      %v1148 = vadd.f32 %v923, %v1147
      %v1149 = vpop.f32.mrb[0].mxu0
      %1150 = vmatprep.mubr.f32.mxu0 %v529
      %1151 = vmatmul.mubr.f32.gmra.mrb[0].mxu0 %v528
      %v1152 = vpop.f32.mrb[0].mxu0
      %v1153 = vadd.f32 %v928, %v1152
      %v1154 = vpop.f32.mrb[0].mxu0
      %1155 = vmatprep.mubr.f32.mxu0 %v538
      %1156 = vmatmul.mubr.f32.gmra.mrb[0].mxu0 %v537
      %v1157 = vpop.f32.mrb[0].mxu0
      %v1158 = vadd.f32 %v933, %v1157
      %v1159 = vpop.f32.mrb[0].mxu0
      %1160 = vmatprep.mubr.f32.mxu0 %v547
      %1161 = vmatmul.mubr.f32.gmra.mrb[0].mxu0 %v546
      %v1162 = vpop.f32.mrb[0].mxu0
      %v1163 = vadd.f32 %v938, %v1162
      %v1164 = vpop.f32.mrb[0].mxu0
      %1165 = vmatprep.mubr.f32.mxu0 %v556
      %1166 = vmatmul.mubr.f32.gmra.mrb[0].mxu0 %v555
      %v1167 = vpop.f32.mrb[0].mxu0
      %v1168 = vadd.f32 %v943, %v1167
      %v1169 = vpop.f32.mrb[0].mxu0
      %1170 = vmatprep.mubr.f32.mxu0 %v565
      %1171 = vmatmul.mubr.f32.gmra.mrb[0].mxu0 %v564
      %v1172 = vpop.f32.mrb[0].mxu0
      %v1173 = vadd.f32 %v948, %v1172
      %v1174 = vpop.f32.mrb[0].mxu0
      %1175 = vmatprep.mubr.f32.mxu0 %v574
      %1176 = vmatmul.mubr.f32.gmra.mrb[0].mxu0 %v573
      %v1177 = vpop.f32.mrb[0].mxu0
      %v1178 = vadd.f32 %v953, %v1177
      %v1179 = vpop.f32.mrb[0].mxu0
      %1180 = vdwg.mxu0
      %1181 = vmatprep.subr.mxu0 0.0
      %1182 = vmatpush1.msra.mxu0 %v644
      %1183 = vmatprep.subr.mxu0 0.0
      %1184 = vmatpush1.msra.mxu0 %v645
      %1185 = vmatprep.subr.mxu0 0.0
      %1186 = vmatpush1.msra.mxu0 %v646
      %1187 = vmatprep.subr.mxu0 0.0
      %1188 = vmatpush1.msra.mxu0 %v647
      %1189 = vmatprep.subr.mxu0 0.0
      %1190 = vmatpush1.msra.mxu0 %v648
      %1191 = vmatprep.subr.mxu0 0.0
      %1192 = vmatpush1.msra.mxu0 %v649
      %1193 = vmatprep.subr.mxu0 0.0
      %1194 = vmatpush1.msra.mxu0 %v650
      %1195 = vmatprep.subr.mxu0 0.0
      %1196 = vmatpush1.msra.mxu0 %v651
      %1197 = vmatprep.subr.mxu0 0.0
      %1198 = vmatpush1.msra.mxu0 %v652
      %1199 = vmatprep.subr.mxu0 0.0
      %1200 = vmatpush1.msra.mxu0 %v653
      %1201 = vmatprep.subr.mxu0 0.0
      %1202 = vmatpush1.msra.mxu0 %v654
      %1203 = vmatprep.subr.mxu0 0.0
      %1204 = vmatpush1.msra.mxu0 %v655
      %1205 = vmatprep.subr.mxu0 0.0
      %1206 = vmatpush1.msra.mxu0 %v656
      %1207 = vmatprep.subr.mxu0 0.0
      %1208 = vmatpush1.msra.mxu0 %v657
      %1209 = vmatprep.subr.mxu0 0.0
      %1210 = vmatpush1.msra.mxu0 %v658
      %1211 = vmatprep.subr.mxu0 0.0
      %1212 = vmatpush1.msra.mxu0 %v659
      %1213 = vmatprep.subr.mxu0 0.0
      %1214 = vmatpush1.msra.mxu0 %v660
      %1215 = vmatprep.subr.mxu0 0.0
      %1216 = vmatpush1.msra.mxu0 %v661
      %1217 = vmatprep.subr.mxu0 0.0
      %1218 = vmatpush1.msra.mxu0 %v662
      %1219 = vmatprep.subr.mxu0 0.0
      %1220 = vmatpush1.msra.mxu0 %v663
      %1221 = vmatprep.subr.mxu0 0.0
      %1222 = vmatpush1.msra.mxu0 %v664
      %1223 = vmatprep.subr.mxu0 0.0
      %1224 = vmatpush1.msra.mxu0 %v665
      %1225 = vmatprep.subr.mxu0 0.0
      %1226 = vmatpush1.msra.mxu0 %v666
      %1227 = vmatprep.subr.mxu0 0.0
      %1228 = vmatpush1.msra.mxu0 %v667
      %1229 = vmatprep.subr.mxu0 0.0
      %1230 = vmatpush1.msra.mxu0 %v668
      %1231 = vmatprep.subr.mxu0 0.0
      %1232 = vmatpush1.msra.mxu0 %v669
      %1233 = vmatprep.subr.mxu0 0.0
      %1234 = vmatpush1.msra.mxu0 %v670
      %1235 = vmatprep.subr.mxu0 0.0
      %1236 = vmatpush1.msra.mxu0 %v671
      %1237 = vmatprep.subr.mxu0 0.0
      %1238 = vmatpush1.msra.mxu0 %v672
      %1239 = vmatprep.subr.mxu0 0.0
      %1240 = vmatpush1.msra.mxu0 %v673
      %1241 = vmatprep.subr.mxu0 0.0
      %1242 = vmatpush1.msra.mxu0 %v674
      %1243 = vmatprep.subr.mxu0 0.0
      %1244 = vmatpush1.msra.mxu0 %v675
      %1245 = vmatprep.mubr.f32.mxu0 %v297
      %1246 = vmatmul.mubr.f32.gmra.mrb[0].mxu0 %v296
      %v1247 = vpop.f32.mrb[0].mxu0
      %v1248 = vadd.f32 %v1023, %v1247
      %v1249 = vpop.f32.mrb[0].mxu0
      %1250 = vmatprep.mubr.f32.mxu0 %v306
      %1251 = vmatmul.mubr.f32.gmra.mrb[0].mxu0 %v305
      %v1252 = vpop.f32.mrb[0].mxu0
      %v1253 = vadd.f32 %v1028, %v1252
      %v1254 = vpop.f32.mrb[0].mxu0
      %1255 = vmatprep.mubr.f32.mxu0 %v315
      %1256 = vmatmul.mubr.f32.gmra.mrb[0].mxu0 %v314
      %v1257 = vpop.f32.mrb[0].mxu0
      %v1258 = vadd.f32 %v1033, %v1257
      %v1259 = vpop.f32.mrb[0].mxu0
      %1260 = vmatprep.mubr.f32.mxu0 %v324
      %1261 = vmatmul.mubr.f32.gmra.mrb[0].mxu0 %v323
      %v1262 = vpop.f32.mrb[0].mxu0
      %v1263 = vadd.f32 %v1038, %v1262
      %v1264 = vpop.f32.mrb[0].mxu0
      %1265 = vmatprep.mubr.f32.mxu0 %v333
      %1266 = vmatmul.mubr.f32.gmra.mrb[0].mxu0 %v332
      %v1267 = vpop.f32.mrb[0].mxu0
      %v1268 = vadd.f32 %v1043, %v1267
      %v1269 = vpop.f32.mrb[0].mxu0
      %1270 = vmatprep.mubr.f32.mxu0 %v342
      %1271 = vmatmul.mubr.f32.gmra.mrb[0].mxu0 %v341
      %v1272 = vpop.f32.mrb[0].mxu0
      %v1273 = vadd.f32 %v1048, %v1272
      %v1274 = vpop.f32.mrb[0].mxu0
      %1275 = vmatprep.mubr.f32.mxu0 %v351
      %1276 = vmatmul.mubr.f32.gmra.mrb[0].mxu0 %v350
      %v1277 = vpop.f32.mrb[0].mxu0
      %v1278 = vadd.f32 %v1053, %v1277
      %v1279 = vpop.f32.mrb[0].mxu0
      %1280 = vmatprep.mubr.f32.mxu0 %v360
      %1281 = vmatmul.mubr.f32.gmra.mrb[0].mxu0 %v359
      %v1282 = vpop.f32.mrb[0].mxu0
      %v1283 = vadd.f32 %v1058, %v1282
      %v1284 = vpop.f32.mrb[0].mxu0
      %1285 = vmatprep.mubr.f32.mxu0 %v369
      %1286 = vmatmul.mubr.f32.gmra.mrb[0].mxu0 %v368
      %v1287 = vpop.f32.mrb[0].mxu0
      %v1288 = vadd.f32 %v1063, %v1287
      %v1289 = vpop.f32.mrb[0].mxu0
      %1290 = vmatprep.mubr.f32.mxu0 %v378
      %1291 = vmatmul.mubr.f32.gmra.mrb[0].mxu0 %v377
      %v1292 = vpop.f32.mrb[0].mxu0
      %v1293 = vadd.f32 %v1068, %v1292
      %v1294 = vpop.f32.mrb[0].mxu0
      %1295 = vmatprep.mubr.f32.mxu0 %v387
      %1296 = vmatmul.mubr.f32.gmra.mrb[0].mxu0 %v386
      %v1297 = vpop.f32.mrb[0].mxu0
      %v1298 = vadd.f32 %v1073, %v1297
      %v1299 = vpop.f32.mrb[0].mxu0
      %1300 = vmatprep.mubr.f32.mxu0 %v396
      %1301 = vmatmul.mubr.f32.gmra.mrb[0].mxu0 %v395
      %v1302 = vpop.f32.mrb[0].mxu0
      %v1303 = vadd.f32 %v1078, %v1302
      %v1304 = vpop.f32.mrb[0].mxu0
      %1305 = vmatprep.mubr.f32.mxu0 %v405
      %1306 = vmatmul.mubr.f32.gmra.mrb[0].mxu0 %v404
      %v1307 = vpop.f32.mrb[0].mxu0
      %v1308 = vadd.f32 %v1083, %v1307
      %v1309 = vpop.f32.mrb[0].mxu0
      %1310 = vmatprep.mubr.f32.mxu0 %v414
      %1311 = vmatmul.mubr.f32.gmra.mrb[0].mxu0 %v413
      %v1312 = vpop.f32.mrb[0].mxu0
      %v1313 = vadd.f32 %v1088, %v1312
      %v1314 = vpop.f32.mrb[0].mxu0
      %1315 = vmatprep.mubr.f32.mxu0 %v423
      %1316 = vmatmul.mubr.f32.gmra.mrb[0].mxu0 %v422
      %v1317 = vpop.f32.mrb[0].mxu0
      %v1318 = vadd.f32 %v1093, %v1317
      %v1319 = vpop.f32.mrb[0].mxu0
      %1320 = vmatprep.mubr.f32.mxu0 %v432
      %1321 = vmatmul.mubr.f32.gmra.mrb[0].mxu0 %v431
      %v1322 = vpop.f32.mrb[0].mxu0
      %v1323 = vadd.f32 %v1098, %v1322
      %v1324 = vpop.f32.mrb[0].mxu0
      %1325 = vmatprep.mubr.f32.mxu0 %v441
      %1326 = vmatmul.mubr.f32.gmra.mrb[0].mxu0 %v440
      %v1327 = vpop.f32.mrb[0].mxu0
      %v1328 = vadd.f32 %v1103, %v1327
      %v1329 = vpop.f32.mrb[0].mxu0
      %1330 = vmatprep.mubr.f32.mxu0 %v450
      %1331 = vmatmul.mubr.f32.gmra.mrb[0].mxu0 %v449
      %v1332 = vpop.f32.mrb[0].mxu0
      %v1333 = vadd.f32 %v1108, %v1332
      %v1334 = vpop.f32.mrb[0].mxu0
      %1335 = vmatprep.mubr.f32.mxu0 %v459
      %1336 = vmatmul.mubr.f32.gmra.mrb[0].mxu0 %v458
      %v1337 = vpop.f32.mrb[0].mxu0
      %v1338 = vadd.f32 %v1113, %v1337
      %v1339 = vpop.f32.mrb[0].mxu0
      %1340 = vmatprep.mubr.f32.mxu0 %v468
      %1341 = vmatmul.mubr.f32.gmra.mrb[0].mxu0 %v467
      %v1342 = vpop.f32.mrb[0].mxu0
      %v1343 = vadd.f32 %v1118, %v1342
      %v1344 = vpop.f32.mrb[0].mxu0
      %1345 = vmatprep.mubr.f32.mxu0 %v477
      %1346 = vmatmul.mubr.f32.gmra.mrb[0].mxu0 %v476
      %v1347 = vpop.f32.mrb[0].mxu0
      %v1348 = vadd.f32 %v1123, %v1347
      %v1349 = vpop.f32.mrb[0].mxu0
      %1350 = vmatprep.mubr.f32.mxu0 %v486
      %1351 = vmatmul.mubr.f32.gmra.mrb[0].mxu0 %v485
      %v1352 = vpop.f32.mrb[0].mxu0
      %v1353 = vadd.f32 %v1128, %v1352
      %v1354 = vpop.f32.mrb[0].mxu0
      %1355 = vmatprep.mubr.f32.mxu0 %v495
      %1356 = vmatmul.mubr.f32.gmra.mrb[0].mxu0 %v494
      %v1357 = vpop.f32.mrb[0].mxu0
      %v1358 = vadd.f32 %v1133, %v1357
      %v1359 = vpop.f32.mrb[0].mxu0
      %1360 = vmatprep.mubr.f32.mxu0 %v504
      %1361 = vmatmul.mubr.f32.gmra.mrb[0].mxu0 %v503
      %v1362 = vpop.f32.mrb[0].mxu0
      %v1363 = vadd.f32 %v1138, %v1362
      %v1364 = vpop.f32.mrb[0].mxu0
      %1365 = vmatprep.mubr.f32.mxu0 %v513
      %1366 = vmatmul.mubr.f32.gmra.mrb[0].mxu0 %v512
      %v1367 = vpop.f32.mrb[0].mxu0
      %v1368 = vadd.f32 %v1143, %v1367
      %v1369 = vpop.f32.mrb[0].mxu0
      %1370 = vmatprep.mubr.f32.mxu0 %v522
      %1371 = vmatmul.mubr.f32.gmra.mrb[0].mxu0 %v521
      %v1372 = vpop.f32.mrb[0].mxu0
      %v1373 = vadd.f32 %v1148, %v1372
      %v1374 = vpop.f32.mrb[0].mxu0
      %1375 = vmatprep.mubr.f32.mxu0 %v531
      %1376 = vmatmul.mubr.f32.gmra.mrb[0].mxu0 %v530
      %v1377 = vpop.f32.mrb[0].mxu0
      %v1378 = vadd.f32 %v1153, %v1377
      %v1379 = vpop.f32.mrb[0].mxu0
      %1380 = vmatprep.mubr.f32.mxu0 %v540
      %1381 = vmatmul.mubr.f32.gmra.mrb[0].mxu0 %v539
      %v1382 = vpop.f32.mrb[0].mxu0
      %v1383 = vadd.f32 %v1158, %v1382
      %v1384 = vpop.f32.mrb[0].mxu0
      %1385 = vmatprep.mubr.f32.mxu0 %v549
      %1386 = vmatmul.mubr.f32.gmra.mrb[0].mxu0 %v548
      %v1387 = vpop.f32.mrb[0].mxu0
      %v1388 = vadd.f32 %v1163, %v1387
      %v1389 = vpop.f32.mrb[0].mxu0
      %1390 = vmatprep.mubr.f32.mxu0 %v558
      %1391 = vmatmul.mubr.f32.gmra.mrb[0].mxu0 %v557
      %v1392 = vpop.f32.mrb[0].mxu0
      %v1393 = vadd.f32 %v1168, %v1392
      %v1394 = vpop.f32.mrb[0].mxu0
      %1395 = vmatprep.mubr.f32.mxu0 %v567
      %1396 = vmatmul.mubr.f32.gmra.mrb[0].mxu0 %v566
      %v1397 = vpop.f32.mrb[0].mxu0
      %v1398 = vadd.f32 %v1173, %v1397
      %v1399 = vpop.f32.mrb[0].mxu0
      %1400 = vmatprep.mubr.f32.mxu0 %v576
      %1401 = vmatmul.mubr.f32.gmra.mrb[0].mxu0 %v575
      %v1402 = vpop.f32.mrb[0].mxu0
      %v1403 = vadd.f32 %v1178, %v1402
      %v1404 = vpop.f32.mrb[0].mxu0
      %1405 = vdwg.mxu0
      %1406 = vmatprep.subr.mxu0 0.0
      %1407 = vmatpush1.msra.mxu0 %v676
      %1408 = vmatprep.subr.mxu0 0.0
      %1409 = vmatpush1.msra.mxu0 %v677
      %1410 = vmatprep.subr.mxu0 0.0
      %1411 = vmatpush1.msra.mxu0 %v678
      %1412 = vmatprep.subr.mxu0 0.0
      %1413 = vmatpush1.msra.mxu0 %v679
      %1414 = vmatprep.subr.mxu0 0.0
      %1415 = vmatpush1.msra.mxu0 %v680
      %1416 = vmatprep.subr.mxu0 0.0
      %1417 = vmatpush1.msra.mxu0 %v681
      %1418 = vmatprep.subr.mxu0 0.0
      %1419 = vmatpush1.msra.mxu0 %v682
      %1420 = vmatprep.subr.mxu0 0.0
      %1421 = vmatpush1.msra.mxu0 %v683
      %1422 = vmatprep.subr.mxu0 0.0
      %1423 = vmatpush1.msra.mxu0 %v684
      %1424 = vmatprep.subr.mxu0 0.0
      %1425 = vmatpush1.msra.mxu0 %v685
      %1426 = vmatprep.subr.mxu0 0.0
      %1427 = vmatpush1.msra.mxu0 %v686
      %1428 = vmatprep.subr.mxu0 0.0
      %1429 = vmatpush1.msra.mxu0 %v687
      %1430 = vmatprep.subr.mxu0 0.0
      %1431 = vmatpush1.msra.mxu0 %v688
      %1432 = vmatprep.subr.mxu0 0.0
      %1433 = vmatpush1.msra.mxu0 %v689
      %1434 = vmatprep.subr.mxu0 0.0
      %1435 = vmatpush1.msra.mxu0 %v690
      %1436 = vmatprep.subr.mxu0 0.0
      %1437 = vmatpush1.msra.mxu0 %v691
      %1438 = vmatprep.subr.mxu0 0.0
      %1439 = vmatpush1.msra.mxu0 %v692
      %1440 = vmatprep.subr.mxu0 0.0
      %1441 = vmatpush1.msra.mxu0 %v693
      %1442 = vmatprep.subr.mxu0 0.0
      %1443 = vmatpush1.msra.mxu0 %v694
      %1444 = vmatprep.subr.mxu0 0.0
      %1445 = vmatpush1.msra.mxu0 %v695
      %1446 = vmatprep.subr.mxu0 0.0
      %1447 = vmatpush1.msra.mxu0 %v696
      %1448 = vmatprep.subr.mxu0 0.0
      %1449 = vmatpush1.msra.mxu0 %v697
      %1450 = vmatprep.subr.mxu0 0.0
      %1451 = vmatpush1.msra.mxu0 %v698
      %1452 = vmatprep.subr.mxu0 0.0
      %1453 = vmatpush1.msra.mxu0 %v699
      %1454 = vmatprep.subr.mxu0 0.0
      %1455 = vmatpush1.msra.mxu0 %v700
      %1456 = vmatprep.subr.mxu0 0.0
      %1457 = vmatpush1.msra.mxu0 %v701
      %1458 = vmatprep.subr.mxu0 0.0
      %1459 = vmatpush1.msra.mxu0 %v702
      %1460 = vmatprep.subr.mxu0 0.0
      %1461 = vmatpush1.msra.mxu0 %v703
      %1462 = vmatprep.subr.mxu0 0.0
      %1463 = vmatpush1.msra.mxu0 %v704
      %1464 = vmatprep.subr.mxu0 0.0
      %1465 = vmatpush1.msra.mxu0 %v705
      %1466 = vmatprep.subr.mxu0 0.0
      %1467 = vmatpush1.msra.mxu0 %v706
      %1468 = vmatprep.subr.mxu0 0.0
      %1469 = vmatpush1.msra.mxu0 %v707
      %1470 = vmatprep.mubr.f32.mxu0 %v299
      %1471 = vmatmul.mubr.f32.gmra.mrb[0].mxu0 %v298
      %v1472 = vpop.f32.mrb[0].mxu0
      %v1473 = vadd.f32 %v1248, %v1472
      %v1474 = vpop.f32.mrb[0].mxu0
      %1475 = vmatprep.mubr.f32.mxu0 %v308
      %1476 = vmatmul.mubr.f32.gmra.mrb[0].mxu0 %v307
      %v1477 = vpop.f32.mrb[0].mxu0
      %v1478 = vadd.f32 %v1253, %v1477
      %v1479 = vpop.f32.mrb[0].mxu0
      %1480 = vmatprep.mubr.f32.mxu0 %v317
      %1481 = vmatmul.mubr.f32.gmra.mrb[0].mxu0 %v316
      %v1482 = vpop.f32.mrb[0].mxu0
      %v1483 = vadd.f32 %v1258, %v1482
      %v1484 = vpop.f32.mrb[0].mxu0
      %1485 = vmatprep.mubr.f32.mxu0 %v326
      %1486 = vmatmul.mubr.f32.gmra.mrb[0].mxu0 %v325
      %v1487 = vpop.f32.mrb[0].mxu0
      %v1488 = vadd.f32 %v1263, %v1487
      %v1489 = vpop.f32.mrb[0].mxu0
      %1490 = vmatprep.mubr.f32.mxu0 %v335
      %1491 = vmatmul.mubr.f32.gmra.mrb[0].mxu0 %v334
      %v1492 = vpop.f32.mrb[0].mxu0
      %v1493 = vadd.f32 %v1268, %v1492
      %v1494 = vpop.f32.mrb[0].mxu0
      %1495 = vmatprep.mubr.f32.mxu0 %v344
      %1496 = vmatmul.mubr.f32.gmra.mrb[0].mxu0 %v343
      %v1497 = vpop.f32.mrb[0].mxu0
      %v1498 = vadd.f32 %v1273, %v1497
      %v1499 = vpop.f32.mrb[0].mxu0
      %1500 = vmatprep.mubr.f32.mxu0 %v353
      %1501 = vmatmul.mubr.f32.gmra.mrb[0].mxu0 %v352
      %v1502 = vpop.f32.mrb[0].mxu0
      %v1503 = vadd.f32 %v1278, %v1502
      %v1504 = vpop.f32.mrb[0].mxu0
      %1505 = vmatprep.mubr.f32.mxu0 %v362
      %1506 = vmatmul.mubr.f32.gmra.mrb[0].mxu0 %v361
      %v1507 = vpop.f32.mrb[0].mxu0
      %v1508 = vadd.f32 %v1283, %v1507
      %v1509 = vpop.f32.mrb[0].mxu0
      %1510 = vmatprep.mubr.f32.mxu0 %v371
      %1511 = vmatmul.mubr.f32.gmra.mrb[0].mxu0 %v370
      %v1512 = vpop.f32.mrb[0].mxu0
      %v1513 = vadd.f32 %v1288, %v1512
      %v1514 = vpop.f32.mrb[0].mxu0
      %1515 = vmatprep.mubr.f32.mxu0 %v380
      %1516 = vmatmul.mubr.f32.gmra.mrb[0].mxu0 %v379
      %v1517 = vpop.f32.mrb[0].mxu0
      %v1518 = vadd.f32 %v1293, %v1517
      %v1519 = vpop.f32.mrb[0].mxu0
      %1520 = vmatprep.mubr.f32.mxu0 %v389
      %1521 = vmatmul.mubr.f32.gmra.mrb[0].mxu0 %v388
      %v1522 = vpop.f32.mrb[0].mxu0
      %v1523 = vadd.f32 %v1298, %v1522
      %v1524 = vpop.f32.mrb[0].mxu0
      %1525 = vmatprep.mubr.f32.mxu0 %v398
      %1526 = vmatmul.mubr.f32.gmra.mrb[0].mxu0 %v397
      %v1527 = vpop.f32.mrb[0].mxu0
      %v1528 = vadd.f32 %v1303, %v1527
      %v1529 = vpop.f32.mrb[0].mxu0
      %1530 = vmatprep.mubr.f32.mxu0 %v407
      %1531 = vmatmul.mubr.f32.gmra.mrb[0].mxu0 %v406
      %v1532 = vpop.f32.mrb[0].mxu0
      %v1533 = vadd.f32 %v1308, %v1532
      %v1534 = vpop.f32.mrb[0].mxu0
      %1535 = vmatprep.mubr.f32.mxu0 %v416
      %1536 = vmatmul.mubr.f32.gmra.mrb[0].mxu0 %v415
      %v1537 = vpop.f32.mrb[0].mxu0
      %v1538 = vadd.f32 %v1313, %v1537
      %v1539 = vpop.f32.mrb[0].mxu0
      %1540 = vmatprep.mubr.f32.mxu0 %v425
      %1541 = vmatmul.mubr.f32.gmra.mrb[0].mxu0 %v424
      %v1542 = vpop.f32.mrb[0].mxu0
      %v1543 = vadd.f32 %v1318, %v1542
      %v1544 = vpop.f32.mrb[0].mxu0
      %1545 = vmatprep.mubr.f32.mxu0 %v434
      %1546 = vmatmul.mubr.f32.gmra.mrb[0].mxu0 %v433
      %v1547 = vpop.f32.mrb[0].mxu0
      %v1548 = vadd.f32 %v1323, %v1547
      %v1549 = vpop.f32.mrb[0].mxu0
      %1550 = vmatprep.mubr.f32.mxu0 %v443
      %1551 = vmatmul.mubr.f32.gmra.mrb[0].mxu0 %v442
      %v1552 = vpop.f32.mrb[0].mxu0
      %v1553 = vadd.f32 %v1328, %v1552
      %v1554 = vpop.f32.mrb[0].mxu0
      %1555 = vmatprep.mubr.f32.mxu0 %v452
      %1556 = vmatmul.mubr.f32.gmra.mrb[0].mxu0 %v451
      %v1557 = vpop.f32.mrb[0].mxu0
      %v1558 = vadd.f32 %v1333, %v1557
      %v1559 = vpop.f32.mrb[0].mxu0
      %1560 = vmatprep.mubr.f32.mxu0 %v461
      %1561 = vmatmul.mubr.f32.gmra.mrb[0].mxu0 %v460
      %v1562 = vpop.f32.mrb[0].mxu0
      %v1563 = vadd.f32 %v1338, %v1562
      %v1564 = vpop.f32.mrb[0].mxu0
      %1565 = vmatprep.mubr.f32.mxu0 %v470
      %1566 = vmatmul.mubr.f32.gmra.mrb[0].mxu0 %v469
      %v1567 = vpop.f32.mrb[0].mxu0
      %v1568 = vadd.f32 %v1343, %v1567
      %v1569 = vpop.f32.mrb[0].mxu0
      %1570 = vmatprep.mubr.f32.mxu0 %v479
      %1571 = vmatmul.mubr.f32.gmra.mrb[0].mxu0 %v478
      %v1572 = vpop.f32.mrb[0].mxu0
      %v1573 = vadd.f32 %v1348, %v1572
      %v1574 = vpop.f32.mrb[0].mxu0
      %1575 = vmatprep.mubr.f32.mxu0 %v488
      %1576 = vmatmul.mubr.f32.gmra.mrb[0].mxu0 %v487
      %v1577 = vpop.f32.mrb[0].mxu0
      %v1578 = vadd.f32 %v1353, %v1577
      %v1579 = vpop.f32.mrb[0].mxu0
      %1580 = vmatprep.mubr.f32.mxu0 %v497
      %1581 = vmatmul.mubr.f32.gmra.mrb[0].mxu0 %v496
      %v1582 = vpop.f32.mrb[0].mxu0
      %v1583 = vadd.f32 %v1358, %v1582
      %v1584 = vpop.f32.mrb[0].mxu0
      %1585 = vmatprep.mubr.f32.mxu0 %v506
      %1586 = vmatmul.mubr.f32.gmra.mrb[0].mxu0 %v505
      %v1587 = vpop.f32.mrb[0].mxu0
      %v1588 = vadd.f32 %v1363, %v1587
      %v1589 = vpop.f32.mrb[0].mxu0
      %1590 = vmatprep.mubr.f32.mxu0 %v515
      %1591 = vmatmul.mubr.f32.gmra.mrb[0].mxu0 %v514
      %v1592 = vpop.f32.mrb[0].mxu0
      %v1593 = vadd.f32 %v1368, %v1592
      %v1594 = vpop.f32.mrb[0].mxu0
      %1595 = vmatprep.mubr.f32.mxu0 %v524
      %1596 = vmatmul.mubr.f32.gmra.mrb[0].mxu0 %v523
      %v1597 = vpop.f32.mrb[0].mxu0
      %v1598 = vadd.f32 %v1373, %v1597
      %v1599 = vpop.f32.mrb[0].mxu0
      %1600 = vmatprep.mubr.f32.mxu0 %v533
      %1601 = vmatmul.mubr.f32.gmra.mrb[0].mxu0 %v532
      %v1602 = vpop.f32.mrb[0].mxu0
      %v1603 = vadd.f32 %v1378, %v1602
      %v1604 = vpop.f32.mrb[0].mxu0
      %1605 = vmatprep.mubr.f32.mxu0 %v542
      %1606 = vmatmul.mubr.f32.gmra.mrb[0].mxu0 %v541
      %v1607 = vpop.f32.mrb[0].mxu0
      %v1608 = vadd.f32 %v1383, %v1607
      %v1609 = vpop.f32.mrb[0].mxu0
      %1610 = vmatprep.mubr.f32.mxu0 %v551
      %1611 = vmatmul.mubr.f32.gmra.mrb[0].mxu0 %v550
      %v1612 = vpop.f32.mrb[0].mxu0
      %v1613 = vadd.f32 %v1388, %v1612
      %v1614 = vpop.f32.mrb[0].mxu0
      %1615 = vmatprep.mubr.f32.mxu0 %v560
      %1616 = vmatmul.mubr.f32.gmra.mrb[0].mxu0 %v559
      %v1617 = vpop.f32.mrb[0].mxu0
      %v1618 = vadd.f32 %v1393, %v1617
      %v1619 = vpop.f32.mrb[0].mxu0
      %1620 = vmatprep.mubr.f32.mxu0 %v569
      %1621 = vmatmul.mubr.f32.gmra.mrb[0].mxu0 %v568
      %v1622 = vpop.f32.mrb[0].mxu0
      %v1623 = vadd.f32 %v1398, %v1622
      %v1624 = vpop.f32.mrb[0].mxu0
      %1625 = vmatprep.mubr.f32.mxu0 %v578
      %1626 = vmatmul.mubr.f32.gmra.mrb[0].mxu0 %v577
      %v1627 = vpop.f32.mrb[0].mxu0
      %v1628 = vadd.f32 %v1403, %v1627
      %v1629 = vpop.f32.mrb[0].mxu0
      %1630 = vdwg.mxu0
      %1631 = vmatprep.subr.mxu0 0.0
      %1632 = vmatpush1.msra.mxu0 %v708
      %1633 = vmatprep.subr.mxu0 0.0
      %1634 = vmatpush1.msra.mxu0 %v709
      %1635 = vmatprep.subr.mxu0 0.0
      %1636 = vmatpush1.msra.mxu0 %v710
      %1637 = vmatprep.subr.mxu0 0.0
      %1638 = vmatpush1.msra.mxu0 %v711
      %1639 = vmatprep.subr.mxu0 0.0
      %1640 = vmatpush1.msra.mxu0 %v712
      %1641 = vmatprep.subr.mxu0 0.0
      %1642 = vmatpush1.msra.mxu0 %v713
      %1643 = vmatprep.subr.mxu0 0.0
      %1644 = vmatpush1.msra.mxu0 %v714
      %1645 = vmatprep.subr.mxu0 0.0
      %1646 = vmatpush1.msra.mxu0 %v715
      %1647 = vmatprep.subr.mxu0 0.0
      %1648 = vmatpush1.msra.mxu0 %v716
      %1649 = vmatprep.subr.mxu0 0.0
      %1650 = vmatpush1.msra.mxu0 %v717
      %1651 = vmatprep.subr.mxu0 0.0
      %1652 = vmatpush1.msra.mxu0 %v718
      %1653 = vmatprep.subr.mxu0 0.0
      %1654 = vmatpush1.msra.mxu0 %v719
      %1655 = vmatprep.subr.mxu0 0.0
      %1656 = vmatpush1.msra.mxu0 %v720
      %1657 = vmatprep.subr.mxu0 0.0
      %1658 = vmatpush1.msra.mxu0 %v721
      %1659 = vmatprep.subr.mxu0 0.0
      %1660 = vmatpush1.msra.mxu0 %v722
      %1661 = vmatprep.subr.mxu0 0.0
      %1662 = vmatpush1.msra.mxu0 %v723
      %1663 = vmatprep.subr.mxu0 0.0
      %1664 = vmatpush1.msra.mxu0 0.0
      %1665 = vmatprep.subr.mxu0 0.0
      %1666 = vmatpush1.msra.mxu0 0.0
      %1667 = vmatprep.subr.mxu0 0.0
      %1668 = vmatpush1.msra.mxu0 0.0
      %1669 = vmatprep.subr.mxu0 0.0
      %1670 = vmatpush1.msra.mxu0 0.0
      %1671 = vmatprep.subr.mxu0 0.0
      %1672 = vmatpush1.msra.mxu0 0.0
      %1673 = vmatprep.subr.mxu0 0.0
      %1674 = vmatpush1.msra.mxu0 0.0
      %1675 = vmatprep.subr.mxu0 0.0
      %1676 = vmatpush1.msra.mxu0 0.0
      %1677 = vmatprep.subr.mxu0 0.0
      %1678 = vmatpush1.msra.mxu0 0.0
      %1679 = vmatprep.subr.mxu0 0.0
      %1680 = vmatpush1.msra.mxu0 0.0
      %1681 = vmatprep.subr.mxu0 0.0
      %1682 = vmatpush1.msra.mxu0 0.0
      %1683 = vmatprep.subr.mxu0 0.0
      %1684 = vmatpush1.msra.mxu0 0.0
      %1685 = vmatprep.subr.mxu0 0.0
      %1686 = vmatpush1.msra.mxu0 0.0
      %1687 = vmatprep.subr.mxu0 0.0
      %1688 = vmatpush1.msra.mxu0 0.0
      %1689 = vmatprep.subr.mxu0 0.0
      %1690 = vmatpush1.msra.mxu0 0.0
      %1691 = vmatprep.subr.mxu0 0.0
      %1692 = vmatpush1.msra.mxu0 0.0
      %1693 = vmatprep.subr.mxu0 0.0
      %1694 = vmatpush1.msra.mxu0 0.0
      %1695 = vmatprep.mubr.f32.mxu0 0.0
      %1696 = vmatmul.mubr.f32.gmra.mrb[0].mxu0 %v300
      %v1697 = vpop.f32.mrb[0].mxu0
      %v1698 = vadd.f32 %v1473, %v1697
      %v1699 = vpop.f32.mrb[0].mxu0
      %1700 = vmatprep.mubr.f32.mxu0 0.0
      %1701 = vmatmul.mubr.f32.gmra.mrb[0].mxu0 %v309
      %v1702 = vpop.f32.mrb[0].mxu0
      %v1703 = vadd.f32 %v1478, %v1702
      %v1704 = vpop.f32.mrb[0].mxu0
      %1705 = vmatprep.mubr.f32.mxu0 0.0
      %1706 = vmatmul.mubr.f32.gmra.mrb[0].mxu0 %v318
      %v1707 = vpop.f32.mrb[0].mxu0
      %v1708 = vadd.f32 %v1483, %v1707
      %v1709 = vpop.f32.mrb[0].mxu0
      %1710 = vmatprep.mubr.f32.mxu0 0.0
      %1711 = vmatmul.mubr.f32.gmra.mrb[0].mxu0 %v327
      %v1712 = vpop.f32.mrb[0].mxu0
      %v1713 = vadd.f32 %v1488, %v1712
      %v1714 = vpop.f32.mrb[0].mxu0
      %1715 = vmatprep.mubr.f32.mxu0 0.0
      %1716 = vmatmul.mubr.f32.gmra.mrb[0].mxu0 %v336
      %v1717 = vpop.f32.mrb[0].mxu0
      %v1718 = vadd.f32 %v1493, %v1717
      %v1719 = vpop.f32.mrb[0].mxu0
      %1720 = vmatprep.mubr.f32.mxu0 0.0
      %1721 = vmatmul.mubr.f32.gmra.mrb[0].mxu0 %v345
      %v1722 = vpop.f32.mrb[0].mxu0
      %v1723 = vadd.f32 %v1498, %v1722
      %v1724 = vpop.f32.mrb[0].mxu0
      %1725 = vmatprep.mubr.f32.mxu0 0.0
      %1726 = vmatmul.mubr.f32.gmra.mrb[0].mxu0 %v354
      %v1727 = vpop.f32.mrb[0].mxu0
      %v1728 = vadd.f32 %v1503, %v1727
      %v1729 = vpop.f32.mrb[0].mxu0
      %1730 = vmatprep.mubr.f32.mxu0 0.0
      %1731 = vmatmul.mubr.f32.gmra.mrb[0].mxu0 %v363
      %v1732 = vpop.f32.mrb[0].mxu0
      %v1733 = vadd.f32 %v1508, %v1732
      %v1734 = vpop.f32.mrb[0].mxu0
      %1735 = vmatprep.mubr.f32.mxu0 0.0
      %1736 = vmatmul.mubr.f32.gmra.mrb[0].mxu0 %v372
      %v1737 = vpop.f32.mrb[0].mxu0
      %v1738 = vadd.f32 %v1513, %v1737
      %v1739 = vpop.f32.mrb[0].mxu0
      %1740 = vmatprep.mubr.f32.mxu0 0.0
      %1741 = vmatmul.mubr.f32.gmra.mrb[0].mxu0 %v381
      %v1742 = vpop.f32.mrb[0].mxu0
      %v1743 = vadd.f32 %v1518, %v1742
      %v1744 = vpop.f32.mrb[0].mxu0
      %1745 = vmatprep.mubr.f32.mxu0 0.0
      %1746 = vmatmul.mubr.f32.gmra.mrb[0].mxu0 %v390
      %v1747 = vpop.f32.mrb[0].mxu0
      %v1748 = vadd.f32 %v1523, %v1747
      %v1749 = vpop.f32.mrb[0].mxu0
      %1750 = vmatprep.mubr.f32.mxu0 0.0
      %1751 = vmatmul.mubr.f32.gmra.mrb[0].mxu0 %v399
      %v1752 = vpop.f32.mrb[0].mxu0
      %v1753 = vadd.f32 %v1528, %v1752
      %v1754 = vpop.f32.mrb[0].mxu0
      %1755 = vmatprep.mubr.f32.mxu0 0.0
      %1756 = vmatmul.mubr.f32.gmra.mrb[0].mxu0 %v408
      %v1757 = vpop.f32.mrb[0].mxu0
      %v1758 = vadd.f32 %v1533, %v1757
      %v1759 = vpop.f32.mrb[0].mxu0
      %1760 = vmatprep.mubr.f32.mxu0 0.0
      %1761 = vmatmul.mubr.f32.gmra.mrb[0].mxu0 %v417
      %v1762 = vpop.f32.mrb[0].mxu0
      %v1763 = vadd.f32 %v1538, %v1762
      %v1764 = vpop.f32.mrb[0].mxu0
      %1765 = vmatprep.mubr.f32.mxu0 0.0
      %1766 = vmatmul.mubr.f32.gmra.mrb[0].mxu0 %v426
      %v1767 = vpop.f32.mrb[0].mxu0
      %v1768 = vadd.f32 %v1543, %v1767
      %v1769 = vpop.f32.mrb[0].mxu0
      %1770 = vmatprep.mubr.f32.mxu0 0.0
      %1771 = vmatmul.mubr.f32.gmra.mrb[0].mxu0 %v435
      %v1772 = vpop.f32.mrb[0].mxu0
      %v1773 = vadd.f32 %v1548, %v1772
      %v1774 = vpop.f32.mrb[0].mxu0
      %1775 = vmatprep.mubr.f32.mxu0 0.0
      %1776 = vmatmul.mubr.f32.gmra.mrb[0].mxu0 %v444
      %v1777 = vpop.f32.mrb[0].mxu0
      %v1778 = vadd.f32 %v1553, %v1777
      %v1779 = vpop.f32.mrb[0].mxu0
      %1780 = vmatprep.mubr.f32.mxu0 0.0
      %1781 = vmatmul.mubr.f32.gmra.mrb[0].mxu0 %v453
      %v1782 = vpop.f32.mrb[0].mxu0
      %v1783 = vadd.f32 %v1558, %v1782
      %v1784 = vpop.f32.mrb[0].mxu0
      %1785 = vmatprep.mubr.f32.mxu0 0.0
      %1786 = vmatmul.mubr.f32.gmra.mrb[0].mxu0 %v462
      %v1787 = vpop.f32.mrb[0].mxu0
      %v1788 = vadd.f32 %v1563, %v1787
      %v1789 = vpop.f32.mrb[0].mxu0
      %1790 = vmatprep.mubr.f32.mxu0 0.0
      %1791 = vmatmul.mubr.f32.gmra.mrb[0].mxu0 %v471
      %v1792 = vpop.f32.mrb[0].mxu0
      %v1793 = vadd.f32 %v1568, %v1792
      %v1794 = vpop.f32.mrb[0].mxu0
      %1795 = vmatprep.mubr.f32.mxu0 0.0
      %1796 = vmatmul.mubr.f32.gmra.mrb[0].mxu0 %v480
      %v1797 = vpop.f32.mrb[0].mxu0
      %v1798 = vadd.f32 %v1573, %v1797
      %v1799 = vpop.f32.mrb[0].mxu0
      %1800 = vmatprep.mubr.f32.mxu0 0.0
      %1801 = vmatmul.mubr.f32.gmra.mrb[0].mxu0 %v489
      %v1802 = vpop.f32.mrb[0].mxu0
      %v1803 = vadd.f32 %v1578, %v1802
      %v1804 = vpop.f32.mrb[0].mxu0
      %1805 = vmatprep.mubr.f32.mxu0 0.0
      %1806 = vmatmul.mubr.f32.gmra.mrb[0].mxu0 %v498
      %v1807 = vpop.f32.mrb[0].mxu0
      %v1808 = vadd.f32 %v1583, %v1807
      %v1809 = vpop.f32.mrb[0].mxu0
      %1810 = vmatprep.mubr.f32.mxu0 0.0
      %1811 = vmatmul.mubr.f32.gmra.mrb[0].mxu0 %v507
      %v1812 = vpop.f32.mrb[0].mxu0
      %v1813 = vadd.f32 %v1588, %v1812
      %v1814 = vpop.f32.mrb[0].mxu0
      %1815 = vmatprep.mubr.f32.mxu0 0.0
      %1816 = vmatmul.mubr.f32.gmra.mrb[0].mxu0 %v516
      %v1817 = vpop.f32.mrb[0].mxu0
      %v1818 = vadd.f32 %v1593, %v1817
      %v1819 = vpop.f32.mrb[0].mxu0
      %1820 = vmatprep.mubr.f32.mxu0 0.0
      %1821 = vmatmul.mubr.f32.gmra.mrb[0].mxu0 %v525
      %v1822 = vpop.f32.mrb[0].mxu0
      %v1823 = vadd.f32 %v1598, %v1822
      %v1824 = vpop.f32.mrb[0].mxu0
      %1825 = vmatprep.mubr.f32.mxu0 0.0
      %1826 = vmatmul.mubr.f32.gmra.mrb[0].mxu0 %v534
      %v1827 = vpop.f32.mrb[0].mxu0
      %v1828 = vadd.f32 %v1603, %v1827
      %v1829 = vpop.f32.mrb[0].mxu0
      %1830 = vmatprep.mubr.f32.mxu0 0.0
      %1831 = vmatmul.mubr.f32.gmra.mrb[0].mxu0 %v543
      %v1832 = vpop.f32.mrb[0].mxu0
      %v1833 = vadd.f32 %v1608, %v1832
      %v1834 = vpop.f32.mrb[0].mxu0
      %1835 = vmatprep.mubr.f32.mxu0 0.0
      %1836 = vmatmul.mubr.f32.gmra.mrb[0].mxu0 %v552
      %v1837 = vpop.f32.mrb[0].mxu0
      %v1838 = vadd.f32 %v1613, %v1837
      %v1839 = vpop.f32.mrb[0].mxu0
      %1840 = vmatprep.mubr.f32.mxu0 0.0
      %1841 = vmatmul.mubr.f32.gmra.mrb[0].mxu0 %v561
      %v1842 = vpop.f32.mrb[0].mxu0
      %v1843 = vadd.f32 %v1618, %v1842
      %v1844 = vpop.f32.mrb[0].mxu0
      %1845 = vmatprep.mubr.f32.mxu0 0.0
      %1846 = vmatmul.mubr.f32.gmra.mrb[0].mxu0 %v570
      %v1847 = vpop.f32.mrb[0].mxu0
      %v1848 = vadd.f32 %v1623, %v1847
      %v1849 = vpop.f32.mrb[0].mxu0
      %1850 = vmatprep.mubr.f32.mxu0 0.0
      %1851 = vmatmul.mubr.f32.gmra.mrb[0].mxu0 %v579
      %v1852 = vpop.f32.mrb[0].mxu0
      %v1853 = vadd.f32 %v1628, %v1852
      %v1854 = vpop.f32.mrb[0].mxu0
      %1855 = vdwg.mxu0
      %v1856 = vld [vmem:[%s278] sm:$0xff]
      %v1857 = vld [vmem:[%s278 + $0x8] sm:$0xff]
      %v1858 = vld [vmem:[%s278 + $0x10] sm:$0xff]
      %v1859 = vld [vmem:[%s278 + $0x18] sm:$0xff]
      %v1860 = vld [vmem:[%s278 + $0x20] sm:$0xff]
      %v1861 = vld [vmem:[%s278 + $0x28] sm:$0xff]
      %v1862 = vld [vmem:[%s278 + $0x30] sm:$0xff]
      %v1863 = vld [vmem:[%s278 + $0x38] sm:$0xff]
      %v1864 = vld [vmem:[%s278 + $0x40] sm:$0xff]
      %v1865 = vld [vmem:[%s278 + $0x48] sm:$0xff]
      %v1866 = vld [vmem:[%s278 + $0x50] sm:$0xff]
      %v1867 = vld [vmem:[%s278 + $0x58] sm:$0xff]
      %v1868 = vld [vmem:[%s278 + $0x60] sm:$0xff]
      %v1869 = vld [vmem:[%s278 + $0x68] sm:$0xff]
      %v1870 = vld [vmem:[%s278 + $0x70] sm:$0xff]
      %v1871 = vld [vmem:[%s278 + $0x78] sm:$0xff]
      %v1872 = vld [vmem:[%s278 + $0x80] sm:$0xff]
      %v1873 = vld [vmem:[%s278 + $0x88] sm:$0xff]
      %v1874 = vld [vmem:[%s278 + $0x90] sm:$0xff]
      %v1875 = vld [vmem:[%s278 + $0x98] sm:$0xff]
      %v1876 = vld [vmem:[%s278 + $0xa0] sm:$0xff]
      %v1877 = vld [vmem:[%s278 + $0xa8] sm:$0xff]
      %v1878 = vld [vmem:[%s278 + $0xb0] sm:$0xff]
      %v1879 = vld [vmem:[%s278 + $0xb8] sm:$0xff]
      %v1880 = vld [vmem:[%s278 + $0xc0] sm:$0xff]
      %v1881 = vld [vmem:[%s278 + $0xc8] sm:$0xff]
      %v1882 = vld [vmem:[%s278 + $0xd0] sm:$0xff]
      %v1883 = vld [vmem:[%s278 + $0xd8] sm:$0xff]
      %v1884 = vld [vmem:[%s278 + $0xe0] sm:$0xff]
      %v1885 = vld [vmem:[%s278 + $0xe8] sm:$0xff]
      %v1886 = vld [vmem:[%s278 + $0xf0] sm:$0xff]
      %v1887 = vld [vmem:[%s278 + $0xf8] sm:$0xff]
      %v1888 = vmax.f32 %v1698, 0.0
      %v1889 = vmax.f32 %v1703, 0.0
      %v1890 = vmax.f32 %v1708, 0.0
      %v1891 = vmax.f32 %v1713, 0.0
      %v1892 = vmax.f32 %v1718, 0.0
      %v1893 = vmax.f32 %v1723, 0.0
      %v1894 = vmax.f32 %v1728, 0.0
      %v1895 = vmax.f32 %v1733, 0.0
      %v1896 = vmax.f32 %v1738, 0.0
      %v1897 = vmax.f32 %v1743, 0.0
      %v1898 = vmax.f32 %v1748, 0.0
      %v1899 = vmax.f32 %v1753, 0.0
      %v1900 = vmax.f32 %v1758, 0.0
      %v1901 = vmax.f32 %v1763, 0.0
      %v1902 = vmax.f32 %v1768, 0.0
      %v1903 = vmax.f32 %v1773, 0.0
      %v1904 = vmax.f32 %v1778, 0.0
      %v1905 = vmax.f32 %v1783, 0.0
      %v1906 = vmax.f32 %v1788, 0.0
      %v1907 = vmax.f32 %v1793, 0.0
      %v1908 = vmax.f32 %v1798, 0.0
      %v1909 = vmax.f32 %v1803, 0.0
      %v1910 = vmax.f32 %v1808, 0.0
      %v1911 = vmax.f32 %v1813, 0.0
      %v1912 = vmax.f32 %v1818, 0.0
      %v1913 = vmax.f32 %v1823, 0.0
      %v1914 = vmax.f32 %v1828, 0.0
      %v1915 = vmax.f32 %v1833, 0.0
      %v1916 = vmax.f32 %v1838, 0.0
      %v1917 = vmax.f32 %v1843, 0.0
      %v1918 = vmax.f32 %v1848, 0.0
      %v1919 = vmax.f32 %v1853, 0.0
      %v1920 = vand.u32 2147483647, %v1698
      %v1921 = vand.u32 2147483647, %v1703
      %v1922 = vand.u32 2147483647, %v1708
      %v1923 = vand.u32 2147483647, %v1713
      %v1924 = vand.u32 2147483647, %v1718
      %v1925 = vand.u32 2147483647, %v1723
      %v1926 = vand.u32 2147483647, %v1728
      %v1927 = vand.u32 2147483647, %v1733
      %v1928 = vand.u32 2147483647, %v1738
      %v1929 = vand.u32 2147483647, %v1743
      %v1930 = vand.u32 2147483647, %v1748
      %v1931 = vand.u32 2147483647, %v1753
      %v1932 = vand.u32 2147483647, %v1758
      %v1933 = vand.u32 2147483647, %v1763
      %v1934 = vand.u32 2147483647, %v1768
      %v1935 = vand.u32 2147483647, %v1773
      %v1936 = vand.u32 2147483647, %v1778
      %v1937 = vand.u32 2147483647, %v1783
      %v1938 = vand.u32 2147483647, %v1788
      %v1939 = vand.u32 2147483647, %v1793
      %v1940 = vand.u32 2147483647, %v1798
      %v1941 = vand.u32 2147483647, %v1803
      %v1942 = vand.u32 2147483647, %v1808
      %v1943 = vand.u32 2147483647, %v1813
      %v1944 = vand.u32 2147483647, %v1818
      %v1945 = vand.u32 2147483647, %v1823
      %v1946 = vand.u32 2147483647, %v1828
      %v1947 = vand.u32 2147483647, %v1833
      %v1948 = vand.u32 2147483647, %v1838
      %v1949 = vand.u32 2147483647, %v1843
      %v1950 = vand.u32 2147483647, %v1848
      %v1951 = vand.u32 2147483647, %v1853
      %v1952 = vsub.f32 0.0, %v1920
      %v1953 = vsub.f32 0.0, %v1921
      %v1954 = vsub.f32 0.0, %v1922
      %v1955 = vsub.f32 0.0, %v1923
      %v1956 = vsub.f32 0.0, %v1924
      %v1957 = vsub.f32 0.0, %v1925
      %v1958 = vsub.f32 0.0, %v1926
      %v1959 = vsub.f32 0.0, %v1927
      %v1960 = vsub.f32 0.0, %v1928
      %v1961 = vsub.f32 0.0, %v1929
      %v1962 = vsub.f32 0.0, %v1930
      %v1963 = vsub.f32 0.0, %v1931
      %v1964 = vsub.f32 0.0, %v1932
      %v1965 = vsub.f32 0.0, %v1933
      %v1966 = vsub.f32 0.0, %v1934
      %v1967 = vsub.f32 0.0, %v1935
      %v1968 = vsub.f32 0.0, %v1936
      %v1969 = vsub.f32 0.0, %v1937
      %v1970 = vsub.f32 0.0, %v1938
      %v1971 = vsub.f32 0.0, %v1939
      %v1972 = vsub.f32 0.0, %v1940
      %v1973 = vsub.f32 0.0, %v1941
      %v1974 = vsub.f32 0.0, %v1942
      %v1975 = vsub.f32 0.0, %v1943
      %v1976 = vsub.f32 0.0, %v1944
      %v1977 = vsub.f32 0.0, %v1945
      %v1978 = vsub.f32 0.0, %v1946
      %v1979 = vsub.f32 0.0, %v1947
      %v1980 = vsub.f32 0.0, %v1948
      %v1981 = vsub.f32 0.0, %v1949
      %v1982 = vsub.f32 0.0, %v1950
      %v1983 = vsub.f32 0.0, %v1951
      %v1984 = vmul.f32 %v1952, 1.442695
      %v1985 = vpow.pop %v1984
      %v1986 = vmul.f32 %v1953, 1.442695
      %v1987 = vpow.pop %v1986
      %v1988 = vmul.f32 %v1954, 1.442695
      %v1989 = vpow.pop %v1988
      %v1990 = vmul.f32 %v1955, 1.442695
      %v1991 = vpow.pop %v1990
      %v1992 = vmul.f32 %v1956, 1.442695
      %v1993 = vpow.pop %v1992
      %v1994 = vmul.f32 %v1957, 1.442695
      %v1995 = vpow.pop %v1994
      %v1996 = vmul.f32 %v1958, 1.442695
      %v1997 = vpow.pop %v1996
      %v1998 = vmul.f32 %v1959, 1.442695
      %v1999 = vpow.pop %v1998
      %v2000 = vmul.f32 %v1960, 1.442695
      %v2001 = vpow.pop %v2000
      %v2002 = vmul.f32 %v1961, 1.442695
      %v2003 = vpow.pop %v2002
      %v2004 = vmul.f32 %v1962, 1.442695
      %v2005 = vpow.pop %v2004
      %v2006 = vmul.f32 %v1963, 1.442695
      %v2007 = vpow.pop %v2006
      %v2008 = vmul.f32 %v1964, 1.442695
      %v2009 = vpow.pop %v2008
      %v2010 = vmul.f32 %v1965, 1.442695
      %v2011 = vpow.pop %v2010
      %v2012 = vmul.f32 %v1966, 1.442695
      %v2013 = vpow.pop %v2012
      %v2014 = vmul.f32 %v1967, 1.442695
      %v2015 = vpow.pop %v2014
      %v2016 = vmul.f32 %v1968, 1.442695
      %v2017 = vpow.pop %v2016
      %v2018 = vmul.f32 %v1969, 1.442695
      %v2019 = vpow.pop %v2018
      %v2020 = vmul.f32 %v1970, 1.442695
      %v2021 = vpow.pop %v2020
      %v2022 = vmul.f32 %v1971, 1.442695
      %v2023 = vpow.pop %v2022
      %v2024 = vmul.f32 %v1972, 1.442695
      %v2025 = vpow.pop %v2024
      %v2026 = vmul.f32 %v1973, 1.442695
      %v2027 = vpow.pop %v2026
      %v2028 = vmul.f32 %v1974, 1.442695
      %v2029 = vpow.pop %v2028
      %v2030 = vmul.f32 %v1975, 1.442695
      %v2031 = vpow.pop %v2030
      %v2032 = vmul.f32 %v1976, 1.442695
      %v2033 = vpow.pop %v2032
      %v2034 = vmul.f32 %v1977, 1.442695
      %v2035 = vpow.pop %v2034
      %v2036 = vmul.f32 %v1978, 1.442695
      %v2037 = vpow.pop %v2036
      %v2038 = vmul.f32 %v1979, 1.442695
      %v2039 = vpow.pop %v2038
      %v2040 = vmul.f32 %v1980, 1.442695
      %v2041 = vpow.pop %v2040
      %v2042 = vmul.f32 %v1981, 1.442695
      %v2043 = vpow.pop %v2042
      %v2044 = vmul.f32 %v1982, 1.442695
      %v2045 = vpow.pop %v2044
      %v2046 = vmul.f32 %v1983, 1.442695
      %v2047 = vpow.pop %v2046
      %v2048 = vadd.f32 %v1985, 1.0
      %v2049 = vadd.f32 %v1987, 1.0
      %v2050 = vadd.f32 %v1989, 1.0
      %v2051 = vadd.f32 %v1991, 1.0
      %v2052 = vadd.f32 %v1993, 1.0
      %v2053 = vadd.f32 %v1995, 1.0
      %v2054 = vadd.f32 %v1997, 1.0
      %v2055 = vadd.f32 %v1999, 1.0
      %v2056 = vadd.f32 %v2001, 1.0
      %v2057 = vadd.f32 %v2003, 1.0
      %v2058 = vadd.f32 %v2005, 1.0
      %v2059 = vadd.f32 %v2007, 1.0
      %v2060 = vadd.f32 %v2009, 1.0
      %v2061 = vadd.f32 %v2011, 1.0
      %v2062 = vadd.f32 %v2013, 1.0
      %v2063 = vadd.f32 %v2015, 1.0
      %v2064 = vadd.f32 %v2017, 1.0
      %v2065 = vadd.f32 %v2019, 1.0
      %v2066 = vadd.f32 %v2021, 1.0
      %v2067 = vadd.f32 %v2023, 1.0
      %v2068 = vadd.f32 %v2025, 1.0
      %v2069 = vadd.f32 %v2027, 1.0
      %v2070 = vadd.f32 %v2029, 1.0
      %v2071 = vadd.f32 %v2031, 1.0
      %v2072 = vadd.f32 %v2033, 1.0
      %v2073 = vadd.f32 %v2035, 1.0
      %v2074 = vadd.f32 %v2037, 1.0
      %v2075 = vadd.f32 %v2039, 1.0
      %v2076 = vadd.f32 %v2041, 1.0
      %v2077 = vadd.f32 %v2043, 1.0
      %v2078 = vadd.f32 %v2045, 1.0
      %v2079 = vadd.f32 %v2047, 1.0
      %v2080 = vlog2.pop %v2048
      %v2081 = vmul.f32 %v2080, 0.6931472
      %v2082 = vlog2.pop %v2049
      %v2083 = vmul.f32 %v2082, 0.6931472
      %v2084 = vlog2.pop %v2050
      %v2085 = vmul.f32 %v2084, 0.6931472
      %v2086 = vlog2.pop %v2051
      %v2087 = vmul.f32 %v2086, 0.6931472
      %v2088 = vlog2.pop %v2052
      %v2089 = vmul.f32 %v2088, 0.6931472
      %v2090 = vlog2.pop %v2053
      %v2091 = vmul.f32 %v2090, 0.6931472
      %v2092 = vlog2.pop %v2054
      %v2093 = vmul.f32 %v2092, 0.6931472
      %v2094 = vlog2.pop %v2055
      %v2095 = vmul.f32 %v2094, 0.6931472
      %v2096 = vlog2.pop %v2056
      %v2097 = vmul.f32 %v2096, 0.6931472
      %v2098 = vlog2.pop %v2057
      %v2099 = vmul.f32 %v2098, 0.6931472
      %v2100 = vlog2.pop %v2058
      %v2101 = vmul.f32 %v2100, 0.6931472
      %v2102 = vlog2.pop %v2059
      %v2103 = vmul.f32 %v2102, 0.6931472
      %v2104 = vlog2.pop %v2060
      %v2105 = vmul.f32 %v2104, 0.6931472
      %v2106 = vlog2.pop %v2061
      %v2107 = vmul.f32 %v2106, 0.6931472
      %v2108 = vlog2.pop %v2062
      %v2109 = vmul.f32 %v2108, 0.6931472
      %v2110 = vlog2.pop %v2063
      %v2111 = vmul.f32 %v2110, 0.6931472
      %v2112 = vlog2.pop %v2064
      %v2113 = vmul.f32 %v2112, 0.6931472
      %v2114 = vlog2.pop %v2065
      %v2115 = vmul.f32 %v2114, 0.6931472
      %v2116 = vlog2.pop %v2066
      %v2117 = vmul.f32 %v2116, 0.6931472
      %v2118 = vlog2.pop %v2067
      %v2119 = vmul.f32 %v2118, 0.6931472
      %v2120 = vlog2.pop %v2068
      %v2121 = vmul.f32 %v2120, 0.6931472
      %v2122 = vlog2.pop %v2069
      %v2123 = vmul.f32 %v2122, 0.6931472
      %v2124 = vlog2.pop %v2070
      %v2125 = vmul.f32 %v2124, 0.6931472
      %v2126 = vlog2.pop %v2071
      %v2127 = vmul.f32 %v2126, 0.6931472
      %v2128 = vlog2.pop %v2072
      %v2129 = vmul.f32 %v2128, 0.6931472
      %v2130 = vlog2.pop %v2073
      %v2131 = vmul.f32 %v2130, 0.6931472
      %v2132 = vlog2.pop %v2074
      %v2133 = vmul.f32 %v2132, 0.6931472
      %v2134 = vlog2.pop %v2075
      %v2135 = vmul.f32 %v2134, 0.6931472
      %v2136 = vlog2.pop %v2076
      %v2137 = vmul.f32 %v2136, 0.6931472
      %v2138 = vlog2.pop %v2077
      %v2139 = vmul.f32 %v2138, 0.6931472
      %v2140 = vlog2.pop %v2078
      %v2141 = vmul.f32 %v2140, 0.6931472
      %v2142 = vlog2.pop %v2079
      %v2143 = vmul.f32 %v2142, 0.6931472
      %v2144 = vadd.f32 %v1888, %v2081
      %v2145 = vadd.f32 %v1889, %v2083
      %v2146 = vadd.f32 %v1890, %v2085
      %v2147 = vadd.f32 %v1891, %v2087
      %v2148 = vadd.f32 %v1892, %v2089
      %v2149 = vadd.f32 %v1893, %v2091
      %v2150 = vadd.f32 %v1894, %v2093
      %v2151 = vadd.f32 %v1895, %v2095
      %v2152 = vadd.f32 %v1896, %v2097
      %v2153 = vadd.f32 %v1897, %v2099
      %v2154 = vadd.f32 %v1898, %v2101
      %v2155 = vadd.f32 %v1899, %v2103
      %v2156 = vadd.f32 %v1900, %v2105
      %v2157 = vadd.f32 %v1901, %v2107
      %v2158 = vadd.f32 %v1902, %v2109
      %v2159 = vadd.f32 %v1903, %v2111
      %v2160 = vadd.f32 %v1904, %v2113
      %v2161 = vadd.f32 %v1905, %v2115
      %v2162 = vadd.f32 %v1906, %v2117
      %v2163 = vadd.f32 %v1907, %v2119
      %v2164 = vadd.f32 %v1908, %v2121
      %v2165 = vadd.f32 %v1909, %v2123
      %v2166 = vadd.f32 %v1910, %v2125
      %v2167 = vadd.f32 %v1911, %v2127
      %v2168 = vadd.f32 %v1912, %v2129
      %v2169 = vadd.f32 %v1913, %v2131
      %v2170 = vadd.f32 %v1914, %v2133
      %v2171 = vadd.f32 %v1915, %v2135
      %v2172 = vadd.f32 %v1916, %v2137
      %v2173 = vadd.f32 %v1917, %v2139
      %v2174 = vadd.f32 %v1918, %v2141
      %v2175 = vadd.f32 %v1919, %v2143
      %v2176 = vmul.f32 %v1856, %v1698
      %v2177 = vmul.f32 %v1857, %v1703
      %v2178 = vmul.f32 %v1858, %v1708
      %v2179 = vmul.f32 %v1859, %v1713
      %v2180 = vmul.f32 %v1860, %v1718
      %v2181 = vmul.f32 %v1861, %v1723
      %v2182 = vmul.f32 %v1862, %v1728
      %v2183 = vmul.f32 %v1863, %v1733
      %v2184 = vmul.f32 %v1864, %v1738
      %v2185 = vmul.f32 %v1865, %v1743
      %v2186 = vmul.f32 %v1866, %v1748
      %v2187 = vmul.f32 %v1867, %v1753
      %v2188 = vmul.f32 %v1868, %v1758
      %v2189 = vmul.f32 %v1869, %v1763
      %v2190 = vmul.f32 %v1870, %v1768
      %v2191 = vmul.f32 %v1871, %v1773
      %v2192 = vmul.f32 %v1872, %v1778
      %v2193 = vmul.f32 %v1873, %v1783
      %v2194 = vmul.f32 %v1874, %v1788
      %v2195 = vmul.f32 %v1875, %v1793
      %v2196 = vmul.f32 %v1876, %v1798
      %v2197 = vmul.f32 %v1877, %v1803
      %v2198 = vmul.f32 %v1878, %v1808
      %v2199 = vmul.f32 %v1879, %v1813
      %v2200 = vmul.f32 %v1880, %v1818
      %v2201 = vmul.f32 %v1881, %v1823
      %v2202 = vmul.f32 %v1882, %v1828
      %v2203 = vmul.f32 %v1883, %v1833
      %v2204 = vmul.f32 %v1884, %v1838
      %v2205 = vmul.f32 %v1885, %v1843
      %v2206 = vmul.f32 %v1886, %v1848
      %v2207 = vmul.f32 %v1887, %v1853
      %v2208 = vsub.f32 %v2144, %v2176
      %v2209 = vsub.f32 %v2145, %v2177
      %v2210 = vsub.f32 %v2146, %v2178
      %v2211 = vsub.f32 %v2147, %v2179
      %v2212 = vsub.f32 %v2148, %v2180
      %v2213 = vsub.f32 %v2149, %v2181
      %v2214 = vsub.f32 %v2150, %v2182
      %v2215 = vsub.f32 %v2151, %v2183
      %v2216 = vsub.f32 %v2152, %v2184
      %v2217 = vsub.f32 %v2153, %v2185
      %v2218 = vsub.f32 %v2154, %v2186
      %v2219 = vsub.f32 %v2155, %v2187
      %v2220 = vsub.f32 %v2156, %v2188
      %v2221 = vsub.f32 %v2157, %v2189
      %v2222 = vsub.f32 %v2158, %v2190
      %v2223 = vsub.f32 %v2159, %v2191
      %v2224 = vsub.f32 %v2160, %v2192
      %v2225 = vsub.f32 %v2161, %v2193
      %v2226 = vsub.f32 %v2162, %v2194
      %v2227 = vsub.f32 %v2163, %v2195
      %v2228 = vsub.f32 %v2164, %v2196
      %v2229 = vsub.f32 %v2165, %v2197
      %v2230 = vsub.f32 %v2166, %v2198
      %v2231 = vsub.f32 %v2167, %v2199
      %v2232 = vsub.f32 %v2168, %v2200
      %v2233 = vsub.f32 %v2169, %v2201
      %v2234 = vsub.f32 %v2170, %v2202
      %v2235 = vsub.f32 %v2171, %v2203
      %v2236 = vsub.f32 %v2172, %v2204
      %v2237 = vsub.f32 %v2173, %v2205
      %v2238 = vsub.f32 %v2174, %v2206
      %v2239 = vsub.f32 %v2175, %v2207
      %v2240 = vld [vmem:[%s4] sm:$0x1]
      %v2242 = vlaneseq
      %v2243 = vshrl.u32 %v2242, 7
      %v2244 = vsub.s32 0, %v2243
      %v2245 = vrot.slane %v2240, %v2244
      %v2247 = vmul.f32 %v2208, %v2245
      %v2248 = vmul.f32 %v2209, %v2245
      %v2249 = vmul.f32 %v2210, %v2245
      %v2250 = vmul.f32 %v2211, %v2245
      %v2251 = vmul.f32 %v2212, %v2245
      %v2252 = vmul.f32 %v2213, %v2245
      %v2253 = vmul.f32 %v2214, %v2245
      %v2254 = vmul.f32 %v2215, %v2245
      %v2255 = vmul.f32 %v2216, %v2245
      %v2256 = vmul.f32 %v2217, %v2245
      %v2257 = vmul.f32 %v2218, %v2245
      %v2258 = vmul.f32 %v2219, %v2245
      %v2259 = vmul.f32 %v2220, %v2245
      %v2260 = vmul.f32 %v2221, %v2245
      %v2261 = vmul.f32 %v2222, %v2245
      %v2262 = vmul.f32 %v2223, %v2245
      %v2263 = vmul.f32 %v2224, %v2245
      %v2264 = vmul.f32 %v2225, %v2245
      %v2265 = vmul.f32 %v2226, %v2245
      %v2266 = vmul.f32 %v2227, %v2245
      %v2267 = vmul.f32 %v2228, %v2245
      %v2268 = vmul.f32 %v2229, %v2245
      %v2269 = vmul.f32 %v2230, %v2245
      %v2270 = vmul.f32 %v2231, %v2245
      %v2271 = vmul.f32 %v2232, %v2245
      %v2272 = vmul.f32 %v2233, %v2245
      %v2273 = vmul.f32 %v2234, %v2245
      %v2274 = vmul.f32 %v2235, %v2245
      %v2275 = vmul.f32 %v2236, %v2245
      %v2276 = vmul.f32 %v2237, %v2245
      %v2277 = vmul.f32 %v2238, %v2245
      %v2278 = vmul.f32 %v2239, %v2245
      %2279 = vadd.xlane.f32.xlu0 %v2247
      %v2280 = vpop.xlane.xlu0 %2279
      %2281 = vadd.xlane.f32.xlu0 %v2248
      %v2282 = vpop.xlane.xlu0 %2281
      %2283 = vadd.xlane.f32.xlu0 %v2249
      %v2284 = vpop.xlane.xlu0 %2283
      %2285 = vadd.xlane.f32.xlu0 %v2250
      %v2286 = vpop.xlane.xlu0 %2285
      %2287 = vadd.xlane.f32.xlu0 %v2251
      %v2288 = vpop.xlane.xlu0 %2287
      %2289 = vadd.xlane.f32.xlu0 %v2252
      %v2290 = vpop.xlane.xlu0 %2289
      %2291 = vadd.xlane.f32.xlu0 %v2253
      %v2292 = vpop.xlane.xlu0 %2291
      %2293 = vadd.xlane.f32.xlu0 %v2254
      %v2294 = vpop.xlane.xlu0 %2293
      %2295 = vadd.xlane.f32.xlu0 %v2255
      %v2296 = vpop.xlane.xlu0 %2295
      %2297 = vadd.xlane.f32.xlu0 %v2256
      %v2298 = vpop.xlane.xlu0 %2297
      %2299 = vadd.xlane.f32.xlu0 %v2257
      %v2300 = vpop.xlane.xlu0 %2299
      %2301 = vadd.xlane.f32.xlu0 %v2258
      %v2302 = vpop.xlane.xlu0 %2301
      %2303 = vadd.xlane.f32.xlu0 %v2259
      %v2304 = vpop.xlane.xlu0 %2303
      %2305 = vadd.xlane.f32.xlu0 %v2260
      %v2306 = vpop.xlane.xlu0 %2305
      %2307 = vadd.xlane.f32.xlu0 %v2261
      %v2308 = vpop.xlane.xlu0 %2307
      %2309 = vadd.xlane.f32.xlu0 %v2262
      %v2310 = vpop.xlane.xlu0 %2309
      %2311 = vadd.xlane.f32.xlu0 %v2263
      %v2312 = vpop.xlane.xlu0 %2311
      %2313 = vadd.xlane.f32.xlu0 %v2264
      %v2314 = vpop.xlane.xlu0 %2313
      %2315 = vadd.xlane.f32.xlu0 %v2265
      %v2316 = vpop.xlane.xlu0 %2315
      %2317 = vadd.xlane.f32.xlu0 %v2266
      %v2318 = vpop.xlane.xlu0 %2317
      %2319 = vadd.xlane.f32.xlu0 %v2267
      %v2320 = vpop.xlane.xlu0 %2319
      %2321 = vadd.xlane.f32.xlu0 %v2268
      %v2322 = vpop.xlane.xlu0 %2321
      %2323 = vadd.xlane.f32.xlu0 %v2269
      %v2324 = vpop.xlane.xlu0 %2323
      %2325 = vadd.xlane.f32.xlu0 %v2270
      %v2326 = vpop.xlane.xlu0 %2325
      %2327 = vadd.xlane.f32.xlu0 %v2271
      %v2328 = vpop.xlane.xlu0 %2327
      %2329 = vadd.xlane.f32.xlu0 %v2272
      %v2330 = vpop.xlane.xlu0 %2329
      %2331 = vadd.xlane.f32.xlu0 %v2273
      %v2332 = vpop.xlane.xlu0 %2331
      %2333 = vadd.xlane.f32.xlu0 %v2274
      %v2334 = vpop.xlane.xlu0 %2333
      %2335 = vadd.xlane.f32.xlu0 %v2275
      %v2336 = vpop.xlane.xlu0 %2335
      %2337 = vadd.xlane.f32.xlu0 %v2276
      %v2338 = vpop.xlane.xlu0 %2337
      %2339 = vadd.xlane.f32.xlu0 %v2277
      %v2340 = vpop.xlane.xlu0 %2339
      %2341 = vadd.xlane.f32.xlu0 %v2278
      %v2342 = vpop.xlane.xlu0 %2341
      %v2343 = vld [vmem:[%s6] sm:$0x3]
      %v2344 = vld [vmem:[%s284] sm:$0xf]
      %v2347 = vunpack.c.l.s4 1983009808
      %v2348 = vunpack.c.0.s8 %v2347
      %v2349 = vlaneseq
      %v2350 = vshrl.u32 %v2349, 7
      %v2351 = vsub.s32 %v2348, %v2350
      %v2352 = vrot.slane %v2344, %v2351
      %v2353 = vcombine.high %v2352, %v2352
      %2356 = vmatprep.subr.mxu0 0.0
      %2357 = vmatpush1.msra.mxu0 %v2280
      %2358 = vmatprep.subr.mxu0 0.0
      %2359 = vmatpush1.msra.mxu0 %v2282
      %2360 = vmatprep.subr.mxu0 0.0
      %2361 = vmatpush1.msra.mxu0 %v2284
      %2362 = vmatprep.subr.mxu0 0.0
      %2363 = vmatpush1.msra.mxu0 %v2286
      %2364 = vmatprep.subr.mxu0 0.0
      %2365 = vmatpush1.msra.mxu0 %v2288
      %2366 = vmatprep.subr.mxu0 0.0
      %2367 = vmatpush1.msra.mxu0 %v2290
      %2368 = vmatprep.subr.mxu0 0.0
      %2369 = vmatpush1.msra.mxu0 %v2292
      %2370 = vmatprep.subr.mxu0 0.0
      %2371 = vmatpush1.msra.mxu0 %v2294
      %2372 = vmatprep.subr.mxu0 0.0
      %2373 = vmatpush1.msra.mxu0 %v2296
      %2374 = vmatprep.subr.mxu0 0.0
      %2375 = vmatpush1.msra.mxu0 %v2298
      %2376 = vmatprep.subr.mxu0 0.0
      %2377 = vmatpush1.msra.mxu0 %v2300
      %2378 = vmatprep.subr.mxu0 0.0
      %2379 = vmatpush1.msra.mxu0 %v2302
      %2380 = vmatprep.subr.mxu0 0.0
      %2381 = vmatpush1.msra.mxu0 %v2304
      %2382 = vmatprep.subr.mxu0 0.0
      %2383 = vmatpush1.msra.mxu0 %v2306
      %2384 = vmatprep.subr.mxu0 0.0
      %2385 = vmatpush1.msra.mxu0 %v2308
      %2386 = vmatprep.subr.mxu0 0.0
      %2387 = vmatpush1.msra.mxu0 %v2310
      %2388 = vmatprep.subr.mxu0 0.0
      %2389 = vmatpush1.msra.mxu0 %v2312
      %2390 = vmatprep.subr.mxu0 0.0
      %2391 = vmatpush1.msra.mxu0 %v2314
      %2392 = vmatprep.subr.mxu0 0.0
      %2393 = vmatpush1.msra.mxu0 %v2316
      %2394 = vmatprep.subr.mxu0 0.0
      %2395 = vmatpush1.msra.mxu0 %v2318
      %2396 = vmatprep.subr.mxu0 0.0
      %2397 = vmatpush1.msra.mxu0 %v2320
      %2398 = vmatprep.subr.mxu0 0.0
      %2399 = vmatpush1.msra.mxu0 %v2322
      %2400 = vmatprep.subr.mxu0 0.0
      %2401 = vmatpush1.msra.mxu0 %v2324
      %2402 = vmatprep.subr.mxu0 0.0
      %2403 = vmatpush1.msra.mxu0 %v2326
      %2404 = vmatprep.subr.mxu0 0.0
      %2405 = vmatpush1.msra.mxu0 %v2328
      %2406 = vmatprep.subr.mxu0 0.0
      %2407 = vmatpush1.msra.mxu0 %v2330
      %2408 = vmatprep.subr.mxu0 0.0
      %2409 = vmatpush1.msra.mxu0 %v2332
      %2410 = vmatprep.subr.mxu0 0.0
      %2411 = vmatpush1.msra.mxu0 %v2334
      %2412 = vmatprep.subr.mxu0 0.0
      %2413 = vmatpush1.msra.mxu0 %v2336
      %2414 = vmatprep.subr.mxu0 0.0
      %2415 = vmatpush1.msra.mxu0 %v2338
      %2416 = vmatprep.subr.mxu0 0.0
      %2417 = vmatpush1.msra.mxu0 %v2340
      %2418 = vmatprep.subr.mxu0 0.0
      %2419 = vmatpush1.msra.mxu0 %v2342
      %2420 = vmatprep.mubr.f32.mxu0 %v2353
      %2421 = vmatmul.mubr.f32.gmra.mrb[0].mxu0 %v2352
      %v2422 = vpop.f32.mrb[0].mxu0
      %v2423 = vadd.f32 0.0, %v2422
      %v2424 = vpop.f32.mrb[0].mxu0
      %2425 = vdwg.mxu0
      %v2426 = vadd.f32 %v2343, %v2423
      %vm2427 = vcmask 1024
      %2428 = vst.msk [vmem:[%s6] sm:$0x3] %vm2427, %v2426
      // Predicated region
      $region49: #{_coop_forward_impl.9} parent=43 // pred_check
        %p2429 = pneg %p171
      $region50: #{_coop_forward_impl.9} parent=43 // pred_check_branch
        %2431 = sbr.rel (%p2429) target = $region52
      $region51: #{_coop_forward_impl.9} parent=43 // pred_region
        _
      $region52: #{_coop_forward_impl.9} parent=43 // pred_fallthru
        _
      // Predicated region
      $region53: #{_coop_forward_impl.9} parent=43 // pred_check
        %p2432 = pneg %p171
      $region54: #{_coop_forward_impl.9} parent=43 // pred_check_branch
        %2434 = sbr.rel (%p2432) target = $region56
      $region55: #{_coop_forward_impl.9} parent=43 // pred_region
        _
      $region56: #{_coop_forward_impl.9} parent=43 // pred_fallthru
        _
    $region44: #{_coop_forward_impl.9} parent=5 // pred_fallthru
      _
    %p2435 = scmp.le.s32.totalorder 2, %s12
    // Predicated region
    $region57: #{_coop_forward_impl.9} parent=5 // pred_check
      %p2436 = pneg %p2435
    $region58: #{_coop_forward_impl.9} parent=5 // pred_check_branch
      %2438 = sbr.rel (%p2436) target = $region60
    $region59: #{_coop_forward_impl.9} parent=5 // pred_region
      %s2439 = ssub.s32 %s12, 2
    $region60: #{_coop_forward_impl.9} parent=5 // pred_fallthru
      _
  $region6: #{_coop_forward_impl.9} parent=0 // loop_footer
    %s16 = sadd.s32 1, %s12
  $region7: #{_coop_forward_impl.9} parent=0 // loop_footer_branch
    %11 = sbr.rel target = $region3
  $region8: #{_coop_forward_impl.9} parent=0 // loop_exit
    _

</llo_original>
